<compile_context>
chip_gen: v7x
topology: tpu7x:2x2x1
jax: 0.10.0
libtpu: 0.0.40
codegen_flags: <defaults>
</compile_context>

<pallas_src>
import functools
import math

import jax
import jax.numpy as jnp
import numpy as np
from jax.experimental import pallas as pl
from jax.experimental.pallas import tpu as pltpu


# ------------------------------ helpers ------------------------------------

def _row_tile(m):
    return m if m <= 256 else 256


_PARALLEL = pltpu.CompilerParams(dimension_semantics=("parallel",))


# ----------------------------- Pallas kernels ------------------------------

def _embed_kernel(xu_ref, xt_ref, pos_ref, vw_ref, tw_ref, o_ref):
    """val(conv-as-matmul) + temporal linear + positional, fused."""
    xu = xu_ref[0].astype(jnp.bfloat16)                     # (L, 3*c_in)
    xt = xt_ref[0].astype(jnp.bfloat16)                     # (L, d_t)
    val = jnp.dot(xu, vw_ref[...].astype(jnp.bfloat16),
                  preferred_element_type=jnp.float32)
    tim = jnp.dot(xt, tw_ref[...].astype(jnp.bfloat16),
                  preferred_element_type=jnp.float32)
    o_ref[0] = (val + tim + pos_ref[...].astype(jnp.float32)).astype(o_ref.dtype)


def _mha_ln_body(xq, xkv, wq_ref, bq_ref, wk_ref, bk_ref, wv_ref, bv_ref,
                 wo_ref, bo_ref, g_ref, beta_ref, o_ref, w_ref, n_heads, scale, eps):
    """Shared body: QKV proj + all-head attention + out proj + residual(xq) + LayerNorm."""
    # TODO(synk): attention masks not implemented (forward uses None masks).
    xqb = xq.astype(jnp.bfloat16)
    xkvb = xkv.astype(jnp.bfloat16)
    q = jnp.dot(xqb, wq_ref[...].astype(jnp.bfloat16),
                preferred_element_type=jnp.float32) + bq_ref[...].astype(jnp.float32)
    k = jnp.dot(xkvb, wk_ref[...].astype(jnp.bfloat16),
                preferred_element_type=jnp.float32) + bk_ref[...].astype(jnp.float32)
    v = jnp.dot(xkvb, wv_ref[...].astype(jnp.bfloat16),
                preferred_element_type=jnp.float32) + bv_ref[...].astype(jnp.float32)

    D = q.shape[-1]
    dh = D // n_heads
    head_outs = []
    for h in range(n_heads):
        lo = h * dh
        qh = q[:, lo:lo + dh].astype(jnp.bfloat16)
        kh = k[:, lo:lo + dh].astype(jnp.bfloat16)
        vh = v[:, lo:lo + dh].astype(jnp.bfloat16)
        # q @ k^T without an explicit transpose (contract last dims of both).
        s = jax.lax.dot_general(qh, kh, (((1,), (1,)), ((), ())),
                                preferred_element_type=jnp.float32) * scale
        s = s - jnp.max(s, axis=-1, keepdims=True)
        p = jnp.exp(s)
        p = p * pl.reciprocal(jnp.sum(p, axis=-1, keepdims=True), approx=True)
        w_ref[0, h] = p.astype(w_ref.dtype)
        head_outs.append(jnp.dot(p.astype(jnp.bfloat16), vh,
                                 preferred_element_type=jnp.float32))
    attn = jnp.concatenate(head_outs, axis=-1)               # (Lq, D) f32

    y = jnp.dot(attn.astype(jnp.bfloat16), wo_ref[...].astype(jnp.bfloat16),
                preferred_element_type=jnp.float32)
    y = y + bo_ref[...].astype(jnp.float32) + xq.astype(jnp.float32)
    mean = jnp.mean(y, axis=-1, keepdims=True)
    var = jnp.mean(jnp.square(y - mean), axis=-1, keepdims=True)
    yn = (y - mean) * jax.lax.rsqrt(var + eps)
    o_ref[0] = (yn * g_ref[...].astype(jnp.float32)
                + beta_ref[...].astype(jnp.float32)).astype(o_ref.dtype)


def _self_attn_sublayer_kernel(x_ref, wq_ref, bq_ref, wk_ref, bk_ref, wv_ref, bv_ref,
                               wo_ref, bo_ref, g_ref, beta_ref, o_ref, w_ref,
                               *, n_heads, scale, eps):
    x = x_ref[0].astype(jnp.float32)                          # (L, D)
    _mha_ln_body(x, x, wq_ref, bq_ref, wk_ref, bk_ref, wv_ref, bv_ref,
                 wo_ref, bo_ref, g_ref, beta_ref, o_ref, w_ref, n_heads, scale, eps)


def _cross_attn_sublayer_kernel(xq_ref, xkv_ref, wq_ref, bq_ref, wk_ref, bk_ref,
                                wv_ref, bv_ref, wo_ref, bo_ref, g_ref, beta_ref,
                                o_ref, w_ref, *, n_heads, scale, eps):
    xq = xq_ref[0].astype(jnp.float32)                        # (Lq, D)
    xkv = xkv_ref[0].astype(jnp.float32)                      # (Lk, D)
    _mha_ln_body(xq, xkv, wq_ref, bq_ref, wk_ref, bk_ref, wv_ref, bv_ref,
                 wo_ref, bo_ref, g_ref, beta_ref, o_ref, w_ref, n_heads, scale, eps)


def _ffn_res_ln_kernel(x_ref, w1_ref, b1_ref, w2_ref, b2_ref, g_ref, beta_ref, o_ref, *, eps):
    """out = LayerNorm(x + relu(x @ W1 + b1) @ W2 + b2); hidden never leaves VMEM."""
    x = x_ref[...]
    h = jnp.dot(x.astype(jnp.bfloat16), w1_ref[...].astype(jnp.bfloat16),
                preferred_element_type=jnp.float32) + b1_ref[...].astype(jnp.float32)
    h = jnp.maximum(h, 0.0)
    y = jnp.dot(h.astype(jnp.bfloat16), w2_ref[...].astype(jnp.bfloat16),
                preferred_element_type=jnp.float32) + b2_ref[...].astype(jnp.float32)
    y = y + x.astype(jnp.float32)
    mean = jnp.mean(y, axis=-1, keepdims=True)
    var = jnp.mean(jnp.square(y - mean), axis=-1, keepdims=True)
    yn = (y - mean) * jax.lax.rsqrt(var + eps)
    o_ref[...] = (yn * g_ref[...] + beta_ref[...]).astype(o_ref.dtype)


def _ln_kernel(x_ref, g_ref, b_ref, o_ref, *, eps):
    x = x_ref[...].astype(jnp.float32)
    mean = jnp.mean(x, axis=-1, keepdims=True)
    var = jnp.mean(jnp.square(x - mean), axis=-1, keepdims=True)
    y = (x - mean) * jax.lax.rsqrt(var + eps)
    o_ref[...] = (y * g_ref[...] + b_ref[...]).astype(o_ref.dtype)


def _ln_linear_kernel(x_ref, g_ref, beta_ref, w_ref, b_ref, o_ref, *, eps):
    """out = LayerNorm(x) @ W + b  (final dec_norm + out_proj fused)."""
    x = x_ref[...].astype(jnp.float32)
    mean = jnp.mean(x, axis=-1, keepdims=True)
    var = jnp.mean(jnp.square(x - mean), axis=-1, keepdims=True)
    xn = (x - mean) * jax.lax.rsqrt(var + eps) * g_ref[...] + beta_ref[...]
    y = jnp.dot(xn.astype(jnp.bfloat16), w_ref[...].astype(jnp.bfloat16),
                preferred_element_type=jnp.float32) + b_ref[...].astype(jnp.float32)
    o_ref[...] = y.astype(o_ref.dtype)


# ------------------------------ kernel wrappers -----------------------------

def _attn_param_pack(ap, lnp, D):
    args = [ap["wq"], ap["bq"].reshape(1, D), ap["wk"], ap["bk"].reshape(1, D),
            ap["wv"], ap["bv"].reshape(1, D), ap["wo"], ap["bo"].reshape(1, D),
            lnp["g"].reshape(1, D), lnp["b"].reshape(1, D)]
    w_spec = pl.BlockSpec((D, D), lambda b: (0, 0))
    v_spec = pl.BlockSpec((1, D), lambda b: (0, 0))
    specs = [w_spec, v_spec, w_spec, v_spec, w_spec, v_spec, w_spec, v_spec, v_spec, v_spec]
    return args, specs


def self_attn_sublayer(x, ap, lnp, n_heads, eps=1e-5):
    """LayerNorm(x + MHA(x, x) @ Wo + bo), one kernel per batch item."""
    B, L, D = x.shape
    dh = D // n_heads
    scale = 1.0 / math.sqrt(dh)
    param_args, param_specs = _attn_param_pack(ap, lnp, D)
    ce = pl.CostEstimate(
        flops=int(8 * B * L * D * D + 4 * B * n_heads * L * L * dh),
        transcendentals=int(B * n_heads * L * L),
        bytes_accessed=int(4 * (2 * B * L * D + 4 * D * D + B * n_heads * L * L)))
    out, w = pl.pallas_call(
        functools.partial(_self_attn_sublayer_kernel, n_heads=n_heads, scale=scale, eps=eps),
        grid=(B,),
        in_specs=[pl.BlockSpec((1, L, D), lambda b: (b, 0, 0))] + param_specs,
        out_specs=(pl.BlockSpec((1, L, D), lambda b: (b, 0, 0)),
                   pl.BlockSpec((1, n_heads, L, L), lambda b: (b, 0, 0, 0))),
        out_shape=(jax.ShapeDtypeStruct((B, L, D), x.dtype),
                   jax.ShapeDtypeStruct((B, n_heads, L, L), jnp.float32)),
        compiler_params=_PARALLEL,
        cost_estimate=ce,
    )(x, *param_args)
    return out, w


def cross_attn_sublayer(x_q, x_kv, ap, lnp, n_heads, eps=1e-5):
    """LayerNorm(x_q + MHA(x_q, x_kv) @ Wo + bo), one kernel per batch item."""
    B, Lq, D = x_q.shape
    Lk = x_kv.shape[1]
    dh = D // n_heads
    scale = 1.0 / math.sqrt(dh)
    param_args, param_specs = _attn_param_pack(ap, lnp, D)
    ce = pl.CostEstimate(
        flops=int(4 * B * Lq * D * D + 4 * B * Lk * D * D + 4 * B * n_heads * Lq * Lk * dh),
        transcendentals=int(B * n_heads * Lq * Lk),
        bytes_accessed=int(4 * (2 * B * Lq * D + B * Lk * D + 4 * D * D
                                + B * n_heads * Lq * Lk)))
    out, w = pl.pallas_call(
        functools.partial(_cross_attn_sublayer_kernel, n_heads=n_heads, scale=scale, eps=eps),
        grid=(B,),
        in_specs=[pl.BlockSpec((1, Lq, D), lambda b: (b, 0, 0)),
                  pl.BlockSpec((1, Lk, D), lambda b: (b, 0, 0))] + param_specs,
        out_specs=(pl.BlockSpec((1, Lq, D), lambda b: (b, 0, 0)),
                   pl.BlockSpec((1, n_heads, Lq, Lk), lambda b: (b, 0, 0, 0))),
        out_shape=(jax.ShapeDtypeStruct((B, Lq, D), x_q.dtype),
                   jax.ShapeDtypeStruct((B, n_heads, Lq, Lk), jnp.float32)),
        compiler_params=_PARALLEL,
        cost_estimate=ce,
    )(x_q, x_kv, *param_args)
    return out, w


def ffn_residual_layernorm(x2d, w1, b1, w2, b2, g, beta, eps=1e-5):
    M, D = x2d.shape
    F = w1.shape[1]
    tm = _row_tile(M)
    ce = pl.CostEstimate(flops=int(4 * M * D * F), transcendentals=0,
                         bytes_accessed=int(4 * (2 * M * D + 2 * D * F)))
    return pl.pallas_call(
        functools.partial(_ffn_res_ln_kernel, eps=eps),
        grid=(pl.cdiv(M, tm),),
        in_specs=[
            pl.BlockSpec((tm, D), lambda i: (i, 0)),
            pl.BlockSpec((D, F), lambda i: (0, 0)),
            pl.BlockSpec((1, F), lambda i: (0, 0)),
            pl.BlockSpec((F, D), lambda i: (0, 0)),
            pl.BlockSpec((1, D), lambda i: (0, 0)),
            pl.BlockSpec((1, D), lambda i: (0, 0)),
            pl.BlockSpec((1, D), lambda i: (0, 0)),
        ],
        out_specs=pl.BlockSpec((tm, D), lambda i: (i, 0)),
        out_shape=jax.ShapeDtypeStruct((M, D), x2d.dtype),
        compiler_params=_PARALLEL,
        cost_estimate=ce,
    )(x2d, w1, b1.reshape(1, F), w2, b2.reshape(1, D),
      g.reshape(1, D), beta.reshape(1, D))


def layer_norm(x2d, g, b, eps=1e-5):
    M, D = x2d.shape
    tm = _row_tile(M)
    return pl.pallas_call(
        functools.partial(_ln_kernel, eps=eps),
        grid=(pl.cdiv(M, tm),),
        in_specs=[pl.BlockSpec((tm, D), lambda i: (i, 0)),
                  pl.BlockSpec((1, D), lambda i: (0, 0)),
                  pl.BlockSpec((1, D), lambda i: (0, 0))],
        out_specs=pl.BlockSpec((tm, D), lambda i: (i, 0)),
        out_shape=jax.ShapeDtypeStruct((M, D), x2d.dtype),
        compiler_params=_PARALLEL,
    )(x2d, g.reshape(1, D), b.reshape(1, D))


def ln_linear(x2d, g, beta, w, b, eps=1e-5):
    M, D = x2d.shape
    N = w.shape[1]
    tm = _row_tile(M)
    ce = pl.CostEstimate(flops=int(2 * M * D * N), transcendentals=0,
                         bytes_accessed=int(4 * (M * D + D * N + M * N)))
    return pl.pallas_call(
        functools.partial(_ln_linear_kernel, eps=eps),
        grid=(pl.cdiv(M, tm),),
        in_specs=[
            pl.BlockSpec((tm, D), lambda i: (i, 0)),
            pl.BlockSpec((1, D), lambda i: (0, 0)),
            pl.BlockSpec((1, D), lambda i: (0, 0)),
            pl.BlockSpec((D, N), lambda i: (0, 0)),
            pl.BlockSpec((1, N), lambda i: (0, 0)),
        ],
        out_specs=pl.BlockSpec((tm, N), lambda i: (i, 0)),
        out_shape=jax.ShapeDtypeStruct((M, N), x2d.dtype),
        compiler_params=_PARALLEL,
        cost_estimate=ce,
    )(x2d, g.reshape(1, D), beta.reshape(1, D), w, b.reshape(1, N))


# --------------------------- model building blocks --------------------------

def positional_embedding(L, D):
    pos = np.arange(L, dtype=np.float32)[:, None]
    i = np.arange(0, D, 2, dtype=np.float32)[None, :]
    angle = pos / np.power(10000.0, i / D)
    pe = np.zeros((L, D), np.float32)
    pe[:, 0::2] = np.sin(angle)
    pe[:, 1::2] = np.cos(angle)
    return jnp.asarray(pe)


def data_embedding(p, x, x_time):
    """Token Conv1d(k=3, circular, no bias) + temporal linear (no bias) + positional, fused."""
    B, L, c_in = x.shape
    D = p["val_w"].shape[1]
    d_t = x_time.shape[-1]
    # circular unfold along L (equivalent to Conv1d NCW, kernel=3, circular padding=1)
    xp = jnp.concatenate([x[:, -1:, :], x, x[:, :1, :]], axis=1)            # (B, L+2, c_in)
    x_unf = jnp.concatenate([xp[:, :-2], xp[:, 1:-1], xp[:, 2:]], axis=-1)  # (B, L, 3*c_in)
    pos = positional_embedding(L, D)
    return pl.pallas_call(
        _embed_kernel,
        grid=(B,),
        in_specs=[
            pl.BlockSpec((1, L, 3 * c_in), lambda b: (b, 0, 0)),
            pl.BlockSpec((1, L, d_t), lambda b: (b, 0, 0)),
            pl.BlockSpec((L, D), lambda b: (0, 0)),
            pl.BlockSpec((3 * c_in, D), lambda b: (0, 0)),
            pl.BlockSpec((d_t, D), lambda b: (0, 0)),
        ],
        out_specs=pl.BlockSpec((1, L, D), lambda b: (b, 0, 0)),
        out_shape=jax.ShapeDtypeStruct((B, L, D), x.dtype),
        compiler_params=_PARALLEL,
    )(x_unf, x_time, pos, p["val_w"], p["time_w"])


def encoder_layer(p, x, n_heads):
    B, L, D = x.shape
    x1, w = self_attn_sublayer(x, p["attn"], p["ln1"], n_heads)
    x2 = ffn_residual_layernorm(x1.reshape(-1, D), p["ff1"]["w"], p["ff1"]["b"],
                                p["ff2"]["w"], p["ff2"]["b"],
                                p["ln2"]["g"], p["ln2"]["b"])
    return x2.reshape(B, L, D), (w, None)


def decoder_layer(p, x, enc_out, n_heads):
    B, L, D = x.shape
    x1, sw = self_attn_sublayer(x, p["self_attn"], p["ln1"], n_heads)
    x2, cw = cross_attn_sublayer(x1, enc_out, p["cross_attn"], p["ln2"], n_heads)
    x3 = ffn_residual_layernorm(x2.reshape(-1, D), p["ff1"]["w"], p["ff1"]["b"],
                                p["ff2"]["w"], p["ff2"]["b"],
                                p["ln3"]["g"], p["ln3"]["b"])
    return x3.reshape(B, L, D), (sw, cw)


def encoder_decoder_forward(params, x_enc, x_time_enc, x_dec, x_time_dec, n_heads):
    # ---- encode ----
    enc_out = data_embedding(params["enc_emb"], x_enc, x_time_enc)
    enc_self_weights = []
    for lp in params["encoder"]:
        enc_out, (w, _) = encoder_layer(lp, enc_out, n_heads)
        enc_self_weights.append(w)
    B, Le, D = enc_out.shape
    enc_out = layer_norm(enc_out.reshape(-1, D), params["enc_norm"]["g"],
                         params["enc_norm"]["b"]).reshape(B, Le, D)

    # ---- decode ----
    dec_out = data_embedding(params["dec_emb"], x_dec, x_time_dec)
    dec_self_weights, dec_enc_weights = [], []
    for lp in params["decoder"]:
        dec_out, (sw, cw) = decoder_layer(lp, dec_out, enc_out, n_heads)
        dec_self_weights.append(sw)
        dec_enc_weights.append(cw)
    Bd, Ld, D = dec_out.shape

    # ---- final norm + output projection (fused) ----
    out = ln_linear(dec_out.reshape(-1, D), params["dec_norm"]["g"], params["dec_norm"]["b"],
                    params["out_proj"]["w"], params["out_proj"]["b"]).reshape(Bd, Ld, -1)
    return out, ((enc_self_weights, None), (dec_self_weights, dec_enc_weights))


# ------------------------------- parameter init -----------------------------

def init_params(key, d_enc_in, d_dec_in, d_dec_out, d_model, n_heads,
                n_enc_layers, n_dec_layers, d_ff, d_temporal):
    keys = iter(jax.random.split(key, 256))

    def lin(d_in, d_out, bias=True):
        kw = next(keys)
        kb = next(keys)
        w = jax.random.normal(kw, (d_in, d_out), jnp.float32) * (1.0 / np.sqrt(d_in))
        if bias:
            b = jax.random.normal(kb, (d_out,), jnp.float32) * 0.01
        else:
            b = jnp.zeros((d_out,), jnp.float32)
        return {"w": w, "b": b}

    def ln(d):
        return {"g": jnp.ones((d,), jnp.float32), "b": jnp.zeros((d,), jnp.float32)}

    def attn():
        ps = {}
        for nm in ("q", "k", "v", "o"):
            l = lin(d_model, d_model)
            ps["w" + nm] = l["w"]
            ps["b" + nm] = l["b"]
        return ps

    def enc_layer_p():
        return {"attn": attn(), "ln1": ln(d_model),
                "ff1": lin(d_model, d_ff), "ff2": lin(d_ff, d_model),
                "ln2": ln(d_model)}

    def dec_layer_p():
        return {"self_attn": attn(), "ln1": ln(d_model),
                "cross_attn": attn(), "ln2": ln(d_model),
                "ff1": lin(d_model, d_ff), "ff2": lin(d_ff, d_model),
                "ln3": ln(d_model)}

    def emb(c_in):
        v = lin(3 * c_in, d_model, bias=False)      # Conv1d(k=3) as unfolded matmul, no bias
        t = lin(d_temporal, d_model, bias=False)    # TimeFeatureEmbedding, no bias
        return {"val_w": v["w"], "time_w": t["w"]}

    return {
        "enc_emb": emb(d_enc_in),
        "dec_emb": emb(d_dec_in),
        "encoder": [enc_layer_p() for _ in range(n_enc_layers)],
        "enc_norm": ln(d_model),
        "decoder": [dec_layer_p() for _ in range(n_dec_layers)],
        "dec_norm": ln(d_model),
        "out_proj": lin(d_model, d_dec_out),
    }


# ------------------------------------ main -----------------------------------

if __name__ == "__main__":
    # small shapes consistent with the forward signature
    B, len_enc, len_dec = 2, 16, 12            # len_dec = len_label + len_pred
    d_enc_in, d_dec_in, d_dec_out = 4, 4, 4
    d_model, n_heads, d_ff = 64, 4, 128
    n_enc_layers, n_dec_layers = 2, 1
    d_temporal = 4                              # freq='h' -> 4 time features

    key = jax.random.PRNGKey(0)
    kp, k1, k2, k3, k4 = jax.random.split(key, 5)

    params = init_params(kp, d_enc_in, d_dec_in, d_dec_out, d_model, n_heads,
                         n_enc_layers, n_dec_layers, d_ff, d_temporal)

    x_enc = jax.random.normal(k1, (B, len_enc, d_enc_in), jnp.float32)
    x_time_enc = jax.random.normal(k2, (B, len_enc, d_temporal), jnp.float32)
    x_dec = jax.random.normal(k3, (B, len_dec, d_dec_in), jnp.float32)
    x_time_dec = jax.random.normal(k4, (B, len_dec, d_temporal), jnp.float32)

    fwd = jax.jit(functools.partial(encoder_decoder_forward, n_heads=n_heads))
    out, ((enc_w, _), (dec_sw, dec_cw)) = fwd(params, x_enc, x_time_enc, x_dec, x_time_dec)

    jax.block_until_ready((out, enc_w, dec_sw, dec_cw))

    assert out.shape == (B, len_dec, d_dec_out), out.shape
    assert enc_w[0].shape == (B, n_heads, len_enc, len_enc)
    assert dec_sw[0].shape == (B, n_heads, len_dec, len_dec)
    assert dec_cw[0].shape == (B, n_heads, len_dec, len_enc)
    assert bool(jnp.all(jnp.isfinite(out)))
    print("KERNEL_OK")
</pallas_src>

<mosaic_0001>
module attributes {stable_mosaic.version = 11 : i64} {
  func.func @_self_attn_sublayer_kernel(%arg0: i32, %arg1: memref<1x16x64xf32, #tpu.memory_space<vmem>>, %arg2: memref<64x64xf32, #tpu.memory_space<vmem>>, %arg3: memref<1x64xf32, #tpu.memory_space<vmem>>, %arg4: memref<64x64xf32, #tpu.memory_space<vmem>>, %arg5: memref<1x64xf32, #tpu.memory_space<vmem>>, %arg6: memref<64x64xf32, #tpu.memory_space<vmem>>, %arg7: memref<1x64xf32, #tpu.memory_space<vmem>>, %arg8: memref<64x64xf32, #tpu.memory_space<vmem>>, %arg9: memref<1x64xf32, #tpu.memory_space<vmem>>, %arg10: memref<1x64xf32, #tpu.memory_space<vmem>>, %arg11: memref<1x64xf32, #tpu.memory_space<vmem>>, %arg12: memref<1x16x64xf32, #tpu.memory_space<vmem>>, %arg13: memref<1x4x16x16xf32, #tpu.memory_space<vmem>>) attributes {dimension_semantics = [#tpu.dimension_semantics<parallel>], iteration_bounds = array<i64: 2>, scalar_prefetch = 0 : i64, scratch_operands = 0 : i64, tpu.core_type = #tpu.core_type<tc>, window_params = [{transform_indices = @transform_0, window_bounds = array<i64: 1, 16, 64>}, {pipeline_mode = #tpu.pipeline_mode<synchronous>, transform_indices = @transform_1, window_bounds = array<i64: 64, 64>}, {pipeline_mode = #tpu.pipeline_mode<synchronous>, transform_indices = @transform_2, window_bounds = array<i64: 1, 64>}, {pipeline_mode = #tpu.pipeline_mode<synchronous>, transform_indices = @transform_3, window_bounds = array<i64: 64, 64>}, {pipeline_mode = #tpu.pipeline_mode<synchronous>, transform_indices = @transform_4, window_bounds = array<i64: 1, 64>}, {pipeline_mode = #tpu.pipeline_mode<synchronous>, transform_indices = @transform_5, window_bounds = array<i64: 64, 64>}, {pipeline_mode = #tpu.pipeline_mode<synchronous>, transform_indices = @transform_6, window_bounds = array<i64: 1, 64>}, {pipeline_mode = #tpu.pipeline_mode<synchronous>, transform_indices = @transform_7, window_bounds = array<i64: 64, 64>}, {pipeline_mode = #tpu.pipeline_mode<synchronous>, transform_indices = @transform_8, window_bounds = array<i64: 1, 64>}, {pipeline_mode = #tpu.pipeline_mode<synchronous>, transform_indices = @transform_9, window_bounds = array<i64: 1, 64>}, {pipeline_mode = #tpu.pipeline_mode<synchronous>, transform_indices = @transform_10, window_bounds = array<i64: 1, 64>}, {transform_indices = @transform_11, window_bounds = array<i64: 1, 16, 64>}, {transform_indices = @transform_12, window_bounds = array<i64: 1, 4, 16, 16>}]} {
    %c0 = arith.constant 0 : index
    %c0_0 = arith.constant 0 : index
    %c0_1 = arith.constant 0 : index
    %0 = vector.load %arg1[%c0, %c0_0, %c0_1] : memref<1x16x64xf32, #tpu.memory_space<vmem>>, vector<1x16x64xf32>
    %1 = vector.shape_cast %0 : vector<1x16x64xf32> to vector<16x64xf32>
    %2 = arith.truncf %1 : vector<16x64xf32> to vector<16x64xbf16>
    %3 = arith.truncf %1 : vector<16x64xf32> to vector<16x64xbf16>
    %c0_2 = arith.constant 0 : index
    %c0_3 = arith.constant 0 : index
    %4 = vector.load %arg2[%c0_2, %c0_3] : memref<64x64xf32, #tpu.memory_space<vmem>>, vector<64x64xf32>
    %5 = arith.truncf %4 : vector<64x64xf32> to vector<64x64xbf16>
    %cst = arith.constant dense<0.000000e+00> : vector<16x64xf32>
    %6 = tpu.matmul %2, %5, %cst {dimension_numbers = #tpu.dot_dimension_numbers<[1], [0], [0], [1], [0, 0, 1, 1], [], []>} : vector<16x64xbf16>, vector<64x64xbf16>, vector<16x64xf32> -> vector<16x64xf32>
    %c0_4 = arith.constant 0 : index
    %c0_5 = arith.constant 0 : index
    %7 = vector.load %arg3[%c0_4, %c0_5] : memref<1x64xf32, #tpu.memory_space<vmem>>, vector<1x64xf32>
    %8 = vector.broadcast %7 : vector<1x64xf32> to vector<16x64xf32>
    %9 = arith.addf %6, %8 : vector<16x64xf32>
    %c0_6 = arith.constant 0 : index
    %c0_7 = arith.constant 0 : index
    %10 = vector.load %arg4[%c0_6, %c0_7] : memref<64x64xf32, #tpu.memory_space<vmem>>, vector<64x64xf32>
    %11 = arith.truncf %10 : vector<64x64xf32> to vector<64x64xbf16>
    %cst_8 = arith.constant dense<0.000000e+00> : vector<16x64xf32>
    %12 = tpu.matmul %3, %11, %cst_8 {dimension_numbers = #tpu.dot_dimension_numbers<[1], [0], [0], [1], [0, 0, 1, 1], [], []>} : vector<16x64xbf16>, vector<64x64xbf16>, vector<16x64xf32> -> vector<16x64xf32>
    %c0_9 = arith.constant 0 : index
    %c0_10 = arith.constant 0 : index
    %13 = vector.load %arg5[%c0_9, %c0_10] : memref<1x64xf32, #tpu.memory_space<vmem>>, vector<1x64xf32>
    %14 = vector.broadcast %13 : vector<1x64xf32> to vector<16x64xf32>
    %15 = arith.addf %12, %14 : vector<16x64xf32>
    %c0_11 = arith.constant 0 : index
    %c0_12 = arith.constant 0 : index
    %16 = vector.load %arg6[%c0_11, %c0_12] : memref<64x64xf32, #tpu.memory_space<vmem>>, vector<64x64xf32>
    %17 = arith.truncf %16 : vector<64x64xf32> to vector<64x64xbf16>
    %cst_13 = arith.constant dense<0.000000e+00> : vector<16x64xf32>
    %18 = tpu.matmul %3, %17, %cst_13 {dimension_numbers = #tpu.dot_dimension_numbers<[1], [0], [0], [1], [0, 0, 1, 1], [], []>} : vector<16x64xbf16>, vector<64x64xbf16>, vector<16x64xf32> -> vector<16x64xf32>
    %c0_14 = arith.constant 0 : index
    %c0_15 = arith.constant 0 : index
    %19 = vector.load %arg7[%c0_14, %c0_15] : memref<1x64xf32, #tpu.memory_space<vmem>>, vector<1x64xf32>
    %20 = vector.broadcast %19 : vector<1x64xf32> to vector<16x64xf32>
    %21 = arith.addf %18, %20 : vector<16x64xf32>
    %22 = vector.extract_strided_slice %9 {offsets = [0, 0], sizes = [16, 16], strides = [1, 1]} : vector<16x64xf32> to vector<16x16xf32>
    %23 = arith.truncf %22 : vector<16x16xf32> to vector<16x16xbf16>
    %24 = vector.extract_strided_slice %15 {offsets = [0, 0], sizes = [16, 16], strides = [1, 1]} : vector<16x64xf32> to vector<16x16xf32>
    %25 = arith.truncf %24 : vector<16x16xf32> to vector<16x16xbf16>
    %26 = vector.extract_strided_slice %21 {offsets = [0, 0], sizes = [16, 16], strides = [1, 1]} : vector<16x64xf32> to vector<16x16xf32>
    %27 = arith.truncf %26 : vector<16x16xf32> to vector<16x16xbf16>
    %cst_16 = arith.constant dense<0.000000e+00> : vector<16x16xf32>
    %28 = tpu.matmul %23, %25, %cst_16 {dimension_numbers = #tpu.dot_dimension_numbers<[1], [1], [0], [0], [0, 0, 1, 0], [], []>} : vector<16x16xbf16>, vector<16x16xbf16>, vector<16x16xf32> -> vector<16x16xf32>
    %cst_17 = arith.constant 2.500000e-01 : f32
    %29 = vector.broadcast %cst_17 : f32 to vector<16x16xf32>
    %30 = arith.mulf %28, %29 : vector<16x16xf32>
    %cst_18 = arith.constant dense<0xFF800000> : vector<16xf32>
    %31 = vector.multi_reduction <maximumf>, %30, %cst_18 [1] : vector<16x16xf32> to vector<16xf32>
    %32 = vector.shape_cast %31 : vector<16xf32> to vector<16x1xf32>
    %33 = vector.broadcast %32 : vector<16x1xf32> to vector<16x16xf32>
    %34 = arith.subf %30, %33 : vector<16x16xf32>
    %35 = math.exp %34 : vector<16x16xf32>
    %cst_19 = arith.constant dense<0.000000e+00> : vector<16xf32>
    %36 = vector.multi_reduction <add>, %35, %cst_19 [1] : vector<16x16xf32> to vector<16xf32>
    %37 = vector.shape_cast %36 : vector<16xf32> to vector<16x1xf32>
    %38 = tpu.reciprocal %37 {approx = true} : vector<16x1xf32> -> vector<16x1xf32>
    %39 = vector.broadcast %38 : vector<16x1xf32> to vector<16x16xf32>
    %40 = arith.mulf %35, %39 : vector<16x16xf32>
    %c0_20 = arith.constant 0 : index
    %c0_21 = arith.constant 0 : index
    %c0_22 = arith.constant 0 : index
    %c0_23 = arith.constant 0 : index
    %41 = vector.load %arg13[%c0_20, %c0_21, %c0_22, %c0_23] : memref<1x4x16x16xf32, #tpu.memory_space<vmem>>, vector<1x1x16x16xf32>
    %42 = vector.shape_cast %41 : vector<1x1x16x16xf32> to vector<16x16xf32>
    %43 = vector.shape_cast %40 : vector<16x16xf32> to vector<1x1x16x16xf32>
    tpu.vector_store %arg13[%c0_20, %c0_21, %c0_22, %c0_23], %43 {strides = array<i32>} : memref<1x4x16x16xf32, #tpu.memory_space<vmem>>, vector<1x1x16x16xf32>,
    %44 = arith.truncf %40 : vector<16x16xf32> to vector<16x16xbf16>
    %cst_24 = arith.constant dense<0.000000e+00> : vector<16x16xf32>
    %45 = tpu.matmul %44, %27, %cst_24 {dimension_numbers = #tpu.dot_dimension_numbers<[1], [0], [0], [1], [0, 0, 1, 1], [], []>} : vector<16x16xbf16>, vector<16x16xbf16>, vector<16x16xf32> -> vector<16x16xf32>
    %46 = vector.extract_strided_slice %9 {offsets = [0, 16], sizes = [16, 16], strides = [1, 1]} : vector<16x64xf32> to vector<16x16xf32>
    %47 = arith.truncf %46 : vector<16x16xf32> to vector<16x16xbf16>
    %48 = vector.extract_strided_slice %15 {offsets = [0, 16], sizes = [16, 16], strides = [1, 1]} : vector<16x64xf32> to vector<16x16xf32>
    %49 = arith.truncf %48 : vector<16x16xf32> to vector<16x16xbf16>
    %50 = vector.extract_strided_slice %21 {offsets = [0, 16], sizes = [16, 16], strides = [1, 1]} : vector<16x64xf32> to vector<16x16xf32>
    %51 = arith.truncf %50 : vector<16x16xf32> to vector<16x16xbf16>
    %cst_25 = arith.constant dense<0.000000e+00> : vector<16x16xf32>
    %52 = tpu.matmul %47, %49, %cst_25 {dimension_numbers = #tpu.dot_dimension_numbers<[1], [1], [0], [0], [0, 0, 1, 0], [], []>} : vector<16x16xbf16>, vector<16x16xbf16>, vector<16x16xf32> -> vector<16x16xf32>
    %cst_26 = arith.constant 2.500000e-01 : f32
    %53 = vector.broadcast %cst_26 : f32 to vector<16x16xf32>
    %54 = arith.mulf %52, %53 : vector<16x16xf32>
    %cst_27 = arith.constant dense<0xFF800000> : vector<16xf32>
    %55 = vector.multi_reduction <maximumf>, %54, %cst_27 [1] : vector<16x16xf32> to vector<16xf32>
    %56 = vector.shape_cast %55 : vector<16xf32> to vector<16x1xf32>
    %57 = vector.broadcast %56 : vector<16x1xf32> to vector<16x16xf32>
    %58 = arith.subf %54, %57 : vector<16x16xf32>
    %59 = math.exp %58 : vector<16x16xf32>
    %cst_28 = arith.constant dense<0.000000e+00> : vector<16xf32>
    %60 = vector.multi_reduction <add>, %59, %cst_28 [1] : vector<16x16xf32> to vector<16xf32>
    %61 = vector.shape_cast %60 : vector<16xf32> to vector<16x1xf32>
    %62 = tpu.reciprocal %61 {approx = true} : vector<16x1xf32> -> vector<16x1xf32>
    %63 = vector.broadcast %62 : vector<16x1xf32> to vector<16x16xf32>
    %64 = arith.mulf %59, %63 : vector<16x16xf32>
    %c0_29 = arith.constant 0 : index
    %c1 = arith.constant 1 : index
    %c0_30 = arith.constant 0 : index
    %c0_31 = arith.constant 0 : index
    %65 = vector.load %arg13[%c0_29, %c1, %c0_30, %c0_31] : memref<1x4x16x16xf32, #tpu.memory_space<vmem>>, vector<1x1x16x16xf32>
    %66 = vector.shape_cast %65 : vector<1x1x16x16xf32> to vector<16x16xf32>
    %67 = vector.shape_cast %64 : vector<16x16xf32> to vector<1x1x16x16xf32>
    tpu.vector_store %arg13[%c0_29, %c1, %c0_30, %c0_31], %67 {strides = array<i32>} : memref<1x4x16x16xf32, #tpu.memory_space<vmem>>, vector<1x1x16x16xf32>,
    %68 = arith.truncf %64 : vector<16x16xf32> to vector<16x16xbf16>
    %cst_32 = arith.constant dense<0.000000e+00> : vector<16x16xf32>
    %69 = tpu.matmul %68, %51, %cst_32 {dimension_numbers = #tpu.dot_dimension_numbers<[1], [0], [0], [1], [0, 0, 1, 1], [], []>} : vector<16x16xbf16>, vector<16x16xbf16>, vector<16x16xf32> -> vector<16x16xf32>
    %70 = vector.extract_strided_slice %9 {offsets = [0, 32], sizes = [16, 16], strides = [1, 1]} : vector<16x64xf32> to vector<16x16xf32>
    %71 = arith.truncf %70 : vector<16x16xf32> to vector<16x16xbf16>
    %72 = vector.extract_strided_slice %15 {offsets = [0, 32], sizes = [16, 16], strides = [1, 1]} : vector<16x64xf32> to vector<16x16xf32>
    %73 = arith.truncf %72 : vector<16x16xf32> to vector<16x16xbf16>
    %74 = vector.extract_strided_slice %21 {offsets = [0, 32], sizes = [16, 16], strides = [1, 1]} : vector<16x64xf32> to vector<16x16xf32>
    %75 = arith.truncf %74 : vector<16x16xf32> to vector<16x16xbf16>
    %cst_33 = arith.constant dense<0.000000e+00> : vector<16x16xf32>
    %76 = tpu.matmul %71, %73, %cst_33 {dimension_numbers = #tpu.dot_dimension_numbers<[1], [1], [0], [0], [0, 0, 1, 0], [], []>} : vector<16x16xbf16>, vector<16x16xbf16>, vector<16x16xf32> -> vector<16x16xf32>
    %cst_34 = arith.constant 2.500000e-01 : f32
    %77 = vector.broadcast %cst_34 : f32 to vector<16x16xf32>
    %78 = arith.mulf %76, %77 : vector<16x16xf32>
    %cst_35 = arith.constant dense<0xFF800000> : vector<16xf32>
    %79 = vector.multi_reduction <maximumf>, %78, %cst_35 [1] : vector<16x16xf32> to vector<16xf32>
    %80 = vector.shape_cast %79 : vector<16xf32> to vector<16x1xf32>
    %81 = vector.broadcast %80 : vector<16x1xf32> to vector<16x16xf32>
    %82 = arith.subf %78, %81 : vector<16x16xf32>
    %83 = math.exp %82 : vector<16x16xf32>
    %cst_36 = arith.constant dense<0.000000e+00> : vector<16xf32>
    %84 = vector.multi_reduction <add>, %83, %cst_36 [1] : vector<16x16xf32> to vector<16xf32>
    %85 = vector.shape_cast %84 : vector<16xf32> to vector<16x1xf32>
    %86 = tpu.reciprocal %85 {approx = true} : vector<16x1xf32> -> vector<16x1xf32>
    %87 = vector.broadcast %86 : vector<16x1xf32> to vector<16x16xf32>
    %88 = arith.mulf %83, %87 : vector<16x16xf32>
    %c0_37 = arith.constant 0 : index
    %c2 = arith.constant 2 : index
    %c0_38 = arith.constant 0 : index
    %c0_39 = arith.constant 0 : index
    %89 = vector.load %arg13[%c0_37, %c2, %c0_38, %c0_39] : memref<1x4x16x16xf32, #tpu.memory_space<vmem>>, vector<1x1x16x16xf32>
    %90 = vector.shape_cast %89 : vector<1x1x16x16xf32> to vector<16x16xf32>
    %91 = vector.shape_cast %88 : vector<16x16xf32> to vector<1x1x16x16xf32>
    tpu.vector_store %arg13[%c0_37, %c2, %c0_38, %c0_39], %91 {strides = array<i32>} : memref<1x4x16x16xf32, #tpu.memory_space<vmem>>, vector<1x1x16x16xf32>,
    %92 = arith.truncf %88 : vector<16x16xf32> to vector<16x16xbf16>
    %cst_40 = arith.constant dense<0.000000e+00> : vector<16x16xf32>
    %93 = tpu.matmul %92, %75, %cst_40 {dimension_numbers = #tpu.dot_dimension_numbers<[1], [0], [0], [1], [0, 0, 1, 1], [], []>} : vector<16x16xbf16>, vector<16x16xbf16>, vector<16x16xf32> -> vector<16x16xf32>
    %94 = vector.extract_strided_slice %9 {offsets = [0, 48], sizes = [16, 16], strides = [1, 1]} : vector<16x64xf32> to vector<16x16xf32>
    %95 = arith.truncf %94 : vector<16x16xf32> to vector<16x16xbf16>
    %96 = vector.extract_strided_slice %15 {offsets = [0, 48], sizes = [16, 16], strides = [1, 1]} : vector<16x64xf32> to vector<16x16xf32>
    %97 = arith.truncf %96 : vector<16x16xf32> to vector<16x16xbf16>
    %98 = vector.extract_strided_slice %21 {offsets = [0, 48], sizes = [16, 16], strides = [1, 1]} : vector<16x64xf32> to vector<16x16xf32>
    %99 = arith.truncf %98 : vector<16x16xf32> to vector<16x16xbf16>
    %cst_41 = arith.constant dense<0.000000e+00> : vector<16x16xf32>
    %100 = tpu.matmul %95, %97, %cst_41 {dimension_numbers = #tpu.dot_dimension_numbers<[1], [1], [0], [0], [0, 0, 1, 0], [], []>} : vector<16x16xbf16>, vector<16x16xbf16>, vector<16x16xf32> -> vector<16x16xf32>
    %cst_42 = arith.constant 2.500000e-01 : f32
    %101 = vector.broadcast %cst_42 : f32 to vector<16x16xf32>
    %102 = arith.mulf %100, %101 : vector<16x16xf32>
    %cst_43 = arith.constant dense<0xFF800000> : vector<16xf32>
    %103 = vector.multi_reduction <maximumf>, %102, %cst_43 [1] : vector<16x16xf32> to vector<16xf32>
    %104 = vector.shape_cast %103 : vector<16xf32> to vector<16x1xf32>
    %105 = vector.broadcast %104 : vector<16x1xf32> to vector<16x16xf32>
    %106 = arith.subf %102, %105 : vector<16x16xf32>
    %107 = math.exp %106 : vector<16x16xf32>
    %cst_44 = arith.constant dense<0.000000e+00> : vector<16xf32>
    %108 = vector.multi_reduction <add>, %107, %cst_44 [1] : vector<16x16xf32> to vector<16xf32>
    %109 = vector.shape_cast %108 : vector<16xf32> to vector<16x1xf32>
    %110 = tpu.reciprocal %109 {approx = true} : vector<16x1xf32> -> vector<16x1xf32>
    %111 = vector.broadcast %110 : vector<16x1xf32> to vector<16x16xf32>
    %112 = arith.mulf %107, %111 : vector<16x16xf32>
    %c0_45 = arith.constant 0 : index
    %c3 = arith.constant 3 : index
    %c0_46 = arith.constant 0 : index
    %c0_47 = arith.constant 0 : index
    %113 = vector.load %arg13[%c0_45, %c3, %c0_46, %c0_47] : memref<1x4x16x16xf32, #tpu.memory_space<vmem>>, vector<1x1x16x16xf32>
    %114 = vector.shape_cast %113 : vector<1x1x16x16xf32> to vector<16x16xf32>
    %115 = vector.shape_cast %112 : vector<16x16xf32> to vector<1x1x16x16xf32>
    tpu.vector_store %arg13[%c0_45, %c3, %c0_46, %c0_47], %115 {strides = array<i32>} : memref<1x4x16x16xf32, #tpu.memory_space<vmem>>, vector<1x1x16x16xf32>,
    %116 = arith.truncf %112 : vector<16x16xf32> to vector<16x16xbf16>
    %cst_48 = arith.constant dense<0.000000e+00> : vector<16x16xf32>
    %117 = tpu.matmul %116, %99, %cst_48 {dimension_numbers = #tpu.dot_dimension_numbers<[1], [0], [0], [1], [0, 0, 1, 1], [], []>} : vector<16x16xbf16>, vector<16x16xbf16>, vector<16x16xf32> -> vector<16x16xf32>
    %118 = tpu.concatenate %45, %69, %93, %117 in 1 : vector<16x16xf32>, vector<16x16xf32>, vector<16x16xf32>, vector<16x16xf32> -> vector<16x64xf32>
    %119 = arith.truncf %118 : vector<16x64xf32> to vector<16x64xbf16>
    %c0_49 = arith.constant 0 : index
    %c0_50 = arith.constant 0 : index
    %120 = vector.load %arg8[%c0_49, %c0_50] : memref<64x64xf32, #tpu.memory_space<vmem>>, vector<64x64xf32>
    %121 = arith.truncf %120 : vector<64x64xf32> to vector<64x64xbf16>
    %cst_51 = arith.constant dense<0.000000e+00> : vector<16x64xf32>
    %122 = tpu.matmul %119, %121, %cst_51 {dimension_numbers = #tpu.dot_dimension_numbers<[1], [0], [0], [1], [0, 0, 1, 1], [], []>} : vector<16x64xbf16>, vector<64x64xbf16>, vector<16x64xf32> -> vector<16x64xf32>
    %c0_52 = arith.constant 0 : index
    %c0_53 = arith.constant 0 : index
    %123 = vector.load %arg9[%c0_52, %c0_53] : memref<1x64xf32, #tpu.memory_space<vmem>>, vector<1x64xf32>
    %124 = vector.broadcast %123 : vector<1x64xf32> to vector<16x64xf32>
    %125 = arith.addf %122, %124 : vector<16x64xf32>
    %126 = arith.addf %125, %1 : vector<16x64xf32>
    %cst_54 = arith.constant dense<0.000000e+00> : vector<16xf32>
    %127 = vector.multi_reduction <add>, %126, %cst_54 [1] : vector<16x64xf32> to vector<16xf32>
    %128 = vector.shape_cast %127 : vector<16xf32> to vector<16x1xf32>
    %cst_55 = arith.constant 6.400000e+01 : f32
    %129 = vector.broadcast %cst_55 : f32 to vector<16x1xf32>
    %130 = arith.divf %128, %129 : vector<16x1xf32>
    %131 = vector.broadcast %130 : vector<16x1xf32> to vector<16x64xf32>
    %132 = arith.subf %126, %131 : vector<16x64xf32>
    %133 = arith.mulf %132, %132 : vector<16x64xf32>
    %cst_56 = arith.constant dense<0.000000e+00> : vector<16xf32>
    %134 = vector.multi_reduction <add>, %133, %cst_56 [1] : vector<16x64xf32> to vector<16xf32>
    %135 = vector.shape_cast %134 : vector<16xf32> to vector<16x1xf32>
    %cst_57 = arith.constant 6.400000e+01 : f32
    %136 = vector.broadcast %cst_57 : f32 to vector<16x1xf32>
    %137 = arith.divf %135, %136 : vector<16x1xf32>
    %138 = vector.broadcast %130 : vector<16x1xf32> to vector<16x64xf32>
    %139 = arith.subf %126, %138 : vector<16x64xf32>
    %cst_58 = arith.constant 9.99999974E-6 : f32
    %140 = vector.broadcast %cst_58 : f32 to vector<16x1xf32>
    %141 = arith.addf %137, %140 : vector<16x1xf32>
    %142 = math.rsqrt %141 : vector<16x1xf32>
    %143 = vector.broadcast %142 : vector<16x1xf32> to vector<16x64xf32>
    %144 = arith.mulf %139, %143 : vector<16x64xf32>
    %c0_59 = arith.constant 0 : index
    %c0_60 = arith.constant 0 : index
    %145 = vector.load %arg10[%c0_59, %c0_60] : memref<1x64xf32, #tpu.memory_space<vmem>>, vector<1x64xf32>
    %146 = vector.broadcast %145 : vector<1x64xf32> to vector<16x64xf32>
    %147 = arith.mulf %144, %146 : vector<16x64xf32>
    %c0_61 = arith.constant 0 : index
    %c0_62 = arith.constant 0 : index
    %148 = vector.load %arg11[%c0_61, %c0_62] : memref<1x64xf32, #tpu.memory_space<vmem>>, vector<1x64xf32>
    %149 = vector.broadcast %148 : vector<1x64xf32> to vector<16x64xf32>
    %150 = arith.addf %147, %149 : vector<16x64xf32>
    %c0_63 = arith.constant 0 : index
    %c0_64 = arith.constant 0 : index
    %c0_65 = arith.constant 0 : index
    %151 = vector.load %arg12[%c0_63, %c0_64, %c0_65] : memref<1x16x64xf32, #tpu.memory_space<vmem>>, vector<1x16x64xf32>
    %152 = vector.shape_cast %151 : vector<1x16x64xf32> to vector<16x64xf32>
    %153 = vector.shape_cast %150 : vector<16x64xf32> to vector<1x16x64xf32>
    tpu.vector_store %arg12[%c0_63, %c0_64, %c0_65], %153 {strides = array<i32>} : memref<1x16x64xf32, #tpu.memory_space<vmem>>, vector<1x16x64xf32>,
    return
  }
  func.func @transform_0(%arg0: i32) -> (i32, i32, i32) {
    %c0_i32 = arith.constant 0 : i32
    %c0_i32_0 = arith.constant 0 : i32
    %c0_i32_1 = arith.constant 0 : i32
    return %arg0, %c0_i32, %c0_i32_0 : i32, i32, i32
  }
  func.func @transform_1(%arg0: i32) -> (i32, i32) {
    %c0_i32 = arith.constant 0 : i32
    %c0_i32_0 = arith.constant 0 : i32
    %c0_i32_1 = arith.constant 0 : i32
    return %c0_i32, %c0_i32_0 : i32, i32
  }
  func.func @transform_2(%arg0: i32) -> (i32, i32) {
    %c0_i32 = arith.constant 0 : i32
    %c0_i32_0 = arith.constant 0 : i32
    %c0_i32_1 = arith.constant 0 : i32
    return %c0_i32, %c0_i32_0 : i32, i32
  }
  func.func @transform_3(%arg0: i32) -> (i32, i32) {
    %c0_i32 = arith.constant 0 : i32
    %c0_i32_0 = arith.constant 0 : i32
    %c0_i32_1 = arith.constant 0 : i32
    return %c0_i32, %c0_i32_0 : i32, i32
  }
  func.func @transform_4(%arg0: i32) -> (i32, i32) {
    %c0_i32 = arith.constant 0 : i32
    %c0_i32_0 = arith.constant 0 : i32
    %c0_i32_1 = arith.constant 0 : i32
    return %c0_i32, %c0_i32_0 : i32, i32
  }
  func.func @transform_5(%arg0: i32) -> (i32, i32) {
    %c0_i32 = arith.constant 0 : i32
    %c0_i32_0 = arith.constant 0 : i32
    %c0_i32_1 = arith.constant 0 : i32
    return %c0_i32, %c0_i32_0 : i32, i32
  }
  func.func @transform_6(%arg0: i32) -> (i32, i32) {
    %c0_i32 = arith.constant 0 : i32
    %c0_i32_0 = arith.constant 0 : i32
    %c0_i32_1 = arith.constant 0 : i32
    return %c0_i32, %c0_i32_0 : i32, i32
  }
  func.func @transform_7(%arg0: i32) -> (i32, i32) {
    %c0_i32 = arith.constant 0 : i32
    %c0_i32_0 = arith.constant 0 : i32
    %c0_i32_1 = arith.constant 0 : i32
    return %c0_i32, %c0_i32_0 : i32, i32
  }
  func.func @transform_8(%arg0: i32) -> (i32, i32) {
    %c0_i32 = arith.constant 0 : i32
    %c0_i32_0 = arith.constant 0 : i32
    %c0_i32_1 = arith.constant 0 : i32
    return %c0_i32, %c0_i32_0 : i32, i32
  }
  func.func @transform_9(%arg0: i32) -> (i32, i32) {
    %c0_i32 = arith.constant 0 : i32
    %c0_i32_0 = arith.constant 0 : i32
    %c0_i32_1 = arith.constant 0 : i32
    return %c0_i32, %c0_i32_0 : i32, i32
  }
  func.func @transform_10(%arg0: i32) -> (i32, i32) {
    %c0_i32 = arith.constant 0 : i32
    %c0_i32_0 = arith.constant 0 : i32
    %c0_i32_1 = arith.constant 0 : i32
    return %c0_i32, %c0_i32_0 : i32, i32
  }
  func.func @transform_11(%arg0: i32) -> (i32, i32, i32) {
    %c0_i32 = arith.constant 0 : i32
    %c0_i32_0 = arith.constant 0 : i32
    %c0_i32_1 = arith.constant 0 : i32
    return %arg0, %c0_i32, %c0_i32_0 : i32, i32, i32
  }
  func.func @transform_12(%arg0: i32) -> (i32, i32, i32, i32) {
    %c0_i32 = arith.constant 0 : i32
    %c0_i32_0 = arith.constant 0 : i32
    %c0_i32_1 = arith.constant 0 : i32
    %c0_i32_2 = arith.constant 0 : i32
    return %arg0, %c0_i32, %c0_i32_0, %c0_i32_1 : i32, i32, i32, i32
  }
}

module attributes {stable_mosaic.version = 11 : i64} {
  func.func @_embed_kernel(%arg0: i32, %arg1: memref<1x16x12xf32, #tpu.memory_space<vmem>>, %arg2: memref<1x16x4xf32, #tpu.memory_space<vmem>>, %arg3: memref<16x64xf32, #tpu.memory_space<vmem>>, %arg4: memref<12x64xf32, #tpu.memory_space<vmem>>, %arg5: memref<4x64xf32, #tpu.memory_space<vmem>>, %arg6: memref<1x16x64xf32, #tpu.memory_space<vmem>>) attributes {dimension_semantics = [#tpu.dimension_semantics<parallel>], iteration_bounds = array<i64: 2>, scalar_prefetch = 0 : i64, scratch_operands = 0 : i64, tpu.core_type = #tpu.core_type<tc>, window_params = [{transform_indices = @transform_0, window_bounds = array<i64: 1, 16, 12>}, {transform_indices = @transform_1, window_bounds = array<i64: 1, 16, 4>}, {pipeline_mode = #tpu.pipeline_mode<synchronous>, transform_indices = @transform_2, window_bounds = array<i64: 16, 64>}, {pipeline_mode = #tpu.pipeline_mode<synchronous>, transform_indices = @transform_3, window_bounds = array<i64: 12, 64>}, {pipeline_mode = #tpu.pipeline_mode<synchronous>, transform_indices = @transform_4, window_bounds = array<i64: 4, 64>}, {transform_indices = @transform_5, window_bounds = array<i64: 1, 16, 64>}]} {
    %c0 = arith.constant 0 : index
    %c0_0 = arith.constant 0 : index
    %c0_1 = arith.constant 0 : index
    %0 = vector.load %arg1[%c0, %c0_0, %c0_1] : memref<1x16x12xf32, #tpu.memory_space<vmem>>, vector<1x16x12xf32>
    %1 = vector.shape_cast %0 : vector<1x16x12xf32> to vector<16x12xf32>
    %2 = arith.truncf %1 : vector<16x12xf32> to vector<16x12xbf16>
    %c0_2 = arith.constant 0 : index
    %c0_3 = arith.constant 0 : index
    %c0_4 = arith.constant 0 : index
    %3 = vector.load %arg2[%c0_2, %c0_3, %c0_4] : memref<1x16x4xf32, #tpu.memory_space<vmem>>, vector<1x16x4xf32>
    %4 = vector.shape_cast %3 : vector<1x16x4xf32> to vector<16x4xf32>
    %5 = arith.truncf %4 : vector<16x4xf32> to vector<16x4xbf16>
    %c0_5 = arith.constant 0 : index
    %c0_6 = arith.constant 0 : index
    %6 = vector.load %arg4[%c0_5, %c0_6] : memref<12x64xf32, #tpu.memory_space<vmem>>, vector<12x64xf32>
    %7 = arith.truncf %6 : vector<12x64xf32> to vector<12x64xbf16>
    %cst = arith.constant dense<0.000000e+00> : vector<16x64xf32>
    %8 = tpu.matmul %2, %7, %cst {dimension_numbers = #tpu.dot_dimension_numbers<[1], [0], [0], [1], [0, 0, 1, 1], [], []>} : vector<16x12xbf16>, vector<12x64xbf16>, vector<16x64xf32> -> vector<16x64xf32>
    %c0_7 = arith.constant 0 : index
    %c0_8 = arith.constant 0 : index
    %9 = vector.load %arg5[%c0_7, %c0_8] : memref<4x64xf32, #tpu.memory_space<vmem>>, vector<4x64xf32>
    %10 = arith.truncf %9 : vector<4x64xf32> to vector<4x64xbf16>
    %cst_9 = arith.constant dense<0.000000e+00> : vector<16x64xf32>
    %11 = tpu.matmul %5, %10, %cst_9 {dimension_numbers = #tpu.dot_dimension_numbers<[1], [0], [0], [1], [0, 0, 1, 1], [], []>} : vector<16x4xbf16>, vector<4x64xbf16>, vector<16x64xf32> -> vector<16x64xf32>
    %12 = arith.addf %8, %11 : vector<16x64xf32>
    %c0_10 = arith.constant 0 : index
    %c0_11 = arith.constant 0 : index
    %13 = vector.load %arg3[%c0_10, %c0_11] : memref<16x64xf32, #tpu.memory_space<vmem>>, vector<16x64xf32>
    %14 = arith.addf %12, %13 : vector<16x64xf32>
    %c0_12 = arith.constant 0 : index
    %c0_13 = arith.constant 0 : index
    %c0_14 = arith.constant 0 : index
    %15 = vector.load %arg6[%c0_12, %c0_13, %c0_14] : memref<1x16x64xf32, #tpu.memory_space<vmem>>, vector<1x16x64xf32>
    %16 = vector.shape_cast %15 : vector<1x16x64xf32> to vector<16x64xf32>
    %17 = vector.shape_cast %14 : vector<16x64xf32> to vector<1x16x64xf32>
    tpu.vector_store %arg6[%c0_12, %c0_13, %c0_14], %17 {strides = array<i32>} : memref<1x16x64xf32, #tpu.memory_space<vmem>>, vector<1x16x64xf32>,
    return
  }
  func.func @transform_0(%arg0: i32) -> (i32, i32, i32) {
    %c0_i32 = arith.constant 0 : i32
    %c0_i32_0 = arith.constant 0 : i32
    %c0_i32_1 = arith.constant 0 : i32
    return %arg0, %c0_i32, %c0_i32_0 : i32, i32, i32
  }
  func.func @transform_1(%arg0: i32) -> (i32, i32, i32) {
    %c0_i32 = arith.constant 0 : i32
    %c0_i32_0 = arith.constant 0 : i32
    %c0_i32_1 = arith.constant 0 : i32
    return %arg0, %c0_i32, %c0_i32_0 : i32, i32, i32
  }
  func.func @transform_2(%arg0: i32) -> (i32, i32) {
    %c0_i32 = arith.constant 0 : i32
    %c0_i32_0 = arith.constant 0 : i32
    %c0_i32_1 = arith.constant 0 : i32
    return %c0_i32, %c0_i32_0 : i32, i32
  }
  func.func @transform_3(%arg0: i32) -> (i32, i32) {
    %c0_i32 = arith.constant 0 : i32
    %c0_i32_0 = arith.constant 0 : i32
    %c0_i32_1 = arith.constant 0 : i32
    return %c0_i32, %c0_i32_0 : i32, i32
  }
  func.func @transform_4(%arg0: i32) -> (i32, i32) {
    %c0_i32 = arith.constant 0 : i32
    %c0_i32_0 = arith.constant 0 : i32
    %c0_i32_1 = arith.constant 0 : i32
    return %c0_i32, %c0_i32_0 : i32, i32
  }
  func.func @transform_5(%arg0: i32) -> (i32, i32, i32) {
    %c0_i32 = arith.constant 0 : i32
    %c0_i32_0 = arith.constant 0 : i32
    %c0_i32_1 = arith.constant 0 : i32
    return %arg0, %c0_i32, %c0_i32_0 : i32, i32, i32
  }
}

module attributes {stable_mosaic.version = 11 : i64} {
  func.func @_ffn_res_ln_kernel(%arg0: i32, %arg1: memref<32x64xf32, #tpu.memory_space<vmem>>, %arg2: memref<64x128xf32, #tpu.memory_space<vmem>>, %arg3: memref<1x128xf32, #tpu.memory_space<vmem>>, %arg4: memref<128x64xf32, #tpu.memory_space<vmem>>, %arg5: memref<1x64xf32, #tpu.memory_space<vmem>>, %arg6: memref<1x64xf32, #tpu.memory_space<vmem>>, %arg7: memref<1x64xf32, #tpu.memory_space<vmem>>, %arg8: memref<32x64xf32, #tpu.memory_space<vmem>>) attributes {dimension_semantics = [#tpu.dimension_semantics<parallel>], iteration_bounds = array<i64: 1>, scalar_prefetch = 0 : i64, scratch_operands = 0 : i64, tpu.core_type = #tpu.core_type<tc>, window_params = [{transform_indices = @transform_0, window_bounds = array<i64: 32, 64>}, {pipeline_mode = #tpu.pipeline_mode<synchronous>, transform_indices = @transform_1, window_bounds = array<i64: 64, 128>}, {pipeline_mode = #tpu.pipeline_mode<synchronous>, transform_indices = @transform_2, window_bounds = array<i64: 1, 128>}, {pipeline_mode = #tpu.pipeline_mode<synchronous>, transform_indices = @transform_3, window_bounds = array<i64: 128, 64>}, {pipeline_mode = #tpu.pipeline_mode<synchronous>, transform_indices = @transform_4, window_bounds = array<i64: 1, 64>}, {pipeline_mode = #tpu.pipeline_mode<synchronous>, transform_indices = @transform_5, window_bounds = array<i64: 1, 64>}, {pipeline_mode = #tpu.pipeline_mode<synchronous>, transform_indices = @transform_6, window_bounds = array<i64: 1, 64>}, {transform_indices = @transform_7, window_bounds = array<i64: 32, 64>}]} {
    %c0 = arith.constant 0 : index
    %c0_0 = arith.constant 0 : index
    %0 = vector.load %arg1[%c0, %c0_0] : memref<32x64xf32, #tpu.memory_space<vmem>>, vector<32x64xf32>
    %1 = arith.truncf %0 : vector<32x64xf32> to vector<32x64xbf16>
    %c0_1 = arith.constant 0 : index
    %c0_2 = arith.constant 0 : index
    %2 = vector.load %arg2[%c0_1, %c0_2] : memref<64x128xf32, #tpu.memory_space<vmem>>, vector<64x128xf32>
    %3 = arith.truncf %2 : vector<64x128xf32> to vector<64x128xbf16>
    %cst = arith.constant dense<0.000000e+00> : vector<32x128xf32>
    %4 = tpu.matmul %1, %3, %cst {dimension_numbers = #tpu.dot_dimension_numbers<[1], [0], [0], [1], [0, 0, 1, 1], [], []>} : vector<32x64xbf16>, vector<64x128xbf16>, vector<32x128xf32> -> vector<32x128xf32>
    %c0_3 = arith.constant 0 : index
    %c0_4 = arith.constant 0 : index
    %5 = vector.load %arg3[%c0_3, %c0_4] : memref<1x128xf32, #tpu.memory_space<vmem>>, vector<1x128xf32>
    %6 = vector.broadcast %5 : vector<1x128xf32> to vector<32x128xf32>
    %7 = arith.addf %4, %6 : vector<32x128xf32>
    %cst_5 = arith.constant 0.000000e+00 : f32
    %8 = vector.broadcast %cst_5 : f32 to vector<32x128xf32>
    %9 = arith.maximumf %7, %8 : vector<32x128xf32>
    %10 = arith.truncf %9 : vector<32x128xf32> to vector<32x128xbf16>
    %c0_6 = arith.constant 0 : index
    %c0_7 = arith.constant 0 : index
    %11 = vector.load %arg4[%c0_6, %c0_7] : memref<128x64xf32, #tpu.memory_space<vmem>>, vector<128x64xf32>
    %12 = arith.truncf %11 : vector<128x64xf32> to vector<128x64xbf16>
    %cst_8 = arith.constant dense<0.000000e+00> : vector<32x64xf32>
    %13 = tpu.matmul %10, %12, %cst_8 {dimension_numbers = #tpu.dot_dimension_numbers<[1], [0], [0], [1], [0, 0, 1, 1], [], []>} : vector<32x128xbf16>, vector<128x64xbf16>, vector<32x64xf32> -> vector<32x64xf32>
    %c0_9 = arith.constant 0 : index
    %c0_10 = arith.constant 0 : index
    %14 = vector.load %arg5[%c0_9, %c0_10] : memref<1x64xf32, #tpu.memory_space<vmem>>, vector<1x64xf32>
    %15 = vector.broadcast %14 : vector<1x64xf32> to vector<32x64xf32>
    %16 = arith.addf %13, %15 : vector<32x64xf32>
    %17 = arith.addf %16, %0 : vector<32x64xf32>
    %cst_11 = arith.constant dense<0.000000e+00> : vector<32xf32>
    %18 = vector.multi_reduction <add>, %17, %cst_11 [1] : vector<32x64xf32> to vector<32xf32>
    %19 = vector.shape_cast %18 : vector<32xf32> to vector<32x1xf32>
    %cst_12 = arith.constant 6.400000e+01 : f32
    %20 = vector.broadcast %cst_12 : f32 to vector<32x1xf32>
    %21 = arith.divf %19, %20 : vector<32x1xf32>
    %22 = vector.broadcast %21 : vector<32x1xf32> to vector<32x64xf32>
    %23 = arith.subf %17, %22 : vector<32x64xf32>
    %24 = arith.mulf %23, %23 : vector<32x64xf32>
    %cst_13 = arith.constant dense<0.000000e+00> : vector<32xf32>
    %25 = vector.multi_reduction <add>, %24, %cst_13 [1] : vector<32x64xf32> to vector<32xf32>
    %26 = vector.shape_cast %25 : vector<32xf32> to vector<32x1xf32>
    %cst_14 = arith.constant 6.400000e+01 : f32
    %27 = vector.broadcast %cst_14 : f32 to vector<32x1xf32>
    %28 = arith.divf %26, %27 : vector<32x1xf32>
    %29 = vector.broadcast %21 : vector<32x1xf32> to vector<32x64xf32>
    %30 = arith.subf %17, %29 : vector<32x64xf32>
    %cst_15 = arith.constant 9.99999974E-6 : f32
    %31 = vector.broadcast %cst_15 : f32 to vector<32x1xf32>
    %32 = arith.addf %28, %31 : vector<32x1xf32>
    %33 = math.rsqrt %32 : vector<32x1xf32>
    %34 = vector.broadcast %33 : vector<32x1xf32> to vector<32x64xf32>
    %35 = arith.mulf %30, %34 : vector<32x64xf32>
    %c0_16 = arith.constant 0 : index
    %c0_17 = arith.constant 0 : index
    %36 = vector.load %arg6[%c0_16, %c0_17] : memref<1x64xf32, #tpu.memory_space<vmem>>, vector<1x64xf32>
    %37 = vector.broadcast %36 : vector<1x64xf32> to vector<32x64xf32>
    %38 = arith.mulf %35, %37 : vector<32x64xf32>
    %c0_18 = arith.constant 0 : index
    %c0_19 = arith.constant 0 : index
    %39 = vector.load %arg7[%c0_18, %c0_19] : memref<1x64xf32, #tpu.memory_space<vmem>>, vector<1x64xf32>
    %40 = vector.broadcast %39 : vector<1x64xf32> to vector<32x64xf32>
    %41 = arith.addf %38, %40 : vector<32x64xf32>
    %c0_20 = arith.constant 0 : index
    %c0_21 = arith.constant 0 : index
    %42 = vector.load %arg8[%c0_20, %c0_21] : memref<32x64xf32, #tpu.memory_space<vmem>>, vector<32x64xf32>
    tpu.vector_store %arg8[%c0_20, %c0_21], %41 {strides = array<i32>} : memref<32x64xf32, #tpu.memory_space<vmem>>, vector<32x64xf32>,
    return
  }
  func.func @transform_0(%arg0: i32) -> (i32, i32) {
    %c0_i32 = arith.constant 0 : i32
    %c0_i32_0 = arith.constant 0 : i32
    return %arg0, %c0_i32 : i32, i32
  }
  func.func @transform_1(%arg0: i32) -> (i32, i32) {
    %c0_i32 = arith.constant 0 : i32
    %c0_i32_0 = arith.constant 0 : i32
    %c0_i32_1 = arith.constant 0 : i32
    return %c0_i32, %c0_i32_0 : i32, i32
  }
  func.func @transform_2(%arg0: i32) -> (i32, i32) {
    %c0_i32 = arith.constant 0 : i32
    %c0_i32_0 = arith.constant 0 : i32
    %c0_i32_1 = arith.constant 0 : i32
    return %c0_i32, %c0_i32_0 : i32, i32
  }
  func.func @transform_3(%arg0: i32) -> (i32, i32) {
    %c0_i32 = arith.constant 0 : i32
    %c0_i32_0 = arith.constant 0 : i32
    %c0_i32_1 = arith.constant 0 : i32
    return %c0_i32, %c0_i32_0 : i32, i32
  }
  func.func @transform_4(%arg0: i32) -> (i32, i32) {
    %c0_i32 = arith.constant 0 : i32
    %c0_i32_0 = arith.constant 0 : i32
    %c0_i32_1 = arith.constant 0 : i32
    return %c0_i32, %c0_i32_0 : i32, i32
  }
  func.func @transform_5(%arg0: i32) -> (i32, i32) {
    %c0_i32 = arith.constant 0 : i32
    %c0_i32_0 = arith.constant 0 : i32
    %c0_i32_1 = arith.constant 0 : i32
    return %c0_i32, %c0_i32_0 : i32, i32
  }
  func.func @transform_6(%arg0: i32) -> (i32, i32) {
    %c0_i32 = arith.constant 0 : i32
    %c0_i32_0 = arith.constant 0 : i32
    %c0_i32_1 = arith.constant 0 : i32
    return %c0_i32, %c0_i32_0 : i32, i32
  }
  func.func @transform_7(%arg0: i32) -> (i32, i32) {
    %c0_i32 = arith.constant 0 : i32
    %c0_i32_0 = arith.constant 0 : i32
    return %arg0, %c0_i32 : i32, i32
  }
}

module attributes {stable_mosaic.version = 11 : i64} {
  func.func @_ln_kernel(%arg0: i32, %arg1: memref<32x64xf32, #tpu.memory_space<vmem>>, %arg2: memref<1x64xf32, #tpu.memory_space<vmem>>, %arg3: memref<1x64xf32, #tpu.memory_space<vmem>>, %arg4: memref<32x64xf32, #tpu.memory_space<vmem>>) attributes {dimension_semantics = [#tpu.dimension_semantics<parallel>], iteration_bounds = array<i64: 1>, scalar_prefetch = 0 : i64, scratch_operands = 0 : i64, tpu.core_type = #tpu.core_type<tc>, window_params = [{transform_indices = @transform_0, window_bounds = array<i64: 32, 64>}, {pipeline_mode = #tpu.pipeline_mode<synchronous>, transform_indices = @transform_1, window_bounds = array<i64: 1, 64>}, {pipeline_mode = #tpu.pipeline_mode<synchronous>, transform_indices = @transform_2, window_bounds = array<i64: 1, 64>}, {transform_indices = @transform_3, window_bounds = array<i64: 32, 64>}]} {
    %c0 = arith.constant 0 : index
    %c0_0 = arith.constant 0 : index
    %0 = vector.load %arg1[%c0, %c0_0] : memref<32x64xf32, #tpu.memory_space<vmem>>, vector<32x64xf32>
    %cst = arith.constant dense<0.000000e+00> : vector<32xf32>
    %1 = vector.multi_reduction <add>, %0, %cst [1] : vector<32x64xf32> to vector<32xf32>
    %2 = vector.shape_cast %1 : vector<32xf32> to vector<32x1xf32>
    %cst_1 = arith.constant 6.400000e+01 : f32
    %3 = vector.broadcast %cst_1 : f32 to vector<32x1xf32>
    %4 = arith.divf %2, %3 : vector<32x1xf32>
    %5 = vector.broadcast %4 : vector<32x1xf32> to vector<32x64xf32>
    %6 = arith.subf %0, %5 : vector<32x64xf32>
    %7 = arith.mulf %6, %6 : vector<32x64xf32>
    %cst_2 = arith.constant dense<0.000000e+00> : vector<32xf32>
    %8 = vector.multi_reduction <add>, %7, %cst_2 [1] : vector<32x64xf32> to vector<32xf32>
    %9 = vector.shape_cast %8 : vector<32xf32> to vector<32x1xf32>
    %cst_3 = arith.constant 6.400000e+01 : f32
    %10 = vector.broadcast %cst_3 : f32 to vector<32x1xf32>
    %11 = arith.divf %9, %10 : vector<32x1xf32>
    %12 = vector.broadcast %4 : vector<32x1xf32> to vector<32x64xf32>
    %13 = arith.subf %0, %12 : vector<32x64xf32>
    %cst_4 = arith.constant 9.99999974E-6 : f32
    %14 = vector.broadcast %cst_4 : f32 to vector<32x1xf32>
    %15 = arith.addf %11, %14 : vector<32x1xf32>
    %16 = math.rsqrt %15 : vector<32x1xf32>
    %17 = vector.broadcast %16 : vector<32x1xf32> to vector<32x64xf32>
    %18 = arith.mulf %13, %17 : vector<32x64xf32>
    %c0_5 = arith.constant 0 : index
    %c0_6 = arith.constant 0 : index
    %19 = vector.load %arg2[%c0_5, %c0_6] : memref<1x64xf32, #tpu.memory_space<vmem>>, vector<1x64xf32>
    %20 = vector.broadcast %19 : vector<1x64xf32> to vector<32x64xf32>
    %21 = arith.mulf %18, %20 : vector<32x64xf32>
    %c0_7 = arith.constant 0 : index
    %c0_8 = arith.constant 0 : index
    %22 = vector.load %arg3[%c0_7, %c0_8] : memref<1x64xf32, #tpu.memory_space<vmem>>, vector<1x64xf32>
    %23 = vector.broadcast %22 : vector<1x64xf32> to vector<32x64xf32>
    %24 = arith.addf %21, %23 : vector<32x64xf32>
    %c0_9 = arith.constant 0 : index
    %c0_10 = arith.constant 0 : index
    %25 = vector.load %arg4[%c0_9, %c0_10] : memref<32x64xf32, #tpu.memory_space<vmem>>, vector<32x64xf32>
    tpu.vector_store %arg4[%c0_9, %c0_10], %24 {strides = array<i32>} : memref<32x64xf32, #tpu.memory_space<vmem>>, vector<32x64xf32>,
    return
  }
  func.func @transform_0(%arg0: i32) -> (i32, i32) {
    %c0_i32 = arith.constant 0 : i32
    %c0_i32_0 = arith.constant 0 : i32
    return %arg0, %c0_i32 : i32, i32
  }
  func.func @transform_1(%arg0: i32) -> (i32, i32) {
    %c0_i32 = arith.constant 0 : i32
    %c0_i32_0 = arith.constant 0 : i32
    %c0_i32_1 = arith.constant 0 : i32
    return %c0_i32, %c0_i32_0 : i32, i32
  }
  func.func @transform_2(%arg0: i32) -> (i32, i32) {
    %c0_i32 = arith.constant 0 : i32
    %c0_i32_0 = arith.constant 0 : i32
    %c0_i32_1 = arith.constant 0 : i32
    return %c0_i32, %c0_i32_0 : i32, i32
  }
  func.func @transform_3(%arg0: i32) -> (i32, i32) {
    %c0_i32 = arith.constant 0 : i32
    %c0_i32_0 = arith.constant 0 : i32
    return %arg0, %c0_i32 : i32, i32
  }
}

module attributes {stable_mosaic.version = 11 : i64} {
  func.func @_embed_kernel(%arg0: i32, %arg1: memref<1x12x12xf32, #tpu.memory_space<vmem>>, %arg2: memref<1x12x4xf32, #tpu.memory_space<vmem>>, %arg3: memref<12x64xf32, #tpu.memory_space<vmem>>, %arg4: memref<12x64xf32, #tpu.memory_space<vmem>>, %arg5: memref<4x64xf32, #tpu.memory_space<vmem>>, %arg6: memref<1x12x64xf32, #tpu.memory_space<vmem>>) attributes {dimension_semantics = [#tpu.dimension_semantics<parallel>], iteration_bounds = array<i64: 2>, scalar_prefetch = 0 : i64, scratch_operands = 0 : i64, tpu.core_type = #tpu.core_type<tc>, window_params = [{transform_indices = @transform_0, window_bounds = array<i64: 1, 12, 12>}, {transform_indices = @transform_1, window_bounds = array<i64: 1, 12, 4>}, {pipeline_mode = #tpu.pipeline_mode<synchronous>, transform_indices = @transform_2, window_bounds = array<i64: 12, 64>}, {pipeline_mode = #tpu.pipeline_mode<synchronous>, transform_indices = @transform_3, window_bounds = array<i64: 12, 64>}, {pipeline_mode = #tpu.pipeline_mode<synchronous>, transform_indices = @transform_4, window_bounds = array<i64: 4, 64>}, {transform_indices = @transform_5, window_bounds = array<i64: 1, 12, 64>}]} {
    %c0 = arith.constant 0 : index
    %c0_0 = arith.constant 0 : index
    %c0_1 = arith.constant 0 : index
    %0 = vector.load %arg1[%c0, %c0_0, %c0_1] : memref<1x12x12xf32, #tpu.memory_space<vmem>>, vector<1x12x12xf32>
    %1 = vector.shape_cast %0 : vector<1x12x12xf32> to vector<12x12xf32>
    %2 = arith.truncf %1 : vector<12x12xf32> to vector<12x12xbf16>
    %c0_2 = arith.constant 0 : index
    %c0_3 = arith.constant 0 : index
    %c0_4 = arith.constant 0 : index
    %3 = vector.load %arg2[%c0_2, %c0_3, %c0_4] : memref<1x12x4xf32, #tpu.memory_space<vmem>>, vector<1x12x4xf32>
    %4 = vector.shape_cast %3 : vector<1x12x4xf32> to vector<12x4xf32>
    %5 = arith.truncf %4 : vector<12x4xf32> to vector<12x4xbf16>
    %c0_5 = arith.constant 0 : index
    %c0_6 = arith.constant 0 : index
    %6 = vector.load %arg4[%c0_5, %c0_6] : memref<12x64xf32, #tpu.memory_space<vmem>>, vector<12x64xf32>
    %7 = arith.truncf %6 : vector<12x64xf32> to vector<12x64xbf16>
    %cst = arith.constant dense<0.000000e+00> : vector<12x64xf32>
    %8 = tpu.matmul %2, %7, %cst {dimension_numbers = #tpu.dot_dimension_numbers<[1], [0], [0], [1], [0, 0, 1, 1], [], []>} : vector<12x12xbf16>, vector<12x64xbf16>, vector<12x64xf32> -> vector<12x64xf32>
    %c0_7 = arith.constant 0 : index
    %c0_8 = arith.constant 0 : index
    %9 = vector.load %arg5[%c0_7, %c0_8] : memref<4x64xf32, #tpu.memory_space<vmem>>, vector<4x64xf32>
    %10 = arith.truncf %9 : vector<4x64xf32> to vector<4x64xbf16>
    %cst_9 = arith.constant dense<0.000000e+00> : vector<12x64xf32>
    %11 = tpu.matmul %5, %10, %cst_9 {dimension_numbers = #tpu.dot_dimension_numbers<[1], [0], [0], [1], [0, 0, 1, 1], [], []>} : vector<12x4xbf16>, vector<4x64xbf16>, vector<12x64xf32> -> vector<12x64xf32>
    %12 = arith.addf %8, %11 : vector<12x64xf32>
    %c0_10 = arith.constant 0 : index
    %c0_11 = arith.constant 0 : index
    %13 = vector.load %arg3[%c0_10, %c0_11] : memref<12x64xf32, #tpu.memory_space<vmem>>, vector<12x64xf32>
    %14 = arith.addf %12, %13 : vector<12x64xf32>
    %c0_12 = arith.constant 0 : index
    %c0_13 = arith.constant 0 : index
    %c0_14 = arith.constant 0 : index
    %15 = vector.load %arg6[%c0_12, %c0_13, %c0_14] : memref<1x12x64xf32, #tpu.memory_space<vmem>>, vector<1x12x64xf32>
    %16 = vector.shape_cast %15 : vector<1x12x64xf32> to vector<12x64xf32>
    %17 = vector.shape_cast %14 : vector<12x64xf32> to vector<1x12x64xf32>
    tpu.vector_store %arg6[%c0_12, %c0_13, %c0_14], %17 {strides = array<i32>} : memref<1x12x64xf32, #tpu.memory_space<vmem>>, vector<1x12x64xf32>,
    return
  }
  func.func @transform_0(%arg0: i32) -> (i32, i32, i32) {
    %c0_i32 = arith.constant 0 : i32
    %c0_i32_0 = arith.constant 0 : i32
    %c0_i32_1 = arith.constant 0 : i32
    return %arg0, %c0_i32, %c0_i32_0 : i32, i32, i32
  }
  func.func @transform_1(%arg0: i32) -> (i32, i32, i32) {
    %c0_i32 = arith.constant 0 : i32
    %c0_i32_0 = arith.constant 0 : i32
    %c0_i32_1 = arith.constant 0 : i32
    return %arg0, %c0_i32, %c0_i32_0 : i32, i32, i32
  }
  func.func @transform_2(%arg0: i32) -> (i32, i32) {
    %c0_i32 = arith.constant 0 : i32
    %c0_i32_0 = arith.constant 0 : i32
    %c0_i32_1 = arith.constant 0 : i32
    return %c0_i32, %c0_i32_0 : i32, i32
  }
  func.func @transform_3(%arg0: i32) -> (i32, i32) {
    %c0_i32 = arith.constant 0 : i32
    %c0_i32_0 = arith.constant 0 : i32
    %c0_i32_1 = arith.constant 0 : i32
    return %c0_i32, %c0_i32_0 : i32, i32
  }
  func.func @transform_4(%arg0: i32) -> (i32, i32) {
    %c0_i32 = arith.constant 0 : i32
    %c0_i32_0 = arith.constant 0 : i32
    %c0_i32_1 = arith.constant 0 : i32
    return %c0_i32, %c0_i32_0 : i32, i32
  }
  func.func @transform_5(%arg0: i32) -> (i32, i32, i32) {
    %c0_i32 = arith.constant 0 : i32
    %c0_i32_0 = arith.constant 0 : i32
    %c0_i32_1 = arith.constant 0 : i32
    return %arg0, %c0_i32, %c0_i32_0 : i32, i32, i32
  }
}

module attributes {stable_mosaic.version = 11 : i64} {
  func.func @_cross_attn_sublayer_kernel(%arg0: i32, %arg1: memref<1x12x64xf32, #tpu.memory_space<vmem>>, %arg2: memref<1x16x64xf32, #tpu.memory_space<vmem>>, %arg3: memref<64x64xf32, #tpu.memory_space<vmem>>, %arg4: memref<1x64xf32, #tpu.memory_space<vmem>>, %arg5: memref<64x64xf32, #tpu.memory_space<vmem>>, %arg6: memref<1x64xf32, #tpu.memory_space<vmem>>, %arg7: memref<64x64xf32, #tpu.memory_space<vmem>>, %arg8: memref<1x64xf32, #tpu.memory_space<vmem>>, %arg9: memref<64x64xf32, #tpu.memory_space<vmem>>, %arg10: memref<1x64xf32, #tpu.memory_space<vmem>>, %arg11: memref<1x64xf32, #tpu.memory_space<vmem>>, %arg12: memref<1x64xf32, #tpu.memory_space<vmem>>, %arg13: memref<1x12x64xf32, #tpu.memory_space<vmem>>, %arg14: memref<1x4x12x16xf32, #tpu.memory_space<vmem>>) attributes {dimension_semantics = [#tpu.dimension_semantics<parallel>], iteration_bounds = array<i64: 2>, scalar_prefetch = 0 : i64, scratch_operands = 0 : i64, tpu.core_type = #tpu.core_type<tc>, window_params = [{transform_indices = @transform_0, window_bounds = array<i64: 1, 12, 64>}, {transform_indices = @transform_1, window_bounds = array<i64: 1, 16, 64>}, {pipeline_mode = #tpu.pipeline_mode<synchronous>, transform_indices = @transform_2, window_bounds = array<i64: 64, 64>}, {pipeline_mode = #tpu.pipeline_mode<synchronous>, transform_indices = @transform_3, window_bounds = array<i64: 1, 64>}, {pipeline_mode = #tpu.pipeline_mode<synchronous>, transform_indices = @transform_4, window_bounds = array<i64: 64, 64>}, {pipeline_mode = #tpu.pipeline_mode<synchronous>, transform_indices = @transform_5, window_bounds = array<i64: 1, 64>}, {pipeline_mode = #tpu.pipeline_mode<synchronous>, transform_indices = @transform_6, window_bounds = array<i64: 64, 64>}, {pipeline_mode = #tpu.pipeline_mode<synchronous>, transform_indices = @transform_7, window_bounds = array<i64: 1, 64>}, {pipeline_mode = #tpu.pipeline_mode<synchronous>, transform_indices = @transform_8, window_bounds = array<i64: 64, 64>}, {pipeline_mode = #tpu.pipeline_mode<synchronous>, transform_indices = @transform_9, window_bounds = array<i64: 1, 64>}, {pipeline_mode = #tpu.pipeline_mode<synchronous>, transform_indices = @transform_10, window_bounds = array<i64: 1, 64>}, {pipeline_mode = #tpu.pipeline_mode<synchronous>, transform_indices = @transform_11, window_bounds = array<i64: 1, 64>}, {transform_indices = @transform_12, window_bounds = array<i64: 1, 12, 64>}, {transform_indices = @transform_13, window_bounds = array<i64: 1, 4, 12, 16>}]} {
    %c0 = arith.constant 0 : index
    %c0_0 = arith.constant 0 : index
    %c0_1 = arith.constant 0 : index
    %0 = vector.load %arg1[%c0, %c0_0, %c0_1] : memref<1x12x64xf32, #tpu.memory_space<vmem>>, vector<1x12x64xf32>
    %1 = vector.shape_cast %0 : vector<1x12x64xf32> to vector<12x64xf32>
    %c0_2 = arith.constant 0 : index
    %c0_3 = arith.constant 0 : index
    %c0_4 = arith.constant 0 : index
    %2 = vector.load %arg2[%c0_2, %c0_3, %c0_4] : memref<1x16x64xf32, #tpu.memory_space<vmem>>, vector<1x16x64xf32>
    %3 = vector.shape_cast %2 : vector<1x16x64xf32> to vector<16x64xf32>
    %4 = arith.truncf %1 : vector<12x64xf32> to vector<12x64xbf16>
    %5 = arith.truncf %3 : vector<16x64xf32> to vector<16x64xbf16>
    %c0_5 = arith.constant 0 : index
    %c0_6 = arith.constant 0 : index
    %6 = vector.load %arg3[%c0_5, %c0_6] : memref<64x64xf32, #tpu.memory_space<vmem>>, vector<64x64xf32>
    %7 = arith.truncf %6 : vector<64x64xf32> to vector<64x64xbf16>
    %cst = arith.constant dense<0.000000e+00> : vector<12x64xf32>
    %8 = tpu.matmul %4, %7, %cst {dimension_numbers = #tpu.dot_dimension_numbers<[1], [0], [0], [1], [0, 0, 1, 1], [], []>} : vector<12x64xbf16>, vector<64x64xbf16>, vector<12x64xf32> -> vector<12x64xf32>
    %c0_7 = arith.constant 0 : index
    %c0_8 = arith.constant 0 : index
    %9 = vector.load %arg4[%c0_7, %c0_8] : memref<1x64xf32, #tpu.memory_space<vmem>>, vector<1x64xf32>
    %10 = vector.broadcast %9 : vector<1x64xf32> to vector<12x64xf32>
    %11 = arith.addf %8, %10 : vector<12x64xf32>
    %c0_9 = arith.constant 0 : index
    %c0_10 = arith.constant 0 : index
    %12 = vector.load %arg5[%c0_9, %c0_10] : memref<64x64xf32, #tpu.memory_space<vmem>>, vector<64x64xf32>
    %13 = arith.truncf %12 : vector<64x64xf32> to vector<64x64xbf16>
    %cst_11 = arith.constant dense<0.000000e+00> : vector<16x64xf32>
    %14 = tpu.matmul %5, %13, %cst_11 {dimension_numbers = #tpu.dot_dimension_numbers<[1], [0], [0], [1], [0, 0, 1, 1], [], []>} : vector<16x64xbf16>, vector<64x64xbf16>, vector<16x64xf32> -> vector<16x64xf32>
    %c0_12 = arith.constant 0 : index
    %c0_13 = arith.constant 0 : index
    %15 = vector.load %arg6[%c0_12, %c0_13] : memref<1x64xf32, #tpu.memory_space<vmem>>, vector<1x64xf32>
    %16 = vector.broadcast %15 : vector<1x64xf32> to vector<16x64xf32>
    %17 = arith.addf %14, %16 : vector<16x64xf32>
    %c0_14 = arith.constant 0 : index
    %c0_15 = arith.constant 0 : index
    %18 = vector.load %arg7[%c0_14, %c0_15] : memref<64x64xf32, #tpu.memory_space<vmem>>, vector<64x64xf32>
    %19 = arith.truncf %18 : vector<64x64xf32> to vector<64x64xbf16>
    %cst_16 = arith.constant dense<0.000000e+00> : vector<16x64xf32>
    %20 = tpu.matmul %5, %19, %cst_16 {dimension_numbers = #tpu.dot_dimension_numbers<[1], [0], [0], [1], [0, 0, 1, 1], [], []>} : vector<16x64xbf16>, vector<64x64xbf16>, vector<16x64xf32> -> vector<16x64xf32>
    %c0_17 = arith.constant 0 : index
    %c0_18 = arith.constant 0 : index
    %21 = vector.load %arg8[%c0_17, %c0_18] : memref<1x64xf32, #tpu.memory_space<vmem>>, vector<1x64xf32>
    %22 = vector.broadcast %21 : vector<1x64xf32> to vector<16x64xf32>
    %23 = arith.addf %20, %22 : vector<16x64xf32>
    %24 = vector.extract_strided_slice %11 {offsets = [0, 0], sizes = [12, 16], strides = [1, 1]} : vector<12x64xf32> to vector<12x16xf32>
    %25 = arith.truncf %24 : vector<12x16xf32> to vector<12x16xbf16>
    %26 = vector.extract_strided_slice %17 {offsets = [0, 0], sizes = [16, 16], strides = [1, 1]} : vector<16x64xf32> to vector<16x16xf32>
    %27 = arith.truncf %26 : vector<16x16xf32> to vector<16x16xbf16>
    %28 = vector.extract_strided_slice %23 {offsets = [0, 0], sizes = [16, 16], strides = [1, 1]} : vector<16x64xf32> to vector<16x16xf32>
    %29 = arith.truncf %28 : vector<16x16xf32> to vector<16x16xbf16>
    %cst_19 = arith.constant dense<0.000000e+00> : vector<12x16xf32>
    %30 = tpu.matmul %25, %27, %cst_19 {dimension_numbers = #tpu.dot_dimension_numbers<[1], [1], [0], [0], [0, 0, 1, 0], [], []>} : vector<12x16xbf16>, vector<16x16xbf16>, vector<12x16xf32> -> vector<12x16xf32>
    %cst_20 = arith.constant 2.500000e-01 : f32
    %31 = vector.broadcast %cst_20 : f32 to vector<12x16xf32>
    %32 = arith.mulf %30, %31 : vector<12x16xf32>
    %cst_21 = arith.constant dense<0xFF800000> : vector<12xf32>
    %33 = vector.multi_reduction <maximumf>, %32, %cst_21 [1] : vector<12x16xf32> to vector<12xf32>
    %34 = vector.shape_cast %33 : vector<12xf32> to vector<12x1xf32>
    %35 = vector.broadcast %34 : vector<12x1xf32> to vector<12x16xf32>
    %36 = arith.subf %32, %35 : vector<12x16xf32>
    %37 = math.exp %36 : vector<12x16xf32>
    %cst_22 = arith.constant dense<0.000000e+00> : vector<12xf32>
    %38 = vector.multi_reduction <add>, %37, %cst_22 [1] : vector<12x16xf32> to vector<12xf32>
    %39 = vector.shape_cast %38 : vector<12xf32> to vector<12x1xf32>
    %40 = tpu.reciprocal %39 {approx = true} : vector<12x1xf32> -> vector<12x1xf32>
    %41 = vector.broadcast %40 : vector<12x1xf32> to vector<12x16xf32>
    %42 = arith.mulf %37, %41 : vector<12x16xf32>
    %c0_23 = arith.constant 0 : index
    %c0_24 = arith.constant 0 : index
    %c0_25 = arith.constant 0 : index
    %c0_26 = arith.constant 0 : index
    %43 = vector.load %arg14[%c0_23, %c0_24, %c0_25, %c0_26] : memref<1x4x12x16xf32, #tpu.memory_space<vmem>>, vector<1x1x12x16xf32>
    %44 = vector.shape_cast %43 : vector<1x1x12x16xf32> to vector<12x16xf32>
    %45 = vector.shape_cast %42 : vector<12x16xf32> to vector<1x1x12x16xf32>
    tpu.vector_store %arg14[%c0_23, %c0_24, %c0_25, %c0_26], %45 {strides = array<i32>} : memref<1x4x12x16xf32, #tpu.memory_space<vmem>>, vector<1x1x12x16xf32>,
    %46 = arith.truncf %42 : vector<12x16xf32> to vector<12x16xbf16>
    %cst_27 = arith.constant dense<0.000000e+00> : vector<12x16xf32>
    %47 = tpu.matmul %46, %29, %cst_27 {dimension_numbers = #tpu.dot_dimension_numbers<[1], [0], [0], [1], [0, 0, 1, 1], [], []>} : vector<12x16xbf16>, vector<16x16xbf16>, vector<12x16xf32> -> vector<12x16xf32>
    %48 = vector.extract_strided_slice %11 {offsets = [0, 16], sizes = [12, 16], strides = [1, 1]} : vector<12x64xf32> to vector<12x16xf32>
    %49 = arith.truncf %48 : vector<12x16xf32> to vector<12x16xbf16>
    %50 = vector.extract_strided_slice %17 {offsets = [0, 16], sizes = [16, 16], strides = [1, 1]} : vector<16x64xf32> to vector<16x16xf32>
    %51 = arith.truncf %50 : vector<16x16xf32> to vector<16x16xbf16>
    %52 = vector.extract_strided_slice %23 {offsets = [0, 16], sizes = [16, 16], strides = [1, 1]} : vector<16x64xf32> to vector<16x16xf32>
    %53 = arith.truncf %52 : vector<16x16xf32> to vector<16x16xbf16>
    %cst_28 = arith.constant dense<0.000000e+00> : vector<12x16xf32>
    %54 = tpu.matmul %49, %51, %cst_28 {dimension_numbers = #tpu.dot_dimension_numbers<[1], [1], [0], [0], [0, 0, 1, 0], [], []>} : vector<12x16xbf16>, vector<16x16xbf16>, vector<12x16xf32> -> vector<12x16xf32>
    %cst_29 = arith.constant 2.500000e-01 : f32
    %55 = vector.broadcast %cst_29 : f32 to vector<12x16xf32>
    %56 = arith.mulf %54, %55 : vector<12x16xf32>
    %cst_30 = arith.constant dense<0xFF800000> : vector<12xf32>
    %57 = vector.multi_reduction <maximumf>, %56, %cst_30 [1] : vector<12x16xf32> to vector<12xf32>
    %58 = vector.shape_cast %57 : vector<12xf32> to vector<12x1xf32>
    %59 = vector.broadcast %58 : vector<12x1xf32> to vector<12x16xf32>
    %60 = arith.subf %56, %59 : vector<12x16xf32>
    %61 = math.exp %60 : vector<12x16xf32>
    %cst_31 = arith.constant dense<0.000000e+00> : vector<12xf32>
    %62 = vector.multi_reduction <add>, %61, %cst_31 [1] : vector<12x16xf32> to vector<12xf32>
    %63 = vector.shape_cast %62 : vector<12xf32> to vector<12x1xf32>
    %64 = tpu.reciprocal %63 {approx = true} : vector<12x1xf32> -> vector<12x1xf32>
    %65 = vector.broadcast %64 : vector<12x1xf32> to vector<12x16xf32>
    %66 = arith.mulf %61, %65 : vector<12x16xf32>
    %c0_32 = arith.constant 0 : index
    %c1 = arith.constant 1 : index
    %c0_33 = arith.constant 0 : index
    %c0_34 = arith.constant 0 : index
    %67 = vector.load %arg14[%c0_32, %c1, %c0_33, %c0_34] : memref<1x4x12x16xf32, #tpu.memory_space<vmem>>, vector<1x1x12x16xf32>
    %68 = vector.shape_cast %67 : vector<1x1x12x16xf32> to vector<12x16xf32>
    %69 = vector.shape_cast %66 : vector<12x16xf32> to vector<1x1x12x16xf32>
    tpu.vector_store %arg14[%c0_32, %c1, %c0_33, %c0_34], %69 {strides = array<i32>} : memref<1x4x12x16xf32, #tpu.memory_space<vmem>>, vector<1x1x12x16xf32>,
    %70 = arith.truncf %66 : vector<12x16xf32> to vector<12x16xbf16>
    %cst_35 = arith.constant dense<0.000000e+00> : vector<12x16xf32>
    %71 = tpu.matmul %70, %53, %cst_35 {dimension_numbers = #tpu.dot_dimension_numbers<[1], [0], [0], [1], [0, 0, 1, 1], [], []>} : vector<12x16xbf16>, vector<16x16xbf16>, vector<12x16xf32> -> vector<12x16xf32>
    %72 = vector.extract_strided_slice %11 {offsets = [0, 32], sizes = [12, 16], strides = [1, 1]} : vector<12x64xf32> to vector<12x16xf32>
    %73 = arith.truncf %72 : vector<12x16xf32> to vector<12x16xbf16>
    %74 = vector.extract_strided_slice %17 {offsets = [0, 32], sizes = [16, 16], strides = [1, 1]} : vector<16x64xf32> to vector<16x16xf32>
    %75 = arith.truncf %74 : vector<16x16xf32> to vector<16x16xbf16>
    %76 = vector.extract_strided_slice %23 {offsets = [0, 32], sizes = [16, 16], strides = [1, 1]} : vector<16x64xf32> to vector<16x16xf32>
    %77 = arith.truncf %76 : vector<16x16xf32> to vector<16x16xbf16>
    %cst_36 = arith.constant dense<0.000000e+00> : vector<12x16xf32>
    %78 = tpu.matmul %73, %75, %cst_36 {dimension_numbers = #tpu.dot_dimension_numbers<[1], [1], [0], [0], [0, 0, 1, 0], [], []>} : vector<12x16xbf16>, vector<16x16xbf16>, vector<12x16xf32> -> vector<12x16xf32>
    %cst_37 = arith.constant 2.500000e-01 : f32
    %79 = vector.broadcast %cst_37 : f32 to vector<12x16xf32>
    %80 = arith.mulf %78, %79 : vector<12x16xf32>
    %cst_38 = arith.constant dense<0xFF800000> : vector<12xf32>
    %81 = vector.multi_reduction <maximumf>, %80, %cst_38 [1] : vector<12x16xf32> to vector<12xf32>
    %82 = vector.shape_cast %81 : vector<12xf32> to vector<12x1xf32>
    %83 = vector.broadcast %82 : vector<12x1xf32> to vector<12x16xf32>
    %84 = arith.subf %80, %83 : vector<12x16xf32>
    %85 = math.exp %84 : vector<12x16xf32>
    %cst_39 = arith.constant dense<0.000000e+00> : vector<12xf32>
    %86 = vector.multi_reduction <add>, %85, %cst_39 [1] : vector<12x16xf32> to vector<12xf32>
    %87 = vector.shape_cast %86 : vector<12xf32> to vector<12x1xf32>
    %88 = tpu.reciprocal %87 {approx = true} : vector<12x1xf32> -> vector<12x1xf32>
    %89 = vector.broadcast %88 : vector<12x1xf32> to vector<12x16xf32>
    %90 = arith.mulf %85, %89 : vector<12x16xf32>
    %c0_40 = arith.constant 0 : index
    %c2 = arith.constant 2 : index
    %c0_41 = arith.constant 0 : index
    %c0_42 = arith.constant 0 : index
    %91 = vector.load %arg14[%c0_40, %c2, %c0_41, %c0_42] : memref<1x4x12x16xf32, #tpu.memory_space<vmem>>, vector<1x1x12x16xf32>
    %92 = vector.shape_cast %91 : vector<1x1x12x16xf32> to vector<12x16xf32>
    %93 = vector.shape_cast %90 : vector<12x16xf32> to vector<1x1x12x16xf32>
    tpu.vector_store %arg14[%c0_40, %c2, %c0_41, %c0_42], %93 {strides = array<i32>} : memref<1x4x12x16xf32, #tpu.memory_space<vmem>>, vector<1x1x12x16xf32>,
    %94 = arith.truncf %90 : vector<12x16xf32> to vector<12x16xbf16>
    %cst_43 = arith.constant dense<0.000000e+00> : vector<12x16xf32>
    %95 = tpu.matmul %94, %77, %cst_43 {dimension_numbers = #tpu.dot_dimension_numbers<[1], [0], [0], [1], [0, 0, 1, 1], [], []>} : vector<12x16xbf16>, vector<16x16xbf16>, vector<12x16xf32> -> vector<12x16xf32>
    %96 = vector.extract_strided_slice %11 {offsets = [0, 48], sizes = [12, 16], strides = [1, 1]} : vector<12x64xf32> to vector<12x16xf32>
    %97 = arith.truncf %96 : vector<12x16xf32> to vector<12x16xbf16>
    %98 = vector.extract_strided_slice %17 {offsets = [0, 48], sizes = [16, 16], strides = [1, 1]} : vector<16x64xf32> to vector<16x16xf32>
    %99 = arith.truncf %98 : vector<16x16xf32> to vector<16x16xbf16>
    %100 = vector.extract_strided_slice %23 {offsets = [0, 48], sizes = [16, 16], strides = [1, 1]} : vector<16x64xf32> to vector<16x16xf32>
    %101 = arith.truncf %100 : vector<16x16xf32> to vector<16x16xbf16>
    %cst_44 = arith.constant dense<0.000000e+00> : vector<12x16xf32>
    %102 = tpu.matmul %97, %99, %cst_44 {dimension_numbers = #tpu.dot_dimension_numbers<[1], [1], [0], [0], [0, 0, 1, 0], [], []>} : vector<12x16xbf16>, vector<16x16xbf16>, vector<12x16xf32> -> vector<12x16xf32>
    %cst_45 = arith.constant 2.500000e-01 : f32
    %103 = vector.broadcast %cst_45 : f32 to vector<12x16xf32>
    %104 = arith.mulf %102, %103 : vector<12x16xf32>
    %cst_46 = arith.constant dense<0xFF800000> : vector<12xf32>
    %105 = vector.multi_reduction <maximumf>, %104, %cst_46 [1] : vector<12x16xf32> to vector<12xf32>
    %106 = vector.shape_cast %105 : vector<12xf32> to vector<12x1xf32>
    %107 = vector.broadcast %106 : vector<12x1xf32> to vector<12x16xf32>
    %108 = arith.subf %104, %107 : vector<12x16xf32>
    %109 = math.exp %108 : vector<12x16xf32>
    %cst_47 = arith.constant dense<0.000000e+00> : vector<12xf32>
    %110 = vector.multi_reduction <add>, %109, %cst_47 [1] : vector<12x16xf32> to vector<12xf32>
    %111 = vector.shape_cast %110 : vector<12xf32> to vector<12x1xf32>
    %112 = tpu.reciprocal %111 {approx = true} : vector<12x1xf32> -> vector<12x1xf32>
    %113 = vector.broadcast %112 : vector<12x1xf32> to vector<12x16xf32>
    %114 = arith.mulf %109, %113 : vector<12x16xf32>
    %c0_48 = arith.constant 0 : index
    %c3 = arith.constant 3 : index
    %c0_49 = arith.constant 0 : index
    %c0_50 = arith.constant 0 : index
    %115 = vector.load %arg14[%c0_48, %c3, %c0_49, %c0_50] : memref<1x4x12x16xf32, #tpu.memory_space<vmem>>, vector<1x1x12x16xf32>
    %116 = vector.shape_cast %115 : vector<1x1x12x16xf32> to vector<12x16xf32>
    %117 = vector.shape_cast %114 : vector<12x16xf32> to vector<1x1x12x16xf32>
    tpu.vector_store %arg14[%c0_48, %c3, %c0_49, %c0_50], %117 {strides = array<i32>} : memref<1x4x12x16xf32, #tpu.memory_space<vmem>>, vector<1x1x12x16xf32>,
    %118 = arith.truncf %114 : vector<12x16xf32> to vector<12x16xbf16>
    %cst_51 = arith.constant dense<0.000000e+00> : vector<12x16xf32>
    %119 = tpu.matmul %118, %101, %cst_51 {dimension_numbers = #tpu.dot_dimension_numbers<[1], [0], [0], [1], [0, 0, 1, 1], [], []>} : vector<12x16xbf16>, vector<16x16xbf16>, vector<12x16xf32> -> vector<12x16xf32>
    %120 = tpu.concatenate %47, %71, %95, %119 in 1 : vector<12x16xf32>, vector<12x16xf32>, vector<12x16xf32>, vector<12x16xf32> -> vector<12x64xf32>
    %121 = arith.truncf %120 : vector<12x64xf32> to vector<12x64xbf16>
    %c0_52 = arith.constant 0 : index
    %c0_53 = arith.constant 0 : index
    %122 = vector.load %arg9[%c0_52, %c0_53] : memref<64x64xf32, #tpu.memory_space<vmem>>, vector<64x64xf32>
    %123 = arith.truncf %122 : vector<64x64xf32> to vector<64x64xbf16>
    %cst_54 = arith.constant dense<0.000000e+00> : vector<12x64xf32>
    %124 = tpu.matmul %121, %123, %cst_54 {dimension_numbers = #tpu.dot_dimension_numbers<[1], [0], [0], [1], [0, 0, 1, 1], [], []>} : vector<12x64xbf16>, vector<64x64xbf16>, vector<12x64xf32> -> vector<12x64xf32>
    %c0_55 = arith.constant 0 : index
    %c0_56 = arith.constant 0 : index
    %125 = vector.load %arg10[%c0_55, %c0_56] : memref<1x64xf32, #tpu.memory_space<vmem>>, vector<1x64xf32>
    %126 = vector.broadcast %125 : vector<1x64xf32> to vector<12x64xf32>
    %127 = arith.addf %124, %126 : vector<12x64xf32>
    %128 = arith.addf %127, %1 : vector<12x64xf32>
    %cst_57 = arith.constant dense<0.000000e+00> : vector<12xf32>
    %129 = vector.multi_reduction <add>, %128, %cst_57 [1] : vector<12x64xf32> to vector<12xf32>
    %130 = vector.shape_cast %129 : vector<12xf32> to vector<12x1xf32>
    %cst_58 = arith.constant 6.400000e+01 : f32
    %131 = vector.broadcast %cst_58 : f32 to vector<12x1xf32>
    %132 = arith.divf %130, %131 : vector<12x1xf32>
    %133 = vector.broadcast %132 : vector<12x1xf32> to vector<12x64xf32>
    %134 = arith.subf %128, %133 : vector<12x64xf32>
    %135 = arith.mulf %134, %134 : vector<12x64xf32>
    %cst_59 = arith.constant dense<0.000000e+00> : vector<12xf32>
    %136 = vector.multi_reduction <add>, %135, %cst_59 [1] : vector<12x64xf32> to vector<12xf32>
    %137 = vector.shape_cast %136 : vector<12xf32> to vector<12x1xf32>
    %cst_60 = arith.constant 6.400000e+01 : f32
    %138 = vector.broadcast %cst_60 : f32 to vector<12x1xf32>
    %139 = arith.divf %137, %138 : vector<12x1xf32>
    %140 = vector.broadcast %132 : vector<12x1xf32> to vector<12x64xf32>
    %141 = arith.subf %128, %140 : vector<12x64xf32>
    %cst_61 = arith.constant 9.99999974E-6 : f32
    %142 = vector.broadcast %cst_61 : f32 to vector<12x1xf32>
    %143 = arith.addf %139, %142 : vector<12x1xf32>
    %144 = math.rsqrt %143 : vector<12x1xf32>
    %145 = vector.broadcast %144 : vector<12x1xf32> to vector<12x64xf32>
    %146 = arith.mulf %141, %145 : vector<12x64xf32>
    %c0_62 = arith.constant 0 : index
    %c0_63 = arith.constant 0 : index
    %147 = vector.load %arg11[%c0_62, %c0_63] : memref<1x64xf32, #tpu.memory_space<vmem>>, vector<1x64xf32>
    %148 = vector.broadcast %147 : vector<1x64xf32> to vector<12x64xf32>
    %149 = arith.mulf %146, %148 : vector<12x64xf32>
    %c0_64 = arith.constant 0 : index
    %c0_65 = arith.constant 0 : index
    %150 = vector.load %arg12[%c0_64, %c0_65] : memref<1x64xf32, #tpu.memory_space<vmem>>, vector<1x64xf32>
    %151 = vector.broadcast %150 : vector<1x64xf32> to vector<12x64xf32>
    %152 = arith.addf %149, %151 : vector<12x64xf32>
    %c0_66 = arith.constant 0 : index
    %c0_67 = arith.constant 0 : index
    %c0_68 = arith.constant 0 : index
    %153 = vector.load %arg13[%c0_66, %c0_67, %c0_68] : memref<1x12x64xf32, #tpu.memory_space<vmem>>, vector<1x12x64xf32>
    %154 = vector.shape_cast %153 : vector<1x12x64xf32> to vector<12x64xf32>
    %155 = vector.shape_cast %152 : vector<12x64xf32> to vector<1x12x64xf32>
    tpu.vector_store %arg13[%c0_66, %c0_67, %c0_68], %155 {strides = array<i32>} : memref<1x12x64xf32, #tpu.memory_space<vmem>>, vector<1x12x64xf32>,
    return
  }
  func.func @transform_0(%arg0: i32) -> (i32, i32, i32) {
    %c0_i32 = arith.constant 0 : i32
    %c0_i32_0 = arith.constant 0 : i32
    %c0_i32_1 = arith.constant 0 : i32
    return %arg0, %c0_i32, %c0_i32_0 : i32, i32, i32
  }
  func.func @transform_1(%arg0: i32) -> (i32, i32, i32) {
    %c0_i32 = arith.constant 0 : i32
    %c0_i32_0 = arith.constant 0 : i32
    %c0_i32_1 = arith.constant 0 : i32
    return %arg0, %c0_i32, %c0_i32_0 : i32, i32, i32
  }
  func.func @transform_2(%arg0: i32) -> (i32, i32) {
    %c0_i32 = arith.constant 0 : i32
    %c0_i32_0 = arith.constant 0 : i32
    %c0_i32_1 = arith.constant 0 : i32
    return %c0_i32, %c0_i32_0 : i32, i32
  }
  func.func @transform_3(%arg0: i32) -> (i32, i32) {
    %c0_i32 = arith.constant 0 : i32
    %c0_i32_0 = arith.constant 0 : i32
    %c0_i32_1 = arith.constant 0 : i32
    return %c0_i32, %c0_i32_0 : i32, i32
  }
  func.func @transform_4(%arg0: i32) -> (i32, i32) {
    %c0_i32 = arith.constant 0 : i32
    %c0_i32_0 = arith.constant 0 : i32
    %c0_i32_1 = arith.constant 0 : i32
    return %c0_i32, %c0_i32_0 : i32, i32
  }
  func.func @transform_5(%arg0: i32) -> (i32, i32) {
    %c0_i32 = arith.constant 0 : i32
    %c0_i32_0 = arith.constant 0 : i32
    %c0_i32_1 = arith.constant 0 : i32
    return %c0_i32, %c0_i32_0 : i32, i32
  }
  func.func @transform_6(%arg0: i32) -> (i32, i32) {
    %c0_i32 = arith.constant 0 : i32
    %c0_i32_0 = arith.constant 0 : i32
    %c0_i32_1 = arith.constant 0 : i32
    return %c0_i32, %c0_i32_0 : i32, i32
  }
  func.func @transform_7(%arg0: i32) -> (i32, i32) {
    %c0_i32 = arith.constant 0 : i32
    %c0_i32_0 = arith.constant 0 : i32
    %c0_i32_1 = arith.constant 0 : i32
    return %c0_i32, %c0_i32_0 : i32, i32
  }
  func.func @transform_8(%arg0: i32) -> (i32, i32) {
    %c0_i32 = arith.constant 0 : i32
    %c0_i32_0 = arith.constant 0 : i32
    %c0_i32_1 = arith.constant 0 : i32
    return %c0_i32, %c0_i32_0 : i32, i32
  }
  func.func @transform_9(%arg0: i32) -> (i32, i32) {
    %c0_i32 = arith.constant 0 : i32
    %c0_i32_0 = arith.constant 0 : i32
    %c0_i32_1 = arith.constant 0 : i32
    return %c0_i32, %c0_i32_0 : i32, i32
  }
  func.func @transform_10(%arg0: i32) -> (i32, i32) {
    %c0_i32 = arith.constant 0 : i32
    %c0_i32_0 = arith.constant 0 : i32
    %c0_i32_1 = arith.constant 0 : i32
    return %c0_i32, %c0_i32_0 : i32, i32
  }
  func.func @transform_11(%arg0: i32) -> (i32, i32) {
    %c0_i32 = arith.constant 0 : i32
    %c0_i32_0 = arith.constant 0 : i32
    %c0_i32_1 = arith.constant 0 : i32
    return %c0_i32, %c0_i32_0 : i32, i32
  }
  func.func @transform_12(%arg0: i32) -> (i32, i32, i32) {
    %c0_i32 = arith.constant 0 : i32
    %c0_i32_0 = arith.constant 0 : i32
    %c0_i32_1 = arith.constant 0 : i32
    return %arg0, %c0_i32, %c0_i32_0 : i32, i32, i32
  }
  func.func @transform_13(%arg0: i32) -> (i32, i32, i32, i32) {
    %c0_i32 = arith.constant 0 : i32
    %c0_i32_0 = arith.constant 0 : i32
    %c0_i32_1 = arith.constant 0 : i32
    %c0_i32_2 = arith.constant 0 : i32
    return %arg0, %c0_i32, %c0_i32_0, %c0_i32_1 : i32, i32, i32, i32
  }
}

module attributes {stable_mosaic.version = 11 : i64} {
  func.func @_self_attn_sublayer_kernel(%arg0: i32, %arg1: memref<1x12x64xf32, #tpu.memory_space<vmem>>, %arg2: memref<64x64xf32, #tpu.memory_space<vmem>>, %arg3: memref<1x64xf32, #tpu.memory_space<vmem>>, %arg4: memref<64x64xf32, #tpu.memory_space<vmem>>, %arg5: memref<1x64xf32, #tpu.memory_space<vmem>>, %arg6: memref<64x64xf32, #tpu.memory_space<vmem>>, %arg7: memref<1x64xf32, #tpu.memory_space<vmem>>, %arg8: memref<64x64xf32, #tpu.memory_space<vmem>>, %arg9: memref<1x64xf32, #tpu.memory_space<vmem>>, %arg10: memref<1x64xf32, #tpu.memory_space<vmem>>, %arg11: memref<1x64xf32, #tpu.memory_space<vmem>>, %arg12: memref<1x12x64xf32, #tpu.memory_space<vmem>>, %arg13: memref<1x4x12x12xf32, #tpu.memory_space<vmem>>) attributes {dimension_semantics = [#tpu.dimension_semantics<parallel>], iteration_bounds = array<i64: 2>, scalar_prefetch = 0 : i64, scratch_operands = 0 : i64, tpu.core_type = #tpu.core_type<tc>, window_params = [{transform_indices = @transform_0, window_bounds = array<i64: 1, 12, 64>}, {pipeline_mode = #tpu.pipeline_mode<synchronous>, transform_indices = @transform_1, window_bounds = array<i64: 64, 64>}, {pipeline_mode = #tpu.pipeline_mode<synchronous>, transform_indices = @transform_2, window_bounds = array<i64: 1, 64>}, {pipeline_mode = #tpu.pipeline_mode<synchronous>, transform_indices = @transform_3, window_bounds = array<i64: 64, 64>}, {pipeline_mode = #tpu.pipeline_mode<synchronous>, transform_indices = @transform_4, window_bounds = array<i64: 1, 64>}, {pipeline_mode = #tpu.pipeline_mode<synchronous>, transform_indices = @transform_5, window_bounds = array<i64: 64, 64>}, {pipeline_mode = #tpu.pipeline_mode<synchronous>, transform_indices = @transform_6, window_bounds = array<i64: 1, 64>}, {pipeline_mode = #tpu.pipeline_mode<synchronous>, transform_indices = @transform_7, window_bounds = array<i64: 64, 64>}, {pipeline_mode = #tpu.pipeline_mode<synchronous>, transform_indices = @transform_8, window_bounds = array<i64: 1, 64>}, {pipeline_mode = #tpu.pipeline_mode<synchronous>, transform_indices = @transform_9, window_bounds = array<i64: 1, 64>}, {pipeline_mode = #tpu.pipeline_mode<synchronous>, transform_indices = @transform_10, window_bounds = array<i64: 1, 64>}, {transform_indices = @transform_11, window_bounds = array<i64: 1, 12, 64>}, {transform_indices = @transform_12, window_bounds = array<i64: 1, 4, 12, 12>}]} {
    %c0 = arith.constant 0 : index
    %c0_0 = arith.constant 0 : index
    %c0_1 = arith.constant 0 : index
    %0 = vector.load %arg1[%c0, %c0_0, %c0_1] : memref<1x12x64xf32, #tpu.memory_space<vmem>>, vector<1x12x64xf32>
    %1 = vector.shape_cast %0 : vector<1x12x64xf32> to vector<12x64xf32>
    %2 = arith.truncf %1 : vector<12x64xf32> to vector<12x64xbf16>
    %3 = arith.truncf %1 : vector<12x64xf32> to vector<12x64xbf16>
    %c0_2 = arith.constant 0 : index
    %c0_3 = arith.constant 0 : index
    %4 = vector.load %arg2[%c0_2, %c0_3] : memref<64x64xf32, #tpu.memory_space<vmem>>, vector<64x64xf32>
    %5 = arith.truncf %4 : vector<64x64xf32> to vector<64x64xbf16>
    %cst = arith.constant dense<0.000000e+00> : vector<12x64xf32>
    %6 = tpu.matmul %2, %5, %cst {dimension_numbers = #tpu.dot_dimension_numbers<[1], [0], [0], [1], [0, 0, 1, 1], [], []>} : vector<12x64xbf16>, vector<64x64xbf16>, vector<12x64xf32> -> vector<12x64xf32>
    %c0_4 = arith.constant 0 : index
    %c0_5 = arith.constant 0 : index
    %7 = vector.load %arg3[%c0_4, %c0_5] : memref<1x64xf32, #tpu.memory_space<vmem>>, vector<1x64xf32>
    %8 = vector.broadcast %7 : vector<1x64xf32> to vector<12x64xf32>
    %9 = arith.addf %6, %8 : vector<12x64xf32>
    %c0_6 = arith.constant 0 : index
    %c0_7 = arith.constant 0 : index
    %10 = vector.load %arg4[%c0_6, %c0_7] : memref<64x64xf32, #tpu.memory_space<vmem>>, vector<64x64xf32>
    %11 = arith.truncf %10 : vector<64x64xf32> to vector<64x64xbf16>
    %cst_8 = arith.constant dense<0.000000e+00> : vector<12x64xf32>
    %12 = tpu.matmul %3, %11, %cst_8 {dimension_numbers = #tpu.dot_dimension_numbers<[1], [0], [0], [1], [0, 0, 1, 1], [], []>} : vector<12x64xbf16>, vector<64x64xbf16>, vector<12x64xf32> -> vector<12x64xf32>
    %c0_9 = arith.constant 0 : index
    %c0_10 = arith.constant 0 : index
    %13 = vector.load %arg5[%c0_9, %c0_10] : memref<1x64xf32, #tpu.memory_space<vmem>>, vector<1x64xf32>
    %14 = vector.broadcast %13 : vector<1x64xf32> to vector<12x64xf32>
    %15 = arith.addf %12, %14 : vector<12x64xf32>
    %c0_11 = arith.constant 0 : index
    %c0_12 = arith.constant 0 : index
    %16 = vector.load %arg6[%c0_11, %c0_12] : memref<64x64xf32, #tpu.memory_space<vmem>>, vector<64x64xf32>
    %17 = arith.truncf %16 : vector<64x64xf32> to vector<64x64xbf16>
    %cst_13 = arith.constant dense<0.000000e+00> : vector<12x64xf32>
    %18 = tpu.matmul %3, %17, %cst_13 {dimension_numbers = #tpu.dot_dimension_numbers<[1], [0], [0], [1], [0, 0, 1, 1], [], []>} : vector<12x64xbf16>, vector<64x64xbf16>, vector<12x64xf32> -> vector<12x64xf32>
    %c0_14 = arith.constant 0 : index
    %c0_15 = arith.constant 0 : index
    %19 = vector.load %arg7[%c0_14, %c0_15] : memref<1x64xf32, #tpu.memory_space<vmem>>, vector<1x64xf32>
    %20 = vector.broadcast %19 : vector<1x64xf32> to vector<12x64xf32>
    %21 = arith.addf %18, %20 : vector<12x64xf32>
    %22 = vector.extract_strided_slice %9 {offsets = [0, 0], sizes = [12, 16], strides = [1, 1]} : vector<12x64xf32> to vector<12x16xf32>
    %23 = arith.truncf %22 : vector<12x16xf32> to vector<12x16xbf16>
    %24 = vector.extract_strided_slice %15 {offsets = [0, 0], sizes = [12, 16], strides = [1, 1]} : vector<12x64xf32> to vector<12x16xf32>
    %25 = arith.truncf %24 : vector<12x16xf32> to vector<12x16xbf16>
    %26 = vector.extract_strided_slice %21 {offsets = [0, 0], sizes = [12, 16], strides = [1, 1]} : vector<12x64xf32> to vector<12x16xf32>
    %27 = arith.truncf %26 : vector<12x16xf32> to vector<12x16xbf16>
    %cst_16 = arith.constant dense<0.000000e+00> : vector<12x12xf32>
    %28 = tpu.matmul %23, %25, %cst_16 {dimension_numbers = #tpu.dot_dimension_numbers<[1], [1], [0], [0], [0, 0, 1, 0], [], []>} : vector<12x16xbf16>, vector<12x16xbf16>, vector<12x12xf32> -> vector<12x12xf32>
    %cst_17 = arith.constant 2.500000e-01 : f32
    %29 = vector.broadcast %cst_17 : f32 to vector<12x12xf32>
    %30 = arith.mulf %28, %29 : vector<12x12xf32>
    %cst_18 = arith.constant dense<0xFF800000> : vector<12xf32>
    %31 = vector.multi_reduction <maximumf>, %30, %cst_18 [1] : vector<12x12xf32> to vector<12xf32>
    %32 = vector.shape_cast %31 : vector<12xf32> to vector<12x1xf32>
    %33 = vector.broadcast %32 : vector<12x1xf32> to vector<12x12xf32>
    %34 = arith.subf %30, %33 : vector<12x12xf32>
    %35 = math.exp %34 : vector<12x12xf32>
    %cst_19 = arith.constant dense<0.000000e+00> : vector<12xf32>
    %36 = vector.multi_reduction <add>, %35, %cst_19 [1] : vector<12x12xf32> to vector<12xf32>
    %37 = vector.shape_cast %36 : vector<12xf32> to vector<12x1xf32>
    %38 = tpu.reciprocal %37 {approx = true} : vector<12x1xf32> -> vector<12x1xf32>
    %39 = vector.broadcast %38 : vector<12x1xf32> to vector<12x12xf32>
    %40 = arith.mulf %35, %39 : vector<12x12xf32>
    %c0_20 = arith.constant 0 : index
    %c0_21 = arith.constant 0 : index
    %c0_22 = arith.constant 0 : index
    %c0_23 = arith.constant 0 : index
    %41 = vector.load %arg13[%c0_20, %c0_21, %c0_22, %c0_23] : memref<1x4x12x12xf32, #tpu.memory_space<vmem>>, vector<1x1x12x12xf32>
    %42 = vector.shape_cast %41 : vector<1x1x12x12xf32> to vector<12x12xf32>
    %43 = vector.shape_cast %40 : vector<12x12xf32> to vector<1x1x12x12xf32>
    tpu.vector_store %arg13[%c0_20, %c0_21, %c0_22, %c0_23], %43 {strides = array<i32>} : memref<1x4x12x12xf32, #tpu.memory_space<vmem>>, vector<1x1x12x12xf32>,
    %44 = arith.truncf %40 : vector<12x12xf32> to vector<12x12xbf16>
    %cst_24 = arith.constant dense<0.000000e+00> : vector<12x16xf32>
    %45 = tpu.matmul %44, %27, %cst_24 {dimension_numbers = #tpu.dot_dimension_numbers<[1], [0], [0], [1], [0, 0, 1, 1], [], []>} : vector<12x12xbf16>, vector<12x16xbf16>, vector<12x16xf32> -> vector<12x16xf32>
    %46 = vector.extract_strided_slice %9 {offsets = [0, 16], sizes = [12, 16], strides = [1, 1]} : vector<12x64xf32> to vector<12x16xf32>
    %47 = arith.truncf %46 : vector<12x16xf32> to vector<12x16xbf16>
    %48 = vector.extract_strided_slice %15 {offsets = [0, 16], sizes = [12, 16], strides = [1, 1]} : vector<12x64xf32> to vector<12x16xf32>
    %49 = arith.truncf %48 : vector<12x16xf32> to vector<12x16xbf16>
    %50 = vector.extract_strided_slice %21 {offsets = [0, 16], sizes = [12, 16], strides = [1, 1]} : vector<12x64xf32> to vector<12x16xf32>
    %51 = arith.truncf %50 : vector<12x16xf32> to vector<12x16xbf16>
    %cst_25 = arith.constant dense<0.000000e+00> : vector<12x12xf32>
    %52 = tpu.matmul %47, %49, %cst_25 {dimension_numbers = #tpu.dot_dimension_numbers<[1], [1], [0], [0], [0, 0, 1, 0], [], []>} : vector<12x16xbf16>, vector<12x16xbf16>, vector<12x12xf32> -> vector<12x12xf32>
    %cst_26 = arith.constant 2.500000e-01 : f32
    %53 = vector.broadcast %cst_26 : f32 to vector<12x12xf32>
    %54 = arith.mulf %52, %53 : vector<12x12xf32>
    %cst_27 = arith.constant dense<0xFF800000> : vector<12xf32>
    %55 = vector.multi_reduction <maximumf>, %54, %cst_27 [1] : vector<12x12xf32> to vector<12xf32>
    %56 = vector.shape_cast %55 : vector<12xf32> to vector<12x1xf32>
    %57 = vector.broadcast %56 : vector<12x1xf32> to vector<12x12xf32>
    %58 = arith.subf %54, %57 : vector<12x12xf32>
    %59 = math.exp %58 : vector<12x12xf32>
    %cst_28 = arith.constant dense<0.000000e+00> : vector<12xf32>
    %60 = vector.multi_reduction <add>, %59, %cst_28 [1] : vector<12x12xf32> to vector<12xf32>
    %61 = vector.shape_cast %60 : vector<12xf32> to vector<12x1xf32>
    %62 = tpu.reciprocal %61 {approx = true} : vector<12x1xf32> -> vector<12x1xf32>
    %63 = vector.broadcast %62 : vector<12x1xf32> to vector<12x12xf32>
    %64 = arith.mulf %59, %63 : vector<12x12xf32>
    %c0_29 = arith.constant 0 : index
    %c1 = arith.constant 1 : index
    %c0_30 = arith.constant 0 : index
    %c0_31 = arith.constant 0 : index
    %65 = vector.load %arg13[%c0_29, %c1, %c0_30, %c0_31] : memref<1x4x12x12xf32, #tpu.memory_space<vmem>>, vector<1x1x12x12xf32>
    %66 = vector.shape_cast %65 : vector<1x1x12x12xf32> to vector<12x12xf32>
    %67 = vector.shape_cast %64 : vector<12x12xf32> to vector<1x1x12x12xf32>
    tpu.vector_store %arg13[%c0_29, %c1, %c0_30, %c0_31], %67 {strides = array<i32>} : memref<1x4x12x12xf32, #tpu.memory_space<vmem>>, vector<1x1x12x12xf32>,
    %68 = arith.truncf %64 : vector<12x12xf32> to vector<12x12xbf16>
    %cst_32 = arith.constant dense<0.000000e+00> : vector<12x16xf32>
    %69 = tpu.matmul %68, %51, %cst_32 {dimension_numbers = #tpu.dot_dimension_numbers<[1], [0], [0], [1], [0, 0, 1, 1], [], []>} : vector<12x12xbf16>, vector<12x16xbf16>, vector<12x16xf32> -> vector<12x16xf32>
    %70 = vector.extract_strided_slice %9 {offsets = [0, 32], sizes = [12, 16], strides = [1, 1]} : vector<12x64xf32> to vector<12x16xf32>
    %71 = arith.truncf %70 : vector<12x16xf32> to vector<12x16xbf16>
    %72 = vector.extract_strided_slice %15 {offsets = [0, 32], sizes = [12, 16], strides = [1, 1]} : vector<12x64xf32> to vector<12x16xf32>
    %73 = arith.truncf %72 : vector<12x16xf32> to vector<12x16xbf16>
    %74 = vector.extract_strided_slice %21 {offsets = [0, 32], sizes = [12, 16], strides = [1, 1]} : vector<12x64xf32> to vector<12x16xf32>
    %75 = arith.truncf %74 : vector<12x16xf32> to vector<12x16xbf16>
    %cst_33 = arith.constant dense<0.000000e+00> : vector<12x12xf32>
    %76 = tpu.matmul %71, %73, %cst_33 {dimension_numbers = #tpu.dot_dimension_numbers<[1], [1], [0], [0], [0, 0, 1, 0], [], []>} : vector<12x16xbf16>, vector<12x16xbf16>, vector<12x12xf32> -> vector<12x12xf32>
    %cst_34 = arith.constant 2.500000e-01 : f32
    %77 = vector.broadcast %cst_34 : f32 to vector<12x12xf32>
    %78 = arith.mulf %76, %77 : vector<12x12xf32>
    %cst_35 = arith.constant dense<0xFF800000> : vector<12xf32>
    %79 = vector.multi_reduction <maximumf>, %78, %cst_35 [1] : vector<12x12xf32> to vector<12xf32>
    %80 = vector.shape_cast %79 : vector<12xf32> to vector<12x1xf32>
    %81 = vector.broadcast %80 : vector<12x1xf32> to vector<12x12xf32>
    %82 = arith.subf %78, %81 : vector<12x12xf32>
    %83 = math.exp %82 : vector<12x12xf32>
    %cst_36 = arith.constant dense<0.000000e+00> : vector<12xf32>
    %84 = vector.multi_reduction <add>, %83, %cst_36 [1] : vector<12x12xf32> to vector<12xf32>
    %85 = vector.shape_cast %84 : vector<12xf32> to vector<12x1xf32>
    %86 = tpu.reciprocal %85 {approx = true} : vector<12x1xf32> -> vector<12x1xf32>
    %87 = vector.broadcast %86 : vector<12x1xf32> to vector<12x12xf32>
    %88 = arith.mulf %83, %87 : vector<12x12xf32>
    %c0_37 = arith.constant 0 : index
    %c2 = arith.constant 2 : index
    %c0_38 = arith.constant 0 : index
    %c0_39 = arith.constant 0 : index
    %89 = vector.load %arg13[%c0_37, %c2, %c0_38, %c0_39] : memref<1x4x12x12xf32, #tpu.memory_space<vmem>>, vector<1x1x12x12xf32>
    %90 = vector.shape_cast %89 : vector<1x1x12x12xf32> to vector<12x12xf32>
    %91 = vector.shape_cast %88 : vector<12x12xf32> to vector<1x1x12x12xf32>
    tpu.vector_store %arg13[%c0_37, %c2, %c0_38, %c0_39], %91 {strides = array<i32>} : memref<1x4x12x12xf32, #tpu.memory_space<vmem>>, vector<1x1x12x12xf32>,
    %92 = arith.truncf %88 : vector<12x12xf32> to vector<12x12xbf16>
    %cst_40 = arith.constant dense<0.000000e+00> : vector<12x16xf32>
    %93 = tpu.matmul %92, %75, %cst_40 {dimension_numbers = #tpu.dot_dimension_numbers<[1], [0], [0], [1], [0, 0, 1, 1], [], []>} : vector<12x12xbf16>, vector<12x16xbf16>, vector<12x16xf32> -> vector<12x16xf32>
    %94 = vector.extract_strided_slice %9 {offsets = [0, 48], sizes = [12, 16], strides = [1, 1]} : vector<12x64xf32> to vector<12x16xf32>
    %95 = arith.truncf %94 : vector<12x16xf32> to vector<12x16xbf16>
    %96 = vector.extract_strided_slice %15 {offsets = [0, 48], sizes = [12, 16], strides = [1, 1]} : vector<12x64xf32> to vector<12x16xf32>
    %97 = arith.truncf %96 : vector<12x16xf32> to vector<12x16xbf16>
    %98 = vector.extract_strided_slice %21 {offsets = [0, 48], sizes = [12, 16], strides = [1, 1]} : vector<12x64xf32> to vector<12x16xf32>
    %99 = arith.truncf %98 : vector<12x16xf32> to vector<12x16xbf16>
    %cst_41 = arith.constant dense<0.000000e+00> : vector<12x12xf32>
    %100 = tpu.matmul %95, %97, %cst_41 {dimension_numbers = #tpu.dot_dimension_numbers<[1], [1], [0], [0], [0, 0, 1, 0], [], []>} : vector<12x16xbf16>, vector<12x16xbf16>, vector<12x12xf32> -> vector<12x12xf32>
    %cst_42 = arith.constant 2.500000e-01 : f32
    %101 = vector.broadcast %cst_42 : f32 to vector<12x12xf32>
    %102 = arith.mulf %100, %101 : vector<12x12xf32>
    %cst_43 = arith.constant dense<0xFF800000> : vector<12xf32>
    %103 = vector.multi_reduction <maximumf>, %102, %cst_43 [1] : vector<12x12xf32> to vector<12xf32>
    %104 = vector.shape_cast %103 : vector<12xf32> to vector<12x1xf32>
    %105 = vector.broadcast %104 : vector<12x1xf32> to vector<12x12xf32>
    %106 = arith.subf %102, %105 : vector<12x12xf32>
    %107 = math.exp %106 : vector<12x12xf32>
    %cst_44 = arith.constant dense<0.000000e+00> : vector<12xf32>
    %108 = vector.multi_reduction <add>, %107, %cst_44 [1] : vector<12x12xf32> to vector<12xf32>
    %109 = vector.shape_cast %108 : vector<12xf32> to vector<12x1xf32>
    %110 = tpu.reciprocal %109 {approx = true} : vector<12x1xf32> -> vector<12x1xf32>
    %111 = vector.broadcast %110 : vector<12x1xf32> to vector<12x12xf32>
    %112 = arith.mulf %107, %111 : vector<12x12xf32>
    %c0_45 = arith.constant 0 : index
    %c3 = arith.constant 3 : index
    %c0_46 = arith.constant 0 : index
    %c0_47 = arith.constant 0 : index
    %113 = vector.load %arg13[%c0_45, %c3, %c0_46, %c0_47] : memref<1x4x12x12xf32, #tpu.memory_space<vmem>>, vector<1x1x12x12xf32>
    %114 = vector.shape_cast %113 : vector<1x1x12x12xf32> to vector<12x12xf32>
    %115 = vector.shape_cast %112 : vector<12x12xf32> to vector<1x1x12x12xf32>
    tpu.vector_store %arg13[%c0_45, %c3, %c0_46, %c0_47], %115 {strides = array<i32>} : memref<1x4x12x12xf32, #tpu.memory_space<vmem>>, vector<1x1x12x12xf32>,
    %116 = arith.truncf %112 : vector<12x12xf32> to vector<12x12xbf16>
    %cst_48 = arith.constant dense<0.000000e+00> : vector<12x16xf32>
    %117 = tpu.matmul %116, %99, %cst_48 {dimension_numbers = #tpu.dot_dimension_numbers<[1], [0], [0], [1], [0, 0, 1, 1], [], []>} : vector<12x12xbf16>, vector<12x16xbf16>, vector<12x16xf32> -> vector<12x16xf32>
    %118 = tpu.concatenate %45, %69, %93, %117 in 1 : vector<12x16xf32>, vector<12x16xf32>, vector<12x16xf32>, vector<12x16xf32> -> vector<12x64xf32>
    %119 = arith.truncf %118 : vector<12x64xf32> to vector<12x64xbf16>
    %c0_49 = arith.constant 0 : index
    %c0_50 = arith.constant 0 : index
    %120 = vector.load %arg8[%c0_49, %c0_50] : memref<64x64xf32, #tpu.memory_space<vmem>>, vector<64x64xf32>
    %121 = arith.truncf %120 : vector<64x64xf32> to vector<64x64xbf16>
    %cst_51 = arith.constant dense<0.000000e+00> : vector<12x64xf32>
    %122 = tpu.matmul %119, %121, %cst_51 {dimension_numbers = #tpu.dot_dimension_numbers<[1], [0], [0], [1], [0, 0, 1, 1], [], []>} : vector<12x64xbf16>, vector<64x64xbf16>, vector<12x64xf32> -> vector<12x64xf32>
    %c0_52 = arith.constant 0 : index
    %c0_53 = arith.constant 0 : index
    %123 = vector.load %arg9[%c0_52, %c0_53] : memref<1x64xf32, #tpu.memory_space<vmem>>, vector<1x64xf32>
    %124 = vector.broadcast %123 : vector<1x64xf32> to vector<12x64xf32>
    %125 = arith.addf %122, %124 : vector<12x64xf32>
    %126 = arith.addf %125, %1 : vector<12x64xf32>
    %cst_54 = arith.constant dense<0.000000e+00> : vector<12xf32>
    %127 = vector.multi_reduction <add>, %126, %cst_54 [1] : vector<12x64xf32> to vector<12xf32>
    %128 = vector.shape_cast %127 : vector<12xf32> to vector<12x1xf32>
    %cst_55 = arith.constant 6.400000e+01 : f32
    %129 = vector.broadcast %cst_55 : f32 to vector<12x1xf32>
    %130 = arith.divf %128, %129 : vector<12x1xf32>
    %131 = vector.broadcast %130 : vector<12x1xf32> to vector<12x64xf32>
    %132 = arith.subf %126, %131 : vector<12x64xf32>
    %133 = arith.mulf %132, %132 : vector<12x64xf32>
    %cst_56 = arith.constant dense<0.000000e+00> : vector<12xf32>
    %134 = vector.multi_reduction <add>, %133, %cst_56 [1] : vector<12x64xf32> to vector<12xf32>
    %135 = vector.shape_cast %134 : vector<12xf32> to vector<12x1xf32>
    %cst_57 = arith.constant 6.400000e+01 : f32
    %136 = vector.broadcast %cst_57 : f32 to vector<12x1xf32>
    %137 = arith.divf %135, %136 : vector<12x1xf32>
    %138 = vector.broadcast %130 : vector<12x1xf32> to vector<12x64xf32>
    %139 = arith.subf %126, %138 : vector<12x64xf32>
    %cst_58 = arith.constant 9.99999974E-6 : f32
    %140 = vector.broadcast %cst_58 : f32 to vector<12x1xf32>
    %141 = arith.addf %137, %140 : vector<12x1xf32>
    %142 = math.rsqrt %141 : vector<12x1xf32>
    %143 = vector.broadcast %142 : vector<12x1xf32> to vector<12x64xf32>
    %144 = arith.mulf %139, %143 : vector<12x64xf32>
    %c0_59 = arith.constant 0 : index
    %c0_60 = arith.constant 0 : index
    %145 = vector.load %arg10[%c0_59, %c0_60] : memref<1x64xf32, #tpu.memory_space<vmem>>, vector<1x64xf32>
    %146 = vector.broadcast %145 : vector<1x64xf32> to vector<12x64xf32>
    %147 = arith.mulf %144, %146 : vector<12x64xf32>
    %c0_61 = arith.constant 0 : index
    %c0_62 = arith.constant 0 : index
    %148 = vector.load %arg11[%c0_61, %c0_62] : memref<1x64xf32, #tpu.memory_space<vmem>>, vector<1x64xf32>
    %149 = vector.broadcast %148 : vector<1x64xf32> to vector<12x64xf32>
    %150 = arith.addf %147, %149 : vector<12x64xf32>
    %c0_63 = arith.constant 0 : index
    %c0_64 = arith.constant 0 : index
    %c0_65 = arith.constant 0 : index
    %151 = vector.load %arg12[%c0_63, %c0_64, %c0_65] : memref<1x12x64xf32, #tpu.memory_space<vmem>>, vector<1x12x64xf32>
    %152 = vector.shape_cast %151 : vector<1x12x64xf32> to vector<12x64xf32>
    %153 = vector.shape_cast %150 : vector<12x64xf32> to vector<1x12x64xf32>
    tpu.vector_store %arg12[%c0_63, %c0_64, %c0_65], %153 {strides = array<i32>} : memref<1x12x64xf32, #tpu.memory_space<vmem>>, vector<1x12x64xf32>,
    return
  }
  func.func @transform_0(%arg0: i32) -> (i32, i32, i32) {
    %c0_i32 = arith.constant 0 : i32
    %c0_i32_0 = arith.constant 0 : i32
    %c0_i32_1 = arith.constant 0 : i32
    return %arg0, %c0_i32, %c0_i32_0 : i32, i32, i32
  }
  func.func @transform_1(%arg0: i32) -> (i32, i32) {
    %c0_i32 = arith.constant 0 : i32
    %c0_i32_0 = arith.constant 0 : i32
    %c0_i32_1 = arith.constant 0 : i32
    return %c0_i32, %c0_i32_0 : i32, i32
  }
  func.func @transform_2(%arg0: i32) -> (i32, i32) {
    %c0_i32 = arith.constant 0 : i32
    %c0_i32_0 = arith.constant 0 : i32
    %c0_i32_1 = arith.constant 0 : i32
    return %c0_i32, %c0_i32_0 : i32, i32
  }
  func.func @transform_3(%arg0: i32) -> (i32, i32) {
    %c0_i32 = arith.constant 0 : i32
    %c0_i32_0 = arith.constant 0 : i32
    %c0_i32_1 = arith.constant 0 : i32
    return %c0_i32, %c0_i32_0 : i32, i32
  }
  func.func @transform_4(%arg0: i32) -> (i32, i32) {
    %c0_i32 = arith.constant 0 : i32
    %c0_i32_0 = arith.constant 0 : i32
    %c0_i32_1 = arith.constant 0 : i32
    return %c0_i32, %c0_i32_0 : i32, i32
  }
  func.func @transform_5(%arg0: i32) -> (i32, i32) {
    %c0_i32 = arith.constant 0 : i32
    %c0_i32_0 = arith.constant 0 : i32
    %c0_i32_1 = arith.constant 0 : i32
    return %c0_i32, %c0_i32_0 : i32, i32
  }
  func.func @transform_6(%arg0: i32) -> (i32, i32) {
    %c0_i32 = arith.constant 0 : i32
    %c0_i32_0 = arith.constant 0 : i32
    %c0_i32_1 = arith.constant 0 : i32
    return %c0_i32, %c0_i32_0 : i32, i32
  }
  func.func @transform_7(%arg0: i32) -> (i32, i32) {
    %c0_i32 = arith.constant 0 : i32
    %c0_i32_0 = arith.constant 0 : i32
    %c0_i32_1 = arith.constant 0 : i32
    return %c0_i32, %c0_i32_0 : i32, i32
  }
  func.func @transform_8(%arg0: i32) -> (i32, i32) {
    %c0_i32 = arith.constant 0 : i32
    %c0_i32_0 = arith.constant 0 : i32
    %c0_i32_1 = arith.constant 0 : i32
    return %c0_i32, %c0_i32_0 : i32, i32
  }
  func.func @transform_9(%arg0: i32) -> (i32, i32) {
    %c0_i32 = arith.constant 0 : i32
    %c0_i32_0 = arith.constant 0 : i32
    %c0_i32_1 = arith.constant 0 : i32
    return %c0_i32, %c0_i32_0 : i32, i32
  }
  func.func @transform_10(%arg0: i32) -> (i32, i32) {
    %c0_i32 = arith.constant 0 : i32
    %c0_i32_0 = arith.constant 0 : i32
    %c0_i32_1 = arith.constant 0 : i32
    return %c0_i32, %c0_i32_0 : i32, i32
  }
  func.func @transform_11(%arg0: i32) -> (i32, i32, i32) {
    %c0_i32 = arith.constant 0 : i32
    %c0_i32_0 = arith.constant 0 : i32
    %c0_i32_1 = arith.constant 0 : i32
    return %arg0, %c0_i32, %c0_i32_0 : i32, i32, i32
  }
  func.func @transform_12(%arg0: i32) -> (i32, i32, i32, i32) {
    %c0_i32 = arith.constant 0 : i32
    %c0_i32_0 = arith.constant 0 : i32
    %c0_i32_1 = arith.constant 0 : i32
    %c0_i32_2 = arith.constant 0 : i32
    return %arg0, %c0_i32, %c0_i32_0, %c0_i32_1 : i32, i32, i32, i32
  }
}

module attributes {stable_mosaic.version = 11 : i64} {
  func.func @_ffn_res_ln_kernel(%arg0: i32, %arg1: memref<24x64xf32, #tpu.memory_space<vmem>>, %arg2: memref<64x128xf32, #tpu.memory_space<vmem>>, %arg3: memref<1x128xf32, #tpu.memory_space<vmem>>, %arg4: memref<128x64xf32, #tpu.memory_space<vmem>>, %arg5: memref<1x64xf32, #tpu.memory_space<vmem>>, %arg6: memref<1x64xf32, #tpu.memory_space<vmem>>, %arg7: memref<1x64xf32, #tpu.memory_space<vmem>>, %arg8: memref<24x64xf32, #tpu.memory_space<vmem>>) attributes {dimension_semantics = [#tpu.dimension_semantics<parallel>], iteration_bounds = array<i64: 1>, scalar_prefetch = 0 : i64, scratch_operands = 0 : i64, tpu.core_type = #tpu.core_type<tc>, window_params = [{transform_indices = @transform_0, window_bounds = array<i64: 24, 64>}, {pipeline_mode = #tpu.pipeline_mode<synchronous>, transform_indices = @transform_1, window_bounds = array<i64: 64, 128>}, {pipeline_mode = #tpu.pipeline_mode<synchronous>, transform_indices = @transform_2, window_bounds = array<i64: 1, 128>}, {pipeline_mode = #tpu.pipeline_mode<synchronous>, transform_indices = @transform_3, window_bounds = array<i64: 128, 64>}, {pipeline_mode = #tpu.pipeline_mode<synchronous>, transform_indices = @transform_4, window_bounds = array<i64: 1, 64>}, {pipeline_mode = #tpu.pipeline_mode<synchronous>, transform_indices = @transform_5, window_bounds = array<i64: 1, 64>}, {pipeline_mode = #tpu.pipeline_mode<synchronous>, transform_indices = @transform_6, window_bounds = array<i64: 1, 64>}, {transform_indices = @transform_7, window_bounds = array<i64: 24, 64>}]} {
    %c0 = arith.constant 0 : index
    %c0_0 = arith.constant 0 : index
    %0 = vector.load %arg1[%c0, %c0_0] : memref<24x64xf32, #tpu.memory_space<vmem>>, vector<24x64xf32>
    %1 = arith.truncf %0 : vector<24x64xf32> to vector<24x64xbf16>
    %c0_1 = arith.constant 0 : index
    %c0_2 = arith.constant 0 : index
    %2 = vector.load %arg2[%c0_1, %c0_2] : memref<64x128xf32, #tpu.memory_space<vmem>>, vector<64x128xf32>
    %3 = arith.truncf %2 : vector<64x128xf32> to vector<64x128xbf16>
    %cst = arith.constant dense<0.000000e+00> : vector<24x128xf32>
    %4 = tpu.matmul %1, %3, %cst {dimension_numbers = #tpu.dot_dimension_numbers<[1], [0], [0], [1], [0, 0, 1, 1], [], []>} : vector<24x64xbf16>, vector<64x128xbf16>, vector<24x128xf32> -> vector<24x128xf32>
    %c0_3 = arith.constant 0 : index
    %c0_4 = arith.constant 0 : index
    %5 = vector.load %arg3[%c0_3, %c0_4] : memref<1x128xf32, #tpu.memory_space<vmem>>, vector<1x128xf32>
    %6 = vector.broadcast %5 : vector<1x128xf32> to vector<24x128xf32>
    %7 = arith.addf %4, %6 : vector<24x128xf32>
    %cst_5 = arith.constant 0.000000e+00 : f32
    %8 = vector.broadcast %cst_5 : f32 to vector<24x128xf32>
    %9 = arith.maximumf %7, %8 : vector<24x128xf32>
    %10 = arith.truncf %9 : vector<24x128xf32> to vector<24x128xbf16>
    %c0_6 = arith.constant 0 : index
    %c0_7 = arith.constant 0 : index
    %11 = vector.load %arg4[%c0_6, %c0_7] : memref<128x64xf32, #tpu.memory_space<vmem>>, vector<128x64xf32>
    %12 = arith.truncf %11 : vector<128x64xf32> to vector<128x64xbf16>
    %cst_8 = arith.constant dense<0.000000e+00> : vector<24x64xf32>
    %13 = tpu.matmul %10, %12, %cst_8 {dimension_numbers = #tpu.dot_dimension_numbers<[1], [0], [0], [1], [0, 0, 1, 1], [], []>} : vector<24x128xbf16>, vector<128x64xbf16>, vector<24x64xf32> -> vector<24x64xf32>
    %c0_9 = arith.constant 0 : index
    %c0_10 = arith.constant 0 : index
    %14 = vector.load %arg5[%c0_9, %c0_10] : memref<1x64xf32, #tpu.memory_space<vmem>>, vector<1x64xf32>
    %15 = vector.broadcast %14 : vector<1x64xf32> to vector<24x64xf32>
    %16 = arith.addf %13, %15 : vector<24x64xf32>
    %17 = arith.addf %16, %0 : vector<24x64xf32>
    %cst_11 = arith.constant dense<0.000000e+00> : vector<24xf32>
    %18 = vector.multi_reduction <add>, %17, %cst_11 [1] : vector<24x64xf32> to vector<24xf32>
    %19 = vector.shape_cast %18 : vector<24xf32> to vector<24x1xf32>
    %cst_12 = arith.constant 6.400000e+01 : f32
    %20 = vector.broadcast %cst_12 : f32 to vector<24x1xf32>
    %21 = arith.divf %19, %20 : vector<24x1xf32>
    %22 = vector.broadcast %21 : vector<24x1xf32> to vector<24x64xf32>
    %23 = arith.subf %17, %22 : vector<24x64xf32>
    %24 = arith.mulf %23, %23 : vector<24x64xf32>
    %cst_13 = arith.constant dense<0.000000e+00> : vector<24xf32>
    %25 = vector.multi_reduction <add>, %24, %cst_13 [1] : vector<24x64xf32> to vector<24xf32>
    %26 = vector.shape_cast %25 : vector<24xf32> to vector<24x1xf32>
    %cst_14 = arith.constant 6.400000e+01 : f32
    %27 = vector.broadcast %cst_14 : f32 to vector<24x1xf32>
    %28 = arith.divf %26, %27 : vector<24x1xf32>
    %29 = vector.broadcast %21 : vector<24x1xf32> to vector<24x64xf32>
    %30 = arith.subf %17, %29 : vector<24x64xf32>
    %cst_15 = arith.constant 9.99999974E-6 : f32
    %31 = vector.broadcast %cst_15 : f32 to vector<24x1xf32>
    %32 = arith.addf %28, %31 : vector<24x1xf32>
    %33 = math.rsqrt %32 : vector<24x1xf32>
    %34 = vector.broadcast %33 : vector<24x1xf32> to vector<24x64xf32>
    %35 = arith.mulf %30, %34 : vector<24x64xf32>
    %c0_16 = arith.constant 0 : index
    %c0_17 = arith.constant 0 : index
    %36 = vector.load %arg6[%c0_16, %c0_17] : memref<1x64xf32, #tpu.memory_space<vmem>>, vector<1x64xf32>
    %37 = vector.broadcast %36 : vector<1x64xf32> to vector<24x64xf32>
    %38 = arith.mulf %35, %37 : vector<24x64xf32>
    %c0_18 = arith.constant 0 : index
    %c0_19 = arith.constant 0 : index
    %39 = vector.load %arg7[%c0_18, %c0_19] : memref<1x64xf32, #tpu.memory_space<vmem>>, vector<1x64xf32>
    %40 = vector.broadcast %39 : vector<1x64xf32> to vector<24x64xf32>
    %41 = arith.addf %38, %40 : vector<24x64xf32>
    %c0_20 = arith.constant 0 : index
    %c0_21 = arith.constant 0 : index
    %42 = vector.load %arg8[%c0_20, %c0_21] : memref<24x64xf32, #tpu.memory_space<vmem>>, vector<24x64xf32>
    tpu.vector_store %arg8[%c0_20, %c0_21], %41 {strides = array<i32>} : memref<24x64xf32, #tpu.memory_space<vmem>>, vector<24x64xf32>,
    return
  }
  func.func @transform_0(%arg0: i32) -> (i32, i32) {
    %c0_i32 = arith.constant 0 : i32
    %c0_i32_0 = arith.constant 0 : i32
    return %arg0, %c0_i32 : i32, i32
  }
  func.func @transform_1(%arg0: i32) -> (i32, i32) {
    %c0_i32 = arith.constant 0 : i32
    %c0_i32_0 = arith.constant 0 : i32
    %c0_i32_1 = arith.constant 0 : i32
    return %c0_i32, %c0_i32_0 : i32, i32
  }
  func.func @transform_2(%arg0: i32) -> (i32, i32) {
    %c0_i32 = arith.constant 0 : i32
    %c0_i32_0 = arith.constant 0 : i32
    %c0_i32_1 = arith.constant 0 : i32
    return %c0_i32, %c0_i32_0 : i32, i32
  }
  func.func @transform_3(%arg0: i32) -> (i32, i32) {
    %c0_i32 = arith.constant 0 : i32
    %c0_i32_0 = arith.constant 0 : i32
    %c0_i32_1 = arith.constant 0 : i32
    return %c0_i32, %c0_i32_0 : i32, i32
  }
  func.func @transform_4(%arg0: i32) -> (i32, i32) {
    %c0_i32 = arith.constant 0 : i32
    %c0_i32_0 = arith.constant 0 : i32
    %c0_i32_1 = arith.constant 0 : i32
    return %c0_i32, %c0_i32_0 : i32, i32
  }
  func.func @transform_5(%arg0: i32) -> (i32, i32) {
    %c0_i32 = arith.constant 0 : i32
    %c0_i32_0 = arith.constant 0 : i32
    %c0_i32_1 = arith.constant 0 : i32
    return %c0_i32, %c0_i32_0 : i32, i32
  }
  func.func @transform_6(%arg0: i32) -> (i32, i32) {
    %c0_i32 = arith.constant 0 : i32
    %c0_i32_0 = arith.constant 0 : i32
    %c0_i32_1 = arith.constant 0 : i32
    return %c0_i32, %c0_i32_0 : i32, i32
  }
  func.func @transform_7(%arg0: i32) -> (i32, i32) {
    %c0_i32 = arith.constant 0 : i32
    %c0_i32_0 = arith.constant 0 : i32
    return %arg0, %c0_i32 : i32, i32
  }
}

module attributes {stable_mosaic.version = 11 : i64} {
  func.func @_ln_linear_kernel(%arg0: i32, %arg1: memref<24x64xf32, #tpu.memory_space<vmem>>, %arg2: memref<1x64xf32, #tpu.memory_space<vmem>>, %arg3: memref<1x64xf32, #tpu.memory_space<vmem>>, %arg4: memref<64x4xf32, #tpu.memory_space<vmem>>, %arg5: memref<1x4xf32, #tpu.memory_space<vmem>>, %arg6: memref<24x4xf32, #tpu.memory_space<vmem>>) attributes {dimension_semantics = [#tpu.dimension_semantics<parallel>], iteration_bounds = array<i64: 1>, scalar_prefetch = 0 : i64, scratch_operands = 0 : i64, tpu.core_type = #tpu.core_type<tc>, window_params = [{transform_indices = @transform_0, window_bounds = array<i64: 24, 64>}, {pipeline_mode = #tpu.pipeline_mode<synchronous>, transform_indices = @transform_1, window_bounds = array<i64: 1, 64>}, {pipeline_mode = #tpu.pipeline_mode<synchronous>, transform_indices = @transform_2, window_bounds = array<i64: 1, 64>}, {pipeline_mode = #tpu.pipeline_mode<synchronous>, transform_indices = @transform_3, window_bounds = array<i64: 64, 4>}, {pipeline_mode = #tpu.pipeline_mode<synchronous>, transform_indices = @transform_4, window_bounds = array<i64: 1, 4>}, {transform_indices = @transform_5, window_bounds = array<i64: 24, 4>}]} {
    %c0 = arith.constant 0 : index
    %c0_0 = arith.constant 0 : index
    %0 = vector.load %arg1[%c0, %c0_0] : memref<24x64xf32, #tpu.memory_space<vmem>>, vector<24x64xf32>
    %cst = arith.constant dense<0.000000e+00> : vector<24xf32>
    %1 = vector.multi_reduction <add>, %0, %cst [1] : vector<24x64xf32> to vector<24xf32>
    %2 = vector.shape_cast %1 : vector<24xf32> to vector<24x1xf32>
    %cst_1 = arith.constant 6.400000e+01 : f32
    %3 = vector.broadcast %cst_1 : f32 to vector<24x1xf32>
    %4 = arith.divf %2, %3 : vector<24x1xf32>
    %5 = vector.broadcast %4 : vector<24x1xf32> to vector<24x64xf32>
    %6 = arith.subf %0, %5 : vector<24x64xf32>
    %7 = arith.mulf %6, %6 : vector<24x64xf32>
    %cst_2 = arith.constant dense<0.000000e+00> : vector<24xf32>
    %8 = vector.multi_reduction <add>, %7, %cst_2 [1] : vector<24x64xf32> to vector<24xf32>
    %9 = vector.shape_cast %8 : vector<24xf32> to vector<24x1xf32>
    %cst_3 = arith.constant 6.400000e+01 : f32
    %10 = vector.broadcast %cst_3 : f32 to vector<24x1xf32>
    %11 = arith.divf %9, %10 : vector<24x1xf32>
    %12 = vector.broadcast %4 : vector<24x1xf32> to vector<24x64xf32>
    %13 = arith.subf %0, %12 : vector<24x64xf32>
    %cst_4 = arith.constant 9.99999974E-6 : f32
    %14 = vector.broadcast %cst_4 : f32 to vector<24x1xf32>
    %15 = arith.addf %11, %14 : vector<24x1xf32>
    %16 = math.rsqrt %15 : vector<24x1xf32>
    %17 = vector.broadcast %16 : vector<24x1xf32> to vector<24x64xf32>
    %18 = arith.mulf %13, %17 : vector<24x64xf32>
    %c0_5 = arith.constant 0 : index
    %c0_6 = arith.constant 0 : index
    %19 = vector.load %arg2[%c0_5, %c0_6] : memref<1x64xf32, #tpu.memory_space<vmem>>, vector<1x64xf32>
    %20 = vector.broadcast %19 : vector<1x64xf32> to vector<24x64xf32>
    %21 = arith.mulf %18, %20 : vector<24x64xf32>
    %c0_7 = arith.constant 0 : index
    %c0_8 = arith.constant 0 : index
    %22 = vector.load %arg3[%c0_7, %c0_8] : memref<1x64xf32, #tpu.memory_space<vmem>>, vector<1x64xf32>
    %23 = vector.broadcast %22 : vector<1x64xf32> to vector<24x64xf32>
    %24 = arith.addf %21, %23 : vector<24x64xf32>
    %25 = arith.truncf %24 : vector<24x64xf32> to vector<24x64xbf16>
    %c0_9 = arith.constant 0 : index
    %c0_10 = arith.constant 0 : index
    %26 = vector.load %arg4[%c0_9, %c0_10] : memref<64x4xf32, #tpu.memory_space<vmem>>, vector<64x4xf32>
    %27 = arith.truncf %26 : vector<64x4xf32> to vector<64x4xbf16>
    %cst_11 = arith.constant dense<0.000000e+00> : vector<24x4xf32>
    %28 = tpu.matmul %25, %27, %cst_11 {dimension_numbers = #tpu.dot_dimension_numbers<[1], [0], [0], [1], [0, 0, 1, 1], [], []>} : vector<24x64xbf16>, vector<64x4xbf16>, vector<24x4xf32> -> vector<24x4xf32>
    %c0_12 = arith.constant 0 : index
    %c0_13 = arith.constant 0 : index
    %29 = vector.load %arg5[%c0_12, %c0_13] : memref<1x4xf32, #tpu.memory_space<vmem>>, vector<1x4xf32>
    %30 = vector.broadcast %29 : vector<1x4xf32> to vector<24x4xf32>
    %31 = arith.addf %28, %30 : vector<24x4xf32>
    %c0_14 = arith.constant 0 : index
    %c0_15 = arith.constant 0 : index
    %32 = vector.load %arg6[%c0_14, %c0_15] : memref<24x4xf32, #tpu.memory_space<vmem>>, vector<24x4xf32>
    tpu.vector_store %arg6[%c0_14, %c0_15], %31 {strides = array<i32>} : memref<24x4xf32, #tpu.memory_space<vmem>>, vector<24x4xf32>,
    return
  }
  func.func @transform_0(%arg0: i32) -> (i32, i32) {
    %c0_i32 = arith.constant 0 : i32
    %c0_i32_0 = arith.constant 0 : i32
    return %arg0, %c0_i32 : i32, i32
  }
  func.func @transform_1(%arg0: i32) -> (i32, i32) {
    %c0_i32 = arith.constant 0 : i32
    %c0_i32_0 = arith.constant 0 : i32
    %c0_i32_1 = arith.constant 0 : i32
    return %c0_i32, %c0_i32_0 : i32, i32
  }
  func.func @transform_2(%arg0: i32) -> (i32, i32) {
    %c0_i32 = arith.constant 0 : i32
    %c0_i32_0 = arith.constant 0 : i32
    %c0_i32_1 = arith.constant 0 : i32
    return %c0_i32, %c0_i32_0 : i32, i32
  }
  func.func @transform_3(%arg0: i32) -> (i32, i32) {
    %c0_i32 = arith.constant 0 : i32
    %c0_i32_0 = arith.constant 0 : i32
    %c0_i32_1 = arith.constant 0 : i32
    return %c0_i32, %c0_i32_0 : i32, i32
  }
  func.func @transform_4(%arg0: i32) -> (i32, i32) {
    %c0_i32 = arith.constant 0 : i32
    %c0_i32_0 = arith.constant 0 : i32
    %c0_i32_1 = arith.constant 0 : i32
    return %c0_i32, %c0_i32_0 : i32, i32
  }
  func.func @transform_5(%arg0: i32) -> (i32, i32) {
    %c0_i32 = arith.constant 0 : i32
    %c0_i32_0 = arith.constant 0 : i32
    return %arg0, %c0_i32 : i32, i32
  }
}

</mosaic_0001>

<llo_original>
// kernel: encoder_decoder_forward.16
$region0: #{encoder_decoder_forward.16}
  #allocation0 [shape = 'u32[]', space=smem, size = 0x4, offset = 0x4, fixed_abs, tag = 'smem constant byte address 0x4 - core index']
  #allocation1 [shape = 'u32[144,128]{1,0:T(1,128)}', space=vmem, size = 0x12000, scoped, tag = 'internal scratch']
  %s0 = inlined_call_operand.vmem [shape: f32[32,64], index: 0, kind: input, shape index: {}]
  %s1 = inlined_call_operand.vmem [shape: f32[1,64], index: 1, kind: input, shape index: {}]
  %s2 = inlined_call_operand.vmem [shape: f32[1,64], index: 2, kind: input, shape index: {}]
  %s3 = inlined_call_operand.vmem [shape: f32[32,64], index: 3, kind: output, shape index: {}]
  %s4 = sld [smem:[#allocation0]]
  $region22: #{encoder_decoder_forward.16} parent=0
    _
  %s6 = ssub.s32 1, %s4
  %s7 = scalar_select 0, %s6, %s4
  // Predicated region
  $region2: #{encoder_decoder_forward.16} parent=0 // pred_check
    _
  $region3: #{encoder_decoder_forward.16} parent=0 // pred_check_branch
    %9 = sbr.rel (0) target = $region5
  $region4: #{encoder_decoder_forward.16} parent=0 // pred_region
    _
  $region5: #{encoder_decoder_forward.16} parent=0 // pred_fallthru
    _
  // Predicated region
  $region6: #{encoder_decoder_forward.16} parent=0 // pred_check
    _
  $region7: #{encoder_decoder_forward.16} parent=0 // pred_check_branch
    %11 = sbr.rel (0) target = $region9
  $region8: #{encoder_decoder_forward.16} parent=0 // pred_region
    _
  $region9: #{encoder_decoder_forward.16} parent=0 // pred_fallthru
    _
  // Predicated region
  $region10: #{encoder_decoder_forward.16} parent=0 // pred_check
    _
  $region11: #{encoder_decoder_forward.16} parent=0 // pred_check_branch
    %13 = sbr.rel (0) target = $region13
  $region12: #{encoder_decoder_forward.16} parent=0 // pred_region
    _
  $region13: #{encoder_decoder_forward.16} parent=0 // pred_fallthru
    _
  %v14 = vld [vmem:[%s0] sm:$0xff]
  %v15 = vld [vmem:[%s0 + $0x8] sm:$0xff]
  %v16 = vld [vmem:[%s0 + $0x10] sm:$0xff]
  %v17 = vld [vmem:[%s0 + $0x18] sm:$0xff]
  %vm18 = vcmask 523264
  %v19 = vsel %vm18, %v14, 0.0
  %20 = vadd.xlane.f32.xlu0 %v19
  %v21 = vpop.xlane.xlu0 %20
  %v22 = vsel %vm18, %v15, 0.0
  %23 = vadd.xlane.f32.xlu0 %v22
  %v24 = vpop.xlane.xlu0 %23
  %v25 = vsel %vm18, %v16, 0.0
  %26 = vadd.xlane.f32.xlu0 %v25
  %v27 = vpop.xlane.xlu0 %26
  %v28 = vsel %vm18, %v17, 0.0
  %29 = vadd.xlane.f32.xlu0 %v28
  %v30 = vpop.xlane.xlu0 %29
  %v31 = vrcp.pop 64.0
  %v32 = vmul.f32 %v21, %v31
  %v33 = vmul.f32 %v24, %v31
  %v34 = vmul.f32 %v27, %v31
  %v35 = vmul.f32 %v30, %v31
  %v36 = vsub.f32 %v14, %v32
  %v37 = vsub.f32 %v15, %v33
  %v38 = vsub.f32 %v16, %v34
  %v39 = vsub.f32 %v17, %v35
  %v40 = vmul.f32 %v36, %v36
  %v41 = vmul.f32 %v37, %v37
  %v42 = vmul.f32 %v38, %v38
  %v43 = vmul.f32 %v39, %v39
  %v44 = vsel %vm18, %v40, 0.0
  %45 = vadd.xlane.f32.xlu0 %v44
  %v46 = vpop.xlane.xlu0 %45
  %v47 = vsel %vm18, %v41, 0.0
  %48 = vadd.xlane.f32.xlu0 %v47
  %v49 = vpop.xlane.xlu0 %48
  %v50 = vsel %vm18, %v42, 0.0
  %51 = vadd.xlane.f32.xlu0 %v50
  %v52 = vpop.xlane.xlu0 %51
  %v53 = vsel %vm18, %v43, 0.0
  %54 = vadd.xlane.f32.xlu0 %v53
  %v55 = vpop.xlane.xlu0 %54
  %v56 = vmul.f32 %v46, %v31
  %v57 = vmul.f32 %v49, %v31
  %v58 = vmul.f32 %v52, %v31
  %v59 = vmul.f32 %v55, %v31
  %v60 = vadd.f32 %v56, 1e-05
  %v61 = vadd.f32 %v57, 1e-05
  %v62 = vadd.f32 %v58, 1e-05
  %v63 = vadd.f32 %v59, 1e-05
  %v64 = vrsqrt.pop %v60
  %v65 = vrsqrt.pop %v61
  %v66 = vrsqrt.pop %v62
  %v67 = vrsqrt.pop %v63
  %v68 = vmul.f32 %v36, %v64
  %v69 = vmul.f32 %v37, %v65
  %v70 = vmul.f32 %v38, %v66
  %v71 = vmul.f32 %v39, %v67
  %v72 = vld [vmem:[%s1] sm:$0x1]
  %v74 = vlaneseq
  %v75 = vshrl.u32 %v74, 7
  %v76 = vsub.s32 0, %v75
  %v77 = vrot.slane %v72, %v76
  %v79 = vmul.f32 %v68, %v77
  %v80 = vmul.f32 %v69, %v77
  %v81 = vmul.f32 %v70, %v77
  %v82 = vmul.f32 %v71, %v77
  %v83 = vld [vmem:[%s2] sm:$0x1]
  %v85 = vlaneseq
  %v86 = vshrl.u32 %v85, 7
  %v87 = vsub.s32 0, %v86
  %v88 = vrot.slane %v83, %v87
  %v90 = vadd.f32 %v79, %v88
  %v91 = vadd.f32 %v80, %v88
  %v92 = vadd.f32 %v81, %v88
  %v93 = vadd.f32 %v82, %v88
  %94 = vst.msk [vmem:[%s3] sm:$0xff] %vm18, %v90
  %95 = vst.msk [vmem:[%s3 + $0x8] sm:$0xff] %vm18, %v91
  %96 = vst.msk [vmem:[%s3 + $0x10] sm:$0xff] %vm18, %v92
  %97 = vst.msk [vmem:[%s3 + $0x18] sm:$0xff] %vm18, %v93
  // Predicated region
  $region14: #{encoder_decoder_forward.16} parent=0 // pred_check
    _
  $region15: #{encoder_decoder_forward.16} parent=0 // pred_check_branch
    %99 = sbr.rel (0) target = $region17
  $region16: #{encoder_decoder_forward.16} parent=0 // pred_region
    _
  $region17: #{encoder_decoder_forward.16} parent=0 // pred_fallthru
    _
  // Predicated region
  $region18: #{encoder_decoder_forward.16} parent=0 // pred_check
    _
  $region19: #{encoder_decoder_forward.16} parent=0 // pred_check_branch
    %101 = sbr.rel (0) target = $region21
  $region20: #{encoder_decoder_forward.16} parent=0 // pred_region
    _
  $region21: #{encoder_decoder_forward.16} parent=0 // pred_fallthru
    _

// kernel: encoder_decoder_forward.11
$region0: #{encoder_decoder_forward.11}
  #allocation0 [shape = 'u32[]', space=smem, size = 0x4, offset = 0x4, fixed_abs, tag = 'smem constant byte address 0x4 - core index']
  #allocation1 [shape = 'u32[144,128]{1,0:T(1,128)}', space=vmem, size = 0x12000, scoped, tag = 'internal scratch']
  %s0 = inlined_call_operand.vmem [shape: f32[2,16,12], index: 0, kind: input, shape index: {}]
  %s1 = inlined_call_operand.vmem [shape: f32[2,16,4], index: 1, kind: input, shape index: {}]
  %s2 = inlined_call_operand.vmem [shape: f32[16,64], index: 2, kind: input, shape index: {}]
  %s3 = inlined_call_operand.vmem [shape: f32[12,64], index: 3, kind: input, shape index: {}]
  %s4 = inlined_call_operand.vmem [shape: f32[4,64], index: 4, kind: input, shape index: {}]
  %s5 = inlined_call_operand.vmem [shape: f32[2,16,64], index: 5, kind: output, shape index: {}]
  %s6 = sld [smem:[#allocation0]]
  $region53: #{encoder_decoder_forward.11} parent=0
    _
  %s8 = ssub.s32 1, %s6
  %s9 = scalar_select 0, %s8, %s6
  loop: start=0, step=1, limit=4
  $region2: #{encoder_decoder_forward.11} parent=0 // loop_pre_header
    _
  $region3: #{encoder_decoder_forward.11} parent=0 // loop_header
    %s11 = sphi 0, %s15
    %p12 = scmp.ge.s32.totalorder %s11, 4
    %s21 = sphi 0, %s23
    %s24 = sphi 0, %s21
    %s25 = sphi 0, %s24
    %s41 = sphi 0, %s25
    %s47 = sphi 0, %s49
    %s50 = sphi 0, %s47
    %s51 = sphi 0, %s50
    %s67 = sphi 0, %s51
    %s71 = sphi 0, %s71
    %s73 = sphi 0, %s71
    %s74 = sphi 0, %s73
    %s88 = sphi 0, %s74
    %s92 = sphi 0, %s92
    %s94 = sphi 0, %s92
    %s95 = sphi 0, %s94
    %s109 = sphi 0, %s95
    %s113 = sphi 0, %s113
    %s115 = sphi 0, %s113
    %s116 = sphi 0, %s115
    %s130 = sphi 0, %s116
    %s136 = sphi 0, %s138
    %s139 = sphi 0, %s136
    %s140 = sphi 0, %s139
    %s156 = sphi 0, %s140
  $region4: #{encoder_decoder_forward.11} parent=0 // loop_header_branch
    %14 = sbr.rel (%p12) target = $region8
  $region5: #{encoder_decoder_forward.11} parent=0 // loop_body
    %s16 = ssub.s32 %s11, 1
    %s17 = ssub.s32 %s11, 2
    %s18 = sadd.s32 %s11, 1
    %s19 = ssub.s32 %s11, %s18
    %p20 = scmp.eq.s32.totalorder %s19, 0
    %s22 = sadd.s32 %s21, 1
    %s23 = scalar_select %p20, %s21, %s22
    %p26 = pneg %p20
    %p27 = scmp.eq.s32.totalorder %s11, 1
    %p28 = por %p26, %p27
    %p29 = scmp.ne.s32.totalorder %s21, %s24
    %p30 = scmp.eq.s32.totalorder %s11, 0
    %p31 = por %p29, %p30
    %p32 = scmp.ne.s32.totalorder %s21, %s24
    %p33 = scmp.eq.s32.totalorder %s16, 1
    %p34 = por %p32, %p33
    %p35 = scmp.ne.s32.totalorder %s24, %s25
    %p36 = scmp.eq.s32.totalorder %s16, 0
    %p37 = por %p35, %p36
    %p38 = scmp.ne.s32.totalorder %s24, %s25
    %p39 = scmp.eq.s32.totalorder %s17, 1
    %p40 = por %p38, %p39
    %p42 = scmp.ne.s32.totalorder %s25, %s41
    %p43 = scmp.eq.s32.totalorder %s17, 0
    %p44 = por %p42, %p43
    %s45 = ssub.s32 %s11, %s18
    %p46 = scmp.eq.s32.totalorder %s45, 0
    %s48 = sadd.s32 %s47, 1
    %s49 = scalar_select %p46, %s47, %s48
    %p52 = pneg %p46
    %p53 = scmp.eq.s32.totalorder %s11, 1
    %p54 = por %p52, %p53
    %p55 = scmp.ne.s32.totalorder %s47, %s50
    %p56 = scmp.eq.s32.totalorder %s11, 0
    %p57 = por %p55, %p56
    %p58 = scmp.ne.s32.totalorder %s47, %s50
    %p59 = scmp.eq.s32.totalorder %s16, 1
    %p60 = por %p58, %p59
    %p61 = scmp.ne.s32.totalorder %s50, %s51
    %p62 = scmp.eq.s32.totalorder %s16, 0
    %p63 = por %p61, %p62
    %p64 = scmp.ne.s32.totalorder %s50, %s51
    %p65 = scmp.eq.s32.totalorder %s17, 1
    %p66 = por %p64, %p65
    %p68 = scmp.ne.s32.totalorder %s51, %s67
    %p69 = scmp.eq.s32.totalorder %s17, 0
    %p70 = por %p68, %p69
    %s72 = sadd.s32 %s71, 1
    %p75 = scmp.eq.s32.totalorder %s11, 1
    %p76 = scmp.ne.s32.totalorder %s71, %s73
    %p77 = scmp.eq.s32.totalorder %s11, 0
    %p78 = por %p76, %p77
    %p79 = scmp.ne.s32.totalorder %s71, %s73
    %p80 = scmp.eq.s32.totalorder %s16, 1
    %p81 = por %p79, %p80
    %p82 = scmp.ne.s32.totalorder %s73, %s74
    %p83 = scmp.eq.s32.totalorder %s16, 0
    %p84 = por %p82, %p83
    %p85 = scmp.ne.s32.totalorder %s73, %s74
    %p86 = scmp.eq.s32.totalorder %s17, 1
    %p87 = por %p85, %p86
    %p89 = scmp.ne.s32.totalorder %s74, %s88
    %p90 = scmp.eq.s32.totalorder %s17, 0
    %p91 = por %p89, %p90
    %s93 = sadd.s32 %s92, 1
    %p96 = scmp.eq.s32.totalorder %s11, 1
    %p97 = scmp.ne.s32.totalorder %s92, %s94
    %p98 = scmp.eq.s32.totalorder %s11, 0
    %p99 = por %p97, %p98
    %p100 = scmp.ne.s32.totalorder %s92, %s94
    %p101 = scmp.eq.s32.totalorder %s16, 1
    %p102 = por %p100, %p101
    %p103 = scmp.ne.s32.totalorder %s94, %s95
    %p104 = scmp.eq.s32.totalorder %s16, 0
    %p105 = por %p103, %p104
    %p106 = scmp.ne.s32.totalorder %s94, %s95
    %p107 = scmp.eq.s32.totalorder %s17, 1
    %p108 = por %p106, %p107
    %p110 = scmp.ne.s32.totalorder %s95, %s109
    %p111 = scmp.eq.s32.totalorder %s17, 0
    %p112 = por %p110, %p111
    %s114 = sadd.s32 %s113, 1
    %p117 = scmp.eq.s32.totalorder %s11, 1
    %p118 = scmp.ne.s32.totalorder %s113, %s115
    %p119 = scmp.eq.s32.totalorder %s11, 0
    %p120 = por %p118, %p119
    %p121 = scmp.ne.s32.totalorder %s113, %s115
    %p122 = scmp.eq.s32.totalorder %s16, 1
    %p123 = por %p121, %p122
    %p124 = scmp.ne.s32.totalorder %s115, %s116
    %p125 = scmp.eq.s32.totalorder %s16, 0
    %p126 = por %p124, %p125
    %p127 = scmp.ne.s32.totalorder %s115, %s116
    %p128 = scmp.eq.s32.totalorder %s17, 1
    %p129 = por %p127, %p128
    %p131 = scmp.ne.s32.totalorder %s116, %s130
    %p132 = scmp.eq.s32.totalorder %s17, 0
    %p133 = por %p131, %p132
    %s134 = ssub.s32 %s11, %s18
    %p135 = scmp.eq.s32.totalorder %s134, 0
    %s137 = sadd.s32 %s136, 1
    %s138 = scalar_select %p135, %s136, %s137
    %p141 = pneg %p135
    %p142 = scmp.eq.s32.totalorder %s11, 1
    %p143 = por %p141, %p142
    %p144 = scmp.ne.s32.totalorder %s136, %s139
    %p145 = scmp.eq.s32.totalorder %s11, 0
    %p146 = por %p144, %p145
    %p147 = scmp.ne.s32.totalorder %s136, %s139
    %p148 = scmp.eq.s32.totalorder %s16, 1
    %p149 = por %p147, %p148
    %p150 = scmp.ne.s32.totalorder %s139, %s140
    %p151 = scmp.eq.s32.totalorder %s16, 0
    %p152 = por %p150, %p151
    %p153 = scmp.ne.s32.totalorder %s139, %s140
    %p154 = scmp.eq.s32.totalorder %s17, 1
    %p155 = por %p153, %p154
    %p157 = scmp.ne.s32.totalorder %s140, %s156
    %p158 = scmp.eq.s32.totalorder %s17, 0
    %p159 = por %p157, %p158
    %p160 = scmp.le.s32.totalorder 1, %s11
    %p161 = scmp.lt.s32.totalorder %s11, 3
    %p162 = pnand %p160, %p161
    %p163 = pneg %p162
    // Predicated region
    $region9: #{encoder_decoder_forward.11} parent=5 // pred_check
      _
    $region10: #{encoder_decoder_forward.11} parent=5 // pred_check_branch
      %165 = sbr.rel (%p162) target = $region12
    $region11: #{encoder_decoder_forward.11} parent=5 // pred_region
      %s166 = ssub.s32 %s11, 1
      // Predicated region
      $region13: #{encoder_decoder_forward.11} parent=11 // pred_check
        %p167 = pneg %p84
      $region14: #{encoder_decoder_forward.11} parent=11 // pred_check_branch
        %169 = sbr.rel (%p167) target = $region16
      $region15: #{encoder_decoder_forward.11} parent=11 // pred_region
        _
      $region16: #{encoder_decoder_forward.11} parent=11 // pred_fallthru
        _
      // Predicated region
      $region17: #{encoder_decoder_forward.11} parent=11 // pred_check
        %p170 = pneg %p105
      $region18: #{encoder_decoder_forward.11} parent=11 // pred_check_branch
        %172 = sbr.rel (%p170) target = $region20
      $region19: #{encoder_decoder_forward.11} parent=11 // pred_region
        _
      $region20: #{encoder_decoder_forward.11} parent=11 // pred_fallthru
        _
      // Predicated region
      $region21: #{encoder_decoder_forward.11} parent=11 // pred_check
        %p173 = pneg %p126
      $region22: #{encoder_decoder_forward.11} parent=11 // pred_check_branch
        %175 = sbr.rel (%p173) target = $region24
      $region23: #{encoder_decoder_forward.11} parent=11 // pred_region
        _
      $region24: #{encoder_decoder_forward.11} parent=11 // pred_fallthru
        _
    $region12: #{encoder_decoder_forward.11} parent=5 // pred_fallthru
      _
    %p176 = scmp.lt.s32.totalorder %s11, 2
    // Predicated region
    $region25: #{encoder_decoder_forward.11} parent=5 // pred_check
      %p177 = pneg %p176
    $region26: #{encoder_decoder_forward.11} parent=5 // pred_check_branch
      %179 = sbr.rel (%p177) target = $region28
    $region27: #{encoder_decoder_forward.11} parent=5 // pred_region
      // Predicated region
      $region29: #{encoder_decoder_forward.11} parent=27 // pred_check
        %p180 = pneg %p31
      $region30: #{encoder_decoder_forward.11} parent=27 // pred_check_branch
        %182 = sbr.rel (%p180) target = $region32
      $region31: #{encoder_decoder_forward.11} parent=27 // pred_region
        %p183 = scmp.lt.s32.totalorder %s11, 1
        %s184 = scalar_select %p183, %s11, 1
        %s185 = smul.addr %s184, 2
        %s186 = smul.addr %s185, 8
        %s187 = scalar_lea.vmem %s0, %s186
      $region32: #{encoder_decoder_forward.11} parent=27 // pred_fallthru
        _
      // Predicated region
      $region33: #{encoder_decoder_forward.11} parent=27 // pred_check
        %p188 = pneg %p57
      $region34: #{encoder_decoder_forward.11} parent=27 // pred_check_branch
        %190 = sbr.rel (%p188) target = $region36
      $region35: #{encoder_decoder_forward.11} parent=27 // pred_region
        %p191 = scmp.lt.s32.totalorder %s11, 1
        %s192 = scalar_select %p191, %s11, 1
        %s193 = smul.addr %s192, 2
        %s194 = smul.addr %s193, 8
        %s195 = scalar_lea.vmem %s1, %s194
      $region36: #{encoder_decoder_forward.11} parent=27 // pred_fallthru
        _
    $region28: #{encoder_decoder_forward.11} parent=5 // pred_fallthru
      _
    %p196 = scmp.le.s32.totalorder 1, %s11
    %p197 = scmp.lt.s32.totalorder %s11, 3
    %p198 = pnand %p196, %p197
    %p199 = pneg %p198
    // Predicated region
    $region37: #{encoder_decoder_forward.11} parent=5 // pred_check
      _
    $region38: #{encoder_decoder_forward.11} parent=5 // pred_check_branch
      %201 = sbr.rel (%p198) target = $region40
    $region39: #{encoder_decoder_forward.11} parent=5 // pred_region
      %s202 = ssub.s32 %s11, 1
      %p203 = scmp.lt.s32.totalorder %s16, 1
      %s204 = scalar_select %p203, %s16, 1
      %s205 = smul.addr %s204, 2
      %s206 = smul.addr %s205, 8
      %s207 = scalar_lea.vmem %s0, %s206
      %p208 = pneg %p37
      %p209 = pneg %p34
      %p210 = scmp.lt.s32.totalorder %s16, 1
      %s211 = scalar_select %p210, %s16, 1
      %s212 = smul.addr %s211, 2
      %s213 = smul.addr %s212, 8
      %s214 = scalar_lea.vmem %s1, %s213
      %p215 = pneg %p63
      %p216 = pneg %p60
      %p217 = pneg %p84
      %p218 = pneg %p81
      %p219 = pneg %p105
      %p220 = pneg %p102
      %p221 = pneg %p126
      %p222 = pneg %p123
      %p223 = pneg %p152
      %p224 = pneg %p149
      %p225 = scmp.lt.s32.totalorder %s16, 1
      %s226 = scalar_select %p225, %s16, 1
      %s227 = smul.addr %s226, 2
      %s228 = smul.addr %s227, 8
      %s229 = scalar_lea.vmem %s5, %s228
      %p230 = scmp.lt.s32.totalorder %s16, 1
      %s231 = scalar_select %p230, %s16, 1
      %s232 = smul.addr %s231, 2
      %s233 = smul.addr %s232, 8
      %s234 = scalar_lea.vmem %s0, %s233
      %p235 = scmp.lt.s32.totalorder %s16, 1
      %s236 = scalar_select %p235, %s16, 1
      %s237 = smul.addr %s236, 2
      %s238 = smul.addr %s237, 8
      %s239 = scalar_lea.vmem %s1, %s238
      %p240 = scmp.lt.s32.totalorder %s16, 1
      %s241 = scalar_select %p240, %s16, 1
      %s242 = smul.addr %s241, 2
      %s243 = smul.addr %s242, 8
      %s244 = scalar_lea.vmem %s5, %s243
      %v246 = vld [vmem:[%s234] sm:$0xff]
      %v247 = vld [vmem:[%s234 + $0x8] sm:$0xff]
      %v248 = vpack.c.bf16 %v247, %v246
      %v249 = vld [vmem:[%s239] sm:$0xff]
      %v250 = vld [vmem:[%s239 + $0x8] sm:$0xff]
      %v251 = vpack.c.bf16 %v250, %v249
      %v252 = vld [vmem:[%s3] sm:$0xff]
      %v253 = vld [vmem:[%s3 + $0x8] sm:$0xf]
      %v254 = vpack.c.bf16 %v253, %v252
      %v255 = vld [vmem:[%s4] sm:$0xf]
      %v256 = vpack.c.bf16 %v255, %v255
      %vm257 = vcmask 31744
      %v259 = vsel %vm257, %v251, 0
      %vm261 = vcmask 1041408
      %v263 = vsel %vm261, %v256, 0
      %265 = vmatprep.subr.bf16.mxu0 0
      %266 = vmatpush1.bf16.msra.mxu0 %v263
      %267 = vmatprep.subr.bf16.mxu0 0
      %268 = vmatpush1.bf16.msra.mxu0 0
      %269 = vmatprep.subr.bf16.mxu0 0
      %270 = vmatpush1.bf16.msra.mxu0 0
      %271 = vmatprep.subr.bf16.mxu0 0
      %272 = vmatpush1.bf16.msra.mxu0 0
      %273 = vmatprep.subr.bf16.mxu0 0
      %274 = vmatpush1.bf16.msra.mxu0 0
      %275 = vmatprep.subr.bf16.mxu0 0
      %276 = vmatpush1.bf16.msra.mxu0 0
      %277 = vmatprep.subr.bf16.mxu0 0
      %278 = vmatpush1.bf16.msra.mxu0 0
      %279 = vmatprep.subr.bf16.mxu0 0
      %280 = vmatpush1.bf16.msra.mxu0 0
      %281 = vmatprep.subr.bf16.mxu0 0
      %282 = vmatpush1.bf16.msra.mxu0 0
      %283 = vmatprep.subr.bf16.mxu0 0
      %284 = vmatpush1.bf16.msra.mxu0 0
      %285 = vmatprep.subr.bf16.mxu0 0
      %286 = vmatpush1.bf16.msra.mxu0 0
      %287 = vmatprep.subr.bf16.mxu0 0
      %288 = vmatpush1.bf16.msra.mxu0 0
      %289 = vmatprep.subr.bf16.mxu0 0
      %290 = vmatpush1.bf16.msra.mxu0 0
      %291 = vmatprep.subr.bf16.mxu0 0
      %292 = vmatpush1.bf16.msra.mxu0 0
      %293 = vmatprep.subr.bf16.mxu0 0
      %294 = vmatpush1.bf16.msra.mxu0 0
      %295 = vmatprep.subr.bf16.mxu0 0
      %296 = vmatpush1.bf16.msra.mxu0 0
      %297 = vmatprep.mubr.bf16.mxu0 0
      %298 = vmatmul.mubr.bf16.gmra.mrb[0].mxu0 %v259
      %v299 = vpop.f32.mrb[0].mxu0
      %v300 = vadd.f32 0.0, %v299
      %v301 = vpop.f32.mrb[0].mxu0
      %v302 = vpop.f32.mrb[0].mxu0
      %v303 = vadd.f32 0.0, %v302
      %v304 = vpop.f32.mrb[0].mxu0
      %305 = vdwg.mxu0
      %vm306 = vcmask 97280
      %v308 = vsel %vm306, %v248, 0
      %vm310 = vcmask 1045504
      %v312 = vsel %vm310, %v254, 0
      %314 = vmatprep.subr.bf16.mxu0 0
      %315 = vmatpush1.bf16.msra.mxu0 %v312
      %316 = vmatprep.subr.bf16.mxu0 0
      %317 = vmatpush1.bf16.msra.mxu0 0
      %318 = vmatprep.subr.bf16.mxu0 0
      %319 = vmatpush1.bf16.msra.mxu0 0
      %320 = vmatprep.subr.bf16.mxu0 0
      %321 = vmatpush1.bf16.msra.mxu0 0
      %322 = vmatprep.subr.bf16.mxu0 0
      %323 = vmatpush1.bf16.msra.mxu0 0
      %324 = vmatprep.subr.bf16.mxu0 0
      %325 = vmatpush1.bf16.msra.mxu0 0
      %326 = vmatprep.subr.bf16.mxu0 0
      %327 = vmatpush1.bf16.msra.mxu0 0
      %328 = vmatprep.subr.bf16.mxu0 0
      %329 = vmatpush1.bf16.msra.mxu0 0
      %330 = vmatprep.subr.bf16.mxu0 0
      %331 = vmatpush1.bf16.msra.mxu0 0
      %332 = vmatprep.subr.bf16.mxu0 0
      %333 = vmatpush1.bf16.msra.mxu0 0
      %334 = vmatprep.subr.bf16.mxu0 0
      %335 = vmatpush1.bf16.msra.mxu0 0
      %336 = vmatprep.subr.bf16.mxu0 0
      %337 = vmatpush1.bf16.msra.mxu0 0
      %338 = vmatprep.subr.bf16.mxu0 0
      %339 = vmatpush1.bf16.msra.mxu0 0
      %340 = vmatprep.subr.bf16.mxu0 0
      %341 = vmatpush1.bf16.msra.mxu0 0
      %342 = vmatprep.subr.bf16.mxu0 0
      %343 = vmatpush1.bf16.msra.mxu0 0
      %344 = vmatprep.subr.bf16.mxu0 0
      %345 = vmatpush1.bf16.msra.mxu0 0
      %346 = vmatprep.mubr.bf16.mxu0 0
      %347 = vmatmul.mubr.bf16.gmra.mrb[0].mxu0 %v308
      %v348 = vpop.f32.mrb[0].mxu0
      %v349 = vadd.f32 %v300, %v348
      %v350 = vpop.f32.mrb[0].mxu0
      %v351 = vpop.f32.mrb[0].mxu0
      %v352 = vadd.f32 %v303, %v351
      %v353 = vpop.f32.mrb[0].mxu0
      %354 = vdwg.mxu0
      %v355 = vld [vmem:[%s2] sm:$0xff]
      %v356 = vld [vmem:[%s2 + $0x8] sm:$0xff]
      %v357 = vadd.f32 %v349, %v355
      %v358 = vadd.f32 %v352, %v356
      %vm359 = vcmask 523264
      %360 = vst.msk [vmem:[%s244] sm:$0xff] %vm359, %v357
      %361 = vst.msk [vmem:[%s244 + $0x8] sm:$0xff] %vm359, %v358
      %p362 = scmp.lt.s32.totalorder %s16, 1
      %s363 = scalar_select %p362, %s16, 1
      %s364 = smul.addr %s363, 2
      %s365 = smul.addr %s364, 8
      %s366 = scalar_lea.vmem %s5, %s365
      // Predicated region
      $region41: #{encoder_decoder_forward.11} parent=39 // pred_check
        %p367 = pneg %p149
      $region42: #{encoder_decoder_forward.11} parent=39 // pred_check_branch
        %369 = sbr.rel (%p367) target = $region44
      $region43: #{encoder_decoder_forward.11} parent=39 // pred_region
        _
      $region44: #{encoder_decoder_forward.11} parent=39 // pred_fallthru
        _
    $region40: #{encoder_decoder_forward.11} parent=5 // pred_fallthru
      _
    %p370 = scmp.le.s32.totalorder 2, %s11
    // Predicated region
    $region45: #{encoder_decoder_forward.11} parent=5 // pred_check
      %p371 = pneg %p370
    $region46: #{encoder_decoder_forward.11} parent=5 // pred_check_branch
      %373 = sbr.rel (%p371) target = $region48
    $region47: #{encoder_decoder_forward.11} parent=5 // pred_region
      %s374 = ssub.s32 %s11, 2
      // Predicated region
      $region49: #{encoder_decoder_forward.11} parent=47 // pred_check
        %p375 = pneg %p155
      $region50: #{encoder_decoder_forward.11} parent=47 // pred_check_branch
        %377 = sbr.rel (%p375) target = $region52
      $region51: #{encoder_decoder_forward.11} parent=47 // pred_region
        %p378 = scmp.lt.s32.totalorder %s17, 1
        %s379 = scalar_select %p378, %s17, 1
        %s380 = smul.addr %s379, 2
        %s381 = smul.addr %s380, 8
        %s382 = scalar_lea.vmem %s5, %s381
      $region52: #{encoder_decoder_forward.11} parent=47 // pred_fallthru
        _
    $region48: #{encoder_decoder_forward.11} parent=5 // pred_fallthru
      _
  $region6: #{encoder_decoder_forward.11} parent=0 // loop_footer
    %s15 = sadd.s32 1, %s11
  $region7: #{encoder_decoder_forward.11} parent=0 // loop_footer_branch
    %10 = sbr.rel target = $region3
  $region8: #{encoder_decoder_forward.11} parent=0 // loop_exit
    _

// kernel: encoder_decoder_forward.13
$region0: #{encoder_decoder_forward.13}
  #allocation0 [shape = 'u32[]', space=smem, size = 0x4, offset = 0x4, fixed_abs, tag = 'smem constant byte address 0x4 - core index']
  #allocation1 [shape = 'u32[144,128]{1,0:T(1,128)}', space=vmem, size = 0x12000, scoped, tag = 'internal scratch']
  %s0 = inlined_call_operand.vmem [shape: f32[32,64], index: 0, kind: input, shape index: {}]
  %s1 = inlined_call_operand.vmem [shape: f32[64,128], index: 1, kind: input, shape index: {}]
  %s2 = inlined_call_operand.vmem [shape: f32[1,128], index: 2, kind: input, shape index: {}]
  %s3 = inlined_call_operand.vmem [shape: f32[128,64], index: 3, kind: input, shape index: {}]
  %s4 = inlined_call_operand.vmem [shape: f32[1,64], index: 4, kind: input, shape index: {}]
  %s5 = inlined_call_operand.vmem [shape: f32[1,64], index: 5, kind: input, shape index: {}]
  %s6 = inlined_call_operand.vmem [shape: f32[1,64], index: 6, kind: input, shape index: {}]
  %s7 = inlined_call_operand.vmem [shape: f32[32,64], index: 7, kind: output, shape index: {}]
  %s8 = sld [smem:[#allocation0]]
  $region38: #{encoder_decoder_forward.13} parent=0
    _
  %s10 = ssub.s32 1, %s8
  %s11 = scalar_select 0, %s10, %s8
  // Predicated region
  $region2: #{encoder_decoder_forward.13} parent=0 // pred_check
    _
  $region3: #{encoder_decoder_forward.13} parent=0 // pred_check_branch
    %13 = sbr.rel (0) target = $region5
  $region4: #{encoder_decoder_forward.13} parent=0 // pred_region
    _
  $region5: #{encoder_decoder_forward.13} parent=0 // pred_fallthru
    _
  // Predicated region
  $region6: #{encoder_decoder_forward.13} parent=0 // pred_check
    _
  $region7: #{encoder_decoder_forward.13} parent=0 // pred_check_branch
    %15 = sbr.rel (0) target = $region9
  $region8: #{encoder_decoder_forward.13} parent=0 // pred_region
    _
  $region9: #{encoder_decoder_forward.13} parent=0 // pred_fallthru
    _
  // Predicated region
  $region10: #{encoder_decoder_forward.13} parent=0 // pred_check
    _
  $region11: #{encoder_decoder_forward.13} parent=0 // pred_check_branch
    %17 = sbr.rel (0) target = $region13
  $region12: #{encoder_decoder_forward.13} parent=0 // pred_region
    _
  $region13: #{encoder_decoder_forward.13} parent=0 // pred_fallthru
    _
  // Predicated region
  $region14: #{encoder_decoder_forward.13} parent=0 // pred_check
    _
  $region15: #{encoder_decoder_forward.13} parent=0 // pred_check_branch
    %19 = sbr.rel (0) target = $region17
  $region16: #{encoder_decoder_forward.13} parent=0 // pred_region
    _
  $region17: #{encoder_decoder_forward.13} parent=0 // pred_fallthru
    _
  // Predicated region
  $region18: #{encoder_decoder_forward.13} parent=0 // pred_check
    _
  $region19: #{encoder_decoder_forward.13} parent=0 // pred_check_branch
    %21 = sbr.rel (0) target = $region21
  $region20: #{encoder_decoder_forward.13} parent=0 // pred_region
    _
  $region21: #{encoder_decoder_forward.13} parent=0 // pred_fallthru
    _
  // Predicated region
  $region22: #{encoder_decoder_forward.13} parent=0 // pred_check
    _
  $region23: #{encoder_decoder_forward.13} parent=0 // pred_check_branch
    %23 = sbr.rel (0) target = $region25
  $region24: #{encoder_decoder_forward.13} parent=0 // pred_region
    _
  $region25: #{encoder_decoder_forward.13} parent=0 // pred_fallthru
    _
  // Predicated region
  $region26: #{encoder_decoder_forward.13} parent=0 // pred_check
    _
  $region27: #{encoder_decoder_forward.13} parent=0 // pred_check_branch
    %25 = sbr.rel (0) target = $region29
  $region28: #{encoder_decoder_forward.13} parent=0 // pred_region
    _
  $region29: #{encoder_decoder_forward.13} parent=0 // pred_fallthru
    _
  %v27 = vld [vmem:[%s0] sm:$0xff]
  %v28 = vld [vmem:[%s0 + $0x8] sm:$0xff]
  %v29 = vld [vmem:[%s0 + $0x10] sm:$0xff]
  %v30 = vld [vmem:[%s0 + $0x18] sm:$0xff]
  %v31 = vpack.c.bf16 %v28, %v27
  %v32 = vpack.c.bf16 %v30, %v29
  %v33 = vld [vmem:[%s1] sm:$0xff]
  %v34 = vld [vmem:[%s1 + $0x8] sm:$0xff]
  %v35 = vld [vmem:[%s1 + $0x10] sm:$0xff]
  %v36 = vld [vmem:[%s1 + $0x18] sm:$0xff]
  %v37 = vld [vmem:[%s1 + $0x20] sm:$0xff]
  %v38 = vld [vmem:[%s1 + $0x28] sm:$0xff]
  %v39 = vld [vmem:[%s1 + $0x30] sm:$0xff]
  %v40 = vld [vmem:[%s1 + $0x38] sm:$0xff]
  %v41 = vpack.c.bf16 %v34, %v33
  %v42 = vpack.c.bf16 %v36, %v35
  %v43 = vpack.c.bf16 %v38, %v37
  %v44 = vpack.c.bf16 %v40, %v39
  %v45 = vld [vmem:[%s2] sm:$0x1]
  %v47 = vlaneseq
  %v48 = vshrl.u32 %v47, 7
  %v49 = vsub.s32 0, %v48
  %v50 = vrot.slane %v45, %v49
  %vm52 = vcmask 523264
  %v54 = vsel %vm52, %v31, 0
  %v57 = vsel %vm52, %v32, 0
  %59 = vmatprep.subr.bf16.mxu0 0
  %60 = vmatpush1.bf16.msra.mxu0 %v41
  %61 = vmatprep.subr.bf16.mxu0 0
  %62 = vmatpush1.bf16.msra.mxu0 %v42
  %63 = vmatprep.subr.bf16.mxu0 0
  %64 = vmatpush1.bf16.msra.mxu0 %v43
  %65 = vmatprep.subr.bf16.mxu0 0
  %66 = vmatpush1.bf16.msra.mxu0 %v44
  %67 = vmatprep.subr.bf16.mxu0 0
  %68 = vmatpush1.bf16.msra.mxu0 0
  %69 = vmatprep.subr.bf16.mxu0 0
  %70 = vmatpush1.bf16.msra.mxu0 0
  %71 = vmatprep.subr.bf16.mxu0 0
  %72 = vmatpush1.bf16.msra.mxu0 0
  %73 = vmatprep.subr.bf16.mxu0 0
  %74 = vmatpush1.bf16.msra.mxu0 0
  %75 = vmatprep.subr.bf16.mxu0 0
  %76 = vmatpush1.bf16.msra.mxu0 0
  %77 = vmatprep.subr.bf16.mxu0 0
  %78 = vmatpush1.bf16.msra.mxu0 0
  %79 = vmatprep.subr.bf16.mxu0 0
  %80 = vmatpush1.bf16.msra.mxu0 0
  %81 = vmatprep.subr.bf16.mxu0 0
  %82 = vmatpush1.bf16.msra.mxu0 0
  %83 = vmatprep.subr.bf16.mxu0 0
  %84 = vmatpush1.bf16.msra.mxu0 0
  %85 = vmatprep.subr.bf16.mxu0 0
  %86 = vmatpush1.bf16.msra.mxu0 0
  %87 = vmatprep.subr.bf16.mxu0 0
  %88 = vmatpush1.bf16.msra.mxu0 0
  %89 = vmatprep.subr.bf16.mxu0 0
  %90 = vmatpush1.bf16.msra.mxu0 0
  %91 = vmatprep.mubr.bf16.mxu0 0
  %92 = vmatmul.mubr.bf16.gmra.mrb[0].mxu0 %v54
  %v93 = vpop.f32.mrb[0].mxu0
  %v94 = vadd.f32 %v50, %v93
  %v95 = vpop.f32.mrb[0].mxu0
  %v96 = vpop.f32.mrb[0].mxu0
  %v97 = vadd.f32 %v50, %v96
  %v98 = vpop.f32.mrb[0].mxu0
  %99 = vmatprep.mubr.bf16.mxu0 0
  %100 = vmatmul.mubr.bf16.gmra.mrb[0].mxu0 %v57
  %v101 = vpop.f32.mrb[0].mxu0
  %v102 = vadd.f32 %v50, %v101
  %v103 = vpop.f32.mrb[0].mxu0
  %v104 = vpop.f32.mrb[0].mxu0
  %v105 = vadd.f32 %v50, %v104
  %v106 = vpop.f32.mrb[0].mxu0
  %107 = vdwg.mxu0
  %v108 = vmax.f32 %v94, 0.0
  %v109 = vmax.f32 %v97, 0.0
  %v110 = vmax.f32 %v102, 0.0
  %v111 = vmax.f32 %v105, 0.0
  %v112 = vpack.c.bf16 %v109, %v108
  %v113 = vpack.c.bf16 %v111, %v110
  %v114 = vld [vmem:[%s3] sm:$0xff]
  %v115 = vld [vmem:[%s3 + $0x8] sm:$0xff]
  %v116 = vld [vmem:[%s3 + $0x10] sm:$0xff]
  %v117 = vld [vmem:[%s3 + $0x18] sm:$0xff]
  %v118 = vld [vmem:[%s3 + $0x20] sm:$0xff]
  %v119 = vld [vmem:[%s3 + $0x28] sm:$0xff]
  %v120 = vld [vmem:[%s3 + $0x30] sm:$0xff]
  %v121 = vld [vmem:[%s3 + $0x38] sm:$0xff]
  %v122 = vld [vmem:[%s3 + $0x40] sm:$0xff]
  %v123 = vld [vmem:[%s3 + $0x48] sm:$0xff]
  %v124 = vld [vmem:[%s3 + $0x50] sm:$0xff]
  %v125 = vld [vmem:[%s3 + $0x58] sm:$0xff]
  %v126 = vld [vmem:[%s3 + $0x60] sm:$0xff]
  %v127 = vld [vmem:[%s3 + $0x68] sm:$0xff]
  %v128 = vld [vmem:[%s3 + $0x70] sm:$0xff]
  %v129 = vld [vmem:[%s3 + $0x78] sm:$0xff]
  %v130 = vpack.c.bf16 %v115, %v114
  %v131 = vpack.c.bf16 %v117, %v116
  %v132 = vpack.c.bf16 %v119, %v118
  %v133 = vpack.c.bf16 %v121, %v120
  %v134 = vpack.c.bf16 %v123, %v122
  %v135 = vpack.c.bf16 %v125, %v124
  %v136 = vpack.c.bf16 %v127, %v126
  %v137 = vpack.c.bf16 %v129, %v128
  %v138 = vld [vmem:[%s4] sm:$0x1]
  %v140 = vlaneseq
  %v141 = vshrl.u32 %v140, 7
  %v142 = vsub.s32 0, %v141
  %v143 = vrot.slane %v138, %v142
  %145 = vmatprep.subr.bf16.mxu0 0
  %146 = vmatpush1.bf16.msra.mxu0 %v130
  %147 = vmatprep.subr.bf16.mxu0 0
  %148 = vmatpush1.bf16.msra.mxu0 %v131
  %149 = vmatprep.subr.bf16.mxu0 0
  %150 = vmatpush1.bf16.msra.mxu0 %v132
  %151 = vmatprep.subr.bf16.mxu0 0
  %152 = vmatpush1.bf16.msra.mxu0 %v133
  %153 = vmatprep.subr.bf16.mxu0 0
  %154 = vmatpush1.bf16.msra.mxu0 %v134
  %155 = vmatprep.subr.bf16.mxu0 0
  %156 = vmatpush1.bf16.msra.mxu0 %v135
  %157 = vmatprep.subr.bf16.mxu0 0
  %158 = vmatpush1.bf16.msra.mxu0 %v136
  %159 = vmatprep.subr.bf16.mxu0 0
  %160 = vmatpush1.bf16.msra.mxu0 %v137
  %161 = vmatprep.subr.bf16.mxu0 0
  %162 = vmatpush1.bf16.msra.mxu0 0
  %163 = vmatprep.subr.bf16.mxu0 0
  %164 = vmatpush1.bf16.msra.mxu0 0
  %165 = vmatprep.subr.bf16.mxu0 0
  %166 = vmatpush1.bf16.msra.mxu0 0
  %167 = vmatprep.subr.bf16.mxu0 0
  %168 = vmatpush1.bf16.msra.mxu0 0
  %169 = vmatprep.subr.bf16.mxu0 0
  %170 = vmatpush1.bf16.msra.mxu0 0
  %171 = vmatprep.subr.bf16.mxu0 0
  %172 = vmatpush1.bf16.msra.mxu0 0
  %173 = vmatprep.subr.bf16.mxu0 0
  %174 = vmatpush1.bf16.msra.mxu0 0
  %175 = vmatprep.subr.bf16.mxu0 0
  %176 = vmatpush1.bf16.msra.mxu0 0
  %177 = vmatprep.mubr.bf16.mxu0 0
  %178 = vmatmul.mubr.bf16.gmra.mrb[0].mxu0 %v112
  %v179 = vpop.f32.mrb[0].mxu0
  %v180 = vadd.f32 %v143, %v179
  %v181 = vpop.f32.mrb[0].mxu0
  %v182 = vpop.f32.mrb[0].mxu0
  %v183 = vadd.f32 %v143, %v182
  %v184 = vpop.f32.mrb[0].mxu0
  %185 = vmatprep.mubr.bf16.mxu0 0
  %186 = vmatmul.mubr.bf16.gmra.mrb[0].mxu0 %v113
  %v187 = vpop.f32.mrb[0].mxu0
  %v188 = vadd.f32 %v143, %v187
  %v189 = vpop.f32.mrb[0].mxu0
  %v190 = vpop.f32.mrb[0].mxu0
  %v191 = vadd.f32 %v143, %v190
  %v192 = vpop.f32.mrb[0].mxu0
  %193 = vdwg.mxu0
  %v194 = vadd.f32 %v180, %v27
  %v195 = vadd.f32 %v183, %v28
  %v196 = vadd.f32 %v188, %v29
  %v197 = vadd.f32 %v191, %v30
  %v198 = vsel %vm52, %v194, 0.0
  %199 = vadd.xlane.f32.xlu0 %v198
  %v200 = vpop.xlane.xlu0 %199
  %v201 = vsel %vm52, %v195, 0.0
  %202 = vadd.xlane.f32.xlu0 %v201
  %v203 = vpop.xlane.xlu0 %202
  %v204 = vsel %vm52, %v196, 0.0
  %205 = vadd.xlane.f32.xlu0 %v204
  %v206 = vpop.xlane.xlu0 %205
  %v207 = vsel %vm52, %v197, 0.0
  %208 = vadd.xlane.f32.xlu0 %v207
  %v209 = vpop.xlane.xlu0 %208
  %v210 = vrcp.pop 64.0
  %v211 = vmul.f32 %v200, %v210
  %v212 = vmul.f32 %v203, %v210
  %v213 = vmul.f32 %v206, %v210
  %v214 = vmul.f32 %v209, %v210
  %v215 = vsub.f32 %v194, %v211
  %v216 = vsub.f32 %v195, %v212
  %v217 = vsub.f32 %v196, %v213
  %v218 = vsub.f32 %v197, %v214
  %v219 = vmul.f32 %v215, %v215
  %v220 = vmul.f32 %v216, %v216
  %v221 = vmul.f32 %v217, %v217
  %v222 = vmul.f32 %v218, %v218
  %v223 = vsel %vm52, %v219, 0.0
  %224 = vadd.xlane.f32.xlu0 %v223
  %v225 = vpop.xlane.xlu0 %224
  %v226 = vsel %vm52, %v220, 0.0
  %227 = vadd.xlane.f32.xlu0 %v226
  %v228 = vpop.xlane.xlu0 %227
  %v229 = vsel %vm52, %v221, 0.0
  %230 = vadd.xlane.f32.xlu0 %v229
  %v231 = vpop.xlane.xlu0 %230
  %v232 = vsel %vm52, %v222, 0.0
  %233 = vadd.xlane.f32.xlu0 %v232
  %v234 = vpop.xlane.xlu0 %233
  %v235 = vmul.f32 %v225, %v210
  %v236 = vmul.f32 %v228, %v210
  %v237 = vmul.f32 %v231, %v210
  %v238 = vmul.f32 %v234, %v210
  %v239 = vadd.f32 %v235, 1e-05
  %v240 = vadd.f32 %v236, 1e-05
  %v241 = vadd.f32 %v237, 1e-05
  %v242 = vadd.f32 %v238, 1e-05
  %v243 = vrsqrt.pop %v239
  %v244 = vrsqrt.pop %v240
  %v245 = vrsqrt.pop %v241
  %v246 = vrsqrt.pop %v242
  %v247 = vmul.f32 %v215, %v243
  %v248 = vmul.f32 %v216, %v244
  %v249 = vmul.f32 %v217, %v245
  %v250 = vmul.f32 %v218, %v246
  %v251 = vld [vmem:[%s5] sm:$0x1]
  %v253 = vlaneseq
  %v254 = vshrl.u32 %v253, 7
  %v255 = vsub.s32 0, %v254
  %v256 = vrot.slane %v251, %v255
  %v258 = vmul.f32 %v247, %v256
  %v259 = vmul.f32 %v248, %v256
  %v260 = vmul.f32 %v249, %v256
  %v261 = vmul.f32 %v250, %v256
  %v262 = vld [vmem:[%s6] sm:$0x1]
  %v264 = vlaneseq
  %v265 = vshrl.u32 %v264, 7
  %v266 = vsub.s32 0, %v265
  %v267 = vrot.slane %v262, %v266
  %v269 = vadd.f32 %v258, %v267
  %v270 = vadd.f32 %v259, %v267
  %v271 = vadd.f32 %v260, %v267
  %v272 = vadd.f32 %v261, %v267
  %273 = vst.msk [vmem:[%s7] sm:$0xff] %vm52, %v269
  %274 = vst.msk [vmem:[%s7 + $0x8] sm:$0xff] %vm52, %v270
  %275 = vst.msk [vmem:[%s7 + $0x10] sm:$0xff] %vm52, %v271
  %276 = vst.msk [vmem:[%s7 + $0x18] sm:$0xff] %vm52, %v272
  // Predicated region
  $region30: #{encoder_decoder_forward.13} parent=0 // pred_check
    _
  $region31: #{encoder_decoder_forward.13} parent=0 // pred_check_branch
    %278 = sbr.rel (0) target = $region33
  $region32: #{encoder_decoder_forward.13} parent=0 // pred_region
    _
  $region33: #{encoder_decoder_forward.13} parent=0 // pred_fallthru
    _
  // Predicated region
  $region34: #{encoder_decoder_forward.13} parent=0 // pred_check
    _
  $region35: #{encoder_decoder_forward.13} parent=0 // pred_check_branch
    %280 = sbr.rel (0) target = $region37
  $region36: #{encoder_decoder_forward.13} parent=0 // pred_region
    _
  $region37: #{encoder_decoder_forward.13} parent=0 // pred_fallthru
    _

// kernel: encoder_decoder_forward.12
$region0: #{encoder_decoder_forward.12}
  #allocation0 [shape = 'u32[]', space=smem, size = 0x4, offset = 0x4, fixed_abs, tag = 'smem constant byte address 0x4 - core index']
  #allocation1 [shape = 'u32[144,128]{1,0:T(1,128)}', space=vmem, size = 0x12000, scoped, tag = 'internal scratch']
  %s0 = inlined_call_operand.vmem [shape: f32[2,16,64], index: 0, kind: input, shape index: {}]
  %s1 = inlined_call_operand.vmem [shape: f32[64,64], index: 1, kind: input, shape index: {}]
  %s2 = inlined_call_operand.vmem [shape: f32[1,64], index: 2, kind: input, shape index: {}]
  %s3 = inlined_call_operand.vmem [shape: f32[64,64], index: 3, kind: input, shape index: {}]
  %s4 = inlined_call_operand.vmem [shape: f32[1,64], index: 4, kind: input, shape index: {}]
  %s5 = inlined_call_operand.vmem [shape: f32[64,64], index: 5, kind: input, shape index: {}]
  %s6 = inlined_call_operand.vmem [shape: f32[1,64], index: 6, kind: input, shape index: {}]
  %s7 = inlined_call_operand.vmem [shape: f32[64,64], index: 7, kind: input, shape index: {}]
  %s8 = inlined_call_operand.vmem [shape: f32[1,64], index: 8, kind: input, shape index: {}]
  %s9 = inlined_call_operand.vmem [shape: f32[1,64], index: 9, kind: input, shape index: {}]
  %s10 = inlined_call_operand.vmem [shape: f32[1,64], index: 10, kind: input, shape index: {}]
  %s11 = inlined_call_operand.vmem [shape: f32[2,16,64], index: 11, kind: output, shape index: {0}]
  %s12 = inlined_call_operand.hbm [shape: f32[2,4,16,16], index: 12, kind: output, shape index: {1}]
  %13 = xla_tuple %s11, %s12
  %s14 = sld [smem:[#allocation0]]
  $region85: #{encoder_decoder_forward.12} parent=0
    _
  %s16 = ssub.s32 1, %s14
  %s17 = scalar_select 0, %s16, %s14
  $region1: #{encoder_decoder_forward.12} parent=0
    #allocation2 [shape = 'u8[65536]{0}', space=vmem, size = 0x10000, scoped, tag = 'output window, operand 1']
    #allocation3 [shape = 's32[2]{0}', space=sflag, size = 0x8, scoped, tag = 'scoped memory for encoder_decoder_forward.12']
    %18 = vsyncpa [#allocation3], 0
    %s19 = scalar_lea.sflag [#allocation3], 1
    %20 = vsyncpa %s19, 0
    loop: start=0, step=1, limit=4
    $region2: #{encoder_decoder_forward.12} parent=1 // loop_pre_header
      _
    $region3: #{encoder_decoder_forward.12} parent=1 // loop_header
      %s22 = sphi 0, %s26
      %p23 = scmp.ge.s32.totalorder %s22, 4
      %s32 = sphi 0, %s34
      %s35 = sphi 0, %s32
      %s36 = sphi 0, %s35
      %s52 = sphi 0, %s36
      %s56 = sphi 0, %s56
      %s58 = sphi 0, %s56
      %s59 = sphi 0, %s58
      %s73 = sphi 0, %s59
      %s77 = sphi 0, %s77
      %s79 = sphi 0, %s77
      %s80 = sphi 0, %s79
      %s94 = sphi 0, %s80
      %s98 = sphi 0, %s98
      %s100 = sphi 0, %s98
      %s101 = sphi 0, %s100
      %s115 = sphi 0, %s101
      %s119 = sphi 0, %s119
      %s121 = sphi 0, %s119
      %s122 = sphi 0, %s121
      %s136 = sphi 0, %s122
      %s140 = sphi 0, %s140
      %s142 = sphi 0, %s140
      %s143 = sphi 0, %s142
      %s157 = sphi 0, %s143
      %s161 = sphi 0, %s161
      %s163 = sphi 0, %s161
      %s164 = sphi 0, %s163
      %s178 = sphi 0, %s164
      %s182 = sphi 0, %s182
      %s184 = sphi 0, %s182
      %s185 = sphi 0, %s184
      %s199 = sphi 0, %s185
      %s203 = sphi 0, %s203
      %s205 = sphi 0, %s203
      %s206 = sphi 0, %s205
      %s220 = sphi 0, %s206
      %s224 = sphi 0, %s224
      %s226 = sphi 0, %s224
      %s227 = sphi 0, %s226
      %s241 = sphi 0, %s227
      %s245 = sphi 0, %s245
      %s247 = sphi 0, %s245
      %s248 = sphi 0, %s247
      %s262 = sphi 0, %s248
      %s268 = sphi 0, %s270
      %s271 = sphi 0, %s268
      %s272 = sphi 0, %s271
      %s288 = sphi 0, %s272
      %s294 = sphi 0, %s296
      %s297 = sphi 0, %s294
      %s298 = sphi 0, %s297
      %s314 = sphi 0, %s298
    $region4: #{encoder_decoder_forward.12} parent=1 // loop_header_branch
      %25 = sbr.rel (%p23) target = $region8
    $region5: #{encoder_decoder_forward.12} parent=1 // loop_body
      %s27 = ssub.s32 %s22, 1
      %s28 = ssub.s32 %s22, 2
      %s29 = sadd.s32 %s22, 1
      %s30 = ssub.s32 %s22, %s29
      %p31 = scmp.eq.s32.totalorder %s30, 0
      %s33 = sadd.s32 %s32, 1
      %s34 = scalar_select %p31, %s32, %s33
      %p37 = pneg %p31
      %p38 = scmp.eq.s32.totalorder %s22, 1
      %p39 = por %p37, %p38
      %p40 = scmp.ne.s32.totalorder %s32, %s35
      %p41 = scmp.eq.s32.totalorder %s22, 0
      %p42 = por %p40, %p41
      %p43 = scmp.ne.s32.totalorder %s32, %s35
      %p44 = scmp.eq.s32.totalorder %s27, 1
      %p45 = por %p43, %p44
      %p46 = scmp.ne.s32.totalorder %s35, %s36
      %p47 = scmp.eq.s32.totalorder %s27, 0
      %p48 = por %p46, %p47
      %p49 = scmp.ne.s32.totalorder %s35, %s36
      %p50 = scmp.eq.s32.totalorder %s28, 1
      %p51 = por %p49, %p50
      %p53 = scmp.ne.s32.totalorder %s36, %s52
      %p54 = scmp.eq.s32.totalorder %s28, 0
      %p55 = por %p53, %p54
      %s57 = sadd.s32 %s56, 1
      %p60 = scmp.eq.s32.totalorder %s22, 1
      %p61 = scmp.ne.s32.totalorder %s56, %s58
      %p62 = scmp.eq.s32.totalorder %s22, 0
      %p63 = por %p61, %p62
      %p64 = scmp.ne.s32.totalorder %s56, %s58
      %p65 = scmp.eq.s32.totalorder %s27, 1
      %p66 = por %p64, %p65
      %p67 = scmp.ne.s32.totalorder %s58, %s59
      %p68 = scmp.eq.s32.totalorder %s27, 0
      %p69 = por %p67, %p68
      %p70 = scmp.ne.s32.totalorder %s58, %s59
      %p71 = scmp.eq.s32.totalorder %s28, 1
      %p72 = por %p70, %p71
      %p74 = scmp.ne.s32.totalorder %s59, %s73
      %p75 = scmp.eq.s32.totalorder %s28, 0
      %p76 = por %p74, %p75
      %s78 = sadd.s32 %s77, 1
      %p81 = scmp.eq.s32.totalorder %s22, 1
      %p82 = scmp.ne.s32.totalorder %s77, %s79
      %p83 = scmp.eq.s32.totalorder %s22, 0
      %p84 = por %p82, %p83
      %p85 = scmp.ne.s32.totalorder %s77, %s79
      %p86 = scmp.eq.s32.totalorder %s27, 1
      %p87 = por %p85, %p86
      %p88 = scmp.ne.s32.totalorder %s79, %s80
      %p89 = scmp.eq.s32.totalorder %s27, 0
      %p90 = por %p88, %p89
      %p91 = scmp.ne.s32.totalorder %s79, %s80
      %p92 = scmp.eq.s32.totalorder %s28, 1
      %p93 = por %p91, %p92
      %p95 = scmp.ne.s32.totalorder %s80, %s94
      %p96 = scmp.eq.s32.totalorder %s28, 0
      %p97 = por %p95, %p96
      %s99 = sadd.s32 %s98, 1
      %p102 = scmp.eq.s32.totalorder %s22, 1
      %p103 = scmp.ne.s32.totalorder %s98, %s100
      %p104 = scmp.eq.s32.totalorder %s22, 0
      %p105 = por %p103, %p104
      %p106 = scmp.ne.s32.totalorder %s98, %s100
      %p107 = scmp.eq.s32.totalorder %s27, 1
      %p108 = por %p106, %p107
      %p109 = scmp.ne.s32.totalorder %s100, %s101
      %p110 = scmp.eq.s32.totalorder %s27, 0
      %p111 = por %p109, %p110
      %p112 = scmp.ne.s32.totalorder %s100, %s101
      %p113 = scmp.eq.s32.totalorder %s28, 1
      %p114 = por %p112, %p113
      %p116 = scmp.ne.s32.totalorder %s101, %s115
      %p117 = scmp.eq.s32.totalorder %s28, 0
      %p118 = por %p116, %p117
      %s120 = sadd.s32 %s119, 1
      %p123 = scmp.eq.s32.totalorder %s22, 1
      %p124 = scmp.ne.s32.totalorder %s119, %s121
      %p125 = scmp.eq.s32.totalorder %s22, 0
      %p126 = por %p124, %p125
      %p127 = scmp.ne.s32.totalorder %s119, %s121
      %p128 = scmp.eq.s32.totalorder %s27, 1
      %p129 = por %p127, %p128
      %p130 = scmp.ne.s32.totalorder %s121, %s122
      %p131 = scmp.eq.s32.totalorder %s27, 0
      %p132 = por %p130, %p131
      %p133 = scmp.ne.s32.totalorder %s121, %s122
      %p134 = scmp.eq.s32.totalorder %s28, 1
      %p135 = por %p133, %p134
      %p137 = scmp.ne.s32.totalorder %s122, %s136
      %p138 = scmp.eq.s32.totalorder %s28, 0
      %p139 = por %p137, %p138
      %s141 = sadd.s32 %s140, 1
      %p144 = scmp.eq.s32.totalorder %s22, 1
      %p145 = scmp.ne.s32.totalorder %s140, %s142
      %p146 = scmp.eq.s32.totalorder %s22, 0
      %p147 = por %p145, %p146
      %p148 = scmp.ne.s32.totalorder %s140, %s142
      %p149 = scmp.eq.s32.totalorder %s27, 1
      %p150 = por %p148, %p149
      %p151 = scmp.ne.s32.totalorder %s142, %s143
      %p152 = scmp.eq.s32.totalorder %s27, 0
      %p153 = por %p151, %p152
      %p154 = scmp.ne.s32.totalorder %s142, %s143
      %p155 = scmp.eq.s32.totalorder %s28, 1
      %p156 = por %p154, %p155
      %p158 = scmp.ne.s32.totalorder %s143, %s157
      %p159 = scmp.eq.s32.totalorder %s28, 0
      %p160 = por %p158, %p159
      %s162 = sadd.s32 %s161, 1
      %p165 = scmp.eq.s32.totalorder %s22, 1
      %p166 = scmp.ne.s32.totalorder %s161, %s163
      %p167 = scmp.eq.s32.totalorder %s22, 0
      %p168 = por %p166, %p167
      %p169 = scmp.ne.s32.totalorder %s161, %s163
      %p170 = scmp.eq.s32.totalorder %s27, 1
      %p171 = por %p169, %p170
      %p172 = scmp.ne.s32.totalorder %s163, %s164
      %p173 = scmp.eq.s32.totalorder %s27, 0
      %p174 = por %p172, %p173
      %p175 = scmp.ne.s32.totalorder %s163, %s164
      %p176 = scmp.eq.s32.totalorder %s28, 1
      %p177 = por %p175, %p176
      %p179 = scmp.ne.s32.totalorder %s164, %s178
      %p180 = scmp.eq.s32.totalorder %s28, 0
      %p181 = por %p179, %p180
      %s183 = sadd.s32 %s182, 1
      %p186 = scmp.eq.s32.totalorder %s22, 1
      %p187 = scmp.ne.s32.totalorder %s182, %s184
      %p188 = scmp.eq.s32.totalorder %s22, 0
      %p189 = por %p187, %p188
      %p190 = scmp.ne.s32.totalorder %s182, %s184
      %p191 = scmp.eq.s32.totalorder %s27, 1
      %p192 = por %p190, %p191
      %p193 = scmp.ne.s32.totalorder %s184, %s185
      %p194 = scmp.eq.s32.totalorder %s27, 0
      %p195 = por %p193, %p194
      %p196 = scmp.ne.s32.totalorder %s184, %s185
      %p197 = scmp.eq.s32.totalorder %s28, 1
      %p198 = por %p196, %p197
      %p200 = scmp.ne.s32.totalorder %s185, %s199
      %p201 = scmp.eq.s32.totalorder %s28, 0
      %p202 = por %p200, %p201
      %s204 = sadd.s32 %s203, 1
      %p207 = scmp.eq.s32.totalorder %s22, 1
      %p208 = scmp.ne.s32.totalorder %s203, %s205
      %p209 = scmp.eq.s32.totalorder %s22, 0
      %p210 = por %p208, %p209
      %p211 = scmp.ne.s32.totalorder %s203, %s205
      %p212 = scmp.eq.s32.totalorder %s27, 1
      %p213 = por %p211, %p212
      %p214 = scmp.ne.s32.totalorder %s205, %s206
      %p215 = scmp.eq.s32.totalorder %s27, 0
      %p216 = por %p214, %p215
      %p217 = scmp.ne.s32.totalorder %s205, %s206
      %p218 = scmp.eq.s32.totalorder %s28, 1
      %p219 = por %p217, %p218
      %p221 = scmp.ne.s32.totalorder %s206, %s220
      %p222 = scmp.eq.s32.totalorder %s28, 0
      %p223 = por %p221, %p222
      %s225 = sadd.s32 %s224, 1
      %p228 = scmp.eq.s32.totalorder %s22, 1
      %p229 = scmp.ne.s32.totalorder %s224, %s226
      %p230 = scmp.eq.s32.totalorder %s22, 0
      %p231 = por %p229, %p230
      %p232 = scmp.ne.s32.totalorder %s224, %s226
      %p233 = scmp.eq.s32.totalorder %s27, 1
      %p234 = por %p232, %p233
      %p235 = scmp.ne.s32.totalorder %s226, %s227
      %p236 = scmp.eq.s32.totalorder %s27, 0
      %p237 = por %p235, %p236
      %p238 = scmp.ne.s32.totalorder %s226, %s227
      %p239 = scmp.eq.s32.totalorder %s28, 1
      %p240 = por %p238, %p239
      %p242 = scmp.ne.s32.totalorder %s227, %s241
      %p243 = scmp.eq.s32.totalorder %s28, 0
      %p244 = por %p242, %p243
      %s246 = sadd.s32 %s245, 1
      %p249 = scmp.eq.s32.totalorder %s22, 1
      %p250 = scmp.ne.s32.totalorder %s245, %s247
      %p251 = scmp.eq.s32.totalorder %s22, 0
      %p252 = por %p250, %p251
      %p253 = scmp.ne.s32.totalorder %s245, %s247
      %p254 = scmp.eq.s32.totalorder %s27, 1
      %p255 = por %p253, %p254
      %p256 = scmp.ne.s32.totalorder %s247, %s248
      %p257 = scmp.eq.s32.totalorder %s27, 0
      %p258 = por %p256, %p257
      %p259 = scmp.ne.s32.totalorder %s247, %s248
      %p260 = scmp.eq.s32.totalorder %s28, 1
      %p261 = por %p259, %p260
      %p263 = scmp.ne.s32.totalorder %s248, %s262
      %p264 = scmp.eq.s32.totalorder %s28, 0
      %p265 = por %p263, %p264
      %s266 = ssub.s32 %s22, %s29
      %p267 = scmp.eq.s32.totalorder %s266, 0
      %s269 = sadd.s32 %s268, 1
      %s270 = scalar_select %p267, %s268, %s269
      %p273 = pneg %p267
      %p274 = scmp.eq.s32.totalorder %s22, 1
      %p275 = por %p273, %p274
      %p276 = scmp.ne.s32.totalorder %s268, %s271
      %p277 = scmp.eq.s32.totalorder %s22, 0
      %p278 = por %p276, %p277
      %p279 = scmp.ne.s32.totalorder %s268, %s271
      %p280 = scmp.eq.s32.totalorder %s27, 1
      %p281 = por %p279, %p280
      %p282 = scmp.ne.s32.totalorder %s271, %s272
      %p283 = scmp.eq.s32.totalorder %s27, 0
      %p284 = por %p282, %p283
      %p285 = scmp.ne.s32.totalorder %s271, %s272
      %p286 = scmp.eq.s32.totalorder %s28, 1
      %p287 = por %p285, %p286
      %p289 = scmp.ne.s32.totalorder %s272, %s288
      %p290 = scmp.eq.s32.totalorder %s28, 0
      %p291 = por %p289, %p290
      %s292 = ssub.s32 %s22, %s29
      %p293 = scmp.eq.s32.totalorder %s292, 0
      %s295 = sadd.s32 %s294, 1
      %s296 = scalar_select %p293, %s294, %s295
      %p299 = pneg %p293
      %p300 = scmp.eq.s32.totalorder %s22, 1
      %p301 = por %p299, %p300
      %p302 = scmp.ne.s32.totalorder %s294, %s297
      %p303 = scmp.eq.s32.totalorder %s22, 0
      %p304 = por %p302, %p303
      %p305 = scmp.ne.s32.totalorder %s294, %s297
      %p306 = scmp.eq.s32.totalorder %s27, 1
      %p307 = por %p305, %p306
      %p308 = scmp.ne.s32.totalorder %s297, %s298
      %p309 = scmp.eq.s32.totalorder %s27, 0
      %p310 = por %p308, %p309
      %p311 = scmp.ne.s32.totalorder %s297, %s298
      %p312 = scmp.eq.s32.totalorder %s28, 1
      %p313 = por %p311, %p312
      %p315 = scmp.ne.s32.totalorder %s298, %s314
      %p316 = scmp.eq.s32.totalorder %s28, 0
      %p317 = por %p315, %p316
      %p318 = scmp.le.s32.totalorder 1, %s22
      %p319 = scmp.lt.s32.totalorder %s22, 3
      %p320 = pnand %p318, %p319
      %p321 = pneg %p320
      // Predicated region
      $region9: #{encoder_decoder_forward.12} parent=5 // pred_check
        _
      $region10: #{encoder_decoder_forward.12} parent=5 // pred_check_branch
        %323 = sbr.rel (%p320) target = $region12
      $region11: #{encoder_decoder_forward.12} parent=5 // pred_region
        %s324 = ssub.s32 %s22, 1
        // Predicated region
        $region13: #{encoder_decoder_forward.12} parent=11 // pred_check
          %p325 = pneg %p69
        $region14: #{encoder_decoder_forward.12} parent=11 // pred_check_branch
          %327 = sbr.rel (%p325) target = $region16
        $region15: #{encoder_decoder_forward.12} parent=11 // pred_region
          _
        $region16: #{encoder_decoder_forward.12} parent=11 // pred_fallthru
          _
        // Predicated region
        $region17: #{encoder_decoder_forward.12} parent=11 // pred_check
          %p328 = pneg %p90
        $region18: #{encoder_decoder_forward.12} parent=11 // pred_check_branch
          %330 = sbr.rel (%p328) target = $region20
        $region19: #{encoder_decoder_forward.12} parent=11 // pred_region
          _
        $region20: #{encoder_decoder_forward.12} parent=11 // pred_fallthru
          _
        // Predicated region
        $region21: #{encoder_decoder_forward.12} parent=11 // pred_check
          %p331 = pneg %p111
        $region22: #{encoder_decoder_forward.12} parent=11 // pred_check_branch
          %333 = sbr.rel (%p331) target = $region24
        $region23: #{encoder_decoder_forward.12} parent=11 // pred_region
          _
        $region24: #{encoder_decoder_forward.12} parent=11 // pred_fallthru
          _
        // Predicated region
        $region25: #{encoder_decoder_forward.12} parent=11 // pred_check
          %p334 = pneg %p132
        $region26: #{encoder_decoder_forward.12} parent=11 // pred_check_branch
          %336 = sbr.rel (%p334) target = $region28
        $region27: #{encoder_decoder_forward.12} parent=11 // pred_region
          _
        $region28: #{encoder_decoder_forward.12} parent=11 // pred_fallthru
          _
        // Predicated region
        $region29: #{encoder_decoder_forward.12} parent=11 // pred_check
          %p337 = pneg %p153
        $region30: #{encoder_decoder_forward.12} parent=11 // pred_check_branch
          %339 = sbr.rel (%p337) target = $region32
        $region31: #{encoder_decoder_forward.12} parent=11 // pred_region
          _
        $region32: #{encoder_decoder_forward.12} parent=11 // pred_fallthru
          _
        // Predicated region
        $region33: #{encoder_decoder_forward.12} parent=11 // pred_check
          %p340 = pneg %p174
        $region34: #{encoder_decoder_forward.12} parent=11 // pred_check_branch
          %342 = sbr.rel (%p340) target = $region36
        $region35: #{encoder_decoder_forward.12} parent=11 // pred_region
          _
        $region36: #{encoder_decoder_forward.12} parent=11 // pred_fallthru
          _
        // Predicated region
        $region37: #{encoder_decoder_forward.12} parent=11 // pred_check
          %p343 = pneg %p195
        $region38: #{encoder_decoder_forward.12} parent=11 // pred_check_branch
          %345 = sbr.rel (%p343) target = $region40
        $region39: #{encoder_decoder_forward.12} parent=11 // pred_region
          _
        $region40: #{encoder_decoder_forward.12} parent=11 // pred_fallthru
          _
        // Predicated region
        $region41: #{encoder_decoder_forward.12} parent=11 // pred_check
          %p346 = pneg %p216
        $region42: #{encoder_decoder_forward.12} parent=11 // pred_check_branch
          %348 = sbr.rel (%p346) target = $region44
        $region43: #{encoder_decoder_forward.12} parent=11 // pred_region
          _
        $region44: #{encoder_decoder_forward.12} parent=11 // pred_fallthru
          _
        // Predicated region
        $region45: #{encoder_decoder_forward.12} parent=11 // pred_check
          %p349 = pneg %p237
        $region46: #{encoder_decoder_forward.12} parent=11 // pred_check_branch
          %351 = sbr.rel (%p349) target = $region48
        $region47: #{encoder_decoder_forward.12} parent=11 // pred_region
          _
        $region48: #{encoder_decoder_forward.12} parent=11 // pred_fallthru
          _
        // Predicated region
        $region49: #{encoder_decoder_forward.12} parent=11 // pred_check
          %p352 = pneg %p258
        $region50: #{encoder_decoder_forward.12} parent=11 // pred_check_branch
          %354 = sbr.rel (%p352) target = $region52
        $region51: #{encoder_decoder_forward.12} parent=11 // pred_region
          _
        $region52: #{encoder_decoder_forward.12} parent=11 // pred_fallthru
          _
      $region12: #{encoder_decoder_forward.12} parent=5 // pred_fallthru
        _
      %p355 = scmp.lt.s32.totalorder %s22, 2
      // Predicated region
      $region53: #{encoder_decoder_forward.12} parent=5 // pred_check
        %p356 = pneg %p355
      $region54: #{encoder_decoder_forward.12} parent=5 // pred_check_branch
        %358 = sbr.rel (%p356) target = $region56
      $region55: #{encoder_decoder_forward.12} parent=5 // pred_region
        // Predicated region
        $region57: #{encoder_decoder_forward.12} parent=55 // pred_check
          %p359 = pneg %p42
        $region58: #{encoder_decoder_forward.12} parent=55 // pred_check_branch
          %361 = sbr.rel (%p359) target = $region60
        $region59: #{encoder_decoder_forward.12} parent=55 // pred_region
          %p362 = scmp.lt.s32.totalorder %s22, 1
          %s363 = scalar_select %p362, %s22, 1
          %s364 = smul.addr %s363, 2
          %s365 = smul.addr %s364, 8
          %s366 = scalar_lea.vmem %s0, %s365
        $region60: #{encoder_decoder_forward.12} parent=55 // pred_fallthru
          _
      $region56: #{encoder_decoder_forward.12} parent=5 // pred_fallthru
        _
      %p367 = scmp.le.s32.totalorder 1, %s22
      %p368 = scmp.lt.s32.totalorder %s22, 3
      %p369 = pnand %p367, %p368
      %p370 = pneg %p369
      // Predicated region
      $region61: #{encoder_decoder_forward.12} parent=5 // pred_check
        _
      $region62: #{encoder_decoder_forward.12} parent=5 // pred_check_branch
        %372 = sbr.rel (%p369) target = $region64
      $region63: #{encoder_decoder_forward.12} parent=5 // pred_region
        %s373 = ssub.s32 %s22, 1
        %p374 = scmp.lt.s32.totalorder %s27, 1
        %s375 = scalar_select %p374, %s27, 1
        %s376 = smul.addr %s375, 2
        %s377 = smul.addr %s376, 8
        %s378 = scalar_lea.vmem %s0, %s377
        %p379 = pneg %p48
        %p380 = pneg %p45
        %p381 = pneg %p69
        %p382 = pneg %p66
        %p383 = pneg %p90
        %p384 = pneg %p87
        %p385 = pneg %p111
        %p386 = pneg %p108
        %p387 = pneg %p132
        %p388 = pneg %p129
        %p389 = pneg %p153
        %p390 = pneg %p150
        %p391 = pneg %p174
        %p392 = pneg %p171
        %p393 = pneg %p195
        %p394 = pneg %p192
        %p395 = pneg %p216
        %p396 = pneg %p213
        %p397 = pneg %p237
        %p398 = pneg %p234
        %p399 = pneg %p258
        %p400 = pneg %p255
        %p401 = pneg %p284
        %p402 = pneg %p281
        %p403 = scmp.lt.s32.totalorder %s27, 1
        %s404 = scalar_select %p403, %s27, 1
        %s405 = smul.addr %s404, 2
        %s406 = smul.addr %s405, 8
        %s407 = scalar_lea.vmem %s11, %s406
        %p408 = pneg %p310
        %p409 = pneg %p307
        %s410 = sand.u32 %s297, 1
        %s411 = scalar_lea.sflag [#allocation3], %s410
        %s412 = sand.u32 %s297, 1
        %s413 = smul.addr %s412, 64
        %s414 = scalar_lea.vmem [#allocation2], %s413
        %p415 = scmp.lt.s32.totalorder %s27, 1
        %s416 = scalar_select %p415, %s27, 1
        %s417 = smul.addr %s416, 2
        %s418 = smul.addr %s417, 8
        %s419 = scalar_lea.vmem %s0, %s418
        %p420 = scmp.lt.s32.totalorder %s27, 1
        %s421 = scalar_select %p420, %s27, 1
        %s422 = smul.addr %s421, 2
        %s423 = smul.addr %s422, 8
        %s424 = scalar_lea.vmem %s11, %s423
        %v426 = vld [vmem:[%s419] sm:$0xff]
        %v427 = vld [vmem:[%s419 + $0x8] sm:$0xff]
        %v428 = vpack.c.bf16 %v427, %v426
        %v429 = vld [vmem:[%s1] sm:$0xff]
        %v430 = vld [vmem:[%s1 + $0x8] sm:$0xff]
        %v431 = vld [vmem:[%s1 + $0x10] sm:$0xff]
        %v432 = vld [vmem:[%s1 + $0x18] sm:$0xff]
        %v433 = vld [vmem:[%s1 + $0x20] sm:$0xff]
        %v434 = vld [vmem:[%s1 + $0x28] sm:$0xff]
        %v435 = vld [vmem:[%s1 + $0x30] sm:$0xff]
        %v436 = vld [vmem:[%s1 + $0x38] sm:$0xff]
        %v437 = vpack.c.bf16 %v430, %v429
        %v438 = vpack.c.bf16 %v432, %v431
        %v439 = vpack.c.bf16 %v434, %v433
        %v440 = vpack.c.bf16 %v436, %v435
        %v441 = vld [vmem:[%s2] sm:$0x1]
        %v443 = vlaneseq
        %v444 = vshrl.u32 %v443, 7
        %v445 = vsub.s32 0, %v444
        %v446 = vrot.slane %v441, %v445
        %vm448 = vcmask 523264
        %v450 = vsel %vm448, %v428, 0
        %452 = vmatprep.subr.bf16.mxu0 0
        %453 = vmatpush1.bf16.msra.mxu0 %v437
        %454 = vmatprep.subr.bf16.mxu0 0
        %455 = vmatpush1.bf16.msra.mxu0 %v438
        %456 = vmatprep.subr.bf16.mxu0 0
        %457 = vmatpush1.bf16.msra.mxu0 %v439
        %458 = vmatprep.subr.bf16.mxu0 0
        %459 = vmatpush1.bf16.msra.mxu0 %v440
        %460 = vmatprep.subr.bf16.mxu0 0
        %461 = vmatpush1.bf16.msra.mxu0 0
        %462 = vmatprep.subr.bf16.mxu0 0
        %463 = vmatpush1.bf16.msra.mxu0 0
        %464 = vmatprep.subr.bf16.mxu0 0
        %465 = vmatpush1.bf16.msra.mxu0 0
        %466 = vmatprep.subr.bf16.mxu0 0
        %467 = vmatpush1.bf16.msra.mxu0 0
        %468 = vmatprep.subr.bf16.mxu0 0
        %469 = vmatpush1.bf16.msra.mxu0 0
        %470 = vmatprep.subr.bf16.mxu0 0
        %471 = vmatpush1.bf16.msra.mxu0 0
        %472 = vmatprep.subr.bf16.mxu0 0
        %473 = vmatpush1.bf16.msra.mxu0 0
        %474 = vmatprep.subr.bf16.mxu0 0
        %475 = vmatpush1.bf16.msra.mxu0 0
        %476 = vmatprep.subr.bf16.mxu0 0
        %477 = vmatpush1.bf16.msra.mxu0 0
        %478 = vmatprep.subr.bf16.mxu0 0
        %479 = vmatpush1.bf16.msra.mxu0 0
        %480 = vmatprep.subr.bf16.mxu0 0
        %481 = vmatpush1.bf16.msra.mxu0 0
        %482 = vmatprep.subr.bf16.mxu0 0
        %483 = vmatpush1.bf16.msra.mxu0 0
        %484 = vmatprep.mubr.bf16.mxu0 0
        %485 = vmatmul.mubr.bf16.gmra.mrb[0].mxu0 %v450
        %v486 = vpop.f32.mrb[0].mxu0
        %v487 = vadd.f32 %v446, %v486
        %v488 = vpop.f32.mrb[0].mxu0
        %v489 = vpop.f32.mrb[0].mxu0
        %v490 = vadd.f32 %v446, %v489
        %v491 = vpop.f32.mrb[0].mxu0
        %492 = vdwg.mxu0
        %v493 = vld [vmem:[%s3] sm:$0xff]
        %v494 = vld [vmem:[%s3 + $0x8] sm:$0xff]
        %v495 = vld [vmem:[%s3 + $0x10] sm:$0xff]
        %v496 = vld [vmem:[%s3 + $0x18] sm:$0xff]
        %v497 = vld [vmem:[%s3 + $0x20] sm:$0xff]
        %v498 = vld [vmem:[%s3 + $0x28] sm:$0xff]
        %v499 = vld [vmem:[%s3 + $0x30] sm:$0xff]
        %v500 = vld [vmem:[%s3 + $0x38] sm:$0xff]
        %v501 = vpack.c.bf16 %v494, %v493
        %v502 = vpack.c.bf16 %v496, %v495
        %v503 = vpack.c.bf16 %v498, %v497
        %v504 = vpack.c.bf16 %v500, %v499
        %v505 = vld [vmem:[%s4] sm:$0x1]
        %v507 = vlaneseq
        %v508 = vshrl.u32 %v507, 7
        %v509 = vsub.s32 0, %v508
        %v510 = vrot.slane %v505, %v509
        %512 = vmatprep.subr.bf16.mxu0 0
        %513 = vmatpush1.bf16.msra.mxu0 %v501
        %514 = vmatprep.subr.bf16.mxu0 0
        %515 = vmatpush1.bf16.msra.mxu0 %v502
        %516 = vmatprep.subr.bf16.mxu0 0
        %517 = vmatpush1.bf16.msra.mxu0 %v503
        %518 = vmatprep.subr.bf16.mxu0 0
        %519 = vmatpush1.bf16.msra.mxu0 %v504
        %520 = vmatprep.subr.bf16.mxu0 0
        %521 = vmatpush1.bf16.msra.mxu0 0
        %522 = vmatprep.subr.bf16.mxu0 0
        %523 = vmatpush1.bf16.msra.mxu0 0
        %524 = vmatprep.subr.bf16.mxu0 0
        %525 = vmatpush1.bf16.msra.mxu0 0
        %526 = vmatprep.subr.bf16.mxu0 0
        %527 = vmatpush1.bf16.msra.mxu0 0
        %528 = vmatprep.subr.bf16.mxu0 0
        %529 = vmatpush1.bf16.msra.mxu0 0
        %530 = vmatprep.subr.bf16.mxu0 0
        %531 = vmatpush1.bf16.msra.mxu0 0
        %532 = vmatprep.subr.bf16.mxu0 0
        %533 = vmatpush1.bf16.msra.mxu0 0
        %534 = vmatprep.subr.bf16.mxu0 0
        %535 = vmatpush1.bf16.msra.mxu0 0
        %536 = vmatprep.subr.bf16.mxu0 0
        %537 = vmatpush1.bf16.msra.mxu0 0
        %538 = vmatprep.subr.bf16.mxu0 0
        %539 = vmatpush1.bf16.msra.mxu0 0
        %540 = vmatprep.subr.bf16.mxu0 0
        %541 = vmatpush1.bf16.msra.mxu0 0
        %542 = vmatprep.subr.bf16.mxu0 0
        %543 = vmatpush1.bf16.msra.mxu0 0
        %544 = vmatprep.mubr.bf16.mxu0 0
        %545 = vmatmul.mubr.bf16.gmra.mrb[0].mxu0 %v450
        %v546 = vpop.f32.mrb[0].mxu0
        %v547 = vadd.f32 %v510, %v546
        %v548 = vpop.f32.mrb[0].mxu0
        %v549 = vpop.f32.mrb[0].mxu0
        %v550 = vadd.f32 %v510, %v549
        %v551 = vpop.f32.mrb[0].mxu0
        %552 = vdwg.mxu0
        %v553 = vld [vmem:[%s5] sm:$0xff]
        %v554 = vld [vmem:[%s5 + $0x8] sm:$0xff]
        %v555 = vld [vmem:[%s5 + $0x10] sm:$0xff]
        %v556 = vld [vmem:[%s5 + $0x18] sm:$0xff]
        %v557 = vld [vmem:[%s5 + $0x20] sm:$0xff]
        %v558 = vld [vmem:[%s5 + $0x28] sm:$0xff]
        %v559 = vld [vmem:[%s5 + $0x30] sm:$0xff]
        %v560 = vld [vmem:[%s5 + $0x38] sm:$0xff]
        %v561 = vpack.c.bf16 %v554, %v553
        %v562 = vpack.c.bf16 %v556, %v555
        %v563 = vpack.c.bf16 %v558, %v557
        %v564 = vpack.c.bf16 %v560, %v559
        %v565 = vld [vmem:[%s6] sm:$0x1]
        %v567 = vlaneseq
        %v568 = vshrl.u32 %v567, 7
        %v569 = vsub.s32 0, %v568
        %v570 = vrot.slane %v565, %v569
        %572 = vmatprep.subr.bf16.mxu0 0
        %573 = vmatpush1.bf16.msra.mxu0 %v561
        %574 = vmatprep.subr.bf16.mxu0 0
        %575 = vmatpush1.bf16.msra.mxu0 %v562
        %576 = vmatprep.subr.bf16.mxu0 0
        %577 = vmatpush1.bf16.msra.mxu0 %v563
        %578 = vmatprep.subr.bf16.mxu0 0
        %579 = vmatpush1.bf16.msra.mxu0 %v564
        %580 = vmatprep.subr.bf16.mxu0 0
        %581 = vmatpush1.bf16.msra.mxu0 0
        %582 = vmatprep.subr.bf16.mxu0 0
        %583 = vmatpush1.bf16.msra.mxu0 0
        %584 = vmatprep.subr.bf16.mxu0 0
        %585 = vmatpush1.bf16.msra.mxu0 0
        %586 = vmatprep.subr.bf16.mxu0 0
        %587 = vmatpush1.bf16.msra.mxu0 0
        %588 = vmatprep.subr.bf16.mxu0 0
        %589 = vmatpush1.bf16.msra.mxu0 0
        %590 = vmatprep.subr.bf16.mxu0 0
        %591 = vmatpush1.bf16.msra.mxu0 0
        %592 = vmatprep.subr.bf16.mxu0 0
        %593 = vmatpush1.bf16.msra.mxu0 0
        %594 = vmatprep.subr.bf16.mxu0 0
        %595 = vmatpush1.bf16.msra.mxu0 0
        %596 = vmatprep.subr.bf16.mxu0 0
        %597 = vmatpush1.bf16.msra.mxu0 0
        %598 = vmatprep.subr.bf16.mxu0 0
        %599 = vmatpush1.bf16.msra.mxu0 0
        %600 = vmatprep.subr.bf16.mxu0 0
        %601 = vmatpush1.bf16.msra.mxu0 0
        %602 = vmatprep.subr.bf16.mxu0 0
        %603 = vmatpush1.bf16.msra.mxu0 0
        %604 = vmatprep.mubr.bf16.mxu0 0
        %605 = vmatmul.mubr.bf16.gmra.mrb[0].mxu0 %v450
        %v606 = vpop.f32.mrb[0].mxu0
        %v607 = vadd.f32 %v570, %v606
        %v608 = vpop.f32.mrb[0].mxu0
        %v609 = vpop.f32.mrb[0].mxu0
        %v610 = vadd.f32 %v570, %v609
        %v611 = vpop.f32.mrb[0].mxu0
        %612 = vdwg.mxu0
        %v613 = vpack.c.bf16 %v490, %v487
        %v614 = vpack.c.bf16 %v550, %v547
        %v615 = vpack.c.bf16 %v610, %v607
        %vm616 = vcmask 130048
        %v618 = vsel %vm616, %v613, 0
        %v621 = vsel %vm616, %v614, 0
        %623 = vmatprep.subr.bf16.mxu0 0
        %624 = vmatpush1.bf16.xpose.msra.mxu0 %v621
        %625 = vmatprep.subr.bf16.mxu0 0
        %626 = vmatpush1.bf16.xpose.msra.mxu0 0
        %627 = vmatprep.subr.bf16.mxu0 0
        %628 = vmatpush1.bf16.xpose.msra.mxu0 0
        %629 = vmatprep.subr.bf16.mxu0 0
        %630 = vmatpush1.bf16.xpose.msra.mxu0 0
        %631 = vmatprep.subr.bf16.mxu0 0
        %632 = vmatpush1.bf16.xpose.msra.mxu0 0
        %633 = vmatprep.subr.bf16.mxu0 0
        %634 = vmatpush1.bf16.xpose.msra.mxu0 0
        %635 = vmatprep.subr.bf16.mxu0 0
        %636 = vmatpush1.bf16.xpose.msra.mxu0 0
        %637 = vmatprep.subr.bf16.mxu0 0
        %638 = vmatpush1.bf16.xpose.msra.mxu0 0
        %639 = vmatprep.subr.bf16.mxu0 0
        %640 = vmatpush1.bf16.xpose.msra.mxu0 0
        %641 = vmatprep.subr.bf16.mxu0 0
        %642 = vmatpush1.bf16.xpose.msra.mxu0 0
        %643 = vmatprep.subr.bf16.mxu0 0
        %644 = vmatpush1.bf16.xpose.msra.mxu0 0
        %645 = vmatprep.subr.bf16.mxu0 0
        %646 = vmatpush1.bf16.xpose.msra.mxu0 0
        %647 = vmatprep.subr.bf16.mxu0 0
        %648 = vmatpush1.bf16.xpose.msra.mxu0 0
        %649 = vmatprep.subr.bf16.mxu0 0
        %650 = vmatpush1.bf16.xpose.msra.mxu0 0
        %651 = vmatprep.subr.bf16.mxu0 0
        %652 = vmatpush1.bf16.xpose.msra.mxu0 0
        %653 = vmatprep.subr.bf16.mxu0 0
        %654 = vmatpush1.bf16.xpose.msra.mxu0 0
        %655 = vmatprep.mubr.bf16.mxu0 0
        %656 = vmatmul.mubr.bf16.gmra.mrb[0].mxu0 %v618
        %v657 = vpop.f32.mrb[0].mxu0
        %v658 = vadd.f32 0.0, %v657
        %v659 = vpop.f32.mrb[0].mxu0
        %v660 = vpop.f32.mrb[0].mxu0
        %v661 = vadd.f32 0.0, %v660
        %v662 = vpop.f32.mrb[0].mxu0
        %663 = vdwg.mxu0
        %v664 = vmul.f32 %v658, 0.25
        %v665 = vmul.f32 %v661, 0.25
        %v666 = vsel %vm616, %v664, -inf
        %667 = vmax.xlane.f32.xlu0 %v666
        %v668 = vpop.xlane.xlu0 %667
        %v669 = vsel %vm616, %v665, -inf
        %670 = vmax.xlane.f32.xlu0 %v669
        %v671 = vpop.xlane.xlu0 %670
        %v672 = vsub.f32 %v664, %v668
        %v673 = vsub.f32 %v665, %v671
        %v674 = vmul.f32 %v672, 1.442695
        %v675 = vpow.pop %v674
        %v676 = vmul.f32 %v673, 1.442695
        %v677 = vpow.pop %v676
        %v678 = vsel %vm616, %v675, 0.0
        %679 = vadd.xlane.f32.xlu0 %v678
        %v680 = vpop.xlane.xlu0 %679
        %v681 = vsel %vm616, %v677, 0.0
        %682 = vadd.xlane.f32.xlu0 %v681
        %v683 = vpop.xlane.xlu0 %682
        %v684 = vrcp.pop %v680
        %v685 = vrcp.pop %v683
        %v686 = vmul.f32 %v675, %v684
        %v687 = vmul.f32 %v677, %v685
        %688 = vst.msk [vmem:[%s414] sm:$0xff] %vm616, %v686
        %689 = vst.msk [vmem:[%s414 + $0x8] sm:$0xff] %vm616, %v687
        %v690 = vpack.c.bf16 %v687, %v686
        %v692 = vsel %vm616, %v690, 0
        %694 = vmatprep.subr.bf16.mxu0 0
        %695 = vmatpush1.bf16.msra.mxu0 %v615
        %696 = vmatprep.subr.bf16.mxu0 0
        %697 = vmatpush1.bf16.msra.mxu0 0
        %698 = vmatprep.subr.bf16.mxu0 0
        %699 = vmatpush1.bf16.msra.mxu0 0
        %700 = vmatprep.subr.bf16.mxu0 0
        %701 = vmatpush1.bf16.msra.mxu0 0
        %702 = vmatprep.subr.bf16.mxu0 0
        %703 = vmatpush1.bf16.msra.mxu0 0
        %704 = vmatprep.subr.bf16.mxu0 0
        %705 = vmatpush1.bf16.msra.mxu0 0
        %706 = vmatprep.subr.bf16.mxu0 0
        %707 = vmatpush1.bf16.msra.mxu0 0
        %708 = vmatprep.subr.bf16.mxu0 0
        %709 = vmatpush1.bf16.msra.mxu0 0
        %710 = vmatprep.subr.bf16.mxu0 0
        %711 = vmatpush1.bf16.msra.mxu0 0
        %712 = vmatprep.subr.bf16.mxu0 0
        %713 = vmatpush1.bf16.msra.mxu0 0
        %714 = vmatprep.subr.bf16.mxu0 0
        %715 = vmatpush1.bf16.msra.mxu0 0
        %716 = vmatprep.subr.bf16.mxu0 0
        %717 = vmatpush1.bf16.msra.mxu0 0
        %718 = vmatprep.subr.bf16.mxu0 0
        %719 = vmatpush1.bf16.msra.mxu0 0
        %720 = vmatprep.subr.bf16.mxu0 0
        %721 = vmatpush1.bf16.msra.mxu0 0
        %722 = vmatprep.subr.bf16.mxu0 0
        %723 = vmatpush1.bf16.msra.mxu0 0
        %724 = vmatprep.subr.bf16.mxu0 0
        %725 = vmatpush1.bf16.msra.mxu0 0
        %726 = vmatprep.mubr.bf16.mxu0 0
        %727 = vmatmul.mubr.bf16.gmra.mrb[0].mxu0 %v692
        %v728 = vpop.f32.mrb[0].mxu0
        %v729 = vadd.f32 0.0, %v728
        %v730 = vpop.f32.mrb[0].mxu0
        %v731 = vpop.f32.mrb[0].mxu0
        %v732 = vadd.f32 0.0, %v731
        %v733 = vpop.f32.mrb[0].mxu0
        %734 = vdwg.mxu0
        %736 = vrot.lane.b32.xlu0 %v613, 112
        %v737 = vpop.permute.xlu0 %736
        %739 = vrot.lane.b32.xlu0 %v614, 112
        %v740 = vpop.permute.xlu0 %739
        %v742 = vsel %vm616, %v737, 0
        %v745 = vsel %vm616, %v740, 0
        %747 = vmatprep.subr.bf16.mxu0 0
        %748 = vmatpush1.bf16.xpose.msra.mxu0 %v745
        %749 = vmatprep.subr.bf16.mxu0 0
        %750 = vmatpush1.bf16.xpose.msra.mxu0 0
        %751 = vmatprep.subr.bf16.mxu0 0
        %752 = vmatpush1.bf16.xpose.msra.mxu0 0
        %753 = vmatprep.subr.bf16.mxu0 0
        %754 = vmatpush1.bf16.xpose.msra.mxu0 0
        %755 = vmatprep.subr.bf16.mxu0 0
        %756 = vmatpush1.bf16.xpose.msra.mxu0 0
        %757 = vmatprep.subr.bf16.mxu0 0
        %758 = vmatpush1.bf16.xpose.msra.mxu0 0
        %759 = vmatprep.subr.bf16.mxu0 0
        %760 = vmatpush1.bf16.xpose.msra.mxu0 0
        %761 = vmatprep.subr.bf16.mxu0 0
        %762 = vmatpush1.bf16.xpose.msra.mxu0 0
        %763 = vmatprep.subr.bf16.mxu0 0
        %764 = vmatpush1.bf16.xpose.msra.mxu0 0
        %765 = vmatprep.subr.bf16.mxu0 0
        %766 = vmatpush1.bf16.xpose.msra.mxu0 0
        %767 = vmatprep.subr.bf16.mxu0 0
        %768 = vmatpush1.bf16.xpose.msra.mxu0 0
        %769 = vmatprep.subr.bf16.mxu0 0
        %770 = vmatpush1.bf16.xpose.msra.mxu0 0
        %771 = vmatprep.subr.bf16.mxu0 0
        %772 = vmatpush1.bf16.xpose.msra.mxu0 0
        %773 = vmatprep.subr.bf16.mxu0 0
        %774 = vmatpush1.bf16.xpose.msra.mxu0 0
        %775 = vmatprep.subr.bf16.mxu0 0
        %776 = vmatpush1.bf16.xpose.msra.mxu0 0
        %777 = vmatprep.subr.bf16.mxu0 0
        %778 = vmatpush1.bf16.xpose.msra.mxu0 0
        %779 = vmatprep.mubr.bf16.mxu0 0
        %780 = vmatmul.mubr.bf16.gmra.mrb[0].mxu0 %v742
        %v781 = vpop.f32.mrb[0].mxu0
        %v782 = vadd.f32 0.0, %v781
        %v783 = vpop.f32.mrb[0].mxu0
        %v784 = vpop.f32.mrb[0].mxu0
        %v785 = vadd.f32 0.0, %v784
        %v786 = vpop.f32.mrb[0].mxu0
        %787 = vdwg.mxu0
        %v788 = vmul.f32 %v782, 0.25
        %v789 = vmul.f32 %v785, 0.25
        %v790 = vsel %vm616, %v788, -inf
        %791 = vmax.xlane.f32.xlu0 %v790
        %v792 = vpop.xlane.xlu0 %791
        %v793 = vsel %vm616, %v789, -inf
        %794 = vmax.xlane.f32.xlu0 %v793
        %v795 = vpop.xlane.xlu0 %794
        %v796 = vsub.f32 %v788, %v792
        %v797 = vsub.f32 %v789, %v795
        %v798 = vmul.f32 %v796, 1.442695
        %v799 = vpow.pop %v798
        %v800 = vmul.f32 %v797, 1.442695
        %v801 = vpow.pop %v800
        %v802 = vsel %vm616, %v799, 0.0
        %803 = vadd.xlane.f32.xlu0 %v802
        %v804 = vpop.xlane.xlu0 %803
        %v805 = vsel %vm616, %v801, 0.0
        %806 = vadd.xlane.f32.xlu0 %v805
        %v807 = vpop.xlane.xlu0 %806
        %v808 = vrcp.pop %v804
        %v809 = vrcp.pop %v807
        %v810 = vmul.f32 %v799, %v808
        %v811 = vmul.f32 %v801, %v809
        %s812 = scalar_lea.vmem %s414, 16 [#allocation2]
        %813 = vst.msk [vmem:[%s812] sm:$0xff] %vm616, %v810
        %814 = vst.msk [vmem:[%s812 + $0x8] sm:$0xff] %vm616, %v811
        %v815 = vpack.c.bf16 %v811, %v810
        %817 = vrot.lane.b32.xlu0 %v615, 112
        %v818 = vpop.permute.xlu0 %817
        %v821 = vsel %vm616, %v815, 0
        %823 = vmatprep.subr.bf16.mxu0 0
        %824 = vmatpush1.bf16.msra.mxu0 %v818
        %825 = vmatprep.subr.bf16.mxu0 0
        %826 = vmatpush1.bf16.msra.mxu0 0
        %827 = vmatprep.subr.bf16.mxu0 0
        %828 = vmatpush1.bf16.msra.mxu0 0
        %829 = vmatprep.subr.bf16.mxu0 0
        %830 = vmatpush1.bf16.msra.mxu0 0
        %831 = vmatprep.subr.bf16.mxu0 0
        %832 = vmatpush1.bf16.msra.mxu0 0
        %833 = vmatprep.subr.bf16.mxu0 0
        %834 = vmatpush1.bf16.msra.mxu0 0
        %835 = vmatprep.subr.bf16.mxu0 0
        %836 = vmatpush1.bf16.msra.mxu0 0
        %837 = vmatprep.subr.bf16.mxu0 0
        %838 = vmatpush1.bf16.msra.mxu0 0
        %839 = vmatprep.subr.bf16.mxu0 0
        %840 = vmatpush1.bf16.msra.mxu0 0
        %841 = vmatprep.subr.bf16.mxu0 0
        %842 = vmatpush1.bf16.msra.mxu0 0
        %843 = vmatprep.subr.bf16.mxu0 0
        %844 = vmatpush1.bf16.msra.mxu0 0
        %845 = vmatprep.subr.bf16.mxu0 0
        %846 = vmatpush1.bf16.msra.mxu0 0
        %847 = vmatprep.subr.bf16.mxu0 0
        %848 = vmatpush1.bf16.msra.mxu0 0
        %849 = vmatprep.subr.bf16.mxu0 0
        %850 = vmatpush1.bf16.msra.mxu0 0
        %851 = vmatprep.subr.bf16.mxu0 0
        %852 = vmatpush1.bf16.msra.mxu0 0
        %853 = vmatprep.subr.bf16.mxu0 0
        %854 = vmatpush1.bf16.msra.mxu0 0
        %855 = vmatprep.mubr.bf16.mxu0 0
        %856 = vmatmul.mubr.bf16.gmra.mrb[0].mxu0 %v821
        %v857 = vpop.f32.mrb[0].mxu0
        %v858 = vadd.f32 0.0, %v857
        %v859 = vpop.f32.mrb[0].mxu0
        %v860 = vpop.f32.mrb[0].mxu0
        %v861 = vadd.f32 0.0, %v860
        %v862 = vpop.f32.mrb[0].mxu0
        %863 = vdwg.mxu0
        %864 = vrot.lane.b32.xlu0 %v613, 96
        %v865 = vpop.permute.xlu0 %864
        %866 = vrot.lane.b32.xlu0 %v614, 96
        %v867 = vpop.permute.xlu0 %866
        %v869 = vsel %vm616, %v865, 0
        %v872 = vsel %vm616, %v867, 0
        %874 = vmatprep.subr.bf16.mxu0 0
        %875 = vmatpush1.bf16.xpose.msra.mxu0 %v872
        %876 = vmatprep.subr.bf16.mxu0 0
        %877 = vmatpush1.bf16.xpose.msra.mxu0 0
        %878 = vmatprep.subr.bf16.mxu0 0
        %879 = vmatpush1.bf16.xpose.msra.mxu0 0
        %880 = vmatprep.subr.bf16.mxu0 0
        %881 = vmatpush1.bf16.xpose.msra.mxu0 0
        %882 = vmatprep.subr.bf16.mxu0 0
        %883 = vmatpush1.bf16.xpose.msra.mxu0 0
        %884 = vmatprep.subr.bf16.mxu0 0
        %885 = vmatpush1.bf16.xpose.msra.mxu0 0
        %886 = vmatprep.subr.bf16.mxu0 0
        %887 = vmatpush1.bf16.xpose.msra.mxu0 0
        %888 = vmatprep.subr.bf16.mxu0 0
        %889 = vmatpush1.bf16.xpose.msra.mxu0 0
        %890 = vmatprep.subr.bf16.mxu0 0
        %891 = vmatpush1.bf16.xpose.msra.mxu0 0
        %892 = vmatprep.subr.bf16.mxu0 0
        %893 = vmatpush1.bf16.xpose.msra.mxu0 0
        %894 = vmatprep.subr.bf16.mxu0 0
        %895 = vmatpush1.bf16.xpose.msra.mxu0 0
        %896 = vmatprep.subr.bf16.mxu0 0
        %897 = vmatpush1.bf16.xpose.msra.mxu0 0
        %898 = vmatprep.subr.bf16.mxu0 0
        %899 = vmatpush1.bf16.xpose.msra.mxu0 0
        %900 = vmatprep.subr.bf16.mxu0 0
        %901 = vmatpush1.bf16.xpose.msra.mxu0 0
        %902 = vmatprep.subr.bf16.mxu0 0
        %903 = vmatpush1.bf16.xpose.msra.mxu0 0
        %904 = vmatprep.subr.bf16.mxu0 0
        %905 = vmatpush1.bf16.xpose.msra.mxu0 0
        %906 = vmatprep.mubr.bf16.mxu0 0
        %907 = vmatmul.mubr.bf16.gmra.mrb[0].mxu0 %v869
        %v908 = vpop.f32.mrb[0].mxu0
        %v909 = vadd.f32 0.0, %v908
        %v910 = vpop.f32.mrb[0].mxu0
        %v911 = vpop.f32.mrb[0].mxu0
        %v912 = vadd.f32 0.0, %v911
        %v913 = vpop.f32.mrb[0].mxu0
        %914 = vdwg.mxu0
        %v915 = vmul.f32 %v909, 0.25
        %v916 = vmul.f32 %v912, 0.25
        %v917 = vsel %vm616, %v915, -inf
        %918 = vmax.xlane.f32.xlu0 %v917
        %v919 = vpop.xlane.xlu0 %918
        %v920 = vsel %vm616, %v916, -inf
        %921 = vmax.xlane.f32.xlu0 %v920
        %v922 = vpop.xlane.xlu0 %921
        %v923 = vsub.f32 %v915, %v919
        %v924 = vsub.f32 %v916, %v922
        %v925 = vmul.f32 %v923, 1.442695
        %v926 = vpow.pop %v925
        %v927 = vmul.f32 %v924, 1.442695
        %v928 = vpow.pop %v927
        %v929 = vsel %vm616, %v926, 0.0
        %930 = vadd.xlane.f32.xlu0 %v929
        %v931 = vpop.xlane.xlu0 %930
        %v932 = vsel %vm616, %v928, 0.0
        %933 = vadd.xlane.f32.xlu0 %v932
        %v934 = vpop.xlane.xlu0 %933
        %v935 = vrcp.pop %v931
        %v936 = vrcp.pop %v934
        %v937 = vmul.f32 %v926, %v935
        %v938 = vmul.f32 %v928, %v936
        %s939 = scalar_lea.vmem %s414, 32 [#allocation2]
        %940 = vst.msk [vmem:[%s939] sm:$0xff] %vm616, %v937
        %941 = vst.msk [vmem:[%s939 + $0x8] sm:$0xff] %vm616, %v938
        %v942 = vpack.c.bf16 %v938, %v937
        %943 = vrot.lane.b32.xlu0 %v615, 96
        %v944 = vpop.permute.xlu0 %943
        %v947 = vsel %vm616, %v942, 0
        %949 = vmatprep.subr.bf16.mxu0 0
        %950 = vmatpush1.bf16.msra.mxu0 %v944
        %951 = vmatprep.subr.bf16.mxu0 0
        %952 = vmatpush1.bf16.msra.mxu0 0
        %953 = vmatprep.subr.bf16.mxu0 0
        %954 = vmatpush1.bf16.msra.mxu0 0
        %955 = vmatprep.subr.bf16.mxu0 0
        %956 = vmatpush1.bf16.msra.mxu0 0
        %957 = vmatprep.subr.bf16.mxu0 0
        %958 = vmatpush1.bf16.msra.mxu0 0
        %959 = vmatprep.subr.bf16.mxu0 0
        %960 = vmatpush1.bf16.msra.mxu0 0
        %961 = vmatprep.subr.bf16.mxu0 0
        %962 = vmatpush1.bf16.msra.mxu0 0
        %963 = vmatprep.subr.bf16.mxu0 0
        %964 = vmatpush1.bf16.msra.mxu0 0
        %965 = vmatprep.subr.bf16.mxu0 0
        %966 = vmatpush1.bf16.msra.mxu0 0
        %967 = vmatprep.subr.bf16.mxu0 0
        %968 = vmatpush1.bf16.msra.mxu0 0
        %969 = vmatprep.subr.bf16.mxu0 0
        %970 = vmatpush1.bf16.msra.mxu0 0
        %971 = vmatprep.subr.bf16.mxu0 0
        %972 = vmatpush1.bf16.msra.mxu0 0
        %973 = vmatprep.subr.bf16.mxu0 0
        %974 = vmatpush1.bf16.msra.mxu0 0
        %975 = vmatprep.subr.bf16.mxu0 0
        %976 = vmatpush1.bf16.msra.mxu0 0
        %977 = vmatprep.subr.bf16.mxu0 0
        %978 = vmatpush1.bf16.msra.mxu0 0
        %979 = vmatprep.subr.bf16.mxu0 0
        %980 = vmatpush1.bf16.msra.mxu0 0
        %981 = vmatprep.mubr.bf16.mxu0 0
        %982 = vmatmul.mubr.bf16.gmra.mrb[0].mxu0 %v947
        %v983 = vpop.f32.mrb[0].mxu0
        %v984 = vadd.f32 0.0, %v983
        %v985 = vpop.f32.mrb[0].mxu0
        %v986 = vpop.f32.mrb[0].mxu0
        %v987 = vadd.f32 0.0, %v986
        %v988 = vpop.f32.mrb[0].mxu0
        %989 = vdwg.mxu0
        %990 = vrot.lane.b32.xlu0 %v613, 80
        %v991 = vpop.permute.xlu0 %990
        %992 = vrot.lane.b32.xlu0 %v614, 80
        %v993 = vpop.permute.xlu0 %992
        %v995 = vsel %vm616, %v991, 0
        %v998 = vsel %vm616, %v993, 0
        %1000 = vmatprep.subr.bf16.mxu0 0
        %1001 = vmatpush1.bf16.xpose.msra.mxu0 %v998
        %1002 = vmatprep.subr.bf16.mxu0 0
        %1003 = vmatpush1.bf16.xpose.msra.mxu0 0
        %1004 = vmatprep.subr.bf16.mxu0 0
        %1005 = vmatpush1.bf16.xpose.msra.mxu0 0
        %1006 = vmatprep.subr.bf16.mxu0 0
        %1007 = vmatpush1.bf16.xpose.msra.mxu0 0
        %1008 = vmatprep.subr.bf16.mxu0 0
        %1009 = vmatpush1.bf16.xpose.msra.mxu0 0
        %1010 = vmatprep.subr.bf16.mxu0 0
        %1011 = vmatpush1.bf16.xpose.msra.mxu0 0
        %1012 = vmatprep.subr.bf16.mxu0 0
        %1013 = vmatpush1.bf16.xpose.msra.mxu0 0
        %1014 = vmatprep.subr.bf16.mxu0 0
        %1015 = vmatpush1.bf16.xpose.msra.mxu0 0
        %1016 = vmatprep.subr.bf16.mxu0 0
        %1017 = vmatpush1.bf16.xpose.msra.mxu0 0
        %1018 = vmatprep.subr.bf16.mxu0 0
        %1019 = vmatpush1.bf16.xpose.msra.mxu0 0
        %1020 = vmatprep.subr.bf16.mxu0 0
        %1021 = vmatpush1.bf16.xpose.msra.mxu0 0
        %1022 = vmatprep.subr.bf16.mxu0 0
        %1023 = vmatpush1.bf16.xpose.msra.mxu0 0
        %1024 = vmatprep.subr.bf16.mxu0 0
        %1025 = vmatpush1.bf16.xpose.msra.mxu0 0
        %1026 = vmatprep.subr.bf16.mxu0 0
        %1027 = vmatpush1.bf16.xpose.msra.mxu0 0
        %1028 = vmatprep.subr.bf16.mxu0 0
        %1029 = vmatpush1.bf16.xpose.msra.mxu0 0
        %1030 = vmatprep.subr.bf16.mxu0 0
        %1031 = vmatpush1.bf16.xpose.msra.mxu0 0
        %1032 = vmatprep.mubr.bf16.mxu0 0
        %1033 = vmatmul.mubr.bf16.gmra.mrb[0].mxu0 %v995
        %v1034 = vpop.f32.mrb[0].mxu0
        %v1035 = vadd.f32 0.0, %v1034
        %v1036 = vpop.f32.mrb[0].mxu0
        %v1037 = vpop.f32.mrb[0].mxu0
        %v1038 = vadd.f32 0.0, %v1037
        %v1039 = vpop.f32.mrb[0].mxu0
        %1040 = vdwg.mxu0
        %v1041 = vmul.f32 %v1035, 0.25
        %v1042 = vmul.f32 %v1038, 0.25
        %v1043 = vsel %vm616, %v1041, -inf
        %1044 = vmax.xlane.f32.xlu0 %v1043
        %v1045 = vpop.xlane.xlu0 %1044
        %v1046 = vsel %vm616, %v1042, -inf
        %1047 = vmax.xlane.f32.xlu0 %v1046
        %v1048 = vpop.xlane.xlu0 %1047
        %v1049 = vsub.f32 %v1041, %v1045
        %v1050 = vsub.f32 %v1042, %v1048
        %v1051 = vmul.f32 %v1049, 1.442695
        %v1052 = vpow.pop %v1051
        %v1053 = vmul.f32 %v1050, 1.442695
        %v1054 = vpow.pop %v1053
        %v1055 = vsel %vm616, %v1052, 0.0
        %1056 = vadd.xlane.f32.xlu0 %v1055
        %v1057 = vpop.xlane.xlu0 %1056
        %v1058 = vsel %vm616, %v1054, 0.0
        %1059 = vadd.xlane.f32.xlu0 %v1058
        %v1060 = vpop.xlane.xlu0 %1059
        %v1061 = vrcp.pop %v1057
        %v1062 = vrcp.pop %v1060
        %v1063 = vmul.f32 %v1052, %v1061
        %v1064 = vmul.f32 %v1054, %v1062
        %s1065 = scalar_lea.vmem %s414, 48 [#allocation2]
        %1066 = vst.msk [vmem:[%s1065] sm:$0xff] %vm616, %v1063
        %1067 = vst.msk [vmem:[%s1065 + $0x8] sm:$0xff] %vm616, %v1064
        %v1068 = vpack.c.bf16 %v1064, %v1063
        %1069 = vrot.lane.b32.xlu0 %v615, 80
        %v1070 = vpop.permute.xlu0 %1069
        %v1073 = vsel %vm616, %v1068, 0
        %1075 = vmatprep.subr.bf16.mxu0 0
        %1076 = vmatpush1.bf16.msra.mxu0 %v1070
        %1077 = vmatprep.subr.bf16.mxu0 0
        %1078 = vmatpush1.bf16.msra.mxu0 0
        %1079 = vmatprep.subr.bf16.mxu0 0
        %1080 = vmatpush1.bf16.msra.mxu0 0
        %1081 = vmatprep.subr.bf16.mxu0 0
        %1082 = vmatpush1.bf16.msra.mxu0 0
        %1083 = vmatprep.subr.bf16.mxu0 0
        %1084 = vmatpush1.bf16.msra.mxu0 0
        %1085 = vmatprep.subr.bf16.mxu0 0
        %1086 = vmatpush1.bf16.msra.mxu0 0
        %1087 = vmatprep.subr.bf16.mxu0 0
        %1088 = vmatpush1.bf16.msra.mxu0 0
        %1089 = vmatprep.subr.bf16.mxu0 0
        %1090 = vmatpush1.bf16.msra.mxu0 0
        %1091 = vmatprep.subr.bf16.mxu0 0
        %1092 = vmatpush1.bf16.msra.mxu0 0
        %1093 = vmatprep.subr.bf16.mxu0 0
        %1094 = vmatpush1.bf16.msra.mxu0 0
        %1095 = vmatprep.subr.bf16.mxu0 0
        %1096 = vmatpush1.bf16.msra.mxu0 0
        %1097 = vmatprep.subr.bf16.mxu0 0
        %1098 = vmatpush1.bf16.msra.mxu0 0
        %1099 = vmatprep.subr.bf16.mxu0 0
        %1100 = vmatpush1.bf16.msra.mxu0 0
        %1101 = vmatprep.subr.bf16.mxu0 0
        %1102 = vmatpush1.bf16.msra.mxu0 0
        %1103 = vmatprep.subr.bf16.mxu0 0
        %1104 = vmatpush1.bf16.msra.mxu0 0
        %1105 = vmatprep.subr.bf16.mxu0 0
        %1106 = vmatpush1.bf16.msra.mxu0 0
        %1107 = vmatprep.mubr.bf16.mxu0 0
        %1108 = vmatmul.mubr.bf16.gmra.mrb[0].mxu0 %v1073
        %v1109 = vpop.f32.mrb[0].mxu0
        %v1110 = vadd.f32 0.0, %v1109
        %v1111 = vpop.f32.mrb[0].mxu0
        %v1112 = vpop.f32.mrb[0].mxu0
        %v1113 = vadd.f32 0.0, %v1112
        %v1114 = vpop.f32.mrb[0].mxu0
        %1115 = vdwg.mxu0
        %1118 = vrot.lane.b32.xlu0 %v858, 16
        %v1119 = vpop.permute.xlu0 %1118
        %1120 = vrot.lane.b32.xlu0 %v861, 16
        %v1121 = vpop.permute.xlu0 %1120
        %1126 = vrot.lane.b32.xlu0 %v984, 32
        %v1127 = vpop.permute.xlu0 %1126
        %1128 = vrot.lane.b32.xlu0 %v987, 32
        %v1129 = vpop.permute.xlu0 %1128
        %1134 = vrot.lane.b32.xlu0 %v1110, 48
        %v1135 = vpop.permute.xlu0 %1134
        %1136 = vrot.lane.b32.xlu0 %v1113, 48
        %v1137 = vpop.permute.xlu0 %1136
        %v1140 = vsel %vm616, %v729, %v1119
        %v1141 = vsel %vm616, %v732, %v1121
        %vm1142 = vcmask 261120
        %v1143 = vsel %vm1142, %v1140, %v1127
        %v1144 = vsel %vm1142, %v1141, %v1129
        %vm1145 = vcmask 392192
        %v1146 = vsel %vm1145, %v1143, %v1135
        %v1147 = vsel %vm1145, %v1144, %v1137
        %v1148 = vpack.c.bf16 %v1147, %v1146
        %v1149 = vld [vmem:[%s7] sm:$0xff]
        %v1150 = vld [vmem:[%s7 + $0x8] sm:$0xff]
        %v1151 = vld [vmem:[%s7 + $0x10] sm:$0xff]
        %v1152 = vld [vmem:[%s7 + $0x18] sm:$0xff]
        %v1153 = vld [vmem:[%s7 + $0x20] sm:$0xff]
        %v1154 = vld [vmem:[%s7 + $0x28] sm:$0xff]
        %v1155 = vld [vmem:[%s7 + $0x30] sm:$0xff]
        %v1156 = vld [vmem:[%s7 + $0x38] sm:$0xff]
        %v1157 = vpack.c.bf16 %v1150, %v1149
        %v1158 = vpack.c.bf16 %v1152, %v1151
        %v1159 = vpack.c.bf16 %v1154, %v1153
        %v1160 = vpack.c.bf16 %v1156, %v1155
        %v1161 = vld [vmem:[%s8] sm:$0x1]
        %v1163 = vlaneseq
        %v1164 = vshrl.u32 %v1163, 7
        %v1165 = vsub.s32 0, %v1164
        %v1166 = vrot.slane %v1161, %v1165
        %v1169 = vsel %vm448, %v1148, 0
        %1171 = vmatprep.subr.bf16.mxu0 0
        %1172 = vmatpush1.bf16.msra.mxu0 %v1157
        %1173 = vmatprep.subr.bf16.mxu0 0
        %1174 = vmatpush1.bf16.msra.mxu0 %v1158
        %1175 = vmatprep.subr.bf16.mxu0 0
        %1176 = vmatpush1.bf16.msra.mxu0 %v1159
        %1177 = vmatprep.subr.bf16.mxu0 0
        %1178 = vmatpush1.bf16.msra.mxu0 %v1160
        %1179 = vmatprep.subr.bf16.mxu0 0
        %1180 = vmatpush1.bf16.msra.mxu0 0
        %1181 = vmatprep.subr.bf16.mxu0 0
        %1182 = vmatpush1.bf16.msra.mxu0 0
        %1183 = vmatprep.subr.bf16.mxu0 0
        %1184 = vmatpush1.bf16.msra.mxu0 0
        %1185 = vmatprep.subr.bf16.mxu0 0
        %1186 = vmatpush1.bf16.msra.mxu0 0
        %1187 = vmatprep.subr.bf16.mxu0 0
        %1188 = vmatpush1.bf16.msra.mxu0 0
        %1189 = vmatprep.subr.bf16.mxu0 0
        %1190 = vmatpush1.bf16.msra.mxu0 0
        %1191 = vmatprep.subr.bf16.mxu0 0
        %1192 = vmatpush1.bf16.msra.mxu0 0
        %1193 = vmatprep.subr.bf16.mxu0 0
        %1194 = vmatpush1.bf16.msra.mxu0 0
        %1195 = vmatprep.subr.bf16.mxu0 0
        %1196 = vmatpush1.bf16.msra.mxu0 0
        %1197 = vmatprep.subr.bf16.mxu0 0
        %1198 = vmatpush1.bf16.msra.mxu0 0
        %1199 = vmatprep.subr.bf16.mxu0 0
        %1200 = vmatpush1.bf16.msra.mxu0 0
        %1201 = vmatprep.subr.bf16.mxu0 0
        %1202 = vmatpush1.bf16.msra.mxu0 0
        %1203 = vmatprep.mubr.bf16.mxu0 0
        %1204 = vmatmul.mubr.bf16.gmra.mrb[0].mxu0 %v1169
        %v1205 = vpop.f32.mrb[0].mxu0
        %v1206 = vadd.f32 %v1166, %v1205
        %v1207 = vpop.f32.mrb[0].mxu0
        %v1208 = vpop.f32.mrb[0].mxu0
        %v1209 = vadd.f32 %v1166, %v1208
        %v1210 = vpop.f32.mrb[0].mxu0
        %1211 = vdwg.mxu0
        %v1212 = vadd.f32 %v1206, %v426
        %v1213 = vadd.f32 %v1209, %v427
        %v1214 = vsel %vm448, %v1212, 0.0
        %1215 = vadd.xlane.f32.xlu0 %v1214
        %v1216 = vpop.xlane.xlu0 %1215
        %v1217 = vsel %vm448, %v1213, 0.0
        %1218 = vadd.xlane.f32.xlu0 %v1217
        %v1219 = vpop.xlane.xlu0 %1218
        %v1220 = vrcp.pop 64.0
        %v1221 = vmul.f32 %v1216, %v1220
        %v1222 = vmul.f32 %v1219, %v1220
        %v1223 = vsub.f32 %v1212, %v1221
        %v1224 = vsub.f32 %v1213, %v1222
        %v1225 = vmul.f32 %v1223, %v1223
        %v1226 = vmul.f32 %v1224, %v1224
        %v1227 = vsel %vm448, %v1225, 0.0
        %1228 = vadd.xlane.f32.xlu0 %v1227
        %v1229 = vpop.xlane.xlu0 %1228
        %v1230 = vsel %vm448, %v1226, 0.0
        %1231 = vadd.xlane.f32.xlu0 %v1230
        %v1232 = vpop.xlane.xlu0 %1231
        %v1233 = vmul.f32 %v1229, %v1220
        %v1234 = vmul.f32 %v1232, %v1220
        %v1235 = vadd.f32 %v1233, 1e-05
        %v1236 = vadd.f32 %v1234, 1e-05
        %v1237 = vrsqrt.pop %v1235
        %v1238 = vrsqrt.pop %v1236
        %v1239 = vmul.f32 %v1223, %v1237
        %v1240 = vmul.f32 %v1224, %v1238
        %v1241 = vld [vmem:[%s9] sm:$0x1]
        %v1243 = vlaneseq
        %v1244 = vshrl.u32 %v1243, 7
        %v1245 = vsub.s32 0, %v1244
        %v1246 = vrot.slane %v1241, %v1245
        %v1248 = vmul.f32 %v1239, %v1246
        %v1249 = vmul.f32 %v1240, %v1246
        %v1250 = vld [vmem:[%s10] sm:$0x1]
        %v1252 = vlaneseq
        %v1253 = vshrl.u32 %v1252, 7
        %v1254 = vsub.s32 0, %v1253
        %v1255 = vrot.slane %v1250, %v1254
        %v1257 = vadd.f32 %v1248, %v1255
        %v1258 = vadd.f32 %v1249, %v1255
        %1259 = vst.msk [vmem:[%s424] sm:$0xff] %vm448, %v1257
        %1260 = vst.msk [vmem:[%s424 + $0x8] sm:$0xff] %vm448, %v1258
        %p1261 = scmp.lt.s32.totalorder %s27, 1
        %s1262 = scalar_select %p1261, %s27, 1
        %s1263 = smul.addr %s1262, 2
        %s1264 = smul.addr %s1263, 8
        %s1265 = scalar_lea.vmem %s11, %s1264
        %s1266 = sand.u32 %s297, 1
        %s1267 = scalar_lea.sflag [#allocation3], %s1266
        %s1268 = sand.u32 %s297, 1
        %s1269 = smul.addr %s1268, 64
        %s1270 = scalar_lea.vmem [#allocation2], %s1269
        // Predicated region
        $region65: #{encoder_decoder_forward.12} parent=63 // pred_check
          %p1271 = pneg %p281
        $region66: #{encoder_decoder_forward.12} parent=63 // pred_check_branch
          %1273 = sbr.rel (%p1271) target = $region68
        $region67: #{encoder_decoder_forward.12} parent=63 // pred_region
          _
        $region68: #{encoder_decoder_forward.12} parent=63 // pred_fallthru
          _
        // Predicated region
        $region69: #{encoder_decoder_forward.12} parent=63 // pred_check
          %p1274 = pneg %p307
        $region70: #{encoder_decoder_forward.12} parent=63 // pred_check_branch
          %1276 = sbr.rel (%p1274) target = $region72
        $region71: #{encoder_decoder_forward.12} parent=63 // pred_region
          %s1278 = ssub.s32 1024, 1024
          %1279 = vsyncadd %s1267, %s1278
          %s1280 = smul.addr %s27, 8
          %s1281 = smul.addr %s1280, 128
          %s1282 = scalar_lea.hbm %s12, %s1281
          %s1283 = sshll.u32 %s1270, 4
          %s1284 = int_to_ptr.vmem [resolvable:$true] %s1283
          %1289 = dma.vmem_to_hbm [thread:$0]  %s1284, 1024, %s1282, %s1267, 128, 128, 8
        $region72: #{encoder_decoder_forward.12} parent=63 // pred_fallthru
          _
      $region64: #{encoder_decoder_forward.12} parent=5 // pred_fallthru
        _
      %p1290 = scmp.le.s32.totalorder 2, %s22
      // Predicated region
      $region73: #{encoder_decoder_forward.12} parent=5 // pred_check
        %p1291 = pneg %p1290
      $region74: #{encoder_decoder_forward.12} parent=5 // pred_check_branch
        %1293 = sbr.rel (%p1291) target = $region76
      $region75: #{encoder_decoder_forward.12} parent=5 // pred_region
        %s1294 = ssub.s32 %s22, 2
        // Predicated region
        $region77: #{encoder_decoder_forward.12} parent=75 // pred_check
          %p1295 = pneg %p287
        $region78: #{encoder_decoder_forward.12} parent=75 // pred_check_branch
          %1297 = sbr.rel (%p1295) target = $region80
        $region79: #{encoder_decoder_forward.12} parent=75 // pred_region
          %p1298 = scmp.lt.s32.totalorder %s28, 1
          %s1299 = scalar_select %p1298, %s28, 1
          %s1300 = smul.addr %s1299, 2
          %s1301 = smul.addr %s1300, 8
          %s1302 = scalar_lea.vmem %s11, %s1301
        $region80: #{encoder_decoder_forward.12} parent=75 // pred_fallthru
          _
        // Predicated region
        $region81: #{encoder_decoder_forward.12} parent=75 // pred_check
          %p1303 = pneg %p313
        $region82: #{encoder_decoder_forward.12} parent=75 // pred_check_branch
          %1305 = sbr.rel (%p1303) target = $region84
        $region83: #{encoder_decoder_forward.12} parent=75 // pred_region
          %s1306 = sand.u32 %s298, 1
          %s1307 = scalar_lea.sflag [#allocation3], %s1306
          %s1308 = sand.u32 %s298, 1
          %s1309 = smul.addr %s1308, 64
          %s1310 = scalar_lea.vmem [#allocation2], %s1309
          %1311 = dma.done %s1307, 1024
        $region84: #{encoder_decoder_forward.12} parent=75 // pred_fallthru
          _
      $region76: #{encoder_decoder_forward.12} parent=5 // pred_fallthru
        _
    $region6: #{encoder_decoder_forward.12} parent=1 // loop_footer
      %s26 = sadd.s32 1, %s22
    $region7: #{encoder_decoder_forward.12} parent=1 // loop_footer_branch
      %21 = sbr.rel target = $region3
    $region8: #{encoder_decoder_forward.12} parent=1 // loop_exit
      _
    %1312 = vsyncpa [#allocation3], 1
    %s1313 = scalar_lea.sflag [#allocation3], 1
    %1314 = vsyncpa %s1313, 1

// kernel: encoder_decoder_forward.17
$region0: #{encoder_decoder_forward.17}
  #allocation0 [shape = 'u32[]', space=smem, size = 0x4, offset = 0x4, fixed_abs, tag = 'smem constant byte address 0x4 - core index']
  #allocation1 [shape = 'u32[144,128]{1,0:T(1,128)}', space=vmem, size = 0x12000, scoped, tag = 'internal scratch']
  %s0 = inlined_call_operand.vmem [shape: f32[2,12,12], index: 0, kind: input, shape index: {}]
  %s1 = inlined_call_operand.vmem [shape: f32[2,12,4], index: 1, kind: input, shape index: {}]
  %s2 = inlined_call_operand.vmem [shape: f32[12,64], index: 2, kind: input, shape index: {}]
  %s3 = inlined_call_operand.vmem [shape: f32[12,64], index: 3, kind: input, shape index: {}]
  %s4 = inlined_call_operand.vmem [shape: f32[4,64], index: 4, kind: input, shape index: {}]
  %s5 = inlined_call_operand.vmem [shape: f32[2,12,64], index: 5, kind: output, shape index: {}]
  %s6 = sld [smem:[#allocation0]]
  $region53: #{encoder_decoder_forward.17} parent=0
    _
  %s8 = ssub.s32 1, %s6
  %s9 = scalar_select 0, %s8, %s6
  loop: start=0, step=1, limit=4
  $region2: #{encoder_decoder_forward.17} parent=0 // loop_pre_header
    _
  $region3: #{encoder_decoder_forward.17} parent=0 // loop_header
    %s11 = sphi 0, %s15
    %p12 = scmp.ge.s32.totalorder %s11, 4
    %s21 = sphi 0, %s23
    %s24 = sphi 0, %s21
    %s25 = sphi 0, %s24
    %s41 = sphi 0, %s25
    %s47 = sphi 0, %s49
    %s50 = sphi 0, %s47
    %s51 = sphi 0, %s50
    %s67 = sphi 0, %s51
    %s71 = sphi 0, %s71
    %s73 = sphi 0, %s71
    %s74 = sphi 0, %s73
    %s88 = sphi 0, %s74
    %s92 = sphi 0, %s92
    %s94 = sphi 0, %s92
    %s95 = sphi 0, %s94
    %s109 = sphi 0, %s95
    %s113 = sphi 0, %s113
    %s115 = sphi 0, %s113
    %s116 = sphi 0, %s115
    %s130 = sphi 0, %s116
    %s136 = sphi 0, %s138
    %s139 = sphi 0, %s136
    %s140 = sphi 0, %s139
    %s156 = sphi 0, %s140
  $region4: #{encoder_decoder_forward.17} parent=0 // loop_header_branch
    %14 = sbr.rel (%p12) target = $region8
  $region5: #{encoder_decoder_forward.17} parent=0 // loop_body
    %s16 = ssub.s32 %s11, 1
    %s17 = ssub.s32 %s11, 2
    %s18 = sadd.s32 %s11, 1
    %s19 = ssub.s32 %s11, %s18
    %p20 = scmp.eq.s32.totalorder %s19, 0
    %s22 = sadd.s32 %s21, 1
    %s23 = scalar_select %p20, %s21, %s22
    %p26 = pneg %p20
    %p27 = scmp.eq.s32.totalorder %s11, 1
    %p28 = por %p26, %p27
    %p29 = scmp.ne.s32.totalorder %s21, %s24
    %p30 = scmp.eq.s32.totalorder %s11, 0
    %p31 = por %p29, %p30
    %p32 = scmp.ne.s32.totalorder %s21, %s24
    %p33 = scmp.eq.s32.totalorder %s16, 1
    %p34 = por %p32, %p33
    %p35 = scmp.ne.s32.totalorder %s24, %s25
    %p36 = scmp.eq.s32.totalorder %s16, 0
    %p37 = por %p35, %p36
    %p38 = scmp.ne.s32.totalorder %s24, %s25
    %p39 = scmp.eq.s32.totalorder %s17, 1
    %p40 = por %p38, %p39
    %p42 = scmp.ne.s32.totalorder %s25, %s41
    %p43 = scmp.eq.s32.totalorder %s17, 0
    %p44 = por %p42, %p43
    %s45 = ssub.s32 %s11, %s18
    %p46 = scmp.eq.s32.totalorder %s45, 0
    %s48 = sadd.s32 %s47, 1
    %s49 = scalar_select %p46, %s47, %s48
    %p52 = pneg %p46
    %p53 = scmp.eq.s32.totalorder %s11, 1
    %p54 = por %p52, %p53
    %p55 = scmp.ne.s32.totalorder %s47, %s50
    %p56 = scmp.eq.s32.totalorder %s11, 0
    %p57 = por %p55, %p56
    %p58 = scmp.ne.s32.totalorder %s47, %s50
    %p59 = scmp.eq.s32.totalorder %s16, 1
    %p60 = por %p58, %p59
    %p61 = scmp.ne.s32.totalorder %s50, %s51
    %p62 = scmp.eq.s32.totalorder %s16, 0
    %p63 = por %p61, %p62
    %p64 = scmp.ne.s32.totalorder %s50, %s51
    %p65 = scmp.eq.s32.totalorder %s17, 1
    %p66 = por %p64, %p65
    %p68 = scmp.ne.s32.totalorder %s51, %s67
    %p69 = scmp.eq.s32.totalorder %s17, 0
    %p70 = por %p68, %p69
    %s72 = sadd.s32 %s71, 1
    %p75 = scmp.eq.s32.totalorder %s11, 1
    %p76 = scmp.ne.s32.totalorder %s71, %s73
    %p77 = scmp.eq.s32.totalorder %s11, 0
    %p78 = por %p76, %p77
    %p79 = scmp.ne.s32.totalorder %s71, %s73
    %p80 = scmp.eq.s32.totalorder %s16, 1
    %p81 = por %p79, %p80
    %p82 = scmp.ne.s32.totalorder %s73, %s74
    %p83 = scmp.eq.s32.totalorder %s16, 0
    %p84 = por %p82, %p83
    %p85 = scmp.ne.s32.totalorder %s73, %s74
    %p86 = scmp.eq.s32.totalorder %s17, 1
    %p87 = por %p85, %p86
    %p89 = scmp.ne.s32.totalorder %s74, %s88
    %p90 = scmp.eq.s32.totalorder %s17, 0
    %p91 = por %p89, %p90
    %s93 = sadd.s32 %s92, 1
    %p96 = scmp.eq.s32.totalorder %s11, 1
    %p97 = scmp.ne.s32.totalorder %s92, %s94
    %p98 = scmp.eq.s32.totalorder %s11, 0
    %p99 = por %p97, %p98
    %p100 = scmp.ne.s32.totalorder %s92, %s94
    %p101 = scmp.eq.s32.totalorder %s16, 1
    %p102 = por %p100, %p101
    %p103 = scmp.ne.s32.totalorder %s94, %s95
    %p104 = scmp.eq.s32.totalorder %s16, 0
    %p105 = por %p103, %p104
    %p106 = scmp.ne.s32.totalorder %s94, %s95
    %p107 = scmp.eq.s32.totalorder %s17, 1
    %p108 = por %p106, %p107
    %p110 = scmp.ne.s32.totalorder %s95, %s109
    %p111 = scmp.eq.s32.totalorder %s17, 0
    %p112 = por %p110, %p111
    %s114 = sadd.s32 %s113, 1
    %p117 = scmp.eq.s32.totalorder %s11, 1
    %p118 = scmp.ne.s32.totalorder %s113, %s115
    %p119 = scmp.eq.s32.totalorder %s11, 0
    %p120 = por %p118, %p119
    %p121 = scmp.ne.s32.totalorder %s113, %s115
    %p122 = scmp.eq.s32.totalorder %s16, 1
    %p123 = por %p121, %p122
    %p124 = scmp.ne.s32.totalorder %s115, %s116
    %p125 = scmp.eq.s32.totalorder %s16, 0
    %p126 = por %p124, %p125
    %p127 = scmp.ne.s32.totalorder %s115, %s116
    %p128 = scmp.eq.s32.totalorder %s17, 1
    %p129 = por %p127, %p128
    %p131 = scmp.ne.s32.totalorder %s116, %s130
    %p132 = scmp.eq.s32.totalorder %s17, 0
    %p133 = por %p131, %p132
    %s134 = ssub.s32 %s11, %s18
    %p135 = scmp.eq.s32.totalorder %s134, 0
    %s137 = sadd.s32 %s136, 1
    %s138 = scalar_select %p135, %s136, %s137
    %p141 = pneg %p135
    %p142 = scmp.eq.s32.totalorder %s11, 1
    %p143 = por %p141, %p142
    %p144 = scmp.ne.s32.totalorder %s136, %s139
    %p145 = scmp.eq.s32.totalorder %s11, 0
    %p146 = por %p144, %p145
    %p147 = scmp.ne.s32.totalorder %s136, %s139
    %p148 = scmp.eq.s32.totalorder %s16, 1
    %p149 = por %p147, %p148
    %p150 = scmp.ne.s32.totalorder %s139, %s140
    %p151 = scmp.eq.s32.totalorder %s16, 0
    %p152 = por %p150, %p151
    %p153 = scmp.ne.s32.totalorder %s139, %s140
    %p154 = scmp.eq.s32.totalorder %s17, 1
    %p155 = por %p153, %p154
    %p157 = scmp.ne.s32.totalorder %s140, %s156
    %p158 = scmp.eq.s32.totalorder %s17, 0
    %p159 = por %p157, %p158
    %p160 = scmp.le.s32.totalorder 1, %s11
    %p161 = scmp.lt.s32.totalorder %s11, 3
    %p162 = pnand %p160, %p161
    %p163 = pneg %p162
    // Predicated region
    $region9: #{encoder_decoder_forward.17} parent=5 // pred_check
      _
    $region10: #{encoder_decoder_forward.17} parent=5 // pred_check_branch
      %165 = sbr.rel (%p162) target = $region12
    $region11: #{encoder_decoder_forward.17} parent=5 // pred_region
      %s166 = ssub.s32 %s11, 1
      // Predicated region
      $region13: #{encoder_decoder_forward.17} parent=11 // pred_check
        %p167 = pneg %p84
      $region14: #{encoder_decoder_forward.17} parent=11 // pred_check_branch
        %169 = sbr.rel (%p167) target = $region16
      $region15: #{encoder_decoder_forward.17} parent=11 // pred_region
        _
      $region16: #{encoder_decoder_forward.17} parent=11 // pred_fallthru
        _
      // Predicated region
      $region17: #{encoder_decoder_forward.17} parent=11 // pred_check
        %p170 = pneg %p105
      $region18: #{encoder_decoder_forward.17} parent=11 // pred_check_branch
        %172 = sbr.rel (%p170) target = $region20
      $region19: #{encoder_decoder_forward.17} parent=11 // pred_region
        _
      $region20: #{encoder_decoder_forward.17} parent=11 // pred_fallthru
        _
      // Predicated region
      $region21: #{encoder_decoder_forward.17} parent=11 // pred_check
        %p173 = pneg %p126
      $region22: #{encoder_decoder_forward.17} parent=11 // pred_check_branch
        %175 = sbr.rel (%p173) target = $region24
      $region23: #{encoder_decoder_forward.17} parent=11 // pred_region
        _
      $region24: #{encoder_decoder_forward.17} parent=11 // pred_fallthru
        _
    $region12: #{encoder_decoder_forward.17} parent=5 // pred_fallthru
      _
    %p176 = scmp.lt.s32.totalorder %s11, 2
    // Predicated region
    $region25: #{encoder_decoder_forward.17} parent=5 // pred_check
      %p177 = pneg %p176
    $region26: #{encoder_decoder_forward.17} parent=5 // pred_check_branch
      %179 = sbr.rel (%p177) target = $region28
    $region27: #{encoder_decoder_forward.17} parent=5 // pred_region
      // Predicated region
      $region29: #{encoder_decoder_forward.17} parent=27 // pred_check
        %p180 = pneg %p31
      $region30: #{encoder_decoder_forward.17} parent=27 // pred_check_branch
        %182 = sbr.rel (%p180) target = $region32
      $region31: #{encoder_decoder_forward.17} parent=27 // pred_region
        %p183 = scmp.lt.s32.totalorder %s11, 1
        %s184 = scalar_select %p183, %s11, 1
        %s185 = smul.addr %s184, 2
        %s186 = smul.addr %s185, 8
        %s187 = scalar_lea.vmem %s0, %s186
      $region32: #{encoder_decoder_forward.17} parent=27 // pred_fallthru
        _
      // Predicated region
      $region33: #{encoder_decoder_forward.17} parent=27 // pred_check
        %p188 = pneg %p57
      $region34: #{encoder_decoder_forward.17} parent=27 // pred_check_branch
        %190 = sbr.rel (%p188) target = $region36
      $region35: #{encoder_decoder_forward.17} parent=27 // pred_region
        %p191 = scmp.lt.s32.totalorder %s11, 1
        %s192 = scalar_select %p191, %s11, 1
        %s193 = smul.addr %s192, 2
        %s194 = smul.addr %s193, 8
        %s195 = scalar_lea.vmem %s1, %s194
      $region36: #{encoder_decoder_forward.17} parent=27 // pred_fallthru
        _
    $region28: #{encoder_decoder_forward.17} parent=5 // pred_fallthru
      _
    %p196 = scmp.le.s32.totalorder 1, %s11
    %p197 = scmp.lt.s32.totalorder %s11, 3
    %p198 = pnand %p196, %p197
    %p199 = pneg %p198
    // Predicated region
    $region37: #{encoder_decoder_forward.17} parent=5 // pred_check
      _
    $region38: #{encoder_decoder_forward.17} parent=5 // pred_check_branch
      %201 = sbr.rel (%p198) target = $region40
    $region39: #{encoder_decoder_forward.17} parent=5 // pred_region
      %s202 = ssub.s32 %s11, 1
      %p203 = scmp.lt.s32.totalorder %s16, 1
      %s204 = scalar_select %p203, %s16, 1
      %s205 = smul.addr %s204, 2
      %s206 = smul.addr %s205, 8
      %s207 = scalar_lea.vmem %s0, %s206
      %p208 = pneg %p37
      %p209 = pneg %p34
      %p210 = scmp.lt.s32.totalorder %s16, 1
      %s211 = scalar_select %p210, %s16, 1
      %s212 = smul.addr %s211, 2
      %s213 = smul.addr %s212, 8
      %s214 = scalar_lea.vmem %s1, %s213
      %p215 = pneg %p63
      %p216 = pneg %p60
      %p217 = pneg %p84
      %p218 = pneg %p81
      %p219 = pneg %p105
      %p220 = pneg %p102
      %p221 = pneg %p126
      %p222 = pneg %p123
      %p223 = pneg %p152
      %p224 = pneg %p149
      %p225 = scmp.lt.s32.totalorder %s16, 1
      %s226 = scalar_select %p225, %s16, 1
      %s227 = smul.addr %s226, 2
      %s228 = smul.addr %s227, 8
      %s229 = scalar_lea.vmem %s5, %s228
      %p230 = scmp.lt.s32.totalorder %s16, 1
      %s231 = scalar_select %p230, %s16, 1
      %s232 = smul.addr %s231, 2
      %s233 = smul.addr %s232, 8
      %s234 = scalar_lea.vmem %s0, %s233
      %p235 = scmp.lt.s32.totalorder %s16, 1
      %s236 = scalar_select %p235, %s16, 1
      %s237 = smul.addr %s236, 2
      %s238 = smul.addr %s237, 8
      %s239 = scalar_lea.vmem %s1, %s238
      %p240 = scmp.lt.s32.totalorder %s16, 1
      %s241 = scalar_select %p240, %s16, 1
      %s242 = smul.addr %s241, 2
      %s243 = smul.addr %s242, 8
      %s244 = scalar_lea.vmem %s5, %s243
      %v246 = vld [vmem:[%s234] sm:$0xff]
      %v247 = vld [vmem:[%s234 + $0x8] sm:$0xf]
      %v248 = vpack.c.bf16 %v247, %v246
      %v249 = vld [vmem:[%s239] sm:$0xff]
      %v250 = vld [vmem:[%s239 + $0x8] sm:$0xf]
      %v251 = vpack.c.bf16 %v250, %v249
      %v252 = vld [vmem:[%s3] sm:$0xff]
      %v253 = vld [vmem:[%s3 + $0x8] sm:$0xf]
      %v254 = vpack.c.bf16 %v253, %v252
      %v255 = vld [vmem:[%s4] sm:$0xf]
      %v256 = vpack.c.bf16 %v255, %v255
      %vm257 = vcmask 31744
      %v259 = vsel %vm257, %v251, 0
      %vm261 = vcmask 1041408
      %v263 = vsel %vm261, %v256, 0
      %265 = vmatprep.subr.bf16.mxu0 0
      %266 = vmatpush1.bf16.msra.mxu0 %v263
      %267 = vmatprep.subr.bf16.mxu0 0
      %268 = vmatpush1.bf16.msra.mxu0 0
      %269 = vmatprep.subr.bf16.mxu0 0
      %270 = vmatpush1.bf16.msra.mxu0 0
      %271 = vmatprep.subr.bf16.mxu0 0
      %272 = vmatpush1.bf16.msra.mxu0 0
      %273 = vmatprep.subr.bf16.mxu0 0
      %274 = vmatpush1.bf16.msra.mxu0 0
      %275 = vmatprep.subr.bf16.mxu0 0
      %276 = vmatpush1.bf16.msra.mxu0 0
      %277 = vmatprep.subr.bf16.mxu0 0
      %278 = vmatpush1.bf16.msra.mxu0 0
      %279 = vmatprep.subr.bf16.mxu0 0
      %280 = vmatpush1.bf16.msra.mxu0 0
      %281 = vmatprep.subr.bf16.mxu0 0
      %282 = vmatpush1.bf16.msra.mxu0 0
      %283 = vmatprep.subr.bf16.mxu0 0
      %284 = vmatpush1.bf16.msra.mxu0 0
      %285 = vmatprep.subr.bf16.mxu0 0
      %286 = vmatpush1.bf16.msra.mxu0 0
      %287 = vmatprep.subr.bf16.mxu0 0
      %288 = vmatpush1.bf16.msra.mxu0 0
      %289 = vmatprep.subr.bf16.mxu0 0
      %290 = vmatpush1.bf16.msra.mxu0 0
      %291 = vmatprep.subr.bf16.mxu0 0
      %292 = vmatpush1.bf16.msra.mxu0 0
      %293 = vmatprep.subr.bf16.mxu0 0
      %294 = vmatpush1.bf16.msra.mxu0 0
      %295 = vmatprep.subr.bf16.mxu0 0
      %296 = vmatpush1.bf16.msra.mxu0 0
      %297 = vmatprep.mubr.bf16.mxu0 0
      %298 = vmatmul.mubr.bf16.gmra.mrb[0].mxu0 %v259
      %v299 = vpop.f32.mrb[0].mxu0
      %v300 = vadd.f32 0.0, %v299
      %v301 = vpop.f32.mrb[0].mxu0
      %v302 = vpop.f32.mrb[0].mxu0
      %v303 = vadd.f32 0.0, %v302
      %v304 = vpop.f32.mrb[0].mxu0
      %305 = vdwg.mxu0
      %vm306 = vcmask 97280
      %v308 = vsel %vm306, %v248, 0
      %vm310 = vcmask 1045504
      %v312 = vsel %vm310, %v254, 0
      %314 = vmatprep.subr.bf16.mxu0 0
      %315 = vmatpush1.bf16.msra.mxu0 %v312
      %316 = vmatprep.subr.bf16.mxu0 0
      %317 = vmatpush1.bf16.msra.mxu0 0
      %318 = vmatprep.subr.bf16.mxu0 0
      %319 = vmatpush1.bf16.msra.mxu0 0
      %320 = vmatprep.subr.bf16.mxu0 0
      %321 = vmatpush1.bf16.msra.mxu0 0
      %322 = vmatprep.subr.bf16.mxu0 0
      %323 = vmatpush1.bf16.msra.mxu0 0
      %324 = vmatprep.subr.bf16.mxu0 0
      %325 = vmatpush1.bf16.msra.mxu0 0
      %326 = vmatprep.subr.bf16.mxu0 0
      %327 = vmatpush1.bf16.msra.mxu0 0
      %328 = vmatprep.subr.bf16.mxu0 0
      %329 = vmatpush1.bf16.msra.mxu0 0
      %330 = vmatprep.subr.bf16.mxu0 0
      %331 = vmatpush1.bf16.msra.mxu0 0
      %332 = vmatprep.subr.bf16.mxu0 0
      %333 = vmatpush1.bf16.msra.mxu0 0
      %334 = vmatprep.subr.bf16.mxu0 0
      %335 = vmatpush1.bf16.msra.mxu0 0
      %336 = vmatprep.subr.bf16.mxu0 0
      %337 = vmatpush1.bf16.msra.mxu0 0
      %338 = vmatprep.subr.bf16.mxu0 0
      %339 = vmatpush1.bf16.msra.mxu0 0
      %340 = vmatprep.subr.bf16.mxu0 0
      %341 = vmatpush1.bf16.msra.mxu0 0
      %342 = vmatprep.subr.bf16.mxu0 0
      %343 = vmatpush1.bf16.msra.mxu0 0
      %344 = vmatprep.subr.bf16.mxu0 0
      %345 = vmatpush1.bf16.msra.mxu0 0
      %346 = vmatprep.mubr.bf16.mxu0 0
      %347 = vmatmul.mubr.bf16.gmra.mrb[0].mxu0 %v308
      %v348 = vpop.f32.mrb[0].mxu0
      %v349 = vadd.f32 %v300, %v348
      %v350 = vpop.f32.mrb[0].mxu0
      %v351 = vpop.f32.mrb[0].mxu0
      %v352 = vadd.f32 %v303, %v351
      %v353 = vpop.f32.mrb[0].mxu0
      %354 = vdwg.mxu0
      %v355 = vld [vmem:[%s2] sm:$0xff]
      %v356 = vld [vmem:[%s2 + $0x8] sm:$0xf]
      %v357 = vadd.f32 %v349, %v355
      %v358 = vadd.f32 %v352, %v356
      %vm359 = vcmask 523264
      %360 = vst.msk [vmem:[%s244] sm:$0xff] %vm359, %v357
      %vm361 = vcmask 519168
      %362 = vst.msk [vmem:[%s244 + $0x8] sm:$0xf] %vm361, %v358
      %p363 = scmp.lt.s32.totalorder %s16, 1
      %s364 = scalar_select %p363, %s16, 1
      %s365 = smul.addr %s364, 2
      %s366 = smul.addr %s365, 8
      %s367 = scalar_lea.vmem %s5, %s366
      // Predicated region
      $region41: #{encoder_decoder_forward.17} parent=39 // pred_check
        %p368 = pneg %p149
      $region42: #{encoder_decoder_forward.17} parent=39 // pred_check_branch
        %370 = sbr.rel (%p368) target = $region44
      $region43: #{encoder_decoder_forward.17} parent=39 // pred_region
        _
      $region44: #{encoder_decoder_forward.17} parent=39 // pred_fallthru
        _
    $region40: #{encoder_decoder_forward.17} parent=5 // pred_fallthru
      _
    %p371 = scmp.le.s32.totalorder 2, %s11
    // Predicated region
    $region45: #{encoder_decoder_forward.17} parent=5 // pred_check
      %p372 = pneg %p371
    $region46: #{encoder_decoder_forward.17} parent=5 // pred_check_branch
      %374 = sbr.rel (%p372) target = $region48
    $region47: #{encoder_decoder_forward.17} parent=5 // pred_region
      %s375 = ssub.s32 %s11, 2
      // Predicated region
      $region49: #{encoder_decoder_forward.17} parent=47 // pred_check
        %p376 = pneg %p155
      $region50: #{encoder_decoder_forward.17} parent=47 // pred_check_branch
        %378 = sbr.rel (%p376) target = $region52
      $region51: #{encoder_decoder_forward.17} parent=47 // pred_region
        %p379 = scmp.lt.s32.totalorder %s17, 1
        %s380 = scalar_select %p379, %s17, 1
        %s381 = smul.addr %s380, 2
        %s382 = smul.addr %s381, 8
        %s383 = scalar_lea.vmem %s5, %s382
      $region52: #{encoder_decoder_forward.17} parent=47 // pred_fallthru
        _
    $region48: #{encoder_decoder_forward.17} parent=5 // pred_fallthru
      _
  $region6: #{encoder_decoder_forward.17} parent=0 // loop_footer
    %s15 = sadd.s32 1, %s11
  $region7: #{encoder_decoder_forward.17} parent=0 // loop_footer_branch
    %10 = sbr.rel target = $region3
  $region8: #{encoder_decoder_forward.17} parent=0 // loop_exit
    _

// kernel: encoder_decoder_forward.19
$region0: #{encoder_decoder_forward.19}
  #allocation0 [shape = 'u32[]', space=smem, size = 0x4, offset = 0x4, fixed_abs, tag = 'smem constant byte address 0x4 - core index']
  #allocation1 [shape = 'u32[144,128]{1,0:T(1,128)}', space=vmem, size = 0x12000, scoped, tag = 'internal scratch']
  %s0 = inlined_call_operand.vmem [shape: f32[2,12,64], index: 0, kind: input, shape index: {}]
  %s1 = inlined_call_operand.vmem [shape: f32[2,16,64], index: 1, kind: input, shape index: {}]
  %s2 = inlined_call_operand.vmem [shape: f32[64,64], index: 2, kind: input, shape index: {}]
  %s3 = inlined_call_operand.vmem [shape: f32[1,64], index: 3, kind: input, shape index: {}]
  %s4 = inlined_call_operand.vmem [shape: f32[64,64], index: 4, kind: input, shape index: {}]
  %s5 = inlined_call_operand.vmem [shape: f32[1,64], index: 5, kind: input, shape index: {}]
  %s6 = inlined_call_operand.vmem [shape: f32[64,64], index: 6, kind: input, shape index: {}]
  %s7 = inlined_call_operand.vmem [shape: f32[1,64], index: 7, kind: input, shape index: {}]
  %s8 = inlined_call_operand.vmem [shape: f32[64,64], index: 8, kind: input, shape index: {}]
  %s9 = inlined_call_operand.vmem [shape: f32[1,64], index: 9, kind: input, shape index: {}]
  %s10 = inlined_call_operand.vmem [shape: f32[1,64], index: 10, kind: input, shape index: {}]
  %s11 = inlined_call_operand.vmem [shape: f32[1,64], index: 11, kind: input, shape index: {}]
  %s12 = inlined_call_operand.vmem [shape: f32[2,12,64], index: 12, kind: output, shape index: {0}]
  %s13 = inlined_call_operand.vmem [shape: f32[2,4,12,16], index: 13, kind: output, shape index: {1}]
  %14 = xla_tuple %s12, %s13
  %s15 = sld [smem:[#allocation0]]
  $region89: #{encoder_decoder_forward.19} parent=0
    _
  %s17 = ssub.s32 1, %s15
  %s18 = scalar_select 0, %s17, %s15
  loop: start=0, step=1, limit=4
  $region2: #{encoder_decoder_forward.19} parent=0 // loop_pre_header
    _
  $region3: #{encoder_decoder_forward.19} parent=0 // loop_header
    %s20 = sphi 0, %s24
    %p21 = scmp.ge.s32.totalorder %s20, 4
    %s30 = sphi 0, %s32
    %s33 = sphi 0, %s30
    %s34 = sphi 0, %s33
    %s50 = sphi 0, %s34
    %s56 = sphi 0, %s58
    %s59 = sphi 0, %s56
    %s60 = sphi 0, %s59
    %s76 = sphi 0, %s60
    %s80 = sphi 0, %s80
    %s82 = sphi 0, %s80
    %s83 = sphi 0, %s82
    %s97 = sphi 0, %s83
    %s101 = sphi 0, %s101
    %s103 = sphi 0, %s101
    %s104 = sphi 0, %s103
    %s118 = sphi 0, %s104
    %s122 = sphi 0, %s122
    %s124 = sphi 0, %s122
    %s125 = sphi 0, %s124
    %s139 = sphi 0, %s125
    %s143 = sphi 0, %s143
    %s145 = sphi 0, %s143
    %s146 = sphi 0, %s145
    %s160 = sphi 0, %s146
    %s164 = sphi 0, %s164
    %s166 = sphi 0, %s164
    %s167 = sphi 0, %s166
    %s181 = sphi 0, %s167
    %s185 = sphi 0, %s185
    %s187 = sphi 0, %s185
    %s188 = sphi 0, %s187
    %s202 = sphi 0, %s188
    %s206 = sphi 0, %s206
    %s208 = sphi 0, %s206
    %s209 = sphi 0, %s208
    %s223 = sphi 0, %s209
    %s227 = sphi 0, %s227
    %s229 = sphi 0, %s227
    %s230 = sphi 0, %s229
    %s244 = sphi 0, %s230
    %s248 = sphi 0, %s248
    %s250 = sphi 0, %s248
    %s251 = sphi 0, %s250
    %s265 = sphi 0, %s251
    %s269 = sphi 0, %s269
    %s271 = sphi 0, %s269
    %s272 = sphi 0, %s271
    %s286 = sphi 0, %s272
    %s292 = sphi 0, %s294
    %s295 = sphi 0, %s292
    %s296 = sphi 0, %s295
    %s312 = sphi 0, %s296
    %s318 = sphi 0, %s320
    %s321 = sphi 0, %s318
    %s322 = sphi 0, %s321
    %s338 = sphi 0, %s322
  $region4: #{encoder_decoder_forward.19} parent=0 // loop_header_branch
    %23 = sbr.rel (%p21) target = $region8
  $region5: #{encoder_decoder_forward.19} parent=0 // loop_body
    %s25 = ssub.s32 %s20, 1
    %s26 = ssub.s32 %s20, 2
    %s27 = sadd.s32 %s20, 1
    %s28 = ssub.s32 %s20, %s27
    %p29 = scmp.eq.s32.totalorder %s28, 0
    %s31 = sadd.s32 %s30, 1
    %s32 = scalar_select %p29, %s30, %s31
    %p35 = pneg %p29
    %p36 = scmp.eq.s32.totalorder %s20, 1
    %p37 = por %p35, %p36
    %p38 = scmp.ne.s32.totalorder %s30, %s33
    %p39 = scmp.eq.s32.totalorder %s20, 0
    %p40 = por %p38, %p39
    %p41 = scmp.ne.s32.totalorder %s30, %s33
    %p42 = scmp.eq.s32.totalorder %s25, 1
    %p43 = por %p41, %p42
    %p44 = scmp.ne.s32.totalorder %s33, %s34
    %p45 = scmp.eq.s32.totalorder %s25, 0
    %p46 = por %p44, %p45
    %p47 = scmp.ne.s32.totalorder %s33, %s34
    %p48 = scmp.eq.s32.totalorder %s26, 1
    %p49 = por %p47, %p48
    %p51 = scmp.ne.s32.totalorder %s34, %s50
    %p52 = scmp.eq.s32.totalorder %s26, 0
    %p53 = por %p51, %p52
    %s54 = ssub.s32 %s20, %s27
    %p55 = scmp.eq.s32.totalorder %s54, 0
    %s57 = sadd.s32 %s56, 1
    %s58 = scalar_select %p55, %s56, %s57
    %p61 = pneg %p55
    %p62 = scmp.eq.s32.totalorder %s20, 1
    %p63 = por %p61, %p62
    %p64 = scmp.ne.s32.totalorder %s56, %s59
    %p65 = scmp.eq.s32.totalorder %s20, 0
    %p66 = por %p64, %p65
    %p67 = scmp.ne.s32.totalorder %s56, %s59
    %p68 = scmp.eq.s32.totalorder %s25, 1
    %p69 = por %p67, %p68
    %p70 = scmp.ne.s32.totalorder %s59, %s60
    %p71 = scmp.eq.s32.totalorder %s25, 0
    %p72 = por %p70, %p71
    %p73 = scmp.ne.s32.totalorder %s59, %s60
    %p74 = scmp.eq.s32.totalorder %s26, 1
    %p75 = por %p73, %p74
    %p77 = scmp.ne.s32.totalorder %s60, %s76
    %p78 = scmp.eq.s32.totalorder %s26, 0
    %p79 = por %p77, %p78
    %s81 = sadd.s32 %s80, 1
    %p84 = scmp.eq.s32.totalorder %s20, 1
    %p85 = scmp.ne.s32.totalorder %s80, %s82
    %p86 = scmp.eq.s32.totalorder %s20, 0
    %p87 = por %p85, %p86
    %p88 = scmp.ne.s32.totalorder %s80, %s82
    %p89 = scmp.eq.s32.totalorder %s25, 1
    %p90 = por %p88, %p89
    %p91 = scmp.ne.s32.totalorder %s82, %s83
    %p92 = scmp.eq.s32.totalorder %s25, 0
    %p93 = por %p91, %p92
    %p94 = scmp.ne.s32.totalorder %s82, %s83
    %p95 = scmp.eq.s32.totalorder %s26, 1
    %p96 = por %p94, %p95
    %p98 = scmp.ne.s32.totalorder %s83, %s97
    %p99 = scmp.eq.s32.totalorder %s26, 0
    %p100 = por %p98, %p99
    %s102 = sadd.s32 %s101, 1
    %p105 = scmp.eq.s32.totalorder %s20, 1
    %p106 = scmp.ne.s32.totalorder %s101, %s103
    %p107 = scmp.eq.s32.totalorder %s20, 0
    %p108 = por %p106, %p107
    %p109 = scmp.ne.s32.totalorder %s101, %s103
    %p110 = scmp.eq.s32.totalorder %s25, 1
    %p111 = por %p109, %p110
    %p112 = scmp.ne.s32.totalorder %s103, %s104
    %p113 = scmp.eq.s32.totalorder %s25, 0
    %p114 = por %p112, %p113
    %p115 = scmp.ne.s32.totalorder %s103, %s104
    %p116 = scmp.eq.s32.totalorder %s26, 1
    %p117 = por %p115, %p116
    %p119 = scmp.ne.s32.totalorder %s104, %s118
    %p120 = scmp.eq.s32.totalorder %s26, 0
    %p121 = por %p119, %p120
    %s123 = sadd.s32 %s122, 1
    %p126 = scmp.eq.s32.totalorder %s20, 1
    %p127 = scmp.ne.s32.totalorder %s122, %s124
    %p128 = scmp.eq.s32.totalorder %s20, 0
    %p129 = por %p127, %p128
    %p130 = scmp.ne.s32.totalorder %s122, %s124
    %p131 = scmp.eq.s32.totalorder %s25, 1
    %p132 = por %p130, %p131
    %p133 = scmp.ne.s32.totalorder %s124, %s125
    %p134 = scmp.eq.s32.totalorder %s25, 0
    %p135 = por %p133, %p134
    %p136 = scmp.ne.s32.totalorder %s124, %s125
    %p137 = scmp.eq.s32.totalorder %s26, 1
    %p138 = por %p136, %p137
    %p140 = scmp.ne.s32.totalorder %s125, %s139
    %p141 = scmp.eq.s32.totalorder %s26, 0
    %p142 = por %p140, %p141
    %s144 = sadd.s32 %s143, 1
    %p147 = scmp.eq.s32.totalorder %s20, 1
    %p148 = scmp.ne.s32.totalorder %s143, %s145
    %p149 = scmp.eq.s32.totalorder %s20, 0
    %p150 = por %p148, %p149
    %p151 = scmp.ne.s32.totalorder %s143, %s145
    %p152 = scmp.eq.s32.totalorder %s25, 1
    %p153 = por %p151, %p152
    %p154 = scmp.ne.s32.totalorder %s145, %s146
    %p155 = scmp.eq.s32.totalorder %s25, 0
    %p156 = por %p154, %p155
    %p157 = scmp.ne.s32.totalorder %s145, %s146
    %p158 = scmp.eq.s32.totalorder %s26, 1
    %p159 = por %p157, %p158
    %p161 = scmp.ne.s32.totalorder %s146, %s160
    %p162 = scmp.eq.s32.totalorder %s26, 0
    %p163 = por %p161, %p162
    %s165 = sadd.s32 %s164, 1
    %p168 = scmp.eq.s32.totalorder %s20, 1
    %p169 = scmp.ne.s32.totalorder %s164, %s166
    %p170 = scmp.eq.s32.totalorder %s20, 0
    %p171 = por %p169, %p170
    %p172 = scmp.ne.s32.totalorder %s164, %s166
    %p173 = scmp.eq.s32.totalorder %s25, 1
    %p174 = por %p172, %p173
    %p175 = scmp.ne.s32.totalorder %s166, %s167
    %p176 = scmp.eq.s32.totalorder %s25, 0
    %p177 = por %p175, %p176
    %p178 = scmp.ne.s32.totalorder %s166, %s167
    %p179 = scmp.eq.s32.totalorder %s26, 1
    %p180 = por %p178, %p179
    %p182 = scmp.ne.s32.totalorder %s167, %s181
    %p183 = scmp.eq.s32.totalorder %s26, 0
    %p184 = por %p182, %p183
    %s186 = sadd.s32 %s185, 1
    %p189 = scmp.eq.s32.totalorder %s20, 1
    %p190 = scmp.ne.s32.totalorder %s185, %s187
    %p191 = scmp.eq.s32.totalorder %s20, 0
    %p192 = por %p190, %p191
    %p193 = scmp.ne.s32.totalorder %s185, %s187
    %p194 = scmp.eq.s32.totalorder %s25, 1
    %p195 = por %p193, %p194
    %p196 = scmp.ne.s32.totalorder %s187, %s188
    %p197 = scmp.eq.s32.totalorder %s25, 0
    %p198 = por %p196, %p197
    %p199 = scmp.ne.s32.totalorder %s187, %s188
    %p200 = scmp.eq.s32.totalorder %s26, 1
    %p201 = por %p199, %p200
    %p203 = scmp.ne.s32.totalorder %s188, %s202
    %p204 = scmp.eq.s32.totalorder %s26, 0
    %p205 = por %p203, %p204
    %s207 = sadd.s32 %s206, 1
    %p210 = scmp.eq.s32.totalorder %s20, 1
    %p211 = scmp.ne.s32.totalorder %s206, %s208
    %p212 = scmp.eq.s32.totalorder %s20, 0
    %p213 = por %p211, %p212
    %p214 = scmp.ne.s32.totalorder %s206, %s208
    %p215 = scmp.eq.s32.totalorder %s25, 1
    %p216 = por %p214, %p215
    %p217 = scmp.ne.s32.totalorder %s208, %s209
    %p218 = scmp.eq.s32.totalorder %s25, 0
    %p219 = por %p217, %p218
    %p220 = scmp.ne.s32.totalorder %s208, %s209
    %p221 = scmp.eq.s32.totalorder %s26, 1
    %p222 = por %p220, %p221
    %p224 = scmp.ne.s32.totalorder %s209, %s223
    %p225 = scmp.eq.s32.totalorder %s26, 0
    %p226 = por %p224, %p225
    %s228 = sadd.s32 %s227, 1
    %p231 = scmp.eq.s32.totalorder %s20, 1
    %p232 = scmp.ne.s32.totalorder %s227, %s229
    %p233 = scmp.eq.s32.totalorder %s20, 0
    %p234 = por %p232, %p233
    %p235 = scmp.ne.s32.totalorder %s227, %s229
    %p236 = scmp.eq.s32.totalorder %s25, 1
    %p237 = por %p235, %p236
    %p238 = scmp.ne.s32.totalorder %s229, %s230
    %p239 = scmp.eq.s32.totalorder %s25, 0
    %p240 = por %p238, %p239
    %p241 = scmp.ne.s32.totalorder %s229, %s230
    %p242 = scmp.eq.s32.totalorder %s26, 1
    %p243 = por %p241, %p242
    %p245 = scmp.ne.s32.totalorder %s230, %s244
    %p246 = scmp.eq.s32.totalorder %s26, 0
    %p247 = por %p245, %p246
    %s249 = sadd.s32 %s248, 1
    %p252 = scmp.eq.s32.totalorder %s20, 1
    %p253 = scmp.ne.s32.totalorder %s248, %s250
    %p254 = scmp.eq.s32.totalorder %s20, 0
    %p255 = por %p253, %p254
    %p256 = scmp.ne.s32.totalorder %s248, %s250
    %p257 = scmp.eq.s32.totalorder %s25, 1
    %p258 = por %p256, %p257
    %p259 = scmp.ne.s32.totalorder %s250, %s251
    %p260 = scmp.eq.s32.totalorder %s25, 0
    %p261 = por %p259, %p260
    %p262 = scmp.ne.s32.totalorder %s250, %s251
    %p263 = scmp.eq.s32.totalorder %s26, 1
    %p264 = por %p262, %p263
    %p266 = scmp.ne.s32.totalorder %s251, %s265
    %p267 = scmp.eq.s32.totalorder %s26, 0
    %p268 = por %p266, %p267
    %s270 = sadd.s32 %s269, 1
    %p273 = scmp.eq.s32.totalorder %s20, 1
    %p274 = scmp.ne.s32.totalorder %s269, %s271
    %p275 = scmp.eq.s32.totalorder %s20, 0
    %p276 = por %p274, %p275
    %p277 = scmp.ne.s32.totalorder %s269, %s271
    %p278 = scmp.eq.s32.totalorder %s25, 1
    %p279 = por %p277, %p278
    %p280 = scmp.ne.s32.totalorder %s271, %s272
    %p281 = scmp.eq.s32.totalorder %s25, 0
    %p282 = por %p280, %p281
    %p283 = scmp.ne.s32.totalorder %s271, %s272
    %p284 = scmp.eq.s32.totalorder %s26, 1
    %p285 = por %p283, %p284
    %p287 = scmp.ne.s32.totalorder %s272, %s286
    %p288 = scmp.eq.s32.totalorder %s26, 0
    %p289 = por %p287, %p288
    %s290 = ssub.s32 %s20, %s27
    %p291 = scmp.eq.s32.totalorder %s290, 0
    %s293 = sadd.s32 %s292, 1
    %s294 = scalar_select %p291, %s292, %s293
    %p297 = pneg %p291
    %p298 = scmp.eq.s32.totalorder %s20, 1
    %p299 = por %p297, %p298
    %p300 = scmp.ne.s32.totalorder %s292, %s295
    %p301 = scmp.eq.s32.totalorder %s20, 0
    %p302 = por %p300, %p301
    %p303 = scmp.ne.s32.totalorder %s292, %s295
    %p304 = scmp.eq.s32.totalorder %s25, 1
    %p305 = por %p303, %p304
    %p306 = scmp.ne.s32.totalorder %s295, %s296
    %p307 = scmp.eq.s32.totalorder %s25, 0
    %p308 = por %p306, %p307
    %p309 = scmp.ne.s32.totalorder %s295, %s296
    %p310 = scmp.eq.s32.totalorder %s26, 1
    %p311 = por %p309, %p310
    %p313 = scmp.ne.s32.totalorder %s296, %s312
    %p314 = scmp.eq.s32.totalorder %s26, 0
    %p315 = por %p313, %p314
    %s316 = ssub.s32 %s20, %s27
    %p317 = scmp.eq.s32.totalorder %s316, 0
    %s319 = sadd.s32 %s318, 1
    %s320 = scalar_select %p317, %s318, %s319
    %p323 = pneg %p317
    %p324 = scmp.eq.s32.totalorder %s20, 1
    %p325 = por %p323, %p324
    %p326 = scmp.ne.s32.totalorder %s318, %s321
    %p327 = scmp.eq.s32.totalorder %s20, 0
    %p328 = por %p326, %p327
    %p329 = scmp.ne.s32.totalorder %s318, %s321
    %p330 = scmp.eq.s32.totalorder %s25, 1
    %p331 = por %p329, %p330
    %p332 = scmp.ne.s32.totalorder %s321, %s322
    %p333 = scmp.eq.s32.totalorder %s25, 0
    %p334 = por %p332, %p333
    %p335 = scmp.ne.s32.totalorder %s321, %s322
    %p336 = scmp.eq.s32.totalorder %s26, 1
    %p337 = por %p335, %p336
    %p339 = scmp.ne.s32.totalorder %s322, %s338
    %p340 = scmp.eq.s32.totalorder %s26, 0
    %p341 = por %p339, %p340
    %p342 = scmp.le.s32.totalorder 1, %s20
    %p343 = scmp.lt.s32.totalorder %s20, 3
    %p344 = pnand %p342, %p343
    %p345 = pneg %p344
    // Predicated region
    $region9: #{encoder_decoder_forward.19} parent=5 // pred_check
      _
    $region10: #{encoder_decoder_forward.19} parent=5 // pred_check_branch
      %347 = sbr.rel (%p344) target = $region12
    $region11: #{encoder_decoder_forward.19} parent=5 // pred_region
      %s348 = ssub.s32 %s20, 1
      // Predicated region
      $region13: #{encoder_decoder_forward.19} parent=11 // pred_check
        %p349 = pneg %p93
      $region14: #{encoder_decoder_forward.19} parent=11 // pred_check_branch
        %351 = sbr.rel (%p349) target = $region16
      $region15: #{encoder_decoder_forward.19} parent=11 // pred_region
        _
      $region16: #{encoder_decoder_forward.19} parent=11 // pred_fallthru
        _
      // Predicated region
      $region17: #{encoder_decoder_forward.19} parent=11 // pred_check
        %p352 = pneg %p114
      $region18: #{encoder_decoder_forward.19} parent=11 // pred_check_branch
        %354 = sbr.rel (%p352) target = $region20
      $region19: #{encoder_decoder_forward.19} parent=11 // pred_region
        _
      $region20: #{encoder_decoder_forward.19} parent=11 // pred_fallthru
        _
      // Predicated region
      $region21: #{encoder_decoder_forward.19} parent=11 // pred_check
        %p355 = pneg %p135
      $region22: #{encoder_decoder_forward.19} parent=11 // pred_check_branch
        %357 = sbr.rel (%p355) target = $region24
      $region23: #{encoder_decoder_forward.19} parent=11 // pred_region
        _
      $region24: #{encoder_decoder_forward.19} parent=11 // pred_fallthru
        _
      // Predicated region
      $region25: #{encoder_decoder_forward.19} parent=11 // pred_check
        %p358 = pneg %p156
      $region26: #{encoder_decoder_forward.19} parent=11 // pred_check_branch
        %360 = sbr.rel (%p358) target = $region28
      $region27: #{encoder_decoder_forward.19} parent=11 // pred_region
        _
      $region28: #{encoder_decoder_forward.19} parent=11 // pred_fallthru
        _
      // Predicated region
      $region29: #{encoder_decoder_forward.19} parent=11 // pred_check
        %p361 = pneg %p177
      $region30: #{encoder_decoder_forward.19} parent=11 // pred_check_branch
        %363 = sbr.rel (%p361) target = $region32
      $region31: #{encoder_decoder_forward.19} parent=11 // pred_region
        _
      $region32: #{encoder_decoder_forward.19} parent=11 // pred_fallthru
        _
      // Predicated region
      $region33: #{encoder_decoder_forward.19} parent=11 // pred_check
        %p364 = pneg %p198
      $region34: #{encoder_decoder_forward.19} parent=11 // pred_check_branch
        %366 = sbr.rel (%p364) target = $region36
      $region35: #{encoder_decoder_forward.19} parent=11 // pred_region
        _
      $region36: #{encoder_decoder_forward.19} parent=11 // pred_fallthru
        _
      // Predicated region
      $region37: #{encoder_decoder_forward.19} parent=11 // pred_check
        %p367 = pneg %p219
      $region38: #{encoder_decoder_forward.19} parent=11 // pred_check_branch
        %369 = sbr.rel (%p367) target = $region40
      $region39: #{encoder_decoder_forward.19} parent=11 // pred_region
        _
      $region40: #{encoder_decoder_forward.19} parent=11 // pred_fallthru
        _
      // Predicated region
      $region41: #{encoder_decoder_forward.19} parent=11 // pred_check
        %p370 = pneg %p240
      $region42: #{encoder_decoder_forward.19} parent=11 // pred_check_branch
        %372 = sbr.rel (%p370) target = $region44
      $region43: #{encoder_decoder_forward.19} parent=11 // pred_region
        _
      $region44: #{encoder_decoder_forward.19} parent=11 // pred_fallthru
        _
      // Predicated region
      $region45: #{encoder_decoder_forward.19} parent=11 // pred_check
        %p373 = pneg %p261
      $region46: #{encoder_decoder_forward.19} parent=11 // pred_check_branch
        %375 = sbr.rel (%p373) target = $region48
      $region47: #{encoder_decoder_forward.19} parent=11 // pred_region
        _
      $region48: #{encoder_decoder_forward.19} parent=11 // pred_fallthru
        _
      // Predicated region
      $region49: #{encoder_decoder_forward.19} parent=11 // pred_check
        %p376 = pneg %p282
      $region50: #{encoder_decoder_forward.19} parent=11 // pred_check_branch
        %378 = sbr.rel (%p376) target = $region52
      $region51: #{encoder_decoder_forward.19} parent=11 // pred_region
        _
      $region52: #{encoder_decoder_forward.19} parent=11 // pred_fallthru
        _
    $region12: #{encoder_decoder_forward.19} parent=5 // pred_fallthru
      _
    %p379 = scmp.lt.s32.totalorder %s20, 2
    // Predicated region
    $region53: #{encoder_decoder_forward.19} parent=5 // pred_check
      %p380 = pneg %p379
    $region54: #{encoder_decoder_forward.19} parent=5 // pred_check_branch
      %382 = sbr.rel (%p380) target = $region56
    $region55: #{encoder_decoder_forward.19} parent=5 // pred_region
      // Predicated region
      $region57: #{encoder_decoder_forward.19} parent=55 // pred_check
        %p383 = pneg %p40
      $region58: #{encoder_decoder_forward.19} parent=55 // pred_check_branch
        %385 = sbr.rel (%p383) target = $region60
      $region59: #{encoder_decoder_forward.19} parent=55 // pred_region
        %p386 = scmp.lt.s32.totalorder %s20, 1
        %s387 = scalar_select %p386, %s20, 1
        %s388 = smul.addr %s387, 2
        %s389 = smul.addr %s388, 8
        %s390 = scalar_lea.vmem %s0, %s389
      $region60: #{encoder_decoder_forward.19} parent=55 // pred_fallthru
        _
      // Predicated region
      $region61: #{encoder_decoder_forward.19} parent=55 // pred_check
        %p391 = pneg %p66
      $region62: #{encoder_decoder_forward.19} parent=55 // pred_check_branch
        %393 = sbr.rel (%p391) target = $region64
      $region63: #{encoder_decoder_forward.19} parent=55 // pred_region
        %p394 = scmp.lt.s32.totalorder %s20, 1
        %s395 = scalar_select %p394, %s20, 1
        %s396 = smul.addr %s395, 2
        %s397 = smul.addr %s396, 8
        %s398 = scalar_lea.vmem %s1, %s397
      $region64: #{encoder_decoder_forward.19} parent=55 // pred_fallthru
        _
    $region56: #{encoder_decoder_forward.19} parent=5 // pred_fallthru
      _
    %p399 = scmp.le.s32.totalorder 1, %s20
    %p400 = scmp.lt.s32.totalorder %s20, 3
    %p401 = pnand %p399, %p400
    %p402 = pneg %p401
    // Predicated region
    $region65: #{encoder_decoder_forward.19} parent=5 // pred_check
      _
    $region66: #{encoder_decoder_forward.19} parent=5 // pred_check_branch
      %404 = sbr.rel (%p401) target = $region68
    $region67: #{encoder_decoder_forward.19} parent=5 // pred_region
      %s405 = ssub.s32 %s20, 1
      %p406 = scmp.lt.s32.totalorder %s25, 1
      %s407 = scalar_select %p406, %s25, 1
      %s408 = smul.addr %s407, 2
      %s409 = smul.addr %s408, 8
      %s410 = scalar_lea.vmem %s0, %s409
      %p411 = pneg %p46
      %p412 = pneg %p43
      %p413 = scmp.lt.s32.totalorder %s25, 1
      %s414 = scalar_select %p413, %s25, 1
      %s415 = smul.addr %s414, 2
      %s416 = smul.addr %s415, 8
      %s417 = scalar_lea.vmem %s1, %s416
      %p418 = pneg %p72
      %p419 = pneg %p69
      %p420 = pneg %p93
      %p421 = pneg %p90
      %p422 = pneg %p114
      %p423 = pneg %p111
      %p424 = pneg %p135
      %p425 = pneg %p132
      %p426 = pneg %p156
      %p427 = pneg %p153
      %p428 = pneg %p177
      %p429 = pneg %p174
      %p430 = pneg %p198
      %p431 = pneg %p195
      %p432 = pneg %p219
      %p433 = pneg %p216
      %p434 = pneg %p240
      %p435 = pneg %p237
      %p436 = pneg %p261
      %p437 = pneg %p258
      %p438 = pneg %p282
      %p439 = pneg %p279
      %p440 = pneg %p308
      %p441 = pneg %p305
      %p442 = scmp.lt.s32.totalorder %s25, 1
      %s443 = scalar_select %p442, %s25, 1
      %s444 = smul.addr %s443, 2
      %s445 = smul.addr %s444, 8
      %s446 = scalar_lea.vmem %s12, %s445
      %p447 = pneg %p334
      %p448 = pneg %p331
      %p449 = scmp.lt.s32.totalorder %s25, 1
      %s450 = scalar_select %p449, %s25, 1
      %s451 = smul.addr %s450, 8
      %s452 = smul.addr %s451, 8
      %s453 = scalar_lea.vmem %s13, %s452
      %p454 = scmp.lt.s32.totalorder %s25, 1
      %s455 = scalar_select %p454, %s25, 1
      %s456 = smul.addr %s455, 2
      %s457 = smul.addr %s456, 8
      %s458 = scalar_lea.vmem %s0, %s457
      %p459 = scmp.lt.s32.totalorder %s25, 1
      %s460 = scalar_select %p459, %s25, 1
      %s461 = smul.addr %s460, 2
      %s462 = smul.addr %s461, 8
      %s463 = scalar_lea.vmem %s1, %s462
      %p464 = scmp.lt.s32.totalorder %s25, 1
      %s465 = scalar_select %p464, %s25, 1
      %s466 = smul.addr %s465, 2
      %s467 = smul.addr %s466, 8
      %s468 = scalar_lea.vmem %s12, %s467
      %p469 = scmp.lt.s32.totalorder %s25, 1
      %s470 = scalar_select %p469, %s25, 1
      %s471 = smul.addr %s470, 8
      %s472 = smul.addr %s471, 8
      %s473 = scalar_lea.vmem %s13, %s472
      %v475 = vld [vmem:[%s458] sm:$0xff]
      %v476 = vld [vmem:[%s458 + $0x8] sm:$0xf]
      %v477 = vld [vmem:[%s463] sm:$0xff]
      %v478 = vld [vmem:[%s463 + $0x8] sm:$0xff]
      %v479 = vpack.c.bf16 %v476, %v475
      %v480 = vpack.c.bf16 %v478, %v477
      %v481 = vld [vmem:[%s2] sm:$0xff]
      %v482 = vld [vmem:[%s2 + $0x8] sm:$0xff]
      %v483 = vld [vmem:[%s2 + $0x10] sm:$0xff]
      %v484 = vld [vmem:[%s2 + $0x18] sm:$0xff]
      %v485 = vld [vmem:[%s2 + $0x20] sm:$0xff]
      %v486 = vld [vmem:[%s2 + $0x28] sm:$0xff]
      %v487 = vld [vmem:[%s2 + $0x30] sm:$0xff]
      %v488 = vld [vmem:[%s2 + $0x38] sm:$0xff]
      %v489 = vpack.c.bf16 %v482, %v481
      %v490 = vpack.c.bf16 %v484, %v483
      %v491 = vpack.c.bf16 %v486, %v485
      %v492 = vpack.c.bf16 %v488, %v487
      %v493 = vld [vmem:[%s3] sm:$0x1]
      %v495 = vlaneseq
      %v496 = vshrl.u32 %v495, 7
      %v497 = vsub.s32 0, %v496
      %v498 = vrot.slane %v493, %v497
      %vm500 = vcmask 523264
      %v502 = vsel %vm500, %v479, 0
      %504 = vmatprep.subr.bf16.mxu0 0
      %505 = vmatpush1.bf16.msra.mxu0 %v489
      %506 = vmatprep.subr.bf16.mxu0 0
      %507 = vmatpush1.bf16.msra.mxu0 %v490
      %508 = vmatprep.subr.bf16.mxu0 0
      %509 = vmatpush1.bf16.msra.mxu0 %v491
      %510 = vmatprep.subr.bf16.mxu0 0
      %511 = vmatpush1.bf16.msra.mxu0 %v492
      %512 = vmatprep.subr.bf16.mxu0 0
      %513 = vmatpush1.bf16.msra.mxu0 0
      %514 = vmatprep.subr.bf16.mxu0 0
      %515 = vmatpush1.bf16.msra.mxu0 0
      %516 = vmatprep.subr.bf16.mxu0 0
      %517 = vmatpush1.bf16.msra.mxu0 0
      %518 = vmatprep.subr.bf16.mxu0 0
      %519 = vmatpush1.bf16.msra.mxu0 0
      %520 = vmatprep.subr.bf16.mxu0 0
      %521 = vmatpush1.bf16.msra.mxu0 0
      %522 = vmatprep.subr.bf16.mxu0 0
      %523 = vmatpush1.bf16.msra.mxu0 0
      %524 = vmatprep.subr.bf16.mxu0 0
      %525 = vmatpush1.bf16.msra.mxu0 0
      %526 = vmatprep.subr.bf16.mxu0 0
      %527 = vmatpush1.bf16.msra.mxu0 0
      %528 = vmatprep.subr.bf16.mxu0 0
      %529 = vmatpush1.bf16.msra.mxu0 0
      %530 = vmatprep.subr.bf16.mxu0 0
      %531 = vmatpush1.bf16.msra.mxu0 0
      %532 = vmatprep.subr.bf16.mxu0 0
      %533 = vmatpush1.bf16.msra.mxu0 0
      %534 = vmatprep.subr.bf16.mxu0 0
      %535 = vmatpush1.bf16.msra.mxu0 0
      %536 = vmatprep.mubr.bf16.mxu0 0
      %537 = vmatmul.mubr.bf16.gmra.mrb[0].mxu0 %v502
      %v538 = vpop.f32.mrb[0].mxu0
      %v539 = vadd.f32 %v498, %v538
      %v540 = vpop.f32.mrb[0].mxu0
      %v541 = vpop.f32.mrb[0].mxu0
      %v542 = vadd.f32 %v498, %v541
      %v543 = vpop.f32.mrb[0].mxu0
      %544 = vdwg.mxu0
      %v545 = vld [vmem:[%s4] sm:$0xff]
      %v546 = vld [vmem:[%s4 + $0x8] sm:$0xff]
      %v547 = vld [vmem:[%s4 + $0x10] sm:$0xff]
      %v548 = vld [vmem:[%s4 + $0x18] sm:$0xff]
      %v549 = vld [vmem:[%s4 + $0x20] sm:$0xff]
      %v550 = vld [vmem:[%s4 + $0x28] sm:$0xff]
      %v551 = vld [vmem:[%s4 + $0x30] sm:$0xff]
      %v552 = vld [vmem:[%s4 + $0x38] sm:$0xff]
      %v553 = vpack.c.bf16 %v546, %v545
      %v554 = vpack.c.bf16 %v548, %v547
      %v555 = vpack.c.bf16 %v550, %v549
      %v556 = vpack.c.bf16 %v552, %v551
      %v557 = vld [vmem:[%s5] sm:$0x1]
      %v559 = vlaneseq
      %v560 = vshrl.u32 %v559, 7
      %v561 = vsub.s32 0, %v560
      %v562 = vrot.slane %v557, %v561
      %v565 = vsel %vm500, %v480, 0
      %567 = vmatprep.subr.bf16.mxu0 0
      %568 = vmatpush1.bf16.msra.mxu0 %v553
      %569 = vmatprep.subr.bf16.mxu0 0
      %570 = vmatpush1.bf16.msra.mxu0 %v554
      %571 = vmatprep.subr.bf16.mxu0 0
      %572 = vmatpush1.bf16.msra.mxu0 %v555
      %573 = vmatprep.subr.bf16.mxu0 0
      %574 = vmatpush1.bf16.msra.mxu0 %v556
      %575 = vmatprep.subr.bf16.mxu0 0
      %576 = vmatpush1.bf16.msra.mxu0 0
      %577 = vmatprep.subr.bf16.mxu0 0
      %578 = vmatpush1.bf16.msra.mxu0 0
      %579 = vmatprep.subr.bf16.mxu0 0
      %580 = vmatpush1.bf16.msra.mxu0 0
      %581 = vmatprep.subr.bf16.mxu0 0
      %582 = vmatpush1.bf16.msra.mxu0 0
      %583 = vmatprep.subr.bf16.mxu0 0
      %584 = vmatpush1.bf16.msra.mxu0 0
      %585 = vmatprep.subr.bf16.mxu0 0
      %586 = vmatpush1.bf16.msra.mxu0 0
      %587 = vmatprep.subr.bf16.mxu0 0
      %588 = vmatpush1.bf16.msra.mxu0 0
      %589 = vmatprep.subr.bf16.mxu0 0
      %590 = vmatpush1.bf16.msra.mxu0 0
      %591 = vmatprep.subr.bf16.mxu0 0
      %592 = vmatpush1.bf16.msra.mxu0 0
      %593 = vmatprep.subr.bf16.mxu0 0
      %594 = vmatpush1.bf16.msra.mxu0 0
      %595 = vmatprep.subr.bf16.mxu0 0
      %596 = vmatpush1.bf16.msra.mxu0 0
      %597 = vmatprep.subr.bf16.mxu0 0
      %598 = vmatpush1.bf16.msra.mxu0 0
      %599 = vmatprep.mubr.bf16.mxu0 0
      %600 = vmatmul.mubr.bf16.gmra.mrb[0].mxu0 %v565
      %v601 = vpop.f32.mrb[0].mxu0
      %v602 = vadd.f32 %v562, %v601
      %v603 = vpop.f32.mrb[0].mxu0
      %v604 = vpop.f32.mrb[0].mxu0
      %v605 = vadd.f32 %v562, %v604
      %v606 = vpop.f32.mrb[0].mxu0
      %607 = vdwg.mxu0
      %v608 = vld [vmem:[%s6] sm:$0xff]
      %v609 = vld [vmem:[%s6 + $0x8] sm:$0xff]
      %v610 = vld [vmem:[%s6 + $0x10] sm:$0xff]
      %v611 = vld [vmem:[%s6 + $0x18] sm:$0xff]
      %v612 = vld [vmem:[%s6 + $0x20] sm:$0xff]
      %v613 = vld [vmem:[%s6 + $0x28] sm:$0xff]
      %v614 = vld [vmem:[%s6 + $0x30] sm:$0xff]
      %v615 = vld [vmem:[%s6 + $0x38] sm:$0xff]
      %v616 = vpack.c.bf16 %v609, %v608
      %v617 = vpack.c.bf16 %v611, %v610
      %v618 = vpack.c.bf16 %v613, %v612
      %v619 = vpack.c.bf16 %v615, %v614
      %v620 = vld [vmem:[%s7] sm:$0x1]
      %v622 = vlaneseq
      %v623 = vshrl.u32 %v622, 7
      %v624 = vsub.s32 0, %v623
      %v625 = vrot.slane %v620, %v624
      %627 = vmatprep.subr.bf16.mxu0 0
      %628 = vmatpush1.bf16.msra.mxu0 %v616
      %629 = vmatprep.subr.bf16.mxu0 0
      %630 = vmatpush1.bf16.msra.mxu0 %v617
      %631 = vmatprep.subr.bf16.mxu0 0
      %632 = vmatpush1.bf16.msra.mxu0 %v618
      %633 = vmatprep.subr.bf16.mxu0 0
      %634 = vmatpush1.bf16.msra.mxu0 %v619
      %635 = vmatprep.subr.bf16.mxu0 0
      %636 = vmatpush1.bf16.msra.mxu0 0
      %637 = vmatprep.subr.bf16.mxu0 0
      %638 = vmatpush1.bf16.msra.mxu0 0
      %639 = vmatprep.subr.bf16.mxu0 0
      %640 = vmatpush1.bf16.msra.mxu0 0
      %641 = vmatprep.subr.bf16.mxu0 0
      %642 = vmatpush1.bf16.msra.mxu0 0
      %643 = vmatprep.subr.bf16.mxu0 0
      %644 = vmatpush1.bf16.msra.mxu0 0
      %645 = vmatprep.subr.bf16.mxu0 0
      %646 = vmatpush1.bf16.msra.mxu0 0
      %647 = vmatprep.subr.bf16.mxu0 0
      %648 = vmatpush1.bf16.msra.mxu0 0
      %649 = vmatprep.subr.bf16.mxu0 0
      %650 = vmatpush1.bf16.msra.mxu0 0
      %651 = vmatprep.subr.bf16.mxu0 0
      %652 = vmatpush1.bf16.msra.mxu0 0
      %653 = vmatprep.subr.bf16.mxu0 0
      %654 = vmatpush1.bf16.msra.mxu0 0
      %655 = vmatprep.subr.bf16.mxu0 0
      %656 = vmatpush1.bf16.msra.mxu0 0
      %657 = vmatprep.subr.bf16.mxu0 0
      %658 = vmatpush1.bf16.msra.mxu0 0
      %659 = vmatprep.mubr.bf16.mxu0 0
      %660 = vmatmul.mubr.bf16.gmra.mrb[0].mxu0 %v565
      %v661 = vpop.f32.mrb[0].mxu0
      %v662 = vadd.f32 %v625, %v661
      %v663 = vpop.f32.mrb[0].mxu0
      %v664 = vpop.f32.mrb[0].mxu0
      %v665 = vadd.f32 %v625, %v664
      %v666 = vpop.f32.mrb[0].mxu0
      %667 = vdwg.mxu0
      %v668 = vpack.c.bf16 %v542, %v539
      %v669 = vpack.c.bf16 %v605, %v602
      %v670 = vpack.c.bf16 %v665, %v662
      %vm671 = vcmask 130048
      %v673 = vsel %vm671, %v668, 0
      %v676 = vsel %vm671, %v669, 0
      %678 = vmatprep.subr.bf16.mxu0 0
      %679 = vmatpush1.bf16.xpose.msra.mxu0 %v676
      %680 = vmatprep.subr.bf16.mxu0 0
      %681 = vmatpush1.bf16.xpose.msra.mxu0 0
      %682 = vmatprep.subr.bf16.mxu0 0
      %683 = vmatpush1.bf16.xpose.msra.mxu0 0
      %684 = vmatprep.subr.bf16.mxu0 0
      %685 = vmatpush1.bf16.xpose.msra.mxu0 0
      %686 = vmatprep.subr.bf16.mxu0 0
      %687 = vmatpush1.bf16.xpose.msra.mxu0 0
      %688 = vmatprep.subr.bf16.mxu0 0
      %689 = vmatpush1.bf16.xpose.msra.mxu0 0
      %690 = vmatprep.subr.bf16.mxu0 0
      %691 = vmatpush1.bf16.xpose.msra.mxu0 0
      %692 = vmatprep.subr.bf16.mxu0 0
      %693 = vmatpush1.bf16.xpose.msra.mxu0 0
      %694 = vmatprep.subr.bf16.mxu0 0
      %695 = vmatpush1.bf16.xpose.msra.mxu0 0
      %696 = vmatprep.subr.bf16.mxu0 0
      %697 = vmatpush1.bf16.xpose.msra.mxu0 0
      %698 = vmatprep.subr.bf16.mxu0 0
      %699 = vmatpush1.bf16.xpose.msra.mxu0 0
      %700 = vmatprep.subr.bf16.mxu0 0
      %701 = vmatpush1.bf16.xpose.msra.mxu0 0
      %702 = vmatprep.subr.bf16.mxu0 0
      %703 = vmatpush1.bf16.xpose.msra.mxu0 0
      %704 = vmatprep.subr.bf16.mxu0 0
      %705 = vmatpush1.bf16.xpose.msra.mxu0 0
      %706 = vmatprep.subr.bf16.mxu0 0
      %707 = vmatpush1.bf16.xpose.msra.mxu0 0
      %708 = vmatprep.subr.bf16.mxu0 0
      %709 = vmatpush1.bf16.xpose.msra.mxu0 0
      %710 = vmatprep.mubr.bf16.mxu0 0
      %711 = vmatmul.mubr.bf16.gmra.mrb[0].mxu0 %v673
      %v712 = vpop.f32.mrb[0].mxu0
      %v713 = vadd.f32 0.0, %v712
      %v714 = vpop.f32.mrb[0].mxu0
      %v715 = vpop.f32.mrb[0].mxu0
      %v716 = vadd.f32 0.0, %v715
      %v717 = vpop.f32.mrb[0].mxu0
      %718 = vdwg.mxu0
      %v719 = vmul.f32 %v713, 0.25
      %v720 = vmul.f32 %v716, 0.25
      %v721 = vsel %vm671, %v719, -inf
      %722 = vmax.xlane.f32.xlu0 %v721
      %v723 = vpop.xlane.xlu0 %722
      %vm724 = vcmask 125952
      %v725 = vsel %vm724, %v720, -inf
      %726 = vmax.xlane.f32.xlu0 %v725
      %v727 = vpop.xlane.xlu0 %726
      %v728 = vsub.f32 %v719, %v723
      %v729 = vsub.f32 %v720, %v727
      %v730 = vmul.f32 %v728, 1.442695
      %v731 = vpow.pop %v730
      %v732 = vmul.f32 %v729, 1.442695
      %v733 = vpow.pop %v732
      %v734 = vsel %vm671, %v731, 0.0
      %735 = vadd.xlane.f32.xlu0 %v734
      %v736 = vpop.xlane.xlu0 %735
      %v737 = vsel %vm724, %v733, 0.0
      %738 = vadd.xlane.f32.xlu0 %v737
      %v739 = vpop.xlane.xlu0 %738
      %v740 = vrcp.pop %v736
      %v741 = vrcp.pop %v739
      %v742 = vmul.f32 %v731, %v740
      %v743 = vmul.f32 %v733, %v741
      %744 = vst.msk [vmem:[%s473] sm:$0xff] %vm671, %v742
      %745 = vst.msk [vmem:[%s473 + $0x8] sm:$0xf] %vm724, %v743
      %v746 = vpack.c.bf16 %v743, %v742
      %v748 = vsel %vm671, %v746, 0
      %750 = vmatprep.subr.bf16.mxu0 0
      %751 = vmatpush1.bf16.msra.mxu0 %v670
      %752 = vmatprep.subr.bf16.mxu0 0
      %753 = vmatpush1.bf16.msra.mxu0 0
      %754 = vmatprep.subr.bf16.mxu0 0
      %755 = vmatpush1.bf16.msra.mxu0 0
      %756 = vmatprep.subr.bf16.mxu0 0
      %757 = vmatpush1.bf16.msra.mxu0 0
      %758 = vmatprep.subr.bf16.mxu0 0
      %759 = vmatpush1.bf16.msra.mxu0 0
      %760 = vmatprep.subr.bf16.mxu0 0
      %761 = vmatpush1.bf16.msra.mxu0 0
      %762 = vmatprep.subr.bf16.mxu0 0
      %763 = vmatpush1.bf16.msra.mxu0 0
      %764 = vmatprep.subr.bf16.mxu0 0
      %765 = vmatpush1.bf16.msra.mxu0 0
      %766 = vmatprep.subr.bf16.mxu0 0
      %767 = vmatpush1.bf16.msra.mxu0 0
      %768 = vmatprep.subr.bf16.mxu0 0
      %769 = vmatpush1.bf16.msra.mxu0 0
      %770 = vmatprep.subr.bf16.mxu0 0
      %771 = vmatpush1.bf16.msra.mxu0 0
      %772 = vmatprep.subr.bf16.mxu0 0
      %773 = vmatpush1.bf16.msra.mxu0 0
      %774 = vmatprep.subr.bf16.mxu0 0
      %775 = vmatpush1.bf16.msra.mxu0 0
      %776 = vmatprep.subr.bf16.mxu0 0
      %777 = vmatpush1.bf16.msra.mxu0 0
      %778 = vmatprep.subr.bf16.mxu0 0
      %779 = vmatpush1.bf16.msra.mxu0 0
      %780 = vmatprep.subr.bf16.mxu0 0
      %781 = vmatpush1.bf16.msra.mxu0 0
      %782 = vmatprep.mubr.bf16.mxu0 0
      %783 = vmatmul.mubr.bf16.gmra.mrb[0].mxu0 %v748
      %v784 = vpop.f32.mrb[0].mxu0
      %v785 = vadd.f32 0.0, %v784
      %v786 = vpop.f32.mrb[0].mxu0
      %v787 = vpop.f32.mrb[0].mxu0
      %v788 = vadd.f32 0.0, %v787
      %v789 = vpop.f32.mrb[0].mxu0
      %790 = vdwg.mxu0
      %792 = vrot.lane.b32.xlu0 %v668, 112
      %v793 = vpop.permute.xlu0 %792
      %795 = vrot.lane.b32.xlu0 %v669, 112
      %v796 = vpop.permute.xlu0 %795
      %v798 = vsel %vm671, %v793, 0
      %v801 = vsel %vm671, %v796, 0
      %803 = vmatprep.subr.bf16.mxu0 0
      %804 = vmatpush1.bf16.xpose.msra.mxu0 %v801
      %805 = vmatprep.subr.bf16.mxu0 0
      %806 = vmatpush1.bf16.xpose.msra.mxu0 0
      %807 = vmatprep.subr.bf16.mxu0 0
      %808 = vmatpush1.bf16.xpose.msra.mxu0 0
      %809 = vmatprep.subr.bf16.mxu0 0
      %810 = vmatpush1.bf16.xpose.msra.mxu0 0
      %811 = vmatprep.subr.bf16.mxu0 0
      %812 = vmatpush1.bf16.xpose.msra.mxu0 0
      %813 = vmatprep.subr.bf16.mxu0 0
      %814 = vmatpush1.bf16.xpose.msra.mxu0 0
      %815 = vmatprep.subr.bf16.mxu0 0
      %816 = vmatpush1.bf16.xpose.msra.mxu0 0
      %817 = vmatprep.subr.bf16.mxu0 0
      %818 = vmatpush1.bf16.xpose.msra.mxu0 0
      %819 = vmatprep.subr.bf16.mxu0 0
      %820 = vmatpush1.bf16.xpose.msra.mxu0 0
      %821 = vmatprep.subr.bf16.mxu0 0
      %822 = vmatpush1.bf16.xpose.msra.mxu0 0
      %823 = vmatprep.subr.bf16.mxu0 0
      %824 = vmatpush1.bf16.xpose.msra.mxu0 0
      %825 = vmatprep.subr.bf16.mxu0 0
      %826 = vmatpush1.bf16.xpose.msra.mxu0 0
      %827 = vmatprep.subr.bf16.mxu0 0
      %828 = vmatpush1.bf16.xpose.msra.mxu0 0
      %829 = vmatprep.subr.bf16.mxu0 0
      %830 = vmatpush1.bf16.xpose.msra.mxu0 0
      %831 = vmatprep.subr.bf16.mxu0 0
      %832 = vmatpush1.bf16.xpose.msra.mxu0 0
      %833 = vmatprep.subr.bf16.mxu0 0
      %834 = vmatpush1.bf16.xpose.msra.mxu0 0
      %835 = vmatprep.mubr.bf16.mxu0 0
      %836 = vmatmul.mubr.bf16.gmra.mrb[0].mxu0 %v798
      %v837 = vpop.f32.mrb[0].mxu0
      %v838 = vadd.f32 0.0, %v837
      %v839 = vpop.f32.mrb[0].mxu0
      %v840 = vpop.f32.mrb[0].mxu0
      %v841 = vadd.f32 0.0, %v840
      %v842 = vpop.f32.mrb[0].mxu0
      %843 = vdwg.mxu0
      %v844 = vmul.f32 %v838, 0.25
      %v845 = vmul.f32 %v841, 0.25
      %v846 = vsel %vm671, %v844, -inf
      %847 = vmax.xlane.f32.xlu0 %v846
      %v848 = vpop.xlane.xlu0 %847
      %v849 = vsel %vm724, %v845, -inf
      %850 = vmax.xlane.f32.xlu0 %v849
      %v851 = vpop.xlane.xlu0 %850
      %v852 = vsub.f32 %v844, %v848
      %v853 = vsub.f32 %v845, %v851
      %v854 = vmul.f32 %v852, 1.442695
      %v855 = vpow.pop %v854
      %v856 = vmul.f32 %v853, 1.442695
      %v857 = vpow.pop %v856
      %v858 = vsel %vm671, %v855, 0.0
      %859 = vadd.xlane.f32.xlu0 %v858
      %v860 = vpop.xlane.xlu0 %859
      %v861 = vsel %vm724, %v857, 0.0
      %862 = vadd.xlane.f32.xlu0 %v861
      %v863 = vpop.xlane.xlu0 %862
      %v864 = vrcp.pop %v860
      %v865 = vrcp.pop %v863
      %v866 = vmul.f32 %v855, %v864
      %v867 = vmul.f32 %v857, %v865
      %s868 = scalar_lea.vmem %s473, 16
      %869 = vst.msk [vmem:[%s868] sm:$0xff] %vm671, %v866
      %870 = vst.msk [vmem:[%s868 + $0x8] sm:$0xf] %vm724, %v867
      %v871 = vpack.c.bf16 %v867, %v866
      %873 = vrot.lane.b32.xlu0 %v670, 112
      %v874 = vpop.permute.xlu0 %873
      %v877 = vsel %vm671, %v871, 0
      %879 = vmatprep.subr.bf16.mxu0 0
      %880 = vmatpush1.bf16.msra.mxu0 %v874
      %881 = vmatprep.subr.bf16.mxu0 0
      %882 = vmatpush1.bf16.msra.mxu0 0
      %883 = vmatprep.subr.bf16.mxu0 0
      %884 = vmatpush1.bf16.msra.mxu0 0
      %885 = vmatprep.subr.bf16.mxu0 0
      %886 = vmatpush1.bf16.msra.mxu0 0
      %887 = vmatprep.subr.bf16.mxu0 0
      %888 = vmatpush1.bf16.msra.mxu0 0
      %889 = vmatprep.subr.bf16.mxu0 0
      %890 = vmatpush1.bf16.msra.mxu0 0
      %891 = vmatprep.subr.bf16.mxu0 0
      %892 = vmatpush1.bf16.msra.mxu0 0
      %893 = vmatprep.subr.bf16.mxu0 0
      %894 = vmatpush1.bf16.msra.mxu0 0
      %895 = vmatprep.subr.bf16.mxu0 0
      %896 = vmatpush1.bf16.msra.mxu0 0
      %897 = vmatprep.subr.bf16.mxu0 0
      %898 = vmatpush1.bf16.msra.mxu0 0
      %899 = vmatprep.subr.bf16.mxu0 0
      %900 = vmatpush1.bf16.msra.mxu0 0
      %901 = vmatprep.subr.bf16.mxu0 0
      %902 = vmatpush1.bf16.msra.mxu0 0
      %903 = vmatprep.subr.bf16.mxu0 0
      %904 = vmatpush1.bf16.msra.mxu0 0
      %905 = vmatprep.subr.bf16.mxu0 0
      %906 = vmatpush1.bf16.msra.mxu0 0
      %907 = vmatprep.subr.bf16.mxu0 0
      %908 = vmatpush1.bf16.msra.mxu0 0
      %909 = vmatprep.subr.bf16.mxu0 0
      %910 = vmatpush1.bf16.msra.mxu0 0
      %911 = vmatprep.mubr.bf16.mxu0 0
      %912 = vmatmul.mubr.bf16.gmra.mrb[0].mxu0 %v877
      %v913 = vpop.f32.mrb[0].mxu0
      %v914 = vadd.f32 0.0, %v913
      %v915 = vpop.f32.mrb[0].mxu0
      %v916 = vpop.f32.mrb[0].mxu0
      %v917 = vadd.f32 0.0, %v916
      %v918 = vpop.f32.mrb[0].mxu0
      %919 = vdwg.mxu0
      %920 = vrot.lane.b32.xlu0 %v668, 96
      %v921 = vpop.permute.xlu0 %920
      %922 = vrot.lane.b32.xlu0 %v669, 96
      %v923 = vpop.permute.xlu0 %922
      %v925 = vsel %vm671, %v921, 0
      %v928 = vsel %vm671, %v923, 0
      %930 = vmatprep.subr.bf16.mxu0 0
      %931 = vmatpush1.bf16.xpose.msra.mxu0 %v928
      %932 = vmatprep.subr.bf16.mxu0 0
      %933 = vmatpush1.bf16.xpose.msra.mxu0 0
      %934 = vmatprep.subr.bf16.mxu0 0
      %935 = vmatpush1.bf16.xpose.msra.mxu0 0
      %936 = vmatprep.subr.bf16.mxu0 0
      %937 = vmatpush1.bf16.xpose.msra.mxu0 0
      %938 = vmatprep.subr.bf16.mxu0 0
      %939 = vmatpush1.bf16.xpose.msra.mxu0 0
      %940 = vmatprep.subr.bf16.mxu0 0
      %941 = vmatpush1.bf16.xpose.msra.mxu0 0
      %942 = vmatprep.subr.bf16.mxu0 0
      %943 = vmatpush1.bf16.xpose.msra.mxu0 0
      %944 = vmatprep.subr.bf16.mxu0 0
      %945 = vmatpush1.bf16.xpose.msra.mxu0 0
      %946 = vmatprep.subr.bf16.mxu0 0
      %947 = vmatpush1.bf16.xpose.msra.mxu0 0
      %948 = vmatprep.subr.bf16.mxu0 0
      %949 = vmatpush1.bf16.xpose.msra.mxu0 0
      %950 = vmatprep.subr.bf16.mxu0 0
      %951 = vmatpush1.bf16.xpose.msra.mxu0 0
      %952 = vmatprep.subr.bf16.mxu0 0
      %953 = vmatpush1.bf16.xpose.msra.mxu0 0
      %954 = vmatprep.subr.bf16.mxu0 0
      %955 = vmatpush1.bf16.xpose.msra.mxu0 0
      %956 = vmatprep.subr.bf16.mxu0 0
      %957 = vmatpush1.bf16.xpose.msra.mxu0 0
      %958 = vmatprep.subr.bf16.mxu0 0
      %959 = vmatpush1.bf16.xpose.msra.mxu0 0
      %960 = vmatprep.subr.bf16.mxu0 0
      %961 = vmatpush1.bf16.xpose.msra.mxu0 0
      %962 = vmatprep.mubr.bf16.mxu0 0
      %963 = vmatmul.mubr.bf16.gmra.mrb[0].mxu0 %v925
      %v964 = vpop.f32.mrb[0].mxu0
      %v965 = vadd.f32 0.0, %v964
      %v966 = vpop.f32.mrb[0].mxu0
      %v967 = vpop.f32.mrb[0].mxu0
      %v968 = vadd.f32 0.0, %v967
      %v969 = vpop.f32.mrb[0].mxu0
      %970 = vdwg.mxu0
      %v971 = vmul.f32 %v965, 0.25
      %v972 = vmul.f32 %v968, 0.25
      %v973 = vsel %vm671, %v971, -inf
      %974 = vmax.xlane.f32.xlu0 %v973
      %v975 = vpop.xlane.xlu0 %974
      %v976 = vsel %vm724, %v972, -inf
      %977 = vmax.xlane.f32.xlu0 %v976
      %v978 = vpop.xlane.xlu0 %977
      %v979 = vsub.f32 %v971, %v975
      %v980 = vsub.f32 %v972, %v978
      %v981 = vmul.f32 %v979, 1.442695
      %v982 = vpow.pop %v981
      %v983 = vmul.f32 %v980, 1.442695
      %v984 = vpow.pop %v983
      %v985 = vsel %vm671, %v982, 0.0
      %986 = vadd.xlane.f32.xlu0 %v985
      %v987 = vpop.xlane.xlu0 %986
      %v988 = vsel %vm724, %v984, 0.0
      %989 = vadd.xlane.f32.xlu0 %v988
      %v990 = vpop.xlane.xlu0 %989
      %v991 = vrcp.pop %v987
      %v992 = vrcp.pop %v990
      %v993 = vmul.f32 %v982, %v991
      %v994 = vmul.f32 %v984, %v992
      %s995 = scalar_lea.vmem %s473, 32
      %996 = vst.msk [vmem:[%s995] sm:$0xff] %vm671, %v993
      %997 = vst.msk [vmem:[%s995 + $0x8] sm:$0xf] %vm724, %v994
      %v998 = vpack.c.bf16 %v994, %v993
      %999 = vrot.lane.b32.xlu0 %v670, 96
      %v1000 = vpop.permute.xlu0 %999
      %v1003 = vsel %vm671, %v998, 0
      %1005 = vmatprep.subr.bf16.mxu0 0
      %1006 = vmatpush1.bf16.msra.mxu0 %v1000
      %1007 = vmatprep.subr.bf16.mxu0 0
      %1008 = vmatpush1.bf16.msra.mxu0 0
      %1009 = vmatprep.subr.bf16.mxu0 0
      %1010 = vmatpush1.bf16.msra.mxu0 0
      %1011 = vmatprep.subr.bf16.mxu0 0
      %1012 = vmatpush1.bf16.msra.mxu0 0
      %1013 = vmatprep.subr.bf16.mxu0 0
      %1014 = vmatpush1.bf16.msra.mxu0 0
      %1015 = vmatprep.subr.bf16.mxu0 0
      %1016 = vmatpush1.bf16.msra.mxu0 0
      %1017 = vmatprep.subr.bf16.mxu0 0
      %1018 = vmatpush1.bf16.msra.mxu0 0
      %1019 = vmatprep.subr.bf16.mxu0 0
      %1020 = vmatpush1.bf16.msra.mxu0 0
      %1021 = vmatprep.subr.bf16.mxu0 0
      %1022 = vmatpush1.bf16.msra.mxu0 0
      %1023 = vmatprep.subr.bf16.mxu0 0
      %1024 = vmatpush1.bf16.msra.mxu0 0
      %1025 = vmatprep.subr.bf16.mxu0 0
      %1026 = vmatpush1.bf16.msra.mxu0 0
      %1027 = vmatprep.subr.bf16.mxu0 0
      %1028 = vmatpush1.bf16.msra.mxu0 0
      %1029 = vmatprep.subr.bf16.mxu0 0
      %1030 = vmatpush1.bf16.msra.mxu0 0
      %1031 = vmatprep.subr.bf16.mxu0 0
      %1032 = vmatpush1.bf16.msra.mxu0 0
      %1033 = vmatprep.subr.bf16.mxu0 0
      %1034 = vmatpush1.bf16.msra.mxu0 0
      %1035 = vmatprep.subr.bf16.mxu0 0
      %1036 = vmatpush1.bf16.msra.mxu0 0
      %1037 = vmatprep.mubr.bf16.mxu0 0
      %1038 = vmatmul.mubr.bf16.gmra.mrb[0].mxu0 %v1003
      %v1039 = vpop.f32.mrb[0].mxu0
      %v1040 = vadd.f32 0.0, %v1039
      %v1041 = vpop.f32.mrb[0].mxu0
      %v1042 = vpop.f32.mrb[0].mxu0
      %v1043 = vadd.f32 0.0, %v1042
      %v1044 = vpop.f32.mrb[0].mxu0
      %1045 = vdwg.mxu0
      %1046 = vrot.lane.b32.xlu0 %v668, 80
      %v1047 = vpop.permute.xlu0 %1046
      %1048 = vrot.lane.b32.xlu0 %v669, 80
      %v1049 = vpop.permute.xlu0 %1048
      %v1051 = vsel %vm671, %v1047, 0
      %v1054 = vsel %vm671, %v1049, 0
      %1056 = vmatprep.subr.bf16.mxu0 0
      %1057 = vmatpush1.bf16.xpose.msra.mxu0 %v1054
      %1058 = vmatprep.subr.bf16.mxu0 0
      %1059 = vmatpush1.bf16.xpose.msra.mxu0 0
      %1060 = vmatprep.subr.bf16.mxu0 0
      %1061 = vmatpush1.bf16.xpose.msra.mxu0 0
      %1062 = vmatprep.subr.bf16.mxu0 0
      %1063 = vmatpush1.bf16.xpose.msra.mxu0 0
      %1064 = vmatprep.subr.bf16.mxu0 0
      %1065 = vmatpush1.bf16.xpose.msra.mxu0 0
      %1066 = vmatprep.subr.bf16.mxu0 0
      %1067 = vmatpush1.bf16.xpose.msra.mxu0 0
      %1068 = vmatprep.subr.bf16.mxu0 0
      %1069 = vmatpush1.bf16.xpose.msra.mxu0 0
      %1070 = vmatprep.subr.bf16.mxu0 0
      %1071 = vmatpush1.bf16.xpose.msra.mxu0 0
      %1072 = vmatprep.subr.bf16.mxu0 0
      %1073 = vmatpush1.bf16.xpose.msra.mxu0 0
      %1074 = vmatprep.subr.bf16.mxu0 0
      %1075 = vmatpush1.bf16.xpose.msra.mxu0 0
      %1076 = vmatprep.subr.bf16.mxu0 0
      %1077 = vmatpush1.bf16.xpose.msra.mxu0 0
      %1078 = vmatprep.subr.bf16.mxu0 0
      %1079 = vmatpush1.bf16.xpose.msra.mxu0 0
      %1080 = vmatprep.subr.bf16.mxu0 0
      %1081 = vmatpush1.bf16.xpose.msra.mxu0 0
      %1082 = vmatprep.subr.bf16.mxu0 0
      %1083 = vmatpush1.bf16.xpose.msra.mxu0 0
      %1084 = vmatprep.subr.bf16.mxu0 0
      %1085 = vmatpush1.bf16.xpose.msra.mxu0 0
      %1086 = vmatprep.subr.bf16.mxu0 0
      %1087 = vmatpush1.bf16.xpose.msra.mxu0 0
      %1088 = vmatprep.mubr.bf16.mxu0 0
      %1089 = vmatmul.mubr.bf16.gmra.mrb[0].mxu0 %v1051
      %v1090 = vpop.f32.mrb[0].mxu0
      %v1091 = vadd.f32 0.0, %v1090
      %v1092 = vpop.f32.mrb[0].mxu0
      %v1093 = vpop.f32.mrb[0].mxu0
      %v1094 = vadd.f32 0.0, %v1093
      %v1095 = vpop.f32.mrb[0].mxu0
      %1096 = vdwg.mxu0
      %v1097 = vmul.f32 %v1091, 0.25
      %v1098 = vmul.f32 %v1094, 0.25
      %v1099 = vsel %vm671, %v1097, -inf
      %1100 = vmax.xlane.f32.xlu0 %v1099
      %v1101 = vpop.xlane.xlu0 %1100
      %v1102 = vsel %vm724, %v1098, -inf
      %1103 = vmax.xlane.f32.xlu0 %v1102
      %v1104 = vpop.xlane.xlu0 %1103
      %v1105 = vsub.f32 %v1097, %v1101
      %v1106 = vsub.f32 %v1098, %v1104
      %v1107 = vmul.f32 %v1105, 1.442695
      %v1108 = vpow.pop %v1107
      %v1109 = vmul.f32 %v1106, 1.442695
      %v1110 = vpow.pop %v1109
      %v1111 = vsel %vm671, %v1108, 0.0
      %1112 = vadd.xlane.f32.xlu0 %v1111
      %v1113 = vpop.xlane.xlu0 %1112
      %v1114 = vsel %vm724, %v1110, 0.0
      %1115 = vadd.xlane.f32.xlu0 %v1114
      %v1116 = vpop.xlane.xlu0 %1115
      %v1117 = vrcp.pop %v1113
      %v1118 = vrcp.pop %v1116
      %v1119 = vmul.f32 %v1108, %v1117
      %v1120 = vmul.f32 %v1110, %v1118
      %s1121 = scalar_lea.vmem %s473, 48
      %1122 = vst.msk [vmem:[%s1121] sm:$0xff] %vm671, %v1119
      %1123 = vst.msk [vmem:[%s1121 + $0x8] sm:$0xf] %vm724, %v1120
      %v1124 = vpack.c.bf16 %v1120, %v1119
      %1125 = vrot.lane.b32.xlu0 %v670, 80
      %v1126 = vpop.permute.xlu0 %1125
      %v1129 = vsel %vm671, %v1124, 0
      %1131 = vmatprep.subr.bf16.mxu0 0
      %1132 = vmatpush1.bf16.msra.mxu0 %v1126
      %1133 = vmatprep.subr.bf16.mxu0 0
      %1134 = vmatpush1.bf16.msra.mxu0 0
      %1135 = vmatprep.subr.bf16.mxu0 0
      %1136 = vmatpush1.bf16.msra.mxu0 0
      %1137 = vmatprep.subr.bf16.mxu0 0
      %1138 = vmatpush1.bf16.msra.mxu0 0
      %1139 = vmatprep.subr.bf16.mxu0 0
      %1140 = vmatpush1.bf16.msra.mxu0 0
      %1141 = vmatprep.subr.bf16.mxu0 0
      %1142 = vmatpush1.bf16.msra.mxu0 0
      %1143 = vmatprep.subr.bf16.mxu0 0
      %1144 = vmatpush1.bf16.msra.mxu0 0
      %1145 = vmatprep.subr.bf16.mxu0 0
      %1146 = vmatpush1.bf16.msra.mxu0 0
      %1147 = vmatprep.subr.bf16.mxu0 0
      %1148 = vmatpush1.bf16.msra.mxu0 0
      %1149 = vmatprep.subr.bf16.mxu0 0
      %1150 = vmatpush1.bf16.msra.mxu0 0
      %1151 = vmatprep.subr.bf16.mxu0 0
      %1152 = vmatpush1.bf16.msra.mxu0 0
      %1153 = vmatprep.subr.bf16.mxu0 0
      %1154 = vmatpush1.bf16.msra.mxu0 0
      %1155 = vmatprep.subr.bf16.mxu0 0
      %1156 = vmatpush1.bf16.msra.mxu0 0
      %1157 = vmatprep.subr.bf16.mxu0 0
      %1158 = vmatpush1.bf16.msra.mxu0 0
      %1159 = vmatprep.subr.bf16.mxu0 0
      %1160 = vmatpush1.bf16.msra.mxu0 0
      %1161 = vmatprep.subr.bf16.mxu0 0
      %1162 = vmatpush1.bf16.msra.mxu0 0
      %1163 = vmatprep.mubr.bf16.mxu0 0
      %1164 = vmatmul.mubr.bf16.gmra.mrb[0].mxu0 %v1129
      %v1165 = vpop.f32.mrb[0].mxu0
      %v1166 = vadd.f32 0.0, %v1165
      %v1167 = vpop.f32.mrb[0].mxu0
      %v1168 = vpop.f32.mrb[0].mxu0
      %v1169 = vadd.f32 0.0, %v1168
      %v1170 = vpop.f32.mrb[0].mxu0
      %1171 = vdwg.mxu0
      %1174 = vrot.lane.b32.xlu0 %v914, 16
      %v1175 = vpop.permute.xlu0 %1174
      %1176 = vrot.lane.b32.xlu0 %v917, 16
      %v1177 = vpop.permute.xlu0 %1176
      %1182 = vrot.lane.b32.xlu0 %v1040, 32
      %v1183 = vpop.permute.xlu0 %1182
      %1184 = vrot.lane.b32.xlu0 %v1043, 32
      %v1185 = vpop.permute.xlu0 %1184
      %1190 = vrot.lane.b32.xlu0 %v1166, 48
      %v1191 = vpop.permute.xlu0 %1190
      %1192 = vrot.lane.b32.xlu0 %v1169, 48
      %v1193 = vpop.permute.xlu0 %1192
      %v1196 = vsel %vm671, %v785, %v1175
      %v1197 = vsel %vm671, %v788, %v1177
      %vm1198 = vcmask 261120
      %v1199 = vsel %vm1198, %v1196, %v1183
      %v1200 = vsel %vm1198, %v1197, %v1185
      %vm1201 = vcmask 392192
      %v1202 = vsel %vm1201, %v1199, %v1191
      %v1203 = vsel %vm1201, %v1200, %v1193
      %v1204 = vpack.c.bf16 %v1203, %v1202
      %v1205 = vld [vmem:[%s8] sm:$0xff]
      %v1206 = vld [vmem:[%s8 + $0x8] sm:$0xff]
      %v1207 = vld [vmem:[%s8 + $0x10] sm:$0xff]
      %v1208 = vld [vmem:[%s8 + $0x18] sm:$0xff]
      %v1209 = vld [vmem:[%s8 + $0x20] sm:$0xff]
      %v1210 = vld [vmem:[%s8 + $0x28] sm:$0xff]
      %v1211 = vld [vmem:[%s8 + $0x30] sm:$0xff]
      %v1212 = vld [vmem:[%s8 + $0x38] sm:$0xff]
      %v1213 = vpack.c.bf16 %v1206, %v1205
      %v1214 = vpack.c.bf16 %v1208, %v1207
      %v1215 = vpack.c.bf16 %v1210, %v1209
      %v1216 = vpack.c.bf16 %v1212, %v1211
      %v1217 = vld [vmem:[%s9] sm:$0x1]
      %v1219 = vlaneseq
      %v1220 = vshrl.u32 %v1219, 7
      %v1221 = vsub.s32 0, %v1220
      %v1222 = vrot.slane %v1217, %v1221
      %v1225 = vsel %vm500, %v1204, 0
      %1227 = vmatprep.subr.bf16.mxu0 0
      %1228 = vmatpush1.bf16.msra.mxu0 %v1213
      %1229 = vmatprep.subr.bf16.mxu0 0
      %1230 = vmatpush1.bf16.msra.mxu0 %v1214
      %1231 = vmatprep.subr.bf16.mxu0 0
      %1232 = vmatpush1.bf16.msra.mxu0 %v1215
      %1233 = vmatprep.subr.bf16.mxu0 0
      %1234 = vmatpush1.bf16.msra.mxu0 %v1216
      %1235 = vmatprep.subr.bf16.mxu0 0
      %1236 = vmatpush1.bf16.msra.mxu0 0
      %1237 = vmatprep.subr.bf16.mxu0 0
      %1238 = vmatpush1.bf16.msra.mxu0 0
      %1239 = vmatprep.subr.bf16.mxu0 0
      %1240 = vmatpush1.bf16.msra.mxu0 0
      %1241 = vmatprep.subr.bf16.mxu0 0
      %1242 = vmatpush1.bf16.msra.mxu0 0
      %1243 = vmatprep.subr.bf16.mxu0 0
      %1244 = vmatpush1.bf16.msra.mxu0 0
      %1245 = vmatprep.subr.bf16.mxu0 0
      %1246 = vmatpush1.bf16.msra.mxu0 0
      %1247 = vmatprep.subr.bf16.mxu0 0
      %1248 = vmatpush1.bf16.msra.mxu0 0
      %1249 = vmatprep.subr.bf16.mxu0 0
      %1250 = vmatpush1.bf16.msra.mxu0 0
      %1251 = vmatprep.subr.bf16.mxu0 0
      %1252 = vmatpush1.bf16.msra.mxu0 0
      %1253 = vmatprep.subr.bf16.mxu0 0
      %1254 = vmatpush1.bf16.msra.mxu0 0
      %1255 = vmatprep.subr.bf16.mxu0 0
      %1256 = vmatpush1.bf16.msra.mxu0 0
      %1257 = vmatprep.subr.bf16.mxu0 0
      %1258 = vmatpush1.bf16.msra.mxu0 0
      %1259 = vmatprep.mubr.bf16.mxu0 0
      %1260 = vmatmul.mubr.bf16.gmra.mrb[0].mxu0 %v1225
      %v1261 = vpop.f32.mrb[0].mxu0
      %v1262 = vadd.f32 %v1222, %v1261
      %v1263 = vpop.f32.mrb[0].mxu0
      %v1264 = vpop.f32.mrb[0].mxu0
      %v1265 = vadd.f32 %v1222, %v1264
      %v1266 = vpop.f32.mrb[0].mxu0
      %1267 = vdwg.mxu0
      %v1268 = vadd.f32 %v1262, %v475
      %v1269 = vadd.f32 %v1265, %v476
      %v1270 = vsel %vm500, %v1268, 0.0
      %1271 = vadd.xlane.f32.xlu0 %v1270
      %v1272 = vpop.xlane.xlu0 %1271
      %vm1273 = vcmask 519168
      %v1274 = vsel %vm1273, %v1269, 0.0
      %1275 = vadd.xlane.f32.xlu0 %v1274
      %v1276 = vpop.xlane.xlu0 %1275
      %v1277 = vrcp.pop 64.0
      %v1278 = vmul.f32 %v1272, %v1277
      %v1279 = vmul.f32 %v1276, %v1277
      %v1280 = vsub.f32 %v1268, %v1278
      %v1281 = vsub.f32 %v1269, %v1279
      %v1282 = vmul.f32 %v1280, %v1280
      %v1283 = vmul.f32 %v1281, %v1281
      %v1284 = vsel %vm500, %v1282, 0.0
      %1285 = vadd.xlane.f32.xlu0 %v1284
      %v1286 = vpop.xlane.xlu0 %1285
      %v1287 = vsel %vm1273, %v1283, 0.0
      %1288 = vadd.xlane.f32.xlu0 %v1287
      %v1289 = vpop.xlane.xlu0 %1288
      %v1290 = vmul.f32 %v1286, %v1277
      %v1291 = vmul.f32 %v1289, %v1277
      %v1292 = vadd.f32 %v1290, 1e-05
      %v1293 = vadd.f32 %v1291, 1e-05
      %v1294 = vrsqrt.pop %v1292
      %v1295 = vrsqrt.pop %v1293
      %v1296 = vmul.f32 %v1280, %v1294
      %v1297 = vmul.f32 %v1281, %v1295
      %v1298 = vld [vmem:[%s10] sm:$0x1]
      %v1300 = vlaneseq
      %v1301 = vshrl.u32 %v1300, 7
      %v1302 = vsub.s32 0, %v1301
      %v1303 = vrot.slane %v1298, %v1302
      %v1305 = vmul.f32 %v1296, %v1303
      %v1306 = vmul.f32 %v1297, %v1303
      %v1307 = vld [vmem:[%s11] sm:$0x1]
      %v1309 = vlaneseq
      %v1310 = vshrl.u32 %v1309, 7
      %v1311 = vsub.s32 0, %v1310
      %v1312 = vrot.slane %v1307, %v1311
      %v1314 = vadd.f32 %v1305, %v1312
      %v1315 = vadd.f32 %v1306, %v1312
      %1316 = vst.msk [vmem:[%s468] sm:$0xff] %vm500, %v1314
      %1317 = vst.msk [vmem:[%s468 + $0x8] sm:$0xf] %vm1273, %v1315
      %p1318 = scmp.lt.s32.totalorder %s25, 1
      %s1319 = scalar_select %p1318, %s25, 1
      %s1320 = smul.addr %s1319, 2
      %s1321 = smul.addr %s1320, 8
      %s1322 = scalar_lea.vmem %s12, %s1321
      %p1323 = scmp.lt.s32.totalorder %s25, 1
      %s1324 = scalar_select %p1323, %s25, 1
      %s1325 = smul.addr %s1324, 8
      %s1326 = smul.addr %s1325, 8
      %s1327 = scalar_lea.vmem %s13, %s1326
      // Predicated region
      $region69: #{encoder_decoder_forward.19} parent=67 // pred_check
        %p1328 = pneg %p305
      $region70: #{encoder_decoder_forward.19} parent=67 // pred_check_branch
        %1330 = sbr.rel (%p1328) target = $region72
      $region71: #{encoder_decoder_forward.19} parent=67 // pred_region
        _
      $region72: #{encoder_decoder_forward.19} parent=67 // pred_fallthru
        _
      // Predicated region
      $region73: #{encoder_decoder_forward.19} parent=67 // pred_check
        %p1331 = pneg %p331
      $region74: #{encoder_decoder_forward.19} parent=67 // pred_check_branch
        %1333 = sbr.rel (%p1331) target = $region76
      $region75: #{encoder_decoder_forward.19} parent=67 // pred_region
        _
      $region76: #{encoder_decoder_forward.19} parent=67 // pred_fallthru
        _
    $region68: #{encoder_decoder_forward.19} parent=5 // pred_fallthru
      _
    %p1334 = scmp.le.s32.totalorder 2, %s20
    // Predicated region
    $region77: #{encoder_decoder_forward.19} parent=5 // pred_check
      %p1335 = pneg %p1334
    $region78: #{encoder_decoder_forward.19} parent=5 // pred_check_branch
      %1337 = sbr.rel (%p1335) target = $region80
    $region79: #{encoder_decoder_forward.19} parent=5 // pred_region
      %s1338 = ssub.s32 %s20, 2
      // Predicated region
      $region81: #{encoder_decoder_forward.19} parent=79 // pred_check
        %p1339 = pneg %p311
      $region82: #{encoder_decoder_forward.19} parent=79 // pred_check_branch
        %1341 = sbr.rel (%p1339) target = $region84
      $region83: #{encoder_decoder_forward.19} parent=79 // pred_region
        %p1342 = scmp.lt.s32.totalorder %s26, 1
        %s1343 = scalar_select %p1342, %s26, 1
        %s1344 = smul.addr %s1343, 2
        %s1345 = smul.addr %s1344, 8
        %s1346 = scalar_lea.vmem %s12, %s1345
      $region84: #{encoder_decoder_forward.19} parent=79 // pred_fallthru
        _
      // Predicated region
      $region85: #{encoder_decoder_forward.19} parent=79 // pred_check
        %p1347 = pneg %p337
      $region86: #{encoder_decoder_forward.19} parent=79 // pred_check_branch
        %1349 = sbr.rel (%p1347) target = $region88
      $region87: #{encoder_decoder_forward.19} parent=79 // pred_region
        %p1350 = scmp.lt.s32.totalorder %s26, 1
        %s1351 = scalar_select %p1350, %s26, 1
        %s1352 = smul.addr %s1351, 8
        %s1353 = smul.addr %s1352, 8
        %s1354 = scalar_lea.vmem %s13, %s1353
      $region88: #{encoder_decoder_forward.19} parent=79 // pred_fallthru
        _
    $region80: #{encoder_decoder_forward.19} parent=5 // pred_fallthru
      _
  $region6: #{encoder_decoder_forward.19} parent=0 // loop_footer
    %s24 = sadd.s32 1, %s20
  $region7: #{encoder_decoder_forward.19} parent=0 // loop_footer_branch
    %19 = sbr.rel target = $region3
  $region8: #{encoder_decoder_forward.19} parent=0 // loop_exit
    _

// kernel: encoder_decoder_forward.18
$region0: #{encoder_decoder_forward.18}
  #allocation0 [shape = 'u32[]', space=smem, size = 0x4, offset = 0x4, fixed_abs, tag = 'smem constant byte address 0x4 - core index']
  #allocation1 [shape = 'u32[144,128]{1,0:T(1,128)}', space=vmem, size = 0x12000, scoped, tag = 'internal scratch']
  %s0 = inlined_call_operand.vmem [shape: f32[2,12,64], index: 0, kind: input, shape index: {}]
  %s1 = inlined_call_operand.vmem [shape: f32[64,64], index: 1, kind: input, shape index: {}]
  %s2 = inlined_call_operand.vmem [shape: f32[1,64], index: 2, kind: input, shape index: {}]
  %s3 = inlined_call_operand.vmem [shape: f32[64,64], index: 3, kind: input, shape index: {}]
  %s4 = inlined_call_operand.vmem [shape: f32[1,64], index: 4, kind: input, shape index: {}]
  %s5 = inlined_call_operand.vmem [shape: f32[64,64], index: 5, kind: input, shape index: {}]
  %s6 = inlined_call_operand.vmem [shape: f32[1,64], index: 6, kind: input, shape index: {}]
  %s7 = inlined_call_operand.vmem [shape: f32[64,64], index: 7, kind: input, shape index: {}]
  %s8 = inlined_call_operand.vmem [shape: f32[1,64], index: 8, kind: input, shape index: {}]
  %s9 = inlined_call_operand.vmem [shape: f32[1,64], index: 9, kind: input, shape index: {}]
  %s10 = inlined_call_operand.vmem [shape: f32[1,64], index: 10, kind: input, shape index: {}]
  %s11 = inlined_call_operand.vmem [shape: f32[2,12,64], index: 11, kind: output, shape index: {0}]
  %s12 = inlined_call_operand.vmem [shape: f32[2,4,12,12], index: 12, kind: output, shape index: {1}]
  %13 = xla_tuple %s11, %s12
  %s14 = sld [smem:[#allocation0]]
  $region85: #{encoder_decoder_forward.18} parent=0
    _
  %s16 = ssub.s32 1, %s14
  %s17 = scalar_select 0, %s16, %s14
  loop: start=0, step=1, limit=4
  $region2: #{encoder_decoder_forward.18} parent=0 // loop_pre_header
    _
  $region3: #{encoder_decoder_forward.18} parent=0 // loop_header
    %s19 = sphi 0, %s23
    %p20 = scmp.ge.s32.totalorder %s19, 4
    %s29 = sphi 0, %s31
    %s32 = sphi 0, %s29
    %s33 = sphi 0, %s32
    %s49 = sphi 0, %s33
    %s53 = sphi 0, %s53
    %s55 = sphi 0, %s53
    %s56 = sphi 0, %s55
    %s70 = sphi 0, %s56
    %s74 = sphi 0, %s74
    %s76 = sphi 0, %s74
    %s77 = sphi 0, %s76
    %s91 = sphi 0, %s77
    %s95 = sphi 0, %s95
    %s97 = sphi 0, %s95
    %s98 = sphi 0, %s97
    %s112 = sphi 0, %s98
    %s116 = sphi 0, %s116
    %s118 = sphi 0, %s116
    %s119 = sphi 0, %s118
    %s133 = sphi 0, %s119
    %s137 = sphi 0, %s137
    %s139 = sphi 0, %s137
    %s140 = sphi 0, %s139
    %s154 = sphi 0, %s140
    %s158 = sphi 0, %s158
    %s160 = sphi 0, %s158
    %s161 = sphi 0, %s160
    %s175 = sphi 0, %s161
    %s179 = sphi 0, %s179
    %s181 = sphi 0, %s179
    %s182 = sphi 0, %s181
    %s196 = sphi 0, %s182
    %s200 = sphi 0, %s200
    %s202 = sphi 0, %s200
    %s203 = sphi 0, %s202
    %s217 = sphi 0, %s203
    %s221 = sphi 0, %s221
    %s223 = sphi 0, %s221
    %s224 = sphi 0, %s223
    %s238 = sphi 0, %s224
    %s242 = sphi 0, %s242
    %s244 = sphi 0, %s242
    %s245 = sphi 0, %s244
    %s259 = sphi 0, %s245
    %s265 = sphi 0, %s267
    %s268 = sphi 0, %s265
    %s269 = sphi 0, %s268
    %s285 = sphi 0, %s269
    %s291 = sphi 0, %s293
    %s294 = sphi 0, %s291
    %s295 = sphi 0, %s294
    %s311 = sphi 0, %s295
  $region4: #{encoder_decoder_forward.18} parent=0 // loop_header_branch
    %22 = sbr.rel (%p20) target = $region8
  $region5: #{encoder_decoder_forward.18} parent=0 // loop_body
    %s24 = ssub.s32 %s19, 1
    %s25 = ssub.s32 %s19, 2
    %s26 = sadd.s32 %s19, 1
    %s27 = ssub.s32 %s19, %s26
    %p28 = scmp.eq.s32.totalorder %s27, 0
    %s30 = sadd.s32 %s29, 1
    %s31 = scalar_select %p28, %s29, %s30
    %p34 = pneg %p28
    %p35 = scmp.eq.s32.totalorder %s19, 1
    %p36 = por %p34, %p35
    %p37 = scmp.ne.s32.totalorder %s29, %s32
    %p38 = scmp.eq.s32.totalorder %s19, 0
    %p39 = por %p37, %p38
    %p40 = scmp.ne.s32.totalorder %s29, %s32
    %p41 = scmp.eq.s32.totalorder %s24, 1
    %p42 = por %p40, %p41
    %p43 = scmp.ne.s32.totalorder %s32, %s33
    %p44 = scmp.eq.s32.totalorder %s24, 0
    %p45 = por %p43, %p44
    %p46 = scmp.ne.s32.totalorder %s32, %s33
    %p47 = scmp.eq.s32.totalorder %s25, 1
    %p48 = por %p46, %p47
    %p50 = scmp.ne.s32.totalorder %s33, %s49
    %p51 = scmp.eq.s32.totalorder %s25, 0
    %p52 = por %p50, %p51
    %s54 = sadd.s32 %s53, 1
    %p57 = scmp.eq.s32.totalorder %s19, 1
    %p58 = scmp.ne.s32.totalorder %s53, %s55
    %p59 = scmp.eq.s32.totalorder %s19, 0
    %p60 = por %p58, %p59
    %p61 = scmp.ne.s32.totalorder %s53, %s55
    %p62 = scmp.eq.s32.totalorder %s24, 1
    %p63 = por %p61, %p62
    %p64 = scmp.ne.s32.totalorder %s55, %s56
    %p65 = scmp.eq.s32.totalorder %s24, 0
    %p66 = por %p64, %p65
    %p67 = scmp.ne.s32.totalorder %s55, %s56
    %p68 = scmp.eq.s32.totalorder %s25, 1
    %p69 = por %p67, %p68
    %p71 = scmp.ne.s32.totalorder %s56, %s70
    %p72 = scmp.eq.s32.totalorder %s25, 0
    %p73 = por %p71, %p72
    %s75 = sadd.s32 %s74, 1
    %p78 = scmp.eq.s32.totalorder %s19, 1
    %p79 = scmp.ne.s32.totalorder %s74, %s76
    %p80 = scmp.eq.s32.totalorder %s19, 0
    %p81 = por %p79, %p80
    %p82 = scmp.ne.s32.totalorder %s74, %s76
    %p83 = scmp.eq.s32.totalorder %s24, 1
    %p84 = por %p82, %p83
    %p85 = scmp.ne.s32.totalorder %s76, %s77
    %p86 = scmp.eq.s32.totalorder %s24, 0
    %p87 = por %p85, %p86
    %p88 = scmp.ne.s32.totalorder %s76, %s77
    %p89 = scmp.eq.s32.totalorder %s25, 1
    %p90 = por %p88, %p89
    %p92 = scmp.ne.s32.totalorder %s77, %s91
    %p93 = scmp.eq.s32.totalorder %s25, 0
    %p94 = por %p92, %p93
    %s96 = sadd.s32 %s95, 1
    %p99 = scmp.eq.s32.totalorder %s19, 1
    %p100 = scmp.ne.s32.totalorder %s95, %s97
    %p101 = scmp.eq.s32.totalorder %s19, 0
    %p102 = por %p100, %p101
    %p103 = scmp.ne.s32.totalorder %s95, %s97
    %p104 = scmp.eq.s32.totalorder %s24, 1
    %p105 = por %p103, %p104
    %p106 = scmp.ne.s32.totalorder %s97, %s98
    %p107 = scmp.eq.s32.totalorder %s24, 0
    %p108 = por %p106, %p107
    %p109 = scmp.ne.s32.totalorder %s97, %s98
    %p110 = scmp.eq.s32.totalorder %s25, 1
    %p111 = por %p109, %p110
    %p113 = scmp.ne.s32.totalorder %s98, %s112
    %p114 = scmp.eq.s32.totalorder %s25, 0
    %p115 = por %p113, %p114
    %s117 = sadd.s32 %s116, 1
    %p120 = scmp.eq.s32.totalorder %s19, 1
    %p121 = scmp.ne.s32.totalorder %s116, %s118
    %p122 = scmp.eq.s32.totalorder %s19, 0
    %p123 = por %p121, %p122
    %p124 = scmp.ne.s32.totalorder %s116, %s118
    %p125 = scmp.eq.s32.totalorder %s24, 1
    %p126 = por %p124, %p125
    %p127 = scmp.ne.s32.totalorder %s118, %s119
    %p128 = scmp.eq.s32.totalorder %s24, 0
    %p129 = por %p127, %p128
    %p130 = scmp.ne.s32.totalorder %s118, %s119
    %p131 = scmp.eq.s32.totalorder %s25, 1
    %p132 = por %p130, %p131
    %p134 = scmp.ne.s32.totalorder %s119, %s133
    %p135 = scmp.eq.s32.totalorder %s25, 0
    %p136 = por %p134, %p135
    %s138 = sadd.s32 %s137, 1
    %p141 = scmp.eq.s32.totalorder %s19, 1
    %p142 = scmp.ne.s32.totalorder %s137, %s139
    %p143 = scmp.eq.s32.totalorder %s19, 0
    %p144 = por %p142, %p143
    %p145 = scmp.ne.s32.totalorder %s137, %s139
    %p146 = scmp.eq.s32.totalorder %s24, 1
    %p147 = por %p145, %p146
    %p148 = scmp.ne.s32.totalorder %s139, %s140
    %p149 = scmp.eq.s32.totalorder %s24, 0
    %p150 = por %p148, %p149
    %p151 = scmp.ne.s32.totalorder %s139, %s140
    %p152 = scmp.eq.s32.totalorder %s25, 1
    %p153 = por %p151, %p152
    %p155 = scmp.ne.s32.totalorder %s140, %s154
    %p156 = scmp.eq.s32.totalorder %s25, 0
    %p157 = por %p155, %p156
    %s159 = sadd.s32 %s158, 1
    %p162 = scmp.eq.s32.totalorder %s19, 1
    %p163 = scmp.ne.s32.totalorder %s158, %s160
    %p164 = scmp.eq.s32.totalorder %s19, 0
    %p165 = por %p163, %p164
    %p166 = scmp.ne.s32.totalorder %s158, %s160
    %p167 = scmp.eq.s32.totalorder %s24, 1
    %p168 = por %p166, %p167
    %p169 = scmp.ne.s32.totalorder %s160, %s161
    %p170 = scmp.eq.s32.totalorder %s24, 0
    %p171 = por %p169, %p170
    %p172 = scmp.ne.s32.totalorder %s160, %s161
    %p173 = scmp.eq.s32.totalorder %s25, 1
    %p174 = por %p172, %p173
    %p176 = scmp.ne.s32.totalorder %s161, %s175
    %p177 = scmp.eq.s32.totalorder %s25, 0
    %p178 = por %p176, %p177
    %s180 = sadd.s32 %s179, 1
    %p183 = scmp.eq.s32.totalorder %s19, 1
    %p184 = scmp.ne.s32.totalorder %s179, %s181
    %p185 = scmp.eq.s32.totalorder %s19, 0
    %p186 = por %p184, %p185
    %p187 = scmp.ne.s32.totalorder %s179, %s181
    %p188 = scmp.eq.s32.totalorder %s24, 1
    %p189 = por %p187, %p188
    %p190 = scmp.ne.s32.totalorder %s181, %s182
    %p191 = scmp.eq.s32.totalorder %s24, 0
    %p192 = por %p190, %p191
    %p193 = scmp.ne.s32.totalorder %s181, %s182
    %p194 = scmp.eq.s32.totalorder %s25, 1
    %p195 = por %p193, %p194
    %p197 = scmp.ne.s32.totalorder %s182, %s196
    %p198 = scmp.eq.s32.totalorder %s25, 0
    %p199 = por %p197, %p198
    %s201 = sadd.s32 %s200, 1
    %p204 = scmp.eq.s32.totalorder %s19, 1
    %p205 = scmp.ne.s32.totalorder %s200, %s202
    %p206 = scmp.eq.s32.totalorder %s19, 0
    %p207 = por %p205, %p206
    %p208 = scmp.ne.s32.totalorder %s200, %s202
    %p209 = scmp.eq.s32.totalorder %s24, 1
    %p210 = por %p208, %p209
    %p211 = scmp.ne.s32.totalorder %s202, %s203
    %p212 = scmp.eq.s32.totalorder %s24, 0
    %p213 = por %p211, %p212
    %p214 = scmp.ne.s32.totalorder %s202, %s203
    %p215 = scmp.eq.s32.totalorder %s25, 1
    %p216 = por %p214, %p215
    %p218 = scmp.ne.s32.totalorder %s203, %s217
    %p219 = scmp.eq.s32.totalorder %s25, 0
    %p220 = por %p218, %p219
    %s222 = sadd.s32 %s221, 1
    %p225 = scmp.eq.s32.totalorder %s19, 1
    %p226 = scmp.ne.s32.totalorder %s221, %s223
    %p227 = scmp.eq.s32.totalorder %s19, 0
    %p228 = por %p226, %p227
    %p229 = scmp.ne.s32.totalorder %s221, %s223
    %p230 = scmp.eq.s32.totalorder %s24, 1
    %p231 = por %p229, %p230
    %p232 = scmp.ne.s32.totalorder %s223, %s224
    %p233 = scmp.eq.s32.totalorder %s24, 0
    %p234 = por %p232, %p233
    %p235 = scmp.ne.s32.totalorder %s223, %s224
    %p236 = scmp.eq.s32.totalorder %s25, 1
    %p237 = por %p235, %p236
    %p239 = scmp.ne.s32.totalorder %s224, %s238
    %p240 = scmp.eq.s32.totalorder %s25, 0
    %p241 = por %p239, %p240
    %s243 = sadd.s32 %s242, 1
    %p246 = scmp.eq.s32.totalorder %s19, 1
    %p247 = scmp.ne.s32.totalorder %s242, %s244
    %p248 = scmp.eq.s32.totalorder %s19, 0
    %p249 = por %p247, %p248
    %p250 = scmp.ne.s32.totalorder %s242, %s244
    %p251 = scmp.eq.s32.totalorder %s24, 1
    %p252 = por %p250, %p251
    %p253 = scmp.ne.s32.totalorder %s244, %s245
    %p254 = scmp.eq.s32.totalorder %s24, 0
    %p255 = por %p253, %p254
    %p256 = scmp.ne.s32.totalorder %s244, %s245
    %p257 = scmp.eq.s32.totalorder %s25, 1
    %p258 = por %p256, %p257
    %p260 = scmp.ne.s32.totalorder %s245, %s259
    %p261 = scmp.eq.s32.totalorder %s25, 0
    %p262 = por %p260, %p261
    %s263 = ssub.s32 %s19, %s26
    %p264 = scmp.eq.s32.totalorder %s263, 0
    %s266 = sadd.s32 %s265, 1
    %s267 = scalar_select %p264, %s265, %s266
    %p270 = pneg %p264
    %p271 = scmp.eq.s32.totalorder %s19, 1
    %p272 = por %p270, %p271
    %p273 = scmp.ne.s32.totalorder %s265, %s268
    %p274 = scmp.eq.s32.totalorder %s19, 0
    %p275 = por %p273, %p274
    %p276 = scmp.ne.s32.totalorder %s265, %s268
    %p277 = scmp.eq.s32.totalorder %s24, 1
    %p278 = por %p276, %p277
    %p279 = scmp.ne.s32.totalorder %s268, %s269
    %p280 = scmp.eq.s32.totalorder %s24, 0
    %p281 = por %p279, %p280
    %p282 = scmp.ne.s32.totalorder %s268, %s269
    %p283 = scmp.eq.s32.totalorder %s25, 1
    %p284 = por %p282, %p283
    %p286 = scmp.ne.s32.totalorder %s269, %s285
    %p287 = scmp.eq.s32.totalorder %s25, 0
    %p288 = por %p286, %p287
    %s289 = ssub.s32 %s19, %s26
    %p290 = scmp.eq.s32.totalorder %s289, 0
    %s292 = sadd.s32 %s291, 1
    %s293 = scalar_select %p290, %s291, %s292
    %p296 = pneg %p290
    %p297 = scmp.eq.s32.totalorder %s19, 1
    %p298 = por %p296, %p297
    %p299 = scmp.ne.s32.totalorder %s291, %s294
    %p300 = scmp.eq.s32.totalorder %s19, 0
    %p301 = por %p299, %p300
    %p302 = scmp.ne.s32.totalorder %s291, %s294
    %p303 = scmp.eq.s32.totalorder %s24, 1
    %p304 = por %p302, %p303
    %p305 = scmp.ne.s32.totalorder %s294, %s295
    %p306 = scmp.eq.s32.totalorder %s24, 0
    %p307 = por %p305, %p306
    %p308 = scmp.ne.s32.totalorder %s294, %s295
    %p309 = scmp.eq.s32.totalorder %s25, 1
    %p310 = por %p308, %p309
    %p312 = scmp.ne.s32.totalorder %s295, %s311
    %p313 = scmp.eq.s32.totalorder %s25, 0
    %p314 = por %p312, %p313
    %p315 = scmp.le.s32.totalorder 1, %s19
    %p316 = scmp.lt.s32.totalorder %s19, 3
    %p317 = pnand %p315, %p316
    %p318 = pneg %p317
    // Predicated region
    $region9: #{encoder_decoder_forward.18} parent=5 // pred_check
      _
    $region10: #{encoder_decoder_forward.18} parent=5 // pred_check_branch
      %320 = sbr.rel (%p317) target = $region12
    $region11: #{encoder_decoder_forward.18} parent=5 // pred_region
      %s321 = ssub.s32 %s19, 1
      // Predicated region
      $region13: #{encoder_decoder_forward.18} parent=11 // pred_check
        %p322 = pneg %p66
      $region14: #{encoder_decoder_forward.18} parent=11 // pred_check_branch
        %324 = sbr.rel (%p322) target = $region16
      $region15: #{encoder_decoder_forward.18} parent=11 // pred_region
        _
      $region16: #{encoder_decoder_forward.18} parent=11 // pred_fallthru
        _
      // Predicated region
      $region17: #{encoder_decoder_forward.18} parent=11 // pred_check
        %p325 = pneg %p87
      $region18: #{encoder_decoder_forward.18} parent=11 // pred_check_branch
        %327 = sbr.rel (%p325) target = $region20
      $region19: #{encoder_decoder_forward.18} parent=11 // pred_region
        _
      $region20: #{encoder_decoder_forward.18} parent=11 // pred_fallthru
        _
      // Predicated region
      $region21: #{encoder_decoder_forward.18} parent=11 // pred_check
        %p328 = pneg %p108
      $region22: #{encoder_decoder_forward.18} parent=11 // pred_check_branch
        %330 = sbr.rel (%p328) target = $region24
      $region23: #{encoder_decoder_forward.18} parent=11 // pred_region
        _
      $region24: #{encoder_decoder_forward.18} parent=11 // pred_fallthru
        _
      // Predicated region
      $region25: #{encoder_decoder_forward.18} parent=11 // pred_check
        %p331 = pneg %p129
      $region26: #{encoder_decoder_forward.18} parent=11 // pred_check_branch
        %333 = sbr.rel (%p331) target = $region28
      $region27: #{encoder_decoder_forward.18} parent=11 // pred_region
        _
      $region28: #{encoder_decoder_forward.18} parent=11 // pred_fallthru
        _
      // Predicated region
      $region29: #{encoder_decoder_forward.18} parent=11 // pred_check
        %p334 = pneg %p150
      $region30: #{encoder_decoder_forward.18} parent=11 // pred_check_branch
        %336 = sbr.rel (%p334) target = $region32
      $region31: #{encoder_decoder_forward.18} parent=11 // pred_region
        _
      $region32: #{encoder_decoder_forward.18} parent=11 // pred_fallthru
        _
      // Predicated region
      $region33: #{encoder_decoder_forward.18} parent=11 // pred_check
        %p337 = pneg %p171
      $region34: #{encoder_decoder_forward.18} parent=11 // pred_check_branch
        %339 = sbr.rel (%p337) target = $region36
      $region35: #{encoder_decoder_forward.18} parent=11 // pred_region
        _
      $region36: #{encoder_decoder_forward.18} parent=11 // pred_fallthru
        _
      // Predicated region
      $region37: #{encoder_decoder_forward.18} parent=11 // pred_check
        %p340 = pneg %p192
      $region38: #{encoder_decoder_forward.18} parent=11 // pred_check_branch
        %342 = sbr.rel (%p340) target = $region40
      $region39: #{encoder_decoder_forward.18} parent=11 // pred_region
        _
      $region40: #{encoder_decoder_forward.18} parent=11 // pred_fallthru
        _
      // Predicated region
      $region41: #{encoder_decoder_forward.18} parent=11 // pred_check
        %p343 = pneg %p213
      $region42: #{encoder_decoder_forward.18} parent=11 // pred_check_branch
        %345 = sbr.rel (%p343) target = $region44
      $region43: #{encoder_decoder_forward.18} parent=11 // pred_region
        _
      $region44: #{encoder_decoder_forward.18} parent=11 // pred_fallthru
        _
      // Predicated region
      $region45: #{encoder_decoder_forward.18} parent=11 // pred_check
        %p346 = pneg %p234
      $region46: #{encoder_decoder_forward.18} parent=11 // pred_check_branch
        %348 = sbr.rel (%p346) target = $region48
      $region47: #{encoder_decoder_forward.18} parent=11 // pred_region
        _
      $region48: #{encoder_decoder_forward.18} parent=11 // pred_fallthru
        _
      // Predicated region
      $region49: #{encoder_decoder_forward.18} parent=11 // pred_check
        %p349 = pneg %p255
      $region50: #{encoder_decoder_forward.18} parent=11 // pred_check_branch
        %351 = sbr.rel (%p349) target = $region52
      $region51: #{encoder_decoder_forward.18} parent=11 // pred_region
        _
      $region52: #{encoder_decoder_forward.18} parent=11 // pred_fallthru
        _
    $region12: #{encoder_decoder_forward.18} parent=5 // pred_fallthru
      _
    %p352 = scmp.lt.s32.totalorder %s19, 2
    // Predicated region
    $region53: #{encoder_decoder_forward.18} parent=5 // pred_check
      %p353 = pneg %p352
    $region54: #{encoder_decoder_forward.18} parent=5 // pred_check_branch
      %355 = sbr.rel (%p353) target = $region56
    $region55: #{encoder_decoder_forward.18} parent=5 // pred_region
      // Predicated region
      $region57: #{encoder_decoder_forward.18} parent=55 // pred_check
        %p356 = pneg %p39
      $region58: #{encoder_decoder_forward.18} parent=55 // pred_check_branch
        %358 = sbr.rel (%p356) target = $region60
      $region59: #{encoder_decoder_forward.18} parent=55 // pred_region
        %p359 = scmp.lt.s32.totalorder %s19, 1
        %s360 = scalar_select %p359, %s19, 1
        %s361 = smul.addr %s360, 2
        %s362 = smul.addr %s361, 8
        %s363 = scalar_lea.vmem %s0, %s362
      $region60: #{encoder_decoder_forward.18} parent=55 // pred_fallthru
        _
    $region56: #{encoder_decoder_forward.18} parent=5 // pred_fallthru
      _
    %p364 = scmp.le.s32.totalorder 1, %s19
    %p365 = scmp.lt.s32.totalorder %s19, 3
    %p366 = pnand %p364, %p365
    %p367 = pneg %p366
    // Predicated region
    $region61: #{encoder_decoder_forward.18} parent=5 // pred_check
      _
    $region62: #{encoder_decoder_forward.18} parent=5 // pred_check_branch
      %369 = sbr.rel (%p366) target = $region64
    $region63: #{encoder_decoder_forward.18} parent=5 // pred_region
      %s370 = ssub.s32 %s19, 1
      %p371 = scmp.lt.s32.totalorder %s24, 1
      %s372 = scalar_select %p371, %s24, 1
      %s373 = smul.addr %s372, 2
      %s374 = smul.addr %s373, 8
      %s375 = scalar_lea.vmem %s0, %s374
      %p376 = pneg %p45
      %p377 = pneg %p42
      %p378 = pneg %p66
      %p379 = pneg %p63
      %p380 = pneg %p87
      %p381 = pneg %p84
      %p382 = pneg %p108
      %p383 = pneg %p105
      %p384 = pneg %p129
      %p385 = pneg %p126
      %p386 = pneg %p150
      %p387 = pneg %p147
      %p388 = pneg %p171
      %p389 = pneg %p168
      %p390 = pneg %p192
      %p391 = pneg %p189
      %p392 = pneg %p213
      %p393 = pneg %p210
      %p394 = pneg %p234
      %p395 = pneg %p231
      %p396 = pneg %p255
      %p397 = pneg %p252
      %p398 = pneg %p281
      %p399 = pneg %p278
      %p400 = scmp.lt.s32.totalorder %s24, 1
      %s401 = scalar_select %p400, %s24, 1
      %s402 = smul.addr %s401, 2
      %s403 = smul.addr %s402, 8
      %s404 = scalar_lea.vmem %s11, %s403
      %p405 = pneg %p307
      %p406 = pneg %p304
      %p407 = scmp.lt.s32.totalorder %s24, 1
      %s408 = scalar_select %p407, %s24, 1
      %s409 = smul.addr %s408, 8
      %s410 = smul.addr %s409, 8
      %s411 = scalar_lea.vmem %s12, %s410
      %p412 = scmp.lt.s32.totalorder %s24, 1
      %s413 = scalar_select %p412, %s24, 1
      %s414 = smul.addr %s413, 2
      %s415 = smul.addr %s414, 8
      %s416 = scalar_lea.vmem %s0, %s415
      %p417 = scmp.lt.s32.totalorder %s24, 1
      %s418 = scalar_select %p417, %s24, 1
      %s419 = smul.addr %s418, 2
      %s420 = smul.addr %s419, 8
      %s421 = scalar_lea.vmem %s11, %s420
      %p422 = scmp.lt.s32.totalorder %s24, 1
      %s423 = scalar_select %p422, %s24, 1
      %s424 = smul.addr %s423, 8
      %s425 = smul.addr %s424, 8
      %s426 = scalar_lea.vmem %s12, %s425
      %v428 = vld [vmem:[%s416] sm:$0xff]
      %v429 = vld [vmem:[%s416 + $0x8] sm:$0xf]
      %v430 = vpack.c.bf16 %v429, %v428
      %v431 = vld [vmem:[%s1] sm:$0xff]
      %v432 = vld [vmem:[%s1 + $0x8] sm:$0xff]
      %v433 = vld [vmem:[%s1 + $0x10] sm:$0xff]
      %v434 = vld [vmem:[%s1 + $0x18] sm:$0xff]
      %v435 = vld [vmem:[%s1 + $0x20] sm:$0xff]
      %v436 = vld [vmem:[%s1 + $0x28] sm:$0xff]
      %v437 = vld [vmem:[%s1 + $0x30] sm:$0xff]
      %v438 = vld [vmem:[%s1 + $0x38] sm:$0xff]
      %v439 = vpack.c.bf16 %v432, %v431
      %v440 = vpack.c.bf16 %v434, %v433
      %v441 = vpack.c.bf16 %v436, %v435
      %v442 = vpack.c.bf16 %v438, %v437
      %v443 = vld [vmem:[%s2] sm:$0x1]
      %v445 = vlaneseq
      %v446 = vshrl.u32 %v445, 7
      %v447 = vsub.s32 0, %v446
      %v448 = vrot.slane %v443, %v447
      %vm450 = vcmask 523264
      %v452 = vsel %vm450, %v430, 0
      %454 = vmatprep.subr.bf16.mxu0 0
      %455 = vmatpush1.bf16.msra.mxu0 %v439
      %456 = vmatprep.subr.bf16.mxu0 0
      %457 = vmatpush1.bf16.msra.mxu0 %v440
      %458 = vmatprep.subr.bf16.mxu0 0
      %459 = vmatpush1.bf16.msra.mxu0 %v441
      %460 = vmatprep.subr.bf16.mxu0 0
      %461 = vmatpush1.bf16.msra.mxu0 %v442
      %462 = vmatprep.subr.bf16.mxu0 0
      %463 = vmatpush1.bf16.msra.mxu0 0
      %464 = vmatprep.subr.bf16.mxu0 0
      %465 = vmatpush1.bf16.msra.mxu0 0
      %466 = vmatprep.subr.bf16.mxu0 0
      %467 = vmatpush1.bf16.msra.mxu0 0
      %468 = vmatprep.subr.bf16.mxu0 0
      %469 = vmatpush1.bf16.msra.mxu0 0
      %470 = vmatprep.subr.bf16.mxu0 0
      %471 = vmatpush1.bf16.msra.mxu0 0
      %472 = vmatprep.subr.bf16.mxu0 0
      %473 = vmatpush1.bf16.msra.mxu0 0
      %474 = vmatprep.subr.bf16.mxu0 0
      %475 = vmatpush1.bf16.msra.mxu0 0
      %476 = vmatprep.subr.bf16.mxu0 0
      %477 = vmatpush1.bf16.msra.mxu0 0
      %478 = vmatprep.subr.bf16.mxu0 0
      %479 = vmatpush1.bf16.msra.mxu0 0
      %480 = vmatprep.subr.bf16.mxu0 0
      %481 = vmatpush1.bf16.msra.mxu0 0
      %482 = vmatprep.subr.bf16.mxu0 0
      %483 = vmatpush1.bf16.msra.mxu0 0
      %484 = vmatprep.subr.bf16.mxu0 0
      %485 = vmatpush1.bf16.msra.mxu0 0
      %486 = vmatprep.mubr.bf16.mxu0 0
      %487 = vmatmul.mubr.bf16.gmra.mrb[0].mxu0 %v452
      %v488 = vpop.f32.mrb[0].mxu0
      %v489 = vadd.f32 %v448, %v488
      %v490 = vpop.f32.mrb[0].mxu0
      %v491 = vpop.f32.mrb[0].mxu0
      %v492 = vadd.f32 %v448, %v491
      %v493 = vpop.f32.mrb[0].mxu0
      %494 = vdwg.mxu0
      %v495 = vld [vmem:[%s3] sm:$0xff]
      %v496 = vld [vmem:[%s3 + $0x8] sm:$0xff]
      %v497 = vld [vmem:[%s3 + $0x10] sm:$0xff]
      %v498 = vld [vmem:[%s3 + $0x18] sm:$0xff]
      %v499 = vld [vmem:[%s3 + $0x20] sm:$0xff]
      %v500 = vld [vmem:[%s3 + $0x28] sm:$0xff]
      %v501 = vld [vmem:[%s3 + $0x30] sm:$0xff]
      %v502 = vld [vmem:[%s3 + $0x38] sm:$0xff]
      %v503 = vpack.c.bf16 %v496, %v495
      %v504 = vpack.c.bf16 %v498, %v497
      %v505 = vpack.c.bf16 %v500, %v499
      %v506 = vpack.c.bf16 %v502, %v501
      %v507 = vld [vmem:[%s4] sm:$0x1]
      %v509 = vlaneseq
      %v510 = vshrl.u32 %v509, 7
      %v511 = vsub.s32 0, %v510
      %v512 = vrot.slane %v507, %v511
      %514 = vmatprep.subr.bf16.mxu0 0
      %515 = vmatpush1.bf16.msra.mxu0 %v503
      %516 = vmatprep.subr.bf16.mxu0 0
      %517 = vmatpush1.bf16.msra.mxu0 %v504
      %518 = vmatprep.subr.bf16.mxu0 0
      %519 = vmatpush1.bf16.msra.mxu0 %v505
      %520 = vmatprep.subr.bf16.mxu0 0
      %521 = vmatpush1.bf16.msra.mxu0 %v506
      %522 = vmatprep.subr.bf16.mxu0 0
      %523 = vmatpush1.bf16.msra.mxu0 0
      %524 = vmatprep.subr.bf16.mxu0 0
      %525 = vmatpush1.bf16.msra.mxu0 0
      %526 = vmatprep.subr.bf16.mxu0 0
      %527 = vmatpush1.bf16.msra.mxu0 0
      %528 = vmatprep.subr.bf16.mxu0 0
      %529 = vmatpush1.bf16.msra.mxu0 0
      %530 = vmatprep.subr.bf16.mxu0 0
      %531 = vmatpush1.bf16.msra.mxu0 0
      %532 = vmatprep.subr.bf16.mxu0 0
      %533 = vmatpush1.bf16.msra.mxu0 0
      %534 = vmatprep.subr.bf16.mxu0 0
      %535 = vmatpush1.bf16.msra.mxu0 0
      %536 = vmatprep.subr.bf16.mxu0 0
      %537 = vmatpush1.bf16.msra.mxu0 0
      %538 = vmatprep.subr.bf16.mxu0 0
      %539 = vmatpush1.bf16.msra.mxu0 0
      %540 = vmatprep.subr.bf16.mxu0 0
      %541 = vmatpush1.bf16.msra.mxu0 0
      %542 = vmatprep.subr.bf16.mxu0 0
      %543 = vmatpush1.bf16.msra.mxu0 0
      %544 = vmatprep.subr.bf16.mxu0 0
      %545 = vmatpush1.bf16.msra.mxu0 0
      %546 = vmatprep.mubr.bf16.mxu0 0
      %547 = vmatmul.mubr.bf16.gmra.mrb[0].mxu0 %v452
      %v548 = vpop.f32.mrb[0].mxu0
      %v549 = vadd.f32 %v512, %v548
      %v550 = vpop.f32.mrb[0].mxu0
      %v551 = vpop.f32.mrb[0].mxu0
      %v552 = vadd.f32 %v512, %v551
      %v553 = vpop.f32.mrb[0].mxu0
      %554 = vdwg.mxu0
      %v555 = vld [vmem:[%s5] sm:$0xff]
      %v556 = vld [vmem:[%s5 + $0x8] sm:$0xff]
      %v557 = vld [vmem:[%s5 + $0x10] sm:$0xff]
      %v558 = vld [vmem:[%s5 + $0x18] sm:$0xff]
      %v559 = vld [vmem:[%s5 + $0x20] sm:$0xff]
      %v560 = vld [vmem:[%s5 + $0x28] sm:$0xff]
      %v561 = vld [vmem:[%s5 + $0x30] sm:$0xff]
      %v562 = vld [vmem:[%s5 + $0x38] sm:$0xff]
      %v563 = vpack.c.bf16 %v556, %v555
      %v564 = vpack.c.bf16 %v558, %v557
      %v565 = vpack.c.bf16 %v560, %v559
      %v566 = vpack.c.bf16 %v562, %v561
      %v567 = vld [vmem:[%s6] sm:$0x1]
      %v569 = vlaneseq
      %v570 = vshrl.u32 %v569, 7
      %v571 = vsub.s32 0, %v570
      %v572 = vrot.slane %v567, %v571
      %574 = vmatprep.subr.bf16.mxu0 0
      %575 = vmatpush1.bf16.msra.mxu0 %v563
      %576 = vmatprep.subr.bf16.mxu0 0
      %577 = vmatpush1.bf16.msra.mxu0 %v564
      %578 = vmatprep.subr.bf16.mxu0 0
      %579 = vmatpush1.bf16.msra.mxu0 %v565
      %580 = vmatprep.subr.bf16.mxu0 0
      %581 = vmatpush1.bf16.msra.mxu0 %v566
      %582 = vmatprep.subr.bf16.mxu0 0
      %583 = vmatpush1.bf16.msra.mxu0 0
      %584 = vmatprep.subr.bf16.mxu0 0
      %585 = vmatpush1.bf16.msra.mxu0 0
      %586 = vmatprep.subr.bf16.mxu0 0
      %587 = vmatpush1.bf16.msra.mxu0 0
      %588 = vmatprep.subr.bf16.mxu0 0
      %589 = vmatpush1.bf16.msra.mxu0 0
      %590 = vmatprep.subr.bf16.mxu0 0
      %591 = vmatpush1.bf16.msra.mxu0 0
      %592 = vmatprep.subr.bf16.mxu0 0
      %593 = vmatpush1.bf16.msra.mxu0 0
      %594 = vmatprep.subr.bf16.mxu0 0
      %595 = vmatpush1.bf16.msra.mxu0 0
      %596 = vmatprep.subr.bf16.mxu0 0
      %597 = vmatpush1.bf16.msra.mxu0 0
      %598 = vmatprep.subr.bf16.mxu0 0
      %599 = vmatpush1.bf16.msra.mxu0 0
      %600 = vmatprep.subr.bf16.mxu0 0
      %601 = vmatpush1.bf16.msra.mxu0 0
      %602 = vmatprep.subr.bf16.mxu0 0
      %603 = vmatpush1.bf16.msra.mxu0 0
      %604 = vmatprep.subr.bf16.mxu0 0
      %605 = vmatpush1.bf16.msra.mxu0 0
      %606 = vmatprep.mubr.bf16.mxu0 0
      %607 = vmatmul.mubr.bf16.gmra.mrb[0].mxu0 %v452
      %v608 = vpop.f32.mrb[0].mxu0
      %v609 = vadd.f32 %v572, %v608
      %v610 = vpop.f32.mrb[0].mxu0
      %v611 = vpop.f32.mrb[0].mxu0
      %v612 = vadd.f32 %v572, %v611
      %v613 = vpop.f32.mrb[0].mxu0
      %614 = vdwg.mxu0
      %v615 = vpack.c.bf16 %v492, %v489
      %v616 = vpack.c.bf16 %v552, %v549
      %v617 = vpack.c.bf16 %v612, %v609
      %vm618 = vcmask 130048
      %v620 = vsel %vm618, %v615, 0
      %v623 = vsel %vm618, %v616, 0
      %625 = vmatprep.subr.bf16.mxu0 0
      %626 = vmatpush1.bf16.xpose.msra.mxu0 %v623
      %627 = vmatprep.subr.bf16.mxu0 0
      %628 = vmatpush1.bf16.xpose.msra.mxu0 0
      %629 = vmatprep.subr.bf16.mxu0 0
      %630 = vmatpush1.bf16.xpose.msra.mxu0 0
      %631 = vmatprep.subr.bf16.mxu0 0
      %632 = vmatpush1.bf16.xpose.msra.mxu0 0
      %633 = vmatprep.subr.bf16.mxu0 0
      %634 = vmatpush1.bf16.xpose.msra.mxu0 0
      %635 = vmatprep.subr.bf16.mxu0 0
      %636 = vmatpush1.bf16.xpose.msra.mxu0 0
      %637 = vmatprep.subr.bf16.mxu0 0
      %638 = vmatpush1.bf16.xpose.msra.mxu0 0
      %639 = vmatprep.subr.bf16.mxu0 0
      %640 = vmatpush1.bf16.xpose.msra.mxu0 0
      %641 = vmatprep.subr.bf16.mxu0 0
      %642 = vmatpush1.bf16.xpose.msra.mxu0 0
      %643 = vmatprep.subr.bf16.mxu0 0
      %644 = vmatpush1.bf16.xpose.msra.mxu0 0
      %645 = vmatprep.subr.bf16.mxu0 0
      %646 = vmatpush1.bf16.xpose.msra.mxu0 0
      %647 = vmatprep.subr.bf16.mxu0 0
      %648 = vmatpush1.bf16.xpose.msra.mxu0 0
      %649 = vmatprep.subr.bf16.mxu0 0
      %650 = vmatpush1.bf16.xpose.msra.mxu0 0
      %651 = vmatprep.subr.bf16.mxu0 0
      %652 = vmatpush1.bf16.xpose.msra.mxu0 0
      %653 = vmatprep.subr.bf16.mxu0 0
      %654 = vmatpush1.bf16.xpose.msra.mxu0 0
      %655 = vmatprep.subr.bf16.mxu0 0
      %656 = vmatpush1.bf16.xpose.msra.mxu0 0
      %657 = vmatprep.mubr.bf16.mxu0 0
      %658 = vmatmul.mubr.bf16.gmra.mrb[0].mxu0 %v620
      %v659 = vpop.f32.mrb[0].mxu0
      %v660 = vadd.f32 0.0, %v659
      %v661 = vpop.f32.mrb[0].mxu0
      %v662 = vpop.f32.mrb[0].mxu0
      %v663 = vadd.f32 0.0, %v662
      %v664 = vpop.f32.mrb[0].mxu0
      %665 = vdwg.mxu0
      %v666 = vmul.f32 %v660, 0.25
      %v667 = vmul.f32 %v663, 0.25
      %vm668 = vcmask 97280
      %v669 = vsel %vm668, %v666, -inf
      %670 = vmax.xlane.f32.xlu0 %v669
      %v671 = vpop.xlane.xlu0 %670
      %vm672 = vcmask 93184
      %v673 = vsel %vm672, %v667, -inf
      %674 = vmax.xlane.f32.xlu0 %v673
      %v675 = vpop.xlane.xlu0 %674
      %v676 = vsub.f32 %v666, %v671
      %v677 = vsub.f32 %v667, %v675
      %v678 = vmul.f32 %v676, 1.442695
      %v679 = vpow.pop %v678
      %v680 = vmul.f32 %v677, 1.442695
      %v681 = vpow.pop %v680
      %v682 = vsel %vm668, %v679, 0.0
      %683 = vadd.xlane.f32.xlu0 %v682
      %v684 = vpop.xlane.xlu0 %683
      %v685 = vsel %vm672, %v681, 0.0
      %686 = vadd.xlane.f32.xlu0 %v685
      %v687 = vpop.xlane.xlu0 %686
      %v688 = vrcp.pop %v684
      %v689 = vrcp.pop %v687
      %v690 = vmul.f32 %v679, %v688
      %v691 = vmul.f32 %v681, %v689
      %692 = vst.msk [vmem:[%s426] sm:$0xff] %vm668, %v690
      %693 = vst.msk [vmem:[%s426 + $0x8] sm:$0xf] %vm672, %v691
      %v694 = vpack.c.bf16 %v691, %v690
      %v696 = vsel %vm668, %v694, 0
      %vm698 = vcmask 1045504
      %v700 = vsel %vm698, %v617, 0
      %702 = vmatprep.subr.bf16.mxu0 0
      %703 = vmatpush1.bf16.msra.mxu0 %v700
      %704 = vmatprep.subr.bf16.mxu0 0
      %705 = vmatpush1.bf16.msra.mxu0 0
      %706 = vmatprep.subr.bf16.mxu0 0
      %707 = vmatpush1.bf16.msra.mxu0 0
      %708 = vmatprep.subr.bf16.mxu0 0
      %709 = vmatpush1.bf16.msra.mxu0 0
      %710 = vmatprep.subr.bf16.mxu0 0
      %711 = vmatpush1.bf16.msra.mxu0 0
      %712 = vmatprep.subr.bf16.mxu0 0
      %713 = vmatpush1.bf16.msra.mxu0 0
      %714 = vmatprep.subr.bf16.mxu0 0
      %715 = vmatpush1.bf16.msra.mxu0 0
      %716 = vmatprep.subr.bf16.mxu0 0
      %717 = vmatpush1.bf16.msra.mxu0 0
      %718 = vmatprep.subr.bf16.mxu0 0
      %719 = vmatpush1.bf16.msra.mxu0 0
      %720 = vmatprep.subr.bf16.mxu0 0
      %721 = vmatpush1.bf16.msra.mxu0 0
      %722 = vmatprep.subr.bf16.mxu0 0
      %723 = vmatpush1.bf16.msra.mxu0 0
      %724 = vmatprep.subr.bf16.mxu0 0
      %725 = vmatpush1.bf16.msra.mxu0 0
      %726 = vmatprep.subr.bf16.mxu0 0
      %727 = vmatpush1.bf16.msra.mxu0 0
      %728 = vmatprep.subr.bf16.mxu0 0
      %729 = vmatpush1.bf16.msra.mxu0 0
      %730 = vmatprep.subr.bf16.mxu0 0
      %731 = vmatpush1.bf16.msra.mxu0 0
      %732 = vmatprep.subr.bf16.mxu0 0
      %733 = vmatpush1.bf16.msra.mxu0 0
      %734 = vmatprep.mubr.bf16.mxu0 0
      %735 = vmatmul.mubr.bf16.gmra.mrb[0].mxu0 %v696
      %v736 = vpop.f32.mrb[0].mxu0
      %v737 = vadd.f32 0.0, %v736
      %v738 = vpop.f32.mrb[0].mxu0
      %v739 = vpop.f32.mrb[0].mxu0
      %v740 = vadd.f32 0.0, %v739
      %v741 = vpop.f32.mrb[0].mxu0
      %742 = vdwg.mxu0
      %744 = vrot.lane.b32.xlu0 %v615, 112
      %v745 = vpop.permute.xlu0 %744
      %747 = vrot.lane.b32.xlu0 %v616, 112
      %v748 = vpop.permute.xlu0 %747
      %v750 = vsel %vm618, %v745, 0
      %v753 = vsel %vm618, %v748, 0
      %755 = vmatprep.subr.bf16.mxu0 0
      %756 = vmatpush1.bf16.xpose.msra.mxu0 %v753
      %757 = vmatprep.subr.bf16.mxu0 0
      %758 = vmatpush1.bf16.xpose.msra.mxu0 0
      %759 = vmatprep.subr.bf16.mxu0 0
      %760 = vmatpush1.bf16.xpose.msra.mxu0 0
      %761 = vmatprep.subr.bf16.mxu0 0
      %762 = vmatpush1.bf16.xpose.msra.mxu0 0
      %763 = vmatprep.subr.bf16.mxu0 0
      %764 = vmatpush1.bf16.xpose.msra.mxu0 0
      %765 = vmatprep.subr.bf16.mxu0 0
      %766 = vmatpush1.bf16.xpose.msra.mxu0 0
      %767 = vmatprep.subr.bf16.mxu0 0
      %768 = vmatpush1.bf16.xpose.msra.mxu0 0
      %769 = vmatprep.subr.bf16.mxu0 0
      %770 = vmatpush1.bf16.xpose.msra.mxu0 0
      %771 = vmatprep.subr.bf16.mxu0 0
      %772 = vmatpush1.bf16.xpose.msra.mxu0 0
      %773 = vmatprep.subr.bf16.mxu0 0
      %774 = vmatpush1.bf16.xpose.msra.mxu0 0
      %775 = vmatprep.subr.bf16.mxu0 0
      %776 = vmatpush1.bf16.xpose.msra.mxu0 0
      %777 = vmatprep.subr.bf16.mxu0 0
      %778 = vmatpush1.bf16.xpose.msra.mxu0 0
      %779 = vmatprep.subr.bf16.mxu0 0
      %780 = vmatpush1.bf16.xpose.msra.mxu0 0
      %781 = vmatprep.subr.bf16.mxu0 0
      %782 = vmatpush1.bf16.xpose.msra.mxu0 0
      %783 = vmatprep.subr.bf16.mxu0 0
      %784 = vmatpush1.bf16.xpose.msra.mxu0 0
      %785 = vmatprep.subr.bf16.mxu0 0
      %786 = vmatpush1.bf16.xpose.msra.mxu0 0
      %787 = vmatprep.mubr.bf16.mxu0 0
      %788 = vmatmul.mubr.bf16.gmra.mrb[0].mxu0 %v750
      %v789 = vpop.f32.mrb[0].mxu0
      %v790 = vadd.f32 0.0, %v789
      %v791 = vpop.f32.mrb[0].mxu0
      %v792 = vpop.f32.mrb[0].mxu0
      %v793 = vadd.f32 0.0, %v792
      %v794 = vpop.f32.mrb[0].mxu0
      %795 = vdwg.mxu0
      %v796 = vmul.f32 %v790, 0.25
      %v797 = vmul.f32 %v793, 0.25
      %v798 = vsel %vm668, %v796, -inf
      %799 = vmax.xlane.f32.xlu0 %v798
      %v800 = vpop.xlane.xlu0 %799
      %v801 = vsel %vm672, %v797, -inf
      %802 = vmax.xlane.f32.xlu0 %v801
      %v803 = vpop.xlane.xlu0 %802
      %v804 = vsub.f32 %v796, %v800
      %v805 = vsub.f32 %v797, %v803
      %v806 = vmul.f32 %v804, 1.442695
      %v807 = vpow.pop %v806
      %v808 = vmul.f32 %v805, 1.442695
      %v809 = vpow.pop %v808
      %v810 = vsel %vm668, %v807, 0.0
      %811 = vadd.xlane.f32.xlu0 %v810
      %v812 = vpop.xlane.xlu0 %811
      %v813 = vsel %vm672, %v809, 0.0
      %814 = vadd.xlane.f32.xlu0 %v813
      %v815 = vpop.xlane.xlu0 %814
      %v816 = vrcp.pop %v812
      %v817 = vrcp.pop %v815
      %v818 = vmul.f32 %v807, %v816
      %v819 = vmul.f32 %v809, %v817
      %s820 = scalar_lea.vmem %s426, 16
      %821 = vst.msk [vmem:[%s820] sm:$0xff] %vm668, %v818
      %822 = vst.msk [vmem:[%s820 + $0x8] sm:$0xf] %vm672, %v819
      %v823 = vpack.c.bf16 %v819, %v818
      %825 = vrot.lane.b32.xlu0 %v617, 112
      %v826 = vpop.permute.xlu0 %825
      %v828 = vsel %vm668, %v823, 0
      %v831 = vsel %vm698, %v826, 0
      %833 = vmatprep.subr.bf16.mxu0 0
      %834 = vmatpush1.bf16.msra.mxu0 %v831
      %835 = vmatprep.subr.bf16.mxu0 0
      %836 = vmatpush1.bf16.msra.mxu0 0
      %837 = vmatprep.subr.bf16.mxu0 0
      %838 = vmatpush1.bf16.msra.mxu0 0
      %839 = vmatprep.subr.bf16.mxu0 0
      %840 = vmatpush1.bf16.msra.mxu0 0
      %841 = vmatprep.subr.bf16.mxu0 0
      %842 = vmatpush1.bf16.msra.mxu0 0
      %843 = vmatprep.subr.bf16.mxu0 0
      %844 = vmatpush1.bf16.msra.mxu0 0
      %845 = vmatprep.subr.bf16.mxu0 0
      %846 = vmatpush1.bf16.msra.mxu0 0
      %847 = vmatprep.subr.bf16.mxu0 0
      %848 = vmatpush1.bf16.msra.mxu0 0
      %849 = vmatprep.subr.bf16.mxu0 0
      %850 = vmatpush1.bf16.msra.mxu0 0
      %851 = vmatprep.subr.bf16.mxu0 0
      %852 = vmatpush1.bf16.msra.mxu0 0
      %853 = vmatprep.subr.bf16.mxu0 0
      %854 = vmatpush1.bf16.msra.mxu0 0
      %855 = vmatprep.subr.bf16.mxu0 0
      %856 = vmatpush1.bf16.msra.mxu0 0
      %857 = vmatprep.subr.bf16.mxu0 0
      %858 = vmatpush1.bf16.msra.mxu0 0
      %859 = vmatprep.subr.bf16.mxu0 0
      %860 = vmatpush1.bf16.msra.mxu0 0
      %861 = vmatprep.subr.bf16.mxu0 0
      %862 = vmatpush1.bf16.msra.mxu0 0
      %863 = vmatprep.subr.bf16.mxu0 0
      %864 = vmatpush1.bf16.msra.mxu0 0
      %865 = vmatprep.mubr.bf16.mxu0 0
      %866 = vmatmul.mubr.bf16.gmra.mrb[0].mxu0 %v828
      %v867 = vpop.f32.mrb[0].mxu0
      %v868 = vadd.f32 0.0, %v867
      %v869 = vpop.f32.mrb[0].mxu0
      %v870 = vpop.f32.mrb[0].mxu0
      %v871 = vadd.f32 0.0, %v870
      %v872 = vpop.f32.mrb[0].mxu0
      %873 = vdwg.mxu0
      %874 = vrot.lane.b32.xlu0 %v615, 96
      %v875 = vpop.permute.xlu0 %874
      %876 = vrot.lane.b32.xlu0 %v616, 96
      %v877 = vpop.permute.xlu0 %876
      %v879 = vsel %vm618, %v875, 0
      %v882 = vsel %vm618, %v877, 0
      %884 = vmatprep.subr.bf16.mxu0 0
      %885 = vmatpush1.bf16.xpose.msra.mxu0 %v882
      %886 = vmatprep.subr.bf16.mxu0 0
      %887 = vmatpush1.bf16.xpose.msra.mxu0 0
      %888 = vmatprep.subr.bf16.mxu0 0
      %889 = vmatpush1.bf16.xpose.msra.mxu0 0
      %890 = vmatprep.subr.bf16.mxu0 0
      %891 = vmatpush1.bf16.xpose.msra.mxu0 0
      %892 = vmatprep.subr.bf16.mxu0 0
      %893 = vmatpush1.bf16.xpose.msra.mxu0 0
      %894 = vmatprep.subr.bf16.mxu0 0
      %895 = vmatpush1.bf16.xpose.msra.mxu0 0
      %896 = vmatprep.subr.bf16.mxu0 0
      %897 = vmatpush1.bf16.xpose.msra.mxu0 0
      %898 = vmatprep.subr.bf16.mxu0 0
      %899 = vmatpush1.bf16.xpose.msra.mxu0 0
      %900 = vmatprep.subr.bf16.mxu0 0
      %901 = vmatpush1.bf16.xpose.msra.mxu0 0
      %902 = vmatprep.subr.bf16.mxu0 0
      %903 = vmatpush1.bf16.xpose.msra.mxu0 0
      %904 = vmatprep.subr.bf16.mxu0 0
      %905 = vmatpush1.bf16.xpose.msra.mxu0 0
      %906 = vmatprep.subr.bf16.mxu0 0
      %907 = vmatpush1.bf16.xpose.msra.mxu0 0
      %908 = vmatprep.subr.bf16.mxu0 0
      %909 = vmatpush1.bf16.xpose.msra.mxu0 0
      %910 = vmatprep.subr.bf16.mxu0 0
      %911 = vmatpush1.bf16.xpose.msra.mxu0 0
      %912 = vmatprep.subr.bf16.mxu0 0
      %913 = vmatpush1.bf16.xpose.msra.mxu0 0
      %914 = vmatprep.subr.bf16.mxu0 0
      %915 = vmatpush1.bf16.xpose.msra.mxu0 0
      %916 = vmatprep.mubr.bf16.mxu0 0
      %917 = vmatmul.mubr.bf16.gmra.mrb[0].mxu0 %v879
      %v918 = vpop.f32.mrb[0].mxu0
      %v919 = vadd.f32 0.0, %v918
      %v920 = vpop.f32.mrb[0].mxu0
      %v921 = vpop.f32.mrb[0].mxu0
      %v922 = vadd.f32 0.0, %v921
      %v923 = vpop.f32.mrb[0].mxu0
      %924 = vdwg.mxu0
      %v925 = vmul.f32 %v919, 0.25
      %v926 = vmul.f32 %v922, 0.25
      %v927 = vsel %vm668, %v925, -inf
      %928 = vmax.xlane.f32.xlu0 %v927
      %v929 = vpop.xlane.xlu0 %928
      %v930 = vsel %vm672, %v926, -inf
      %931 = vmax.xlane.f32.xlu0 %v930
      %v932 = vpop.xlane.xlu0 %931
      %v933 = vsub.f32 %v925, %v929
      %v934 = vsub.f32 %v926, %v932
      %v935 = vmul.f32 %v933, 1.442695
      %v936 = vpow.pop %v935
      %v937 = vmul.f32 %v934, 1.442695
      %v938 = vpow.pop %v937
      %v939 = vsel %vm668, %v936, 0.0
      %940 = vadd.xlane.f32.xlu0 %v939
      %v941 = vpop.xlane.xlu0 %940
      %v942 = vsel %vm672, %v938, 0.0
      %943 = vadd.xlane.f32.xlu0 %v942
      %v944 = vpop.xlane.xlu0 %943
      %v945 = vrcp.pop %v941
      %v946 = vrcp.pop %v944
      %v947 = vmul.f32 %v936, %v945
      %v948 = vmul.f32 %v938, %v946
      %s949 = scalar_lea.vmem %s426, 32
      %950 = vst.msk [vmem:[%s949] sm:$0xff] %vm668, %v947
      %951 = vst.msk [vmem:[%s949 + $0x8] sm:$0xf] %vm672, %v948
      %v952 = vpack.c.bf16 %v948, %v947
      %953 = vrot.lane.b32.xlu0 %v617, 96
      %v954 = vpop.permute.xlu0 %953
      %v956 = vsel %vm668, %v952, 0
      %v959 = vsel %vm698, %v954, 0
      %961 = vmatprep.subr.bf16.mxu0 0
      %962 = vmatpush1.bf16.msra.mxu0 %v959
      %963 = vmatprep.subr.bf16.mxu0 0
      %964 = vmatpush1.bf16.msra.mxu0 0
      %965 = vmatprep.subr.bf16.mxu0 0
      %966 = vmatpush1.bf16.msra.mxu0 0
      %967 = vmatprep.subr.bf16.mxu0 0
      %968 = vmatpush1.bf16.msra.mxu0 0
      %969 = vmatprep.subr.bf16.mxu0 0
      %970 = vmatpush1.bf16.msra.mxu0 0
      %971 = vmatprep.subr.bf16.mxu0 0
      %972 = vmatpush1.bf16.msra.mxu0 0
      %973 = vmatprep.subr.bf16.mxu0 0
      %974 = vmatpush1.bf16.msra.mxu0 0
      %975 = vmatprep.subr.bf16.mxu0 0
      %976 = vmatpush1.bf16.msra.mxu0 0
      %977 = vmatprep.subr.bf16.mxu0 0
      %978 = vmatpush1.bf16.msra.mxu0 0
      %979 = vmatprep.subr.bf16.mxu0 0
      %980 = vmatpush1.bf16.msra.mxu0 0
      %981 = vmatprep.subr.bf16.mxu0 0
      %982 = vmatpush1.bf16.msra.mxu0 0
      %983 = vmatprep.subr.bf16.mxu0 0
      %984 = vmatpush1.bf16.msra.mxu0 0
      %985 = vmatprep.subr.bf16.mxu0 0
      %986 = vmatpush1.bf16.msra.mxu0 0
      %987 = vmatprep.subr.bf16.mxu0 0
      %988 = vmatpush1.bf16.msra.mxu0 0
      %989 = vmatprep.subr.bf16.mxu0 0
      %990 = vmatpush1.bf16.msra.mxu0 0
      %991 = vmatprep.subr.bf16.mxu0 0
      %992 = vmatpush1.bf16.msra.mxu0 0
      %993 = vmatprep.mubr.bf16.mxu0 0
      %994 = vmatmul.mubr.bf16.gmra.mrb[0].mxu0 %v956
      %v995 = vpop.f32.mrb[0].mxu0
      %v996 = vadd.f32 0.0, %v995
      %v997 = vpop.f32.mrb[0].mxu0
      %v998 = vpop.f32.mrb[0].mxu0
      %v999 = vadd.f32 0.0, %v998
      %v1000 = vpop.f32.mrb[0].mxu0
      %1001 = vdwg.mxu0
      %1002 = vrot.lane.b32.xlu0 %v615, 80
      %v1003 = vpop.permute.xlu0 %1002
      %1004 = vrot.lane.b32.xlu0 %v616, 80
      %v1005 = vpop.permute.xlu0 %1004
      %v1007 = vsel %vm618, %v1003, 0
      %v1010 = vsel %vm618, %v1005, 0
      %1012 = vmatprep.subr.bf16.mxu0 0
      %1013 = vmatpush1.bf16.xpose.msra.mxu0 %v1010
      %1014 = vmatprep.subr.bf16.mxu0 0
      %1015 = vmatpush1.bf16.xpose.msra.mxu0 0
      %1016 = vmatprep.subr.bf16.mxu0 0
      %1017 = vmatpush1.bf16.xpose.msra.mxu0 0
      %1018 = vmatprep.subr.bf16.mxu0 0
      %1019 = vmatpush1.bf16.xpose.msra.mxu0 0
      %1020 = vmatprep.subr.bf16.mxu0 0
      %1021 = vmatpush1.bf16.xpose.msra.mxu0 0
      %1022 = vmatprep.subr.bf16.mxu0 0
      %1023 = vmatpush1.bf16.xpose.msra.mxu0 0
      %1024 = vmatprep.subr.bf16.mxu0 0
      %1025 = vmatpush1.bf16.xpose.msra.mxu0 0
      %1026 = vmatprep.subr.bf16.mxu0 0
      %1027 = vmatpush1.bf16.xpose.msra.mxu0 0
      %1028 = vmatprep.subr.bf16.mxu0 0
      %1029 = vmatpush1.bf16.xpose.msra.mxu0 0
      %1030 = vmatprep.subr.bf16.mxu0 0
      %1031 = vmatpush1.bf16.xpose.msra.mxu0 0
      %1032 = vmatprep.subr.bf16.mxu0 0
      %1033 = vmatpush1.bf16.xpose.msra.mxu0 0
      %1034 = vmatprep.subr.bf16.mxu0 0
      %1035 = vmatpush1.bf16.xpose.msra.mxu0 0
      %1036 = vmatprep.subr.bf16.mxu0 0
      %1037 = vmatpush1.bf16.xpose.msra.mxu0 0
      %1038 = vmatprep.subr.bf16.mxu0 0
      %1039 = vmatpush1.bf16.xpose.msra.mxu0 0
      %1040 = vmatprep.subr.bf16.mxu0 0
      %1041 = vmatpush1.bf16.xpose.msra.mxu0 0
      %1042 = vmatprep.subr.bf16.mxu0 0
      %1043 = vmatpush1.bf16.xpose.msra.mxu0 0
      %1044 = vmatprep.mubr.bf16.mxu0 0
      %1045 = vmatmul.mubr.bf16.gmra.mrb[0].mxu0 %v1007
      %v1046 = vpop.f32.mrb[0].mxu0
      %v1047 = vadd.f32 0.0, %v1046
      %v1048 = vpop.f32.mrb[0].mxu0
      %v1049 = vpop.f32.mrb[0].mxu0
      %v1050 = vadd.f32 0.0, %v1049
      %v1051 = vpop.f32.mrb[0].mxu0
      %1052 = vdwg.mxu0
      %v1053 = vmul.f32 %v1047, 0.25
      %v1054 = vmul.f32 %v1050, 0.25
      %v1055 = vsel %vm668, %v1053, -inf
      %1056 = vmax.xlane.f32.xlu0 %v1055
      %v1057 = vpop.xlane.xlu0 %1056
      %v1058 = vsel %vm672, %v1054, -inf
      %1059 = vmax.xlane.f32.xlu0 %v1058
      %v1060 = vpop.xlane.xlu0 %1059
      %v1061 = vsub.f32 %v1053, %v1057
      %v1062 = vsub.f32 %v1054, %v1060
      %v1063 = vmul.f32 %v1061, 1.442695
      %v1064 = vpow.pop %v1063
      %v1065 = vmul.f32 %v1062, 1.442695
      %v1066 = vpow.pop %v1065
      %v1067 = vsel %vm668, %v1064, 0.0
      %1068 = vadd.xlane.f32.xlu0 %v1067
      %v1069 = vpop.xlane.xlu0 %1068
      %v1070 = vsel %vm672, %v1066, 0.0
      %1071 = vadd.xlane.f32.xlu0 %v1070
      %v1072 = vpop.xlane.xlu0 %1071
      %v1073 = vrcp.pop %v1069
      %v1074 = vrcp.pop %v1072
      %v1075 = vmul.f32 %v1064, %v1073
      %v1076 = vmul.f32 %v1066, %v1074
      %s1077 = scalar_lea.vmem %s426, 48
      %1078 = vst.msk [vmem:[%s1077] sm:$0xff] %vm668, %v1075
      %1079 = vst.msk [vmem:[%s1077 + $0x8] sm:$0xf] %vm672, %v1076
      %v1080 = vpack.c.bf16 %v1076, %v1075
      %1081 = vrot.lane.b32.xlu0 %v617, 80
      %v1082 = vpop.permute.xlu0 %1081
      %v1084 = vsel %vm668, %v1080, 0
      %v1087 = vsel %vm698, %v1082, 0
      %1089 = vmatprep.subr.bf16.mxu0 0
      %1090 = vmatpush1.bf16.msra.mxu0 %v1087
      %1091 = vmatprep.subr.bf16.mxu0 0
      %1092 = vmatpush1.bf16.msra.mxu0 0
      %1093 = vmatprep.subr.bf16.mxu0 0
      %1094 = vmatpush1.bf16.msra.mxu0 0
      %1095 = vmatprep.subr.bf16.mxu0 0
      %1096 = vmatpush1.bf16.msra.mxu0 0
      %1097 = vmatprep.subr.bf16.mxu0 0
      %1098 = vmatpush1.bf16.msra.mxu0 0
      %1099 = vmatprep.subr.bf16.mxu0 0
      %1100 = vmatpush1.bf16.msra.mxu0 0
      %1101 = vmatprep.subr.bf16.mxu0 0
      %1102 = vmatpush1.bf16.msra.mxu0 0
      %1103 = vmatprep.subr.bf16.mxu0 0
      %1104 = vmatpush1.bf16.msra.mxu0 0
      %1105 = vmatprep.subr.bf16.mxu0 0
      %1106 = vmatpush1.bf16.msra.mxu0 0
      %1107 = vmatprep.subr.bf16.mxu0 0
      %1108 = vmatpush1.bf16.msra.mxu0 0
      %1109 = vmatprep.subr.bf16.mxu0 0
      %1110 = vmatpush1.bf16.msra.mxu0 0
      %1111 = vmatprep.subr.bf16.mxu0 0
      %1112 = vmatpush1.bf16.msra.mxu0 0
      %1113 = vmatprep.subr.bf16.mxu0 0
      %1114 = vmatpush1.bf16.msra.mxu0 0
      %1115 = vmatprep.subr.bf16.mxu0 0
      %1116 = vmatpush1.bf16.msra.mxu0 0
      %1117 = vmatprep.subr.bf16.mxu0 0
      %1118 = vmatpush1.bf16.msra.mxu0 0
      %1119 = vmatprep.subr.bf16.mxu0 0
      %1120 = vmatpush1.bf16.msra.mxu0 0
      %1121 = vmatprep.mubr.bf16.mxu0 0
      %1122 = vmatmul.mubr.bf16.gmra.mrb[0].mxu0 %v1084
      %v1123 = vpop.f32.mrb[0].mxu0
      %v1124 = vadd.f32 0.0, %v1123
      %v1125 = vpop.f32.mrb[0].mxu0
      %v1126 = vpop.f32.mrb[0].mxu0
      %v1127 = vadd.f32 0.0, %v1126
      %v1128 = vpop.f32.mrb[0].mxu0
      %1129 = vdwg.mxu0
      %1132 = vrot.lane.b32.xlu0 %v868, 16
      %v1133 = vpop.permute.xlu0 %1132
      %1134 = vrot.lane.b32.xlu0 %v871, 16
      %v1135 = vpop.permute.xlu0 %1134
      %1140 = vrot.lane.b32.xlu0 %v996, 32
      %v1141 = vpop.permute.xlu0 %1140
      %1142 = vrot.lane.b32.xlu0 %v999, 32
      %v1143 = vpop.permute.xlu0 %1142
      %1148 = vrot.lane.b32.xlu0 %v1124, 48
      %v1149 = vpop.permute.xlu0 %1148
      %1150 = vrot.lane.b32.xlu0 %v1127, 48
      %v1151 = vpop.permute.xlu0 %1150
      %v1154 = vsel %vm618, %v737, %v1133
      %v1155 = vsel %vm618, %v740, %v1135
      %vm1156 = vcmask 261120
      %v1157 = vsel %vm1156, %v1154, %v1141
      %v1158 = vsel %vm1156, %v1155, %v1143
      %vm1159 = vcmask 392192
      %v1160 = vsel %vm1159, %v1157, %v1149
      %v1161 = vsel %vm1159, %v1158, %v1151
      %v1162 = vpack.c.bf16 %v1161, %v1160
      %v1163 = vld [vmem:[%s7] sm:$0xff]
      %v1164 = vld [vmem:[%s7 + $0x8] sm:$0xff]
      %v1165 = vld [vmem:[%s7 + $0x10] sm:$0xff]
      %v1166 = vld [vmem:[%s7 + $0x18] sm:$0xff]
      %v1167 = vld [vmem:[%s7 + $0x20] sm:$0xff]
      %v1168 = vld [vmem:[%s7 + $0x28] sm:$0xff]
      %v1169 = vld [vmem:[%s7 + $0x30] sm:$0xff]
      %v1170 = vld [vmem:[%s7 + $0x38] sm:$0xff]
      %v1171 = vpack.c.bf16 %v1164, %v1163
      %v1172 = vpack.c.bf16 %v1166, %v1165
      %v1173 = vpack.c.bf16 %v1168, %v1167
      %v1174 = vpack.c.bf16 %v1170, %v1169
      %v1175 = vld [vmem:[%s8] sm:$0x1]
      %v1177 = vlaneseq
      %v1178 = vshrl.u32 %v1177, 7
      %v1179 = vsub.s32 0, %v1178
      %v1180 = vrot.slane %v1175, %v1179
      %v1183 = vsel %vm450, %v1162, 0
      %1185 = vmatprep.subr.bf16.mxu0 0
      %1186 = vmatpush1.bf16.msra.mxu0 %v1171
      %1187 = vmatprep.subr.bf16.mxu0 0
      %1188 = vmatpush1.bf16.msra.mxu0 %v1172
      %1189 = vmatprep.subr.bf16.mxu0 0
      %1190 = vmatpush1.bf16.msra.mxu0 %v1173
      %1191 = vmatprep.subr.bf16.mxu0 0
      %1192 = vmatpush1.bf16.msra.mxu0 %v1174
      %1193 = vmatprep.subr.bf16.mxu0 0
      %1194 = vmatpush1.bf16.msra.mxu0 0
      %1195 = vmatprep.subr.bf16.mxu0 0
      %1196 = vmatpush1.bf16.msra.mxu0 0
      %1197 = vmatprep.subr.bf16.mxu0 0
      %1198 = vmatpush1.bf16.msra.mxu0 0
      %1199 = vmatprep.subr.bf16.mxu0 0
      %1200 = vmatpush1.bf16.msra.mxu0 0
      %1201 = vmatprep.subr.bf16.mxu0 0
      %1202 = vmatpush1.bf16.msra.mxu0 0
      %1203 = vmatprep.subr.bf16.mxu0 0
      %1204 = vmatpush1.bf16.msra.mxu0 0
      %1205 = vmatprep.subr.bf16.mxu0 0
      %1206 = vmatpush1.bf16.msra.mxu0 0
      %1207 = vmatprep.subr.bf16.mxu0 0
      %1208 = vmatpush1.bf16.msra.mxu0 0
      %1209 = vmatprep.subr.bf16.mxu0 0
      %1210 = vmatpush1.bf16.msra.mxu0 0
      %1211 = vmatprep.subr.bf16.mxu0 0
      %1212 = vmatpush1.bf16.msra.mxu0 0
      %1213 = vmatprep.subr.bf16.mxu0 0
      %1214 = vmatpush1.bf16.msra.mxu0 0
      %1215 = vmatprep.subr.bf16.mxu0 0
      %1216 = vmatpush1.bf16.msra.mxu0 0
      %1217 = vmatprep.mubr.bf16.mxu0 0
      %1218 = vmatmul.mubr.bf16.gmra.mrb[0].mxu0 %v1183
      %v1219 = vpop.f32.mrb[0].mxu0
      %v1220 = vadd.f32 %v1180, %v1219
      %v1221 = vpop.f32.mrb[0].mxu0
      %v1222 = vpop.f32.mrb[0].mxu0
      %v1223 = vadd.f32 %v1180, %v1222
      %v1224 = vpop.f32.mrb[0].mxu0
      %1225 = vdwg.mxu0
      %v1226 = vadd.f32 %v1220, %v428
      %v1227 = vadd.f32 %v1223, %v429
      %v1228 = vsel %vm450, %v1226, 0.0
      %1229 = vadd.xlane.f32.xlu0 %v1228
      %v1230 = vpop.xlane.xlu0 %1229
      %vm1231 = vcmask 519168
      %v1232 = vsel %vm1231, %v1227, 0.0
      %1233 = vadd.xlane.f32.xlu0 %v1232
      %v1234 = vpop.xlane.xlu0 %1233
      %v1235 = vrcp.pop 64.0
      %v1236 = vmul.f32 %v1230, %v1235
      %v1237 = vmul.f32 %v1234, %v1235
      %v1238 = vsub.f32 %v1226, %v1236
      %v1239 = vsub.f32 %v1227, %v1237
      %v1240 = vmul.f32 %v1238, %v1238
      %v1241 = vmul.f32 %v1239, %v1239
      %v1242 = vsel %vm450, %v1240, 0.0
      %1243 = vadd.xlane.f32.xlu0 %v1242
      %v1244 = vpop.xlane.xlu0 %1243
      %v1245 = vsel %vm1231, %v1241, 0.0
      %1246 = vadd.xlane.f32.xlu0 %v1245
      %v1247 = vpop.xlane.xlu0 %1246
      %v1248 = vmul.f32 %v1244, %v1235
      %v1249 = vmul.f32 %v1247, %v1235
      %v1250 = vadd.f32 %v1248, 1e-05
      %v1251 = vadd.f32 %v1249, 1e-05
      %v1252 = vrsqrt.pop %v1250
      %v1253 = vrsqrt.pop %v1251
      %v1254 = vmul.f32 %v1238, %v1252
      %v1255 = vmul.f32 %v1239, %v1253
      %v1256 = vld [vmem:[%s9] sm:$0x1]
      %v1258 = vlaneseq
      %v1259 = vshrl.u32 %v1258, 7
      %v1260 = vsub.s32 0, %v1259
      %v1261 = vrot.slane %v1256, %v1260
      %v1263 = vmul.f32 %v1254, %v1261
      %v1264 = vmul.f32 %v1255, %v1261
      %v1265 = vld [vmem:[%s10] sm:$0x1]
      %v1267 = vlaneseq
      %v1268 = vshrl.u32 %v1267, 7
      %v1269 = vsub.s32 0, %v1268
      %v1270 = vrot.slane %v1265, %v1269
      %v1272 = vadd.f32 %v1263, %v1270
      %v1273 = vadd.f32 %v1264, %v1270
      %1274 = vst.msk [vmem:[%s421] sm:$0xff] %vm450, %v1272
      %1275 = vst.msk [vmem:[%s421 + $0x8] sm:$0xf] %vm1231, %v1273
      %p1276 = scmp.lt.s32.totalorder %s24, 1
      %s1277 = scalar_select %p1276, %s24, 1
      %s1278 = smul.addr %s1277, 2
      %s1279 = smul.addr %s1278, 8
      %s1280 = scalar_lea.vmem %s11, %s1279
      %p1281 = scmp.lt.s32.totalorder %s24, 1
      %s1282 = scalar_select %p1281, %s24, 1
      %s1283 = smul.addr %s1282, 8
      %s1284 = smul.addr %s1283, 8
      %s1285 = scalar_lea.vmem %s12, %s1284
      // Predicated region
      $region65: #{encoder_decoder_forward.18} parent=63 // pred_check
        %p1286 = pneg %p278
      $region66: #{encoder_decoder_forward.18} parent=63 // pred_check_branch
        %1288 = sbr.rel (%p1286) target = $region68
      $region67: #{encoder_decoder_forward.18} parent=63 // pred_region
        _
      $region68: #{encoder_decoder_forward.18} parent=63 // pred_fallthru
        _
      // Predicated region
      $region69: #{encoder_decoder_forward.18} parent=63 // pred_check
        %p1289 = pneg %p304
      $region70: #{encoder_decoder_forward.18} parent=63 // pred_check_branch
        %1291 = sbr.rel (%p1289) target = $region72
      $region71: #{encoder_decoder_forward.18} parent=63 // pred_region
        _
      $region72: #{encoder_decoder_forward.18} parent=63 // pred_fallthru
        _
    $region64: #{encoder_decoder_forward.18} parent=5 // pred_fallthru
      _
    %p1292 = scmp.le.s32.totalorder 2, %s19
    // Predicated region
    $region73: #{encoder_decoder_forward.18} parent=5 // pred_check
      %p1293 = pneg %p1292
    $region74: #{encoder_decoder_forward.18} parent=5 // pred_check_branch
      %1295 = sbr.rel (%p1293) target = $region76
    $region75: #{encoder_decoder_forward.18} parent=5 // pred_region
      %s1296 = ssub.s32 %s19, 2
      // Predicated region
      $region77: #{encoder_decoder_forward.18} parent=75 // pred_check
        %p1297 = pneg %p284
      $region78: #{encoder_decoder_forward.18} parent=75 // pred_check_branch
        %1299 = sbr.rel (%p1297) target = $region80
      $region79: #{encoder_decoder_forward.18} parent=75 // pred_region
        %p1300 = scmp.lt.s32.totalorder %s25, 1
        %s1301 = scalar_select %p1300, %s25, 1
        %s1302 = smul.addr %s1301, 2
        %s1303 = smul.addr %s1302, 8
        %s1304 = scalar_lea.vmem %s11, %s1303
      $region80: #{encoder_decoder_forward.18} parent=75 // pred_fallthru
        _
      // Predicated region
      $region81: #{encoder_decoder_forward.18} parent=75 // pred_check
        %p1305 = pneg %p310
      $region82: #{encoder_decoder_forward.18} parent=75 // pred_check_branch
        %1307 = sbr.rel (%p1305) target = $region84
      $region83: #{encoder_decoder_forward.18} parent=75 // pred_region
        %p1308 = scmp.lt.s32.totalorder %s25, 1
        %s1309 = scalar_select %p1308, %s25, 1
        %s1310 = smul.addr %s1309, 8
        %s1311 = smul.addr %s1310, 8
        %s1312 = scalar_lea.vmem %s12, %s1311
      $region84: #{encoder_decoder_forward.18} parent=75 // pred_fallthru
        _
    $region76: #{encoder_decoder_forward.18} parent=5 // pred_fallthru
      _
  $region6: #{encoder_decoder_forward.18} parent=0 // loop_footer
    %s23 = sadd.s32 1, %s19
  $region7: #{encoder_decoder_forward.18} parent=0 // loop_footer_branch
    %18 = sbr.rel target = $region3
  $region8: #{encoder_decoder_forward.18} parent=0 // loop_exit
    _

// kernel: encoder_decoder_forward.20
$region0: #{encoder_decoder_forward.20}
  #allocation0 [shape = 'u32[]', space=smem, size = 0x4, offset = 0x4, fixed_abs, tag = 'smem constant byte address 0x4 - core index']
  #allocation1 [shape = 'u32[144,128]{1,0:T(1,128)}', space=vmem, size = 0x12000, scoped, tag = 'internal scratch']
  %s0 = inlined_call_operand.vmem [shape: f32[24,64], index: 0, kind: input, shape index: {}]
  %s1 = inlined_call_operand.vmem [shape: f32[64,128], index: 1, kind: input, shape index: {}]
  %s2 = inlined_call_operand.vmem [shape: f32[1,128], index: 2, kind: input, shape index: {}]
  %s3 = inlined_call_operand.vmem [shape: f32[128,64], index: 3, kind: input, shape index: {}]
  %s4 = inlined_call_operand.vmem [shape: f32[1,64], index: 4, kind: input, shape index: {}]
  %s5 = inlined_call_operand.vmem [shape: f32[1,64], index: 5, kind: input, shape index: {}]
  %s6 = inlined_call_operand.vmem [shape: f32[1,64], index: 6, kind: input, shape index: {}]
  %s7 = inlined_call_operand.vmem [shape: f32[24,64], index: 7, kind: output, shape index: {}]
  %s8 = sld [smem:[#allocation0]]
  $region38: #{encoder_decoder_forward.20} parent=0
    _
  %s10 = ssub.s32 1, %s8
  %s11 = scalar_select 0, %s10, %s8
  // Predicated region
  $region2: #{encoder_decoder_forward.20} parent=0 // pred_check
    _
  $region3: #{encoder_decoder_forward.20} parent=0 // pred_check_branch
    %13 = sbr.rel (0) target = $region5
  $region4: #{encoder_decoder_forward.20} parent=0 // pred_region
    _
  $region5: #{encoder_decoder_forward.20} parent=0 // pred_fallthru
    _
  // Predicated region
  $region6: #{encoder_decoder_forward.20} parent=0 // pred_check
    _
  $region7: #{encoder_decoder_forward.20} parent=0 // pred_check_branch
    %15 = sbr.rel (0) target = $region9
  $region8: #{encoder_decoder_forward.20} parent=0 // pred_region
    _
  $region9: #{encoder_decoder_forward.20} parent=0 // pred_fallthru
    _
  // Predicated region
  $region10: #{encoder_decoder_forward.20} parent=0 // pred_check
    _
  $region11: #{encoder_decoder_forward.20} parent=0 // pred_check_branch
    %17 = sbr.rel (0) target = $region13
  $region12: #{encoder_decoder_forward.20} parent=0 // pred_region
    _
  $region13: #{encoder_decoder_forward.20} parent=0 // pred_fallthru
    _
  // Predicated region
  $region14: #{encoder_decoder_forward.20} parent=0 // pred_check
    _
  $region15: #{encoder_decoder_forward.20} parent=0 // pred_check_branch
    %19 = sbr.rel (0) target = $region17
  $region16: #{encoder_decoder_forward.20} parent=0 // pred_region
    _
  $region17: #{encoder_decoder_forward.20} parent=0 // pred_fallthru
    _
  // Predicated region
  $region18: #{encoder_decoder_forward.20} parent=0 // pred_check
    _
  $region19: #{encoder_decoder_forward.20} parent=0 // pred_check_branch
    %21 = sbr.rel (0) target = $region21
  $region20: #{encoder_decoder_forward.20} parent=0 // pred_region
    _
  $region21: #{encoder_decoder_forward.20} parent=0 // pred_fallthru
    _
  // Predicated region
  $region22: #{encoder_decoder_forward.20} parent=0 // pred_check
    _
  $region23: #{encoder_decoder_forward.20} parent=0 // pred_check_branch
    %23 = sbr.rel (0) target = $region25
  $region24: #{encoder_decoder_forward.20} parent=0 // pred_region
    _
  $region25: #{encoder_decoder_forward.20} parent=0 // pred_fallthru
    _
  // Predicated region
  $region26: #{encoder_decoder_forward.20} parent=0 // pred_check
    _
  $region27: #{encoder_decoder_forward.20} parent=0 // pred_check_branch
    %25 = sbr.rel (0) target = $region29
  $region28: #{encoder_decoder_forward.20} parent=0 // pred_region
    _
  $region29: #{encoder_decoder_forward.20} parent=0 // pred_fallthru
    _
  %v27 = vld [vmem:[%s0] sm:$0xff]
  %v28 = vld [vmem:[%s0 + $0x8] sm:$0xff]
  %v29 = vld [vmem:[%s0 + $0x10] sm:$0xff]
  %v30 = vpack.c.bf16 %v28, %v27
  %v31 = vpack.c.bf16 %v29, %v29
  %v32 = vld [vmem:[%s1] sm:$0xff]
  %v33 = vld [vmem:[%s1 + $0x8] sm:$0xff]
  %v34 = vld [vmem:[%s1 + $0x10] sm:$0xff]
  %v35 = vld [vmem:[%s1 + $0x18] sm:$0xff]
  %v36 = vld [vmem:[%s1 + $0x20] sm:$0xff]
  %v37 = vld [vmem:[%s1 + $0x28] sm:$0xff]
  %v38 = vld [vmem:[%s1 + $0x30] sm:$0xff]
  %v39 = vld [vmem:[%s1 + $0x38] sm:$0xff]
  %v40 = vpack.c.bf16 %v33, %v32
  %v41 = vpack.c.bf16 %v35, %v34
  %v42 = vpack.c.bf16 %v37, %v36
  %v43 = vpack.c.bf16 %v39, %v38
  %v44 = vld [vmem:[%s2] sm:$0x1]
  %v46 = vlaneseq
  %v47 = vshrl.u32 %v46, 7
  %v48 = vsub.s32 0, %v47
  %v49 = vrot.slane %v44, %v48
  %vm51 = vcmask 523264
  %v53 = vsel %vm51, %v30, 0
  %v56 = vsel %vm51, %v31, 0
  %58 = vmatprep.subr.bf16.mxu0 0
  %59 = vmatpush1.bf16.msra.mxu0 %v40
  %60 = vmatprep.subr.bf16.mxu0 0
  %61 = vmatpush1.bf16.msra.mxu0 %v41
  %62 = vmatprep.subr.bf16.mxu0 0
  %63 = vmatpush1.bf16.msra.mxu0 %v42
  %64 = vmatprep.subr.bf16.mxu0 0
  %65 = vmatpush1.bf16.msra.mxu0 %v43
  %66 = vmatprep.subr.bf16.mxu0 0
  %67 = vmatpush1.bf16.msra.mxu0 0
  %68 = vmatprep.subr.bf16.mxu0 0
  %69 = vmatpush1.bf16.msra.mxu0 0
  %70 = vmatprep.subr.bf16.mxu0 0
  %71 = vmatpush1.bf16.msra.mxu0 0
  %72 = vmatprep.subr.bf16.mxu0 0
  %73 = vmatpush1.bf16.msra.mxu0 0
  %74 = vmatprep.subr.bf16.mxu0 0
  %75 = vmatpush1.bf16.msra.mxu0 0
  %76 = vmatprep.subr.bf16.mxu0 0
  %77 = vmatpush1.bf16.msra.mxu0 0
  %78 = vmatprep.subr.bf16.mxu0 0
  %79 = vmatpush1.bf16.msra.mxu0 0
  %80 = vmatprep.subr.bf16.mxu0 0
  %81 = vmatpush1.bf16.msra.mxu0 0
  %82 = vmatprep.subr.bf16.mxu0 0
  %83 = vmatpush1.bf16.msra.mxu0 0
  %84 = vmatprep.subr.bf16.mxu0 0
  %85 = vmatpush1.bf16.msra.mxu0 0
  %86 = vmatprep.subr.bf16.mxu0 0
  %87 = vmatpush1.bf16.msra.mxu0 0
  %88 = vmatprep.subr.bf16.mxu0 0
  %89 = vmatpush1.bf16.msra.mxu0 0
  %90 = vmatprep.mubr.bf16.mxu0 0
  %91 = vmatmul.mubr.bf16.gmra.mrb[0].mxu0 %v53
  %v92 = vpop.f32.mrb[0].mxu0
  %v93 = vadd.f32 %v49, %v92
  %v94 = vpop.f32.mrb[0].mxu0
  %v95 = vpop.f32.mrb[0].mxu0
  %v96 = vadd.f32 %v49, %v95
  %v97 = vpop.f32.mrb[0].mxu0
  %98 = vmatprep.mubr.bf16.mxu0 0
  %99 = vmatmul.mubr.bf16.gmra.mrb[0].mxu0 %v56
  %v100 = vpop.f32.mrb[0].mxu0
  %v101 = vadd.f32 %v49, %v100
  %v102 = vpop.f32.mrb[0].mxu0
  %v103 = vpop.f32.mrb[0].mxu0
  %v104 = vpop.f32.mrb[0].mxu0
  %105 = vdwg.mxu0
  %v106 = vmax.f32 %v93, 0.0
  %v107 = vmax.f32 %v96, 0.0
  %v108 = vmax.f32 %v101, 0.0
  %v109 = vpack.c.bf16 %v107, %v106
  %v110 = vpack.c.bf16 %v108, %v108
  %v111 = vld [vmem:[%s3] sm:$0xff]
  %v112 = vld [vmem:[%s3 + $0x8] sm:$0xff]
  %v113 = vld [vmem:[%s3 + $0x10] sm:$0xff]
  %v114 = vld [vmem:[%s3 + $0x18] sm:$0xff]
  %v115 = vld [vmem:[%s3 + $0x20] sm:$0xff]
  %v116 = vld [vmem:[%s3 + $0x28] sm:$0xff]
  %v117 = vld [vmem:[%s3 + $0x30] sm:$0xff]
  %v118 = vld [vmem:[%s3 + $0x38] sm:$0xff]
  %v119 = vld [vmem:[%s3 + $0x40] sm:$0xff]
  %v120 = vld [vmem:[%s3 + $0x48] sm:$0xff]
  %v121 = vld [vmem:[%s3 + $0x50] sm:$0xff]
  %v122 = vld [vmem:[%s3 + $0x58] sm:$0xff]
  %v123 = vld [vmem:[%s3 + $0x60] sm:$0xff]
  %v124 = vld [vmem:[%s3 + $0x68] sm:$0xff]
  %v125 = vld [vmem:[%s3 + $0x70] sm:$0xff]
  %v126 = vld [vmem:[%s3 + $0x78] sm:$0xff]
  %v127 = vpack.c.bf16 %v112, %v111
  %v128 = vpack.c.bf16 %v114, %v113
  %v129 = vpack.c.bf16 %v116, %v115
  %v130 = vpack.c.bf16 %v118, %v117
  %v131 = vpack.c.bf16 %v120, %v119
  %v132 = vpack.c.bf16 %v122, %v121
  %v133 = vpack.c.bf16 %v124, %v123
  %v134 = vpack.c.bf16 %v126, %v125
  %v135 = vld [vmem:[%s4] sm:$0x1]
  %v137 = vlaneseq
  %v138 = vshrl.u32 %v137, 7
  %v139 = vsub.s32 0, %v138
  %v140 = vrot.slane %v135, %v139
  %142 = vmatprep.subr.bf16.mxu0 0
  %143 = vmatpush1.bf16.msra.mxu0 %v127
  %144 = vmatprep.subr.bf16.mxu0 0
  %145 = vmatpush1.bf16.msra.mxu0 %v128
  %146 = vmatprep.subr.bf16.mxu0 0
  %147 = vmatpush1.bf16.msra.mxu0 %v129
  %148 = vmatprep.subr.bf16.mxu0 0
  %149 = vmatpush1.bf16.msra.mxu0 %v130
  %150 = vmatprep.subr.bf16.mxu0 0
  %151 = vmatpush1.bf16.msra.mxu0 %v131
  %152 = vmatprep.subr.bf16.mxu0 0
  %153 = vmatpush1.bf16.msra.mxu0 %v132
  %154 = vmatprep.subr.bf16.mxu0 0
  %155 = vmatpush1.bf16.msra.mxu0 %v133
  %156 = vmatprep.subr.bf16.mxu0 0
  %157 = vmatpush1.bf16.msra.mxu0 %v134
  %158 = vmatprep.subr.bf16.mxu0 0
  %159 = vmatpush1.bf16.msra.mxu0 0
  %160 = vmatprep.subr.bf16.mxu0 0
  %161 = vmatpush1.bf16.msra.mxu0 0
  %162 = vmatprep.subr.bf16.mxu0 0
  %163 = vmatpush1.bf16.msra.mxu0 0
  %164 = vmatprep.subr.bf16.mxu0 0
  %165 = vmatpush1.bf16.msra.mxu0 0
  %166 = vmatprep.subr.bf16.mxu0 0
  %167 = vmatpush1.bf16.msra.mxu0 0
  %168 = vmatprep.subr.bf16.mxu0 0
  %169 = vmatpush1.bf16.msra.mxu0 0
  %170 = vmatprep.subr.bf16.mxu0 0
  %171 = vmatpush1.bf16.msra.mxu0 0
  %172 = vmatprep.subr.bf16.mxu0 0
  %173 = vmatpush1.bf16.msra.mxu0 0
  %174 = vmatprep.mubr.bf16.mxu0 0
  %175 = vmatmul.mubr.bf16.gmra.mrb[0].mxu0 %v109
  %v176 = vpop.f32.mrb[0].mxu0
  %v177 = vadd.f32 %v140, %v176
  %v178 = vpop.f32.mrb[0].mxu0
  %v179 = vpop.f32.mrb[0].mxu0
  %v180 = vadd.f32 %v140, %v179
  %v181 = vpop.f32.mrb[0].mxu0
  %182 = vmatprep.mubr.bf16.mxu0 0
  %183 = vmatmul.mubr.bf16.gmra.mrb[0].mxu0 %v110
  %v184 = vpop.f32.mrb[0].mxu0
  %v185 = vadd.f32 %v140, %v184
  %v186 = vpop.f32.mrb[0].mxu0
  %v187 = vpop.f32.mrb[0].mxu0
  %v188 = vpop.f32.mrb[0].mxu0
  %189 = vdwg.mxu0
  %v190 = vadd.f32 %v177, %v27
  %v191 = vadd.f32 %v180, %v28
  %v192 = vadd.f32 %v185, %v29
  %v193 = vsel %vm51, %v190, 0.0
  %194 = vadd.xlane.f32.xlu0 %v193
  %v195 = vpop.xlane.xlu0 %194
  %v196 = vsel %vm51, %v191, 0.0
  %197 = vadd.xlane.f32.xlu0 %v196
  %v198 = vpop.xlane.xlu0 %197
  %v199 = vsel %vm51, %v192, 0.0
  %200 = vadd.xlane.f32.xlu0 %v199
  %v201 = vpop.xlane.xlu0 %200
  %v202 = vrcp.pop 64.0
  %v203 = vmul.f32 %v195, %v202
  %v204 = vmul.f32 %v198, %v202
  %v205 = vmul.f32 %v201, %v202
  %v206 = vsub.f32 %v190, %v203
  %v207 = vsub.f32 %v191, %v204
  %v208 = vsub.f32 %v192, %v205
  %v209 = vmul.f32 %v206, %v206
  %v210 = vmul.f32 %v207, %v207
  %v211 = vmul.f32 %v208, %v208
  %v212 = vsel %vm51, %v209, 0.0
  %213 = vadd.xlane.f32.xlu0 %v212
  %v214 = vpop.xlane.xlu0 %213
  %v215 = vsel %vm51, %v210, 0.0
  %216 = vadd.xlane.f32.xlu0 %v215
  %v217 = vpop.xlane.xlu0 %216
  %v218 = vsel %vm51, %v211, 0.0
  %219 = vadd.xlane.f32.xlu0 %v218
  %v220 = vpop.xlane.xlu0 %219
  %v221 = vmul.f32 %v214, %v202
  %v222 = vmul.f32 %v217, %v202
  %v223 = vmul.f32 %v220, %v202
  %v224 = vadd.f32 %v221, 1e-05
  %v225 = vadd.f32 %v222, 1e-05
  %v226 = vadd.f32 %v223, 1e-05
  %v227 = vrsqrt.pop %v224
  %v228 = vrsqrt.pop %v225
  %v229 = vrsqrt.pop %v226
  %v230 = vmul.f32 %v206, %v227
  %v231 = vmul.f32 %v207, %v228
  %v232 = vmul.f32 %v208, %v229
  %v233 = vld [vmem:[%s5] sm:$0x1]
  %v235 = vlaneseq
  %v236 = vshrl.u32 %v235, 7
  %v237 = vsub.s32 0, %v236
  %v238 = vrot.slane %v233, %v237
  %v240 = vmul.f32 %v230, %v238
  %v241 = vmul.f32 %v231, %v238
  %v242 = vmul.f32 %v232, %v238
  %v243 = vld [vmem:[%s6] sm:$0x1]
  %v245 = vlaneseq
  %v246 = vshrl.u32 %v245, 7
  %v247 = vsub.s32 0, %v246
  %v248 = vrot.slane %v243, %v247
  %v250 = vadd.f32 %v240, %v248
  %v251 = vadd.f32 %v241, %v248
  %v252 = vadd.f32 %v242, %v248
  %253 = vst.msk [vmem:[%s7] sm:$0xff] %vm51, %v250
  %254 = vst.msk [vmem:[%s7 + $0x8] sm:$0xff] %vm51, %v251
  %255 = vst.msk [vmem:[%s7 + $0x10] sm:$0xff] %vm51, %v252
  // Predicated region
  $region30: #{encoder_decoder_forward.20} parent=0 // pred_check
    _
  $region31: #{encoder_decoder_forward.20} parent=0 // pred_check_branch
    %257 = sbr.rel (0) target = $region33
  $region32: #{encoder_decoder_forward.20} parent=0 // pred_region
    _
  $region33: #{encoder_decoder_forward.20} parent=0 // pred_fallthru
    _
  // Predicated region
  $region34: #{encoder_decoder_forward.20} parent=0 // pred_check
    _
  $region35: #{encoder_decoder_forward.20} parent=0 // pred_check_branch
    %259 = sbr.rel (0) target = $region37
  $region36: #{encoder_decoder_forward.20} parent=0 // pred_region
    _
  $region37: #{encoder_decoder_forward.20} parent=0 // pred_fallthru
    _

// kernel: encoder_decoder_forward.21
$region0: #{encoder_decoder_forward.21}
  #allocation0 [shape = 'u32[]', space=smem, size = 0x4, offset = 0x4, fixed_abs, tag = 'smem constant byte address 0x4 - core index']
  #allocation1 [shape = 'u32[144,128]{1,0:T(1,128)}', space=vmem, size = 0x12000, scoped, tag = 'internal scratch']
  %s0 = inlined_call_operand.vmem [shape: f32[24,64], index: 0, kind: input, shape index: {}]
  %s1 = inlined_call_operand.vmem [shape: f32[1,64], index: 1, kind: input, shape index: {}]
  %s2 = inlined_call_operand.vmem [shape: f32[1,64], index: 2, kind: input, shape index: {}]
  %s3 = inlined_call_operand.vmem [shape: f32[64,4], index: 3, kind: input, shape index: {}]
  %s4 = inlined_call_operand.vmem [shape: f32[1,4], index: 4, kind: input, shape index: {}]
  %s5 = inlined_call_operand.vmem [shape: f32[24,4], index: 5, kind: output, shape index: {}]
  %s6 = sld [smem:[#allocation0]]
  $region30: #{encoder_decoder_forward.21} parent=0
    _
  %s8 = ssub.s32 1, %s6
  %s9 = scalar_select 0, %s8, %s6
  // Predicated region
  $region2: #{encoder_decoder_forward.21} parent=0 // pred_check
    _
  $region3: #{encoder_decoder_forward.21} parent=0 // pred_check_branch
    %11 = sbr.rel (0) target = $region5
  $region4: #{encoder_decoder_forward.21} parent=0 // pred_region
    _
  $region5: #{encoder_decoder_forward.21} parent=0 // pred_fallthru
    _
  // Predicated region
  $region6: #{encoder_decoder_forward.21} parent=0 // pred_check
    _
  $region7: #{encoder_decoder_forward.21} parent=0 // pred_check_branch
    %13 = sbr.rel (0) target = $region9
  $region8: #{encoder_decoder_forward.21} parent=0 // pred_region
    _
  $region9: #{encoder_decoder_forward.21} parent=0 // pred_fallthru
    _
  // Predicated region
  $region10: #{encoder_decoder_forward.21} parent=0 // pred_check
    _
  $region11: #{encoder_decoder_forward.21} parent=0 // pred_check_branch
    %15 = sbr.rel (0) target = $region13
  $region12: #{encoder_decoder_forward.21} parent=0 // pred_region
    _
  $region13: #{encoder_decoder_forward.21} parent=0 // pred_fallthru
    _
  // Predicated region
  $region14: #{encoder_decoder_forward.21} parent=0 // pred_check
    _
  $region15: #{encoder_decoder_forward.21} parent=0 // pred_check_branch
    %17 = sbr.rel (0) target = $region17
  $region16: #{encoder_decoder_forward.21} parent=0 // pred_region
    _
  $region17: #{encoder_decoder_forward.21} parent=0 // pred_fallthru
    _
  // Predicated region
  $region18: #{encoder_decoder_forward.21} parent=0 // pred_check
    _
  $region19: #{encoder_decoder_forward.21} parent=0 // pred_check_branch
    %19 = sbr.rel (0) target = $region21
  $region20: #{encoder_decoder_forward.21} parent=0 // pred_region
    _
  $region21: #{encoder_decoder_forward.21} parent=0 // pred_fallthru
    _
  %v21 = vld [vmem:[%s0] sm:$0xff]
  %v22 = vld [vmem:[%s0 + $0x8] sm:$0xff]
  %v23 = vld [vmem:[%s0 + $0x10] sm:$0xff]
  %vm24 = vcmask 523264
  %v25 = vsel %vm24, %v21, 0.0
  %26 = vadd.xlane.f32.xlu0 %v25
  %v27 = vpop.xlane.xlu0 %26
  %v28 = vsel %vm24, %v22, 0.0
  %29 = vadd.xlane.f32.xlu0 %v28
  %v30 = vpop.xlane.xlu0 %29
  %v31 = vsel %vm24, %v23, 0.0
  %32 = vadd.xlane.f32.xlu0 %v31
  %v33 = vpop.xlane.xlu0 %32
  %v34 = vrcp.pop 64.0
  %v35 = vmul.f32 %v27, %v34
  %v36 = vmul.f32 %v30, %v34
  %v37 = vmul.f32 %v33, %v34
  %v38 = vsub.f32 %v21, %v35
  %v39 = vsub.f32 %v22, %v36
  %v40 = vsub.f32 %v23, %v37
  %v41 = vmul.f32 %v38, %v38
  %v42 = vmul.f32 %v39, %v39
  %v43 = vmul.f32 %v40, %v40
  %v44 = vsel %vm24, %v41, 0.0
  %45 = vadd.xlane.f32.xlu0 %v44
  %v46 = vpop.xlane.xlu0 %45
  %v47 = vsel %vm24, %v42, 0.0
  %48 = vadd.xlane.f32.xlu0 %v47
  %v49 = vpop.xlane.xlu0 %48
  %v50 = vsel %vm24, %v43, 0.0
  %51 = vadd.xlane.f32.xlu0 %v50
  %v52 = vpop.xlane.xlu0 %51
  %v53 = vmul.f32 %v46, %v34
  %v54 = vmul.f32 %v49, %v34
  %v55 = vmul.f32 %v52, %v34
  %v56 = vadd.f32 %v53, 1e-05
  %v57 = vadd.f32 %v54, 1e-05
  %v58 = vadd.f32 %v55, 1e-05
  %v59 = vrsqrt.pop %v56
  %v60 = vrsqrt.pop %v57
  %v61 = vrsqrt.pop %v58
  %v62 = vmul.f32 %v38, %v59
  %v63 = vmul.f32 %v39, %v60
  %v64 = vmul.f32 %v40, %v61
  %v65 = vld [vmem:[%s1] sm:$0x1]
  %v67 = vlaneseq
  %v68 = vshrl.u32 %v67, 7
  %v69 = vsub.s32 0, %v68
  %v70 = vrot.slane %v65, %v69
  %v72 = vmul.f32 %v62, %v70
  %v73 = vmul.f32 %v63, %v70
  %v74 = vmul.f32 %v64, %v70
  %v75 = vld [vmem:[%s2] sm:$0x1]
  %v77 = vlaneseq
  %v78 = vshrl.u32 %v77, 7
  %v79 = vsub.s32 0, %v78
  %v80 = vrot.slane %v75, %v79
  %v82 = vadd.f32 %v72, %v80
  %v83 = vadd.f32 %v73, %v80
  %v84 = vadd.f32 %v74, %v80
  %v85 = vpack.c.bf16 %v83, %v82
  %v86 = vpack.c.bf16 %v84, %v84
  %v87 = vld [vmem:[%s3] sm:$0xff]
  %v88 = vld [vmem:[%s3 + $0x8] sm:$0xff]
  %v89 = vld [vmem:[%s3 + $0x10] sm:$0xff]
  %v90 = vld [vmem:[%s3 + $0x18] sm:$0xff]
  %v91 = vld [vmem:[%s3 + $0x20] sm:$0xff]
  %v92 = vld [vmem:[%s3 + $0x28] sm:$0xff]
  %v93 = vld [vmem:[%s3 + $0x30] sm:$0xff]
  %v94 = vld [vmem:[%s3 + $0x38] sm:$0xff]
  %v95 = vpack.c.bf16 %v88, %v87
  %v96 = vpack.c.bf16 %v90, %v89
  %v97 = vpack.c.bf16 %v92, %v91
  %v98 = vpack.c.bf16 %v94, %v93
  %v99 = vld [vmem:[%s4] sm:$0x1]
  %v101 = vlaneseq
  %v102 = vshrl.u32 %v101, 7
  %v103 = vsub.s32 0, %v102
  %v104 = vrot.slane %v99, %v103
  %v107 = vsel %vm24, %v85, 0
  %v110 = vsel %vm24, %v86, 0
  %112 = vmatprep.subr.bf16.mxu0 0
  %113 = vmatpush1.bf16.msra.mxu0 %v95
  %114 = vmatprep.subr.bf16.mxu0 0
  %115 = vmatpush1.bf16.msra.mxu0 %v96
  %116 = vmatprep.subr.bf16.mxu0 0
  %117 = vmatpush1.bf16.msra.mxu0 %v97
  %118 = vmatprep.subr.bf16.mxu0 0
  %119 = vmatpush1.bf16.msra.mxu0 %v98
  %120 = vmatprep.subr.bf16.mxu0 0
  %121 = vmatpush1.bf16.msra.mxu0 0
  %122 = vmatprep.subr.bf16.mxu0 0
  %123 = vmatpush1.bf16.msra.mxu0 0
  %124 = vmatprep.subr.bf16.mxu0 0
  %125 = vmatpush1.bf16.msra.mxu0 0
  %126 = vmatprep.subr.bf16.mxu0 0
  %127 = vmatpush1.bf16.msra.mxu0 0
  %128 = vmatprep.subr.bf16.mxu0 0
  %129 = vmatpush1.bf16.msra.mxu0 0
  %130 = vmatprep.subr.bf16.mxu0 0
  %131 = vmatpush1.bf16.msra.mxu0 0
  %132 = vmatprep.subr.bf16.mxu0 0
  %133 = vmatpush1.bf16.msra.mxu0 0
  %134 = vmatprep.subr.bf16.mxu0 0
  %135 = vmatpush1.bf16.msra.mxu0 0
  %136 = vmatprep.subr.bf16.mxu0 0
  %137 = vmatpush1.bf16.msra.mxu0 0
  %138 = vmatprep.subr.bf16.mxu0 0
  %139 = vmatpush1.bf16.msra.mxu0 0
  %140 = vmatprep.subr.bf16.mxu0 0
  %141 = vmatpush1.bf16.msra.mxu0 0
  %142 = vmatprep.subr.bf16.mxu0 0
  %143 = vmatpush1.bf16.msra.mxu0 0
  %144 = vmatprep.mubr.bf16.mxu0 0
  %145 = vmatmul.mubr.bf16.gmra.mrb[0].mxu0 %v107
  %v146 = vpop.f32.mrb[0].mxu0
  %v147 = vadd.f32 %v104, %v146
  %v148 = vpop.f32.mrb[0].mxu0
  %v149 = vpop.f32.mrb[0].mxu0
  %v150 = vadd.f32 %v104, %v149
  %v151 = vpop.f32.mrb[0].mxu0
  %152 = vmatprep.mubr.bf16.mxu0 0
  %153 = vmatmul.mubr.bf16.gmra.mrb[0].mxu0 %v110
  %v154 = vpop.f32.mrb[0].mxu0
  %v155 = vadd.f32 %v104, %v154
  %v156 = vpop.f32.mrb[0].mxu0
  %v157 = vpop.f32.mrb[0].mxu0
  %v158 = vpop.f32.mrb[0].mxu0
  %159 = vdwg.mxu0
  %vm160 = vcmask 31744
  %161 = vst.msk [vmem:[%s5] sm:$0xff] %vm160, %v147
  %162 = vst.msk [vmem:[%s5 + $0x8] sm:$0xff] %vm160, %v150
  %163 = vst.msk [vmem:[%s5 + $0x10] sm:$0xff] %vm160, %v155
  // Predicated region
  $region22: #{encoder_decoder_forward.21} parent=0 // pred_check
    _
  $region23: #{encoder_decoder_forward.21} parent=0 // pred_check_branch
    %165 = sbr.rel (0) target = $region25
  $region24: #{encoder_decoder_forward.21} parent=0 // pred_region
    _
  $region25: #{encoder_decoder_forward.21} parent=0 // pred_fallthru
    _
  // Predicated region
  $region26: #{encoder_decoder_forward.21} parent=0 // pred_check
    _
  $region27: #{encoder_decoder_forward.21} parent=0 // pred_check_branch
    %167 = sbr.rel (0) target = $region29
  $region28: #{encoder_decoder_forward.21} parent=0 // pred_region
    _
  $region29: #{encoder_decoder_forward.21} parent=0 // pred_fallthru
    _

</llo_original>
